<compile_context>
chip_gen: v5e
topology: v5e:2x2
jax: 0.10.0
libtpu: 0.0.40
codegen_flags: <defaults>
</compile_context>

<pallas_src>
import jax
import jax.numpy as jnp
from jax import lax
from jax.experimental import pallas as pl
from jax.experimental.pallas import tpu as pltpu

H = W = 16
HW = H * W            # 256 flattened board positions (h*16 + w)
PAD = 128             # lane-aligned zero margin in the conv scratch buffers
PADDED = PAD + HW + PAD


# ------------------------------ fused kernel --------------------------------

def _tron_kernel(board_ref, dlc_ref,
                 c1w_ref, c1b_ref, c2w_ref, c2b_ref,
                 w0_ref, b0_ref,
                 w1b0_ref, w1b1_ref, w1d_ref, s1_ref, b1_ref,
                 w2_ref, s2_ref, b2_ref,
                 w3_ref, b3_ref,
                 wh_ref, bh_ref,
                 out_ref,
                 pad1_ref, pad2_ref):
    B = board_ref.shape[0]
    f32 = jnp.float32
    bf16 = jnp.bfloat16

    # Width-boundary masks for the zero-padded 3x3 conv in flattened layout.
    col = lax.broadcasted_iota(jnp.int32, (B, HW), 1) % W     # w coordinate
    not_first_col = col != 0          # needed for kw == 0 taps
    not_last_col = col != (W - 1)     # needed for kw == 2 taps

    # ---- conv1: 1 -> 4 channels, 3x3, pad 1, ReLU (VPU shifted MACs) ----
    pad1_ref[...] = jnp.zeros((B, PADDED), f32)
    pad1_ref[:, pl.ds(PAD, HW)] = board_ref[...]

    c1 = [jnp.zeros((B, HW), f32) for _ in range(4)]
    for kh in range(3):
        for kw in range(3):
            s = (kh - 1) * W + (kw - 1)
            t = pad1_ref[:, pl.ds(PAD + s, HW)]               # (B, HW)
            if kw == 0:
                t = jnp.where(not_first_col, t, 0.0)
            elif kw == 2:
                t = jnp.where(not_last_col, t, 0.0)
            for co in range(4):
                c1[co] = c1[co] + c1w_ref[co, kh * 3 + kw] * t
    c1 = [jnp.maximum(c1[co] + c1b_ref[co], 0.0) for co in range(4)]

    # ---- conv2: 4 -> 2 channels, 3x3, pad 1, ReLU ----
    # One dynamic slice per (kh, kw) tap loads all 4 input channels at once.
    pad2_ref[...] = jnp.zeros((4, B, PADDED), f32)
    for ci in range(4):
        pad2_ref[ci, :, pl.ds(PAD, HW)] = c1[ci]

    nfc = not_first_col[None]                                 # (1, B, HW)
    nlc = not_last_col[None]
    c2 = [jnp.zeros((B, HW), f32) for _ in range(2)]
    for kh in range(3):
        for kw in range(3):
            s = (kh - 1) * W + (kw - 1)
            taps = pad2_ref[:, :, pl.ds(PAD + s, HW)]         # (4, B, HW)
            if kw == 0:
                taps = jnp.where(nfc, taps, 0.0)
            elif kw == 2:
                taps = jnp.where(nlc, taps, 0.0)
            for ci in range(4):
                t = taps[ci]
                for co in range(2):
                    c2[co] = c2[co] + c2w_ref[co, ci * 9 + kh * 3 + kw] * t
    c2 = [jnp.maximum(c2[co] + c2b_ref[co], 0.0) for co in range(2)]

    # bicubic 16x16 -> 16x16 resize is the identity; board_flat is just the
    # NCHW flatten [c2[0] | c2[1]] which is folded into fc1 via its row split.

    # ---- fc0 on dlc ----
    h0 = jnp.dot(dlc_ref[...], w0_ref[...], preferred_element_type=f32)
    h0 = jnp.maximum(h0 + b0_ref[...], 0.0)                   # (B, 32)

    # ---- fc1 (544 -> 1024): int8 weights, bf16 dequant, f32 accumulate,
    #      per-output-channel scale fused into the bias-add ----
    h1 = jnp.dot(c2[0].astype(bf16), w1b0_ref[...].astype(bf16),
                 preferred_element_type=f32)
    h1 = h1 + jnp.dot(c2[1].astype(bf16), w1b1_ref[...].astype(bf16),
                      preferred_element_type=f32)
    h1 = h1 + jnp.dot(h0.astype(bf16), w1d_ref[...].astype(bf16),
                      preferred_element_type=f32)
    h1 = jnp.maximum(h1 * s1_ref[...] + b1_ref[...], 0.0)     # (B, 1024)

    # ---- fc2 (1024 -> 1024): int8 weights, same dequant scheme ----
    h2 = jnp.dot(h1.astype(bf16), w2_ref[...].astype(bf16),
                 preferred_element_type=f32)
    h2 = jnp.maximum(h2 * s2_ref[...] + b2_ref[...], 0.0)     # (B, 1024)

    # ---- fc3 (1024 -> 64): bf16 weights, f32 accumulate ----
    h3 = jnp.dot(h2.astype(bf16), w3_ref[...], preferred_element_type=f32)
    h3 = jnp.maximum(h3 + b3_ref[...], 0.0)                   # (B, 64)

    # ---- merged policy/critic head: one lane-dense (64, 128) bf16 matmul ----
    heads = jnp.dot(h3.astype(bf16), wh_ref[...],
                    preferred_element_type=f32) + bh_ref[...]

    lane = lax.broadcasted_iota(jnp.int32, heads.shape, 1)
    is_pol = lane < 4
    logits = jnp.where(is_pol, heads, -jnp.inf)
    m = jnp.max(logits, axis=-1, keepdims=True)
    e = jnp.exp(logits - m)
    denom = jnp.sum(e, axis=-1, keepdims=True)
    pol = e / denom                                  # exact normalization
    # lanes 0..3: softmax policy, lane 4: raw critic, lanes 5..127: zeros
    out_ref[...] = jnp.where(lane == 4, heads, pol)


# -------------------------------- wrapper ------------------------------------

def tron_net_forward(params, board, dlc):
    B = board.shape[0]
    board_flat = board.reshape(B, HW)            # (B,1,16,16) -> (B,256), h*16+w

    args = (
        board_flat, dlc,
        params["conv1_w"], params["conv1_b"],
        params["conv2_w"], params["conv2_b"],
        params["fc0_w"], params["fc0_b"],
        params["fc1_qb0"], params["fc1_qb1"], params["fc1_qd"],
        params["fc1_scale"], params["fc1_b"],
        params["fc2_q"], params["fc2_scale"], params["fc2_b"],
        params["fc3_w"], params["fc3_b"],
        params["head_w"], params["head_b"],
    )
    smem = pl.BlockSpec(memory_space=pltpu.MemorySpace.SMEM)
    vmem = pl.BlockSpec(memory_space=pltpu.MemorySpace.VMEM)
    in_specs = [vmem, vmem, smem, smem, smem, smem] + [vmem] * 14

    out = pl.pallas_call(
        _tron_kernel,
        out_shape=jax.ShapeDtypeStruct((B, 128), jnp.float32),
        in_specs=in_specs,
        out_specs=vmem,
        scratch_shapes=[
            pltpu.VMEM((B, PADDED), jnp.float32),      # zero-padded conv1 input
            pltpu.VMEM((4, B, PADDED), jnp.float32),   # zero-padded conv1 output
        ],
        compiler_params=pltpu.CompilerParams(vmem_limit_bytes=16 << 20),
    )(*args)

    policy = out[:, :4]
    critic = out[:, 4:5]
    return policy, critic


# --------------------------- parameter creation ------------------------------

def _quantize_int8(w):
    """Symmetric per-output-channel (per-column) int8 quantization."""
    s = jnp.max(jnp.abs(w), axis=0, keepdims=True) / 127.0
    s = jnp.maximum(s, 1e-8)
    q = jnp.clip(jnp.round(w / s), -127.0, 127.0).astype(jnp.int8)
    return q, s.astype(jnp.float32)


def init_params(key):
    ks = jax.random.split(key, 16)

    def uni(k, shape, fan_in):
        bound = 1.0 / jnp.sqrt(jnp.asarray(fan_in, jnp.float32))
        return jax.random.uniform(k, shape, jnp.float32, -bound, bound)

    p = {}
    # conv1: torch weight (4,1,3,3) -> (4, 9), column order kh*3+kw
    p["conv1_w"] = uni(ks[0], (4, 1, 3, 3), 9).reshape(4, 9)
    p["conv1_b"] = uni(ks[1], (4,), 9)
    # conv2: torch weight (2,4,3,3) -> (2, 36), column order ci*9 + kh*3 + kw
    p["conv2_w"] = uni(ks[2], (2, 4, 3, 3), 36).reshape(2, 36)
    p["conv2_b"] = uni(ks[3], (2,), 36)
    # fc0: 4 -> 32 (stored (in, out))
    p["fc0_w"] = uni(ks[4], (4, 32), 4)
    p["fc0_b"] = uni(ks[5], (1, 32), 4)
    # fc1: 544 -> 1024, int8 + per-output-channel f32 scale.  Rows split at the
    # concat boundary (board 512 | dlc 32); board part split per conv channel.
    w1 = uni(ks[6], (544, 1024), 544)
    q1, s1 = _quantize_int8(w1)
    p["fc1_qb0"] = q1[:256]
    p["fc1_qb1"] = q1[256:512]
    p["fc1_qd"] = q1[512:]
    p["fc1_scale"] = s1
    p["fc1_b"] = uni(ks[7], (1, 1024), 544)
    # fc2: 1024 -> 1024, int8 + scale
    q2, s2 = _quantize_int8(uni(ks[8], (1024, 1024), 1024))
    p["fc2_q"] = q2
    p["fc2_scale"] = s2
    p["fc2_b"] = uni(ks[9], (1, 1024), 1024)
    # fc3: 1024 -> 64, bf16
    p["fc3_w"] = uni(ks[10], (1024, 64), 1024).astype(jnp.bfloat16)
    p["fc3_b"] = uni(ks[11], (1, 64), 1024)
    # policy (fc4: 64->4) + critic (64->1) merged into a lane-dense (64, 128)
    # bf16 weight: cols 0..3 = policy logits, col 4 = critic, rest zero.
    fc4_w = uni(ks[12], (64, 4), 64)
    fc4_b = uni(ks[13], (4,), 64)
    cr_w = uni(ks[14], (64, 1), 64)
    cr_b = uni(ks[15], (1,), 64)
    head_w = jnp.zeros((64, 128), jnp.float32)
    head_w = head_w.at[:, 0:4].set(fc4_w).at[:, 4:5].set(cr_w)
    head_b = jnp.zeros((1, 128), jnp.float32)
    head_b = head_b.at[0, 0:4].set(fc4_b).at[0, 4].set(cr_b[0])
    p["head_w"] = head_w.astype(jnp.bfloat16)
    p["head_b"] = head_b
    return p


# ------------------------------ pure-JAX ref ----------------------------------

def reference_forward(params, board, dlc):
    B = board.shape[0]
    bf16 = jnp.bfloat16
    f32 = jnp.float32

    def conv(x, w_flat, b):
        # w_flat: (Cout, Cin*9), columns ordered ci*9 + kh*3 + kw
        Bb, C, Hh, Ww = x.shape
        xp = jnp.pad(x, ((0, 0), (0, 0), (1, 1), (1, 1)))
        cols = [xp[:, :, kh:kh + Hh, kw:kw + Ww]
                for kh in range(3) for kw in range(3)]
        p = jnp.stack(cols, axis=-1)                      # (B, Cin, H, W, 9)
        p = p.transpose(0, 2, 3, 1, 4).reshape(Bb, Hh, Ww, -1)
        y = jnp.einsum("bhwk,ck->bchw", p, w_flat) + b[None, :, None, None]
        return jnp.maximum(y, 0.0)

    def qdot(x, q):
        return jnp.dot(x.astype(bf16), q.astype(bf16),
                       preferred_element_type=f32)

    h = conv(board, params["conv1_w"], params["conv1_b"])     # (B,4,16,16)
    h = conv(h, params["conv2_w"], params["conv2_b"])         # (B,2,16,16)
    board_flat = h.reshape(B, 512)                            # NCHW .view order

    h0 = jnp.maximum(dlc @ params["fc0_w"] + params["fc0_b"], 0.0)
    h1 = (qdot(board_flat[:, :256], params["fc1_qb0"])
          + qdot(board_flat[:, 256:], params["fc1_qb1"])
          + qdot(h0, params["fc1_qd"]))
    h1 = jnp.maximum(h1 * params["fc1_scale"] + params["fc1_b"], 0.0)
    h2 = qdot(h1, params["fc2_q"])
    h2 = jnp.maximum(h2 * params["fc2_scale"] + params["fc2_b"], 0.0)
    h3 = jnp.dot(h2.astype(bf16), params["fc3_w"], preferred_element_type=f32)
    h3 = jnp.maximum(h3 + params["fc3_b"], 0.0)
    heads = jnp.dot(h3.astype(bf16), params["head_w"],
                    preferred_element_type=f32) + params["head_b"]
    policy = jax.nn.softmax(heads[:, :4], axis=-1)
    critic = heads[:, 4:5]
    return policy, critic


# ----------------------------------- main -------------------------------------

if __name__ == "__main__":
    key = jax.random.PRNGKey(0)
    k_params, k_board, k_dlc = jax.random.split(key, 3)

    params = init_params(k_params)
    board = jax.random.normal(k_board, (2, 1, 16, 16), jnp.float32)
    dlc = jax.random.normal(k_dlc, (2, 4), jnp.float32)

    policy, critic = jax.jit(tron_net_forward)(params, board, dlc)
    jax.block_until_ready((policy, critic))

    ref_policy, ref_critic = reference_forward(params, board, dlc)
    assert policy.shape == (2, 4) and critic.shape == (2, 1)
    assert jnp.allclose(policy, ref_policy, rtol=1e-2, atol=1e-2)
    assert jnp.allclose(critic, ref_critic, rtol=1e-2, atol=1e-2)
    assert jnp.allclose(jnp.sum(policy, axis=-1), 1.0, atol=1e-3)

    print("KERNEL_OK")
</pallas_src>

<mosaic_0001>
module attributes {stable_mosaic.version = 11 : i64} {
  func.func @_tron_kernel(%arg0: memref<2x256xf32, #tpu.memory_space<vmem>>, %arg1: memref<2x4xf32, #tpu.memory_space<vmem>>, %arg2: memref<4x9xf32, #tpu.memory_space<smem>>, %arg3: memref<4xf32, #tpu.memory_space<smem>>, %arg4: memref<2x36xf32, #tpu.memory_space<smem>>, %arg5: memref<2xf32, #tpu.memory_space<smem>>, %arg6: memref<4x32xf32, #tpu.memory_space<vmem>>, %arg7: memref<1x32xf32, #tpu.memory_space<vmem>>, %arg8: memref<256x1024xi8, #tpu.memory_space<vmem>>, %arg9: memref<256x1024xi8, #tpu.memory_space<vmem>>, %arg10: memref<32x1024xi8, #tpu.memory_space<vmem>>, %arg11: memref<1x1024xf32, #tpu.memory_space<vmem>>, %arg12: memref<1x1024xf32, #tpu.memory_space<vmem>>, %arg13: memref<1024x1024xi8, #tpu.memory_space<vmem>>, %arg14: memref<1x1024xf32, #tpu.memory_space<vmem>>, %arg15: memref<1x1024xf32, #tpu.memory_space<vmem>>, %arg16: memref<1024x64xbf16, #tpu.memory_space<vmem>>, %arg17: memref<1x64xf32, #tpu.memory_space<vmem>>, %arg18: memref<64x128xbf16, #tpu.memory_space<vmem>>, %arg19: memref<1x128xf32, #tpu.memory_space<vmem>>, %arg20: memref<2x128xf32, #tpu.memory_space<vmem>>, %arg21: memref<2x512xf32, #tpu.memory_space<vmem>>, %arg22: memref<4x2x512xf32, #tpu.memory_space<vmem>>) attributes {dimension_semantics = [], scalar_prefetch = 0 : i64, scratch_operands = 2 : i64, tpu.core_type = #tpu.core_type<tc>} {
    %0 = tpu.iota {dimensions = array<i32: 1>} : vector<2x256xi32>
    %c16_i32 = arith.constant 16 : i32
    %c0_i32 = arith.constant 0 : i32
    %1 = arith.cmpi eq, %c16_i32, %c0_i32 : i32
    %c1_i32 = arith.constant 1 : i32
    %2 = arith.select %1, %c1_i32, %c16_i32 : i32
    %3 = vector.broadcast %2 : i32 to vector<2x256xi32>
    %4 = arith.remsi %0, %3 : vector<2x256xi32>
    %c0_i32_0 = arith.constant 0 : i32
    %5 = vector.broadcast %c0_i32_0 : i32 to vector<2x256xi32>
    %6 = arith.cmpi ne, %4, %5 : vector<2x256xi32>
    %c0_i32_1 = arith.constant 0 : i32
    %7 = vector.broadcast %c0_i32_1 : i32 to vector<2x256xi32>
    %8 = arith.cmpi slt, %4, %7 : vector<2x256xi32>
    %c0_i32_2 = arith.constant 0 : i32
    %9 = arith.cmpi slt, %2, %c0_i32_2 : i32
    %10 = vector.broadcast %9 : i1 to vector<2x256xi1>
    %11 = vector.broadcast %10 : vector<2x256xi1> to vector<2x256xi1>
    %12 = arith.xori %8, %11 : vector<2x256xi1>
    %13 = arith.andi %12, %6 : vector<2x256xi1>
    %14 = vector.broadcast %2 : i32 to vector<2x256xi32>
    %15 = arith.addi %4, %14 : vector<2x256xi32>
    %16 = arith.select %13, %15, %4 : vector<2x256xi1>, vector<2x256xi32>
    %c0_i32_3 = arith.constant 0 : i32
    %17 = vector.broadcast %c0_i32_3 : i32 to vector<2x256xi32>
    %18 = arith.cmpi ne, %16, %17 : vector<2x256xi32>
    %c15_i32 = arith.constant 15 : i32
    %19 = vector.broadcast %c15_i32 : i32 to vector<2x256xi32>
    %20 = arith.cmpi ne, %16, %19 : vector<2x256xi32>
    %cst = arith.constant 0.000000e+00 : f32
    %21 = vector.broadcast %cst : f32 to vector<2x512xf32>
    %c0 = arith.constant 0 : index
    %c0_4 = arith.constant 0 : index
    %22 = vector.load %arg21[%c0, %c0_4] : memref<2x512xf32, #tpu.memory_space<vmem>>, vector<2x512xf32>
    tpu.vector_store %arg21[%c0, %c0_4], %21 {strides = array<i32>} : memref<2x512xf32, #tpu.memory_space<vmem>>, vector<2x512xf32>,
    %c0_5 = arith.constant 0 : index
    %c0_6 = arith.constant 0 : index
    %23 = vector.load %arg0[%c0_5, %c0_6] : memref<2x256xf32, #tpu.memory_space<vmem>>, vector<2x256xf32>
    %c0_7 = arith.constant 0 : index
    %c128 = arith.constant 128 : index
    %24 = vector.load %arg21[%c0_7, %c128] : memref<2x512xf32, #tpu.memory_space<vmem>>, vector<2x256xf32>
    tpu.vector_store %arg21[%c0_7, %c128], %23 {strides = array<i32>} : memref<2x512xf32, #tpu.memory_space<vmem>>, vector<2x256xf32>,
    %cst_8 = arith.constant 0.000000e+00 : f32
    %25 = vector.broadcast %cst_8 : f32 to vector<2x256xf32>
    %cst_9 = arith.constant 0.000000e+00 : f32
    %26 = vector.broadcast %cst_9 : f32 to vector<2x256xf32>
    %cst_10 = arith.constant 0.000000e+00 : f32
    %27 = vector.broadcast %cst_10 : f32 to vector<2x256xf32>
    %cst_11 = arith.constant 0.000000e+00 : f32
    %28 = vector.broadcast %cst_11 : f32 to vector<2x256xf32>
    %c0_12 = arith.constant 0 : index
    %c111 = arith.constant 111 : index
    %29 = vector.load %arg21[%c0_12, %c111] : memref<2x512xf32, #tpu.memory_space<vmem>>, vector<2x256xf32>
    %cst_13 = arith.constant 0.000000e+00 : f32
    %30 = vector.broadcast %cst_13 : f32 to vector<2x256xf32>
    %31 = arith.select %18, %29, %30 : vector<2x256xi1>, vector<2x256xf32>
    %c0_14 = arith.constant 0 : index
    %c0_15 = arith.constant 0 : index
    %32 = memref.load %arg2[%c0_14, %c0_15] : memref<4x9xf32, #tpu.memory_space<smem>>
    %33 = vector.broadcast %32 : f32 to vector<2x256xf32>
    %34 = arith.mulf %33, %31 : vector<2x256xf32>
    %35 = arith.addf %25, %34 : vector<2x256xf32>
    %c1 = arith.constant 1 : index
    %c0_16 = arith.constant 0 : index
    %36 = memref.load %arg2[%c1, %c0_16] : memref<4x9xf32, #tpu.memory_space<smem>>
    %37 = vector.broadcast %36 : f32 to vector<2x256xf32>
    %38 = arith.mulf %37, %31 : vector<2x256xf32>
    %39 = arith.addf %26, %38 : vector<2x256xf32>
    %c2 = arith.constant 2 : index
    %c0_17 = arith.constant 0 : index
    %40 = memref.load %arg2[%c2, %c0_17] : memref<4x9xf32, #tpu.memory_space<smem>>
    %41 = vector.broadcast %40 : f32 to vector<2x256xf32>
    %42 = arith.mulf %41, %31 : vector<2x256xf32>
    %43 = arith.addf %27, %42 : vector<2x256xf32>
    %c3 = arith.constant 3 : index
    %c0_18 = arith.constant 0 : index
    %44 = memref.load %arg2[%c3, %c0_18] : memref<4x9xf32, #tpu.memory_space<smem>>
    %45 = vector.broadcast %44 : f32 to vector<2x256xf32>
    %46 = arith.mulf %45, %31 : vector<2x256xf32>
    %47 = arith.addf %28, %46 : vector<2x256xf32>
    %c0_19 = arith.constant 0 : index
    %c112 = arith.constant 112 : index
    %48 = vector.load %arg21[%c0_19, %c112] : memref<2x512xf32, #tpu.memory_space<vmem>>, vector<2x256xf32>
    %c0_20 = arith.constant 0 : index
    %c1_21 = arith.constant 1 : index
    %49 = memref.load %arg2[%c0_20, %c1_21] : memref<4x9xf32, #tpu.memory_space<smem>>
    %50 = vector.broadcast %49 : f32 to vector<2x256xf32>
    %51 = arith.mulf %50, %48 : vector<2x256xf32>
    %52 = arith.addf %35, %51 : vector<2x256xf32>
    %c1_22 = arith.constant 1 : index
    %c1_23 = arith.constant 1 : index
    %53 = memref.load %arg2[%c1_22, %c1_23] : memref<4x9xf32, #tpu.memory_space<smem>>
    %54 = vector.broadcast %53 : f32 to vector<2x256xf32>
    %55 = arith.mulf %54, %48 : vector<2x256xf32>
    %56 = arith.addf %39, %55 : vector<2x256xf32>
    %c2_24 = arith.constant 2 : index
    %c1_25 = arith.constant 1 : index
    %57 = memref.load %arg2[%c2_24, %c1_25] : memref<4x9xf32, #tpu.memory_space<smem>>
    %58 = vector.broadcast %57 : f32 to vector<2x256xf32>
    %59 = arith.mulf %58, %48 : vector<2x256xf32>
    %60 = arith.addf %43, %59 : vector<2x256xf32>
    %c3_26 = arith.constant 3 : index
    %c1_27 = arith.constant 1 : index
    %61 = memref.load %arg2[%c3_26, %c1_27] : memref<4x9xf32, #tpu.memory_space<smem>>
    %62 = vector.broadcast %61 : f32 to vector<2x256xf32>
    %63 = arith.mulf %62, %48 : vector<2x256xf32>
    %64 = arith.addf %47, %63 : vector<2x256xf32>
    %c0_28 = arith.constant 0 : index
    %c113 = arith.constant 113 : index
    %65 = vector.load %arg21[%c0_28, %c113] : memref<2x512xf32, #tpu.memory_space<vmem>>, vector<2x256xf32>
    %cst_29 = arith.constant 0.000000e+00 : f32
    %66 = vector.broadcast %cst_29 : f32 to vector<2x256xf32>
    %67 = arith.select %20, %65, %66 : vector<2x256xi1>, vector<2x256xf32>
    %c0_30 = arith.constant 0 : index
    %c2_31 = arith.constant 2 : index
    %68 = memref.load %arg2[%c0_30, %c2_31] : memref<4x9xf32, #tpu.memory_space<smem>>
    %69 = vector.broadcast %68 : f32 to vector<2x256xf32>
    %70 = arith.mulf %69, %67 : vector<2x256xf32>
    %71 = arith.addf %52, %70 : vector<2x256xf32>
    %c1_32 = arith.constant 1 : index
    %c2_33 = arith.constant 2 : index
    %72 = memref.load %arg2[%c1_32, %c2_33] : memref<4x9xf32, #tpu.memory_space<smem>>
    %73 = vector.broadcast %72 : f32 to vector<2x256xf32>
    %74 = arith.mulf %73, %67 : vector<2x256xf32>
    %75 = arith.addf %56, %74 : vector<2x256xf32>
    %c2_34 = arith.constant 2 : index
    %c2_35 = arith.constant 2 : index
    %76 = memref.load %arg2[%c2_34, %c2_35] : memref<4x9xf32, #tpu.memory_space<smem>>
    %77 = vector.broadcast %76 : f32 to vector<2x256xf32>
    %78 = arith.mulf %77, %67 : vector<2x256xf32>
    %79 = arith.addf %60, %78 : vector<2x256xf32>
    %c3_36 = arith.constant 3 : index
    %c2_37 = arith.constant 2 : index
    %80 = memref.load %arg2[%c3_36, %c2_37] : memref<4x9xf32, #tpu.memory_space<smem>>
    %81 = vector.broadcast %80 : f32 to vector<2x256xf32>
    %82 = arith.mulf %81, %67 : vector<2x256xf32>
    %83 = arith.addf %64, %82 : vector<2x256xf32>
    %c0_38 = arith.constant 0 : index
    %c127 = arith.constant 127 : index
    %84 = vector.load %arg21[%c0_38, %c127] : memref<2x512xf32, #tpu.memory_space<vmem>>, vector<2x256xf32>
    %cst_39 = arith.constant 0.000000e+00 : f32
    %85 = vector.broadcast %cst_39 : f32 to vector<2x256xf32>
    %86 = arith.select %18, %84, %85 : vector<2x256xi1>, vector<2x256xf32>
    %c0_40 = arith.constant 0 : index
    %c3_41 = arith.constant 3 : index
    %87 = memref.load %arg2[%c0_40, %c3_41] : memref<4x9xf32, #tpu.memory_space<smem>>
    %88 = vector.broadcast %87 : f32 to vector<2x256xf32>
    %89 = arith.mulf %88, %86 : vector<2x256xf32>
    %90 = arith.addf %71, %89 : vector<2x256xf32>
    %c1_42 = arith.constant 1 : index
    %c3_43 = arith.constant 3 : index
    %91 = memref.load %arg2[%c1_42, %c3_43] : memref<4x9xf32, #tpu.memory_space<smem>>
    %92 = vector.broadcast %91 : f32 to vector<2x256xf32>
    %93 = arith.mulf %92, %86 : vector<2x256xf32>
    %94 = arith.addf %75, %93 : vector<2x256xf32>
    %c2_44 = arith.constant 2 : index
    %c3_45 = arith.constant 3 : index
    %95 = memref.load %arg2[%c2_44, %c3_45] : memref<4x9xf32, #tpu.memory_space<smem>>
    %96 = vector.broadcast %95 : f32 to vector<2x256xf32>
    %97 = arith.mulf %96, %86 : vector<2x256xf32>
    %98 = arith.addf %79, %97 : vector<2x256xf32>
    %c3_46 = arith.constant 3 : index
    %c3_47 = arith.constant 3 : index
    %99 = memref.load %arg2[%c3_46, %c3_47] : memref<4x9xf32, #tpu.memory_space<smem>>
    %100 = vector.broadcast %99 : f32 to vector<2x256xf32>
    %101 = arith.mulf %100, %86 : vector<2x256xf32>
    %102 = arith.addf %83, %101 : vector<2x256xf32>
    %c0_48 = arith.constant 0 : index
    %c128_49 = arith.constant 128 : index
    %103 = vector.load %arg21[%c0_48, %c128_49] : memref<2x512xf32, #tpu.memory_space<vmem>>, vector<2x256xf32>
    %c0_50 = arith.constant 0 : index
    %c4 = arith.constant 4 : index
    %104 = memref.load %arg2[%c0_50, %c4] : memref<4x9xf32, #tpu.memory_space<smem>>
    %105 = vector.broadcast %104 : f32 to vector<2x256xf32>
    %106 = arith.mulf %105, %103 : vector<2x256xf32>
    %107 = arith.addf %90, %106 : vector<2x256xf32>
    %c1_51 = arith.constant 1 : index
    %c4_52 = arith.constant 4 : index
    %108 = memref.load %arg2[%c1_51, %c4_52] : memref<4x9xf32, #tpu.memory_space<smem>>
    %109 = vector.broadcast %108 : f32 to vector<2x256xf32>
    %110 = arith.mulf %109, %103 : vector<2x256xf32>
    %111 = arith.addf %94, %110 : vector<2x256xf32>
    %c2_53 = arith.constant 2 : index
    %c4_54 = arith.constant 4 : index
    %112 = memref.load %arg2[%c2_53, %c4_54] : memref<4x9xf32, #tpu.memory_space<smem>>
    %113 = vector.broadcast %112 : f32 to vector<2x256xf32>
    %114 = arith.mulf %113, %103 : vector<2x256xf32>
    %115 = arith.addf %98, %114 : vector<2x256xf32>
    %c3_55 = arith.constant 3 : index
    %c4_56 = arith.constant 4 : index
    %116 = memref.load %arg2[%c3_55, %c4_56] : memref<4x9xf32, #tpu.memory_space<smem>>
    %117 = vector.broadcast %116 : f32 to vector<2x256xf32>
    %118 = arith.mulf %117, %103 : vector<2x256xf32>
    %119 = arith.addf %102, %118 : vector<2x256xf32>
    %c0_57 = arith.constant 0 : index
    %c129 = arith.constant 129 : index
    %120 = vector.load %arg21[%c0_57, %c129] : memref<2x512xf32, #tpu.memory_space<vmem>>, vector<2x256xf32>
    %cst_58 = arith.constant 0.000000e+00 : f32
    %121 = vector.broadcast %cst_58 : f32 to vector<2x256xf32>
    %122 = arith.select %20, %120, %121 : vector<2x256xi1>, vector<2x256xf32>
    %c0_59 = arith.constant 0 : index
    %c5 = arith.constant 5 : index
    %123 = memref.load %arg2[%c0_59, %c5] : memref<4x9xf32, #tpu.memory_space<smem>>
    %124 = vector.broadcast %123 : f32 to vector<2x256xf32>
    %125 = arith.mulf %124, %122 : vector<2x256xf32>
    %126 = arith.addf %107, %125 : vector<2x256xf32>
    %c1_60 = arith.constant 1 : index
    %c5_61 = arith.constant 5 : index
    %127 = memref.load %arg2[%c1_60, %c5_61] : memref<4x9xf32, #tpu.memory_space<smem>>
    %128 = vector.broadcast %127 : f32 to vector<2x256xf32>
    %129 = arith.mulf %128, %122 : vector<2x256xf32>
    %130 = arith.addf %111, %129 : vector<2x256xf32>
    %c2_62 = arith.constant 2 : index
    %c5_63 = arith.constant 5 : index
    %131 = memref.load %arg2[%c2_62, %c5_63] : memref<4x9xf32, #tpu.memory_space<smem>>
    %132 = vector.broadcast %131 : f32 to vector<2x256xf32>
    %133 = arith.mulf %132, %122 : vector<2x256xf32>
    %134 = arith.addf %115, %133 : vector<2x256xf32>
    %c3_64 = arith.constant 3 : index
    %c5_65 = arith.constant 5 : index
    %135 = memref.load %arg2[%c3_64, %c5_65] : memref<4x9xf32, #tpu.memory_space<smem>>
    %136 = vector.broadcast %135 : f32 to vector<2x256xf32>
    %137 = arith.mulf %136, %122 : vector<2x256xf32>
    %138 = arith.addf %119, %137 : vector<2x256xf32>
    %c0_66 = arith.constant 0 : index
    %c143 = arith.constant 143 : index
    %139 = vector.load %arg21[%c0_66, %c143] : memref<2x512xf32, #tpu.memory_space<vmem>>, vector<2x256xf32>
    %cst_67 = arith.constant 0.000000e+00 : f32
    %140 = vector.broadcast %cst_67 : f32 to vector<2x256xf32>
    %141 = arith.select %18, %139, %140 : vector<2x256xi1>, vector<2x256xf32>
    %c0_68 = arith.constant 0 : index
    %c6 = arith.constant 6 : index
    %142 = memref.load %arg2[%c0_68, %c6] : memref<4x9xf32, #tpu.memory_space<smem>>
    %143 = vector.broadcast %142 : f32 to vector<2x256xf32>
    %144 = arith.mulf %143, %141 : vector<2x256xf32>
    %145 = arith.addf %126, %144 : vector<2x256xf32>
    %c1_69 = arith.constant 1 : index
    %c6_70 = arith.constant 6 : index
    %146 = memref.load %arg2[%c1_69, %c6_70] : memref<4x9xf32, #tpu.memory_space<smem>>
    %147 = vector.broadcast %146 : f32 to vector<2x256xf32>
    %148 = arith.mulf %147, %141 : vector<2x256xf32>
    %149 = arith.addf %130, %148 : vector<2x256xf32>
    %c2_71 = arith.constant 2 : index
    %c6_72 = arith.constant 6 : index
    %150 = memref.load %arg2[%c2_71, %c6_72] : memref<4x9xf32, #tpu.memory_space<smem>>
    %151 = vector.broadcast %150 : f32 to vector<2x256xf32>
    %152 = arith.mulf %151, %141 : vector<2x256xf32>
    %153 = arith.addf %134, %152 : vector<2x256xf32>
    %c3_73 = arith.constant 3 : index
    %c6_74 = arith.constant 6 : index
    %154 = memref.load %arg2[%c3_73, %c6_74] : memref<4x9xf32, #tpu.memory_space<smem>>
    %155 = vector.broadcast %154 : f32 to vector<2x256xf32>
    %156 = arith.mulf %155, %141 : vector<2x256xf32>
    %157 = arith.addf %138, %156 : vector<2x256xf32>
    %c0_75 = arith.constant 0 : index
    %c144 = arith.constant 144 : index
    %158 = vector.load %arg21[%c0_75, %c144] : memref<2x512xf32, #tpu.memory_space<vmem>>, vector<2x256xf32>
    %c0_76 = arith.constant 0 : index
    %c7 = arith.constant 7 : index
    %159 = memref.load %arg2[%c0_76, %c7] : memref<4x9xf32, #tpu.memory_space<smem>>
    %160 = vector.broadcast %159 : f32 to vector<2x256xf32>
    %161 = arith.mulf %160, %158 : vector<2x256xf32>
    %162 = arith.addf %145, %161 : vector<2x256xf32>
    %c1_77 = arith.constant 1 : index
    %c7_78 = arith.constant 7 : index
    %163 = memref.load %arg2[%c1_77, %c7_78] : memref<4x9xf32, #tpu.memory_space<smem>>
    %164 = vector.broadcast %163 : f32 to vector<2x256xf32>
    %165 = arith.mulf %164, %158 : vector<2x256xf32>
    %166 = arith.addf %149, %165 : vector<2x256xf32>
    %c2_79 = arith.constant 2 : index
    %c7_80 = arith.constant 7 : index
    %167 = memref.load %arg2[%c2_79, %c7_80] : memref<4x9xf32, #tpu.memory_space<smem>>
    %168 = vector.broadcast %167 : f32 to vector<2x256xf32>
    %169 = arith.mulf %168, %158 : vector<2x256xf32>
    %170 = arith.addf %153, %169 : vector<2x256xf32>
    %c3_81 = arith.constant 3 : index
    %c7_82 = arith.constant 7 : index
    %171 = memref.load %arg2[%c3_81, %c7_82] : memref<4x9xf32, #tpu.memory_space<smem>>
    %172 = vector.broadcast %171 : f32 to vector<2x256xf32>
    %173 = arith.mulf %172, %158 : vector<2x256xf32>
    %174 = arith.addf %157, %173 : vector<2x256xf32>
    %c0_83 = arith.constant 0 : index
    %c145 = arith.constant 145 : index
    %175 = vector.load %arg21[%c0_83, %c145] : memref<2x512xf32, #tpu.memory_space<vmem>>, vector<2x256xf32>
    %cst_84 = arith.constant 0.000000e+00 : f32
    %176 = vector.broadcast %cst_84 : f32 to vector<2x256xf32>
    %177 = arith.select %20, %175, %176 : vector<2x256xi1>, vector<2x256xf32>
    %c0_85 = arith.constant 0 : index
    %c8 = arith.constant 8 : index
    %178 = memref.load %arg2[%c0_85, %c8] : memref<4x9xf32, #tpu.memory_space<smem>>
    %179 = vector.broadcast %178 : f32 to vector<2x256xf32>
    %180 = arith.mulf %179, %177 : vector<2x256xf32>
    %181 = arith.addf %162, %180 : vector<2x256xf32>
    %c1_86 = arith.constant 1 : index
    %c8_87 = arith.constant 8 : index
    %182 = memref.load %arg2[%c1_86, %c8_87] : memref<4x9xf32, #tpu.memory_space<smem>>
    %183 = vector.broadcast %182 : f32 to vector<2x256xf32>
    %184 = arith.mulf %183, %177 : vector<2x256xf32>
    %185 = arith.addf %166, %184 : vector<2x256xf32>
    %c2_88 = arith.constant 2 : index
    %c8_89 = arith.constant 8 : index
    %186 = memref.load %arg2[%c2_88, %c8_89] : memref<4x9xf32, #tpu.memory_space<smem>>
    %187 = vector.broadcast %186 : f32 to vector<2x256xf32>
    %188 = arith.mulf %187, %177 : vector<2x256xf32>
    %189 = arith.addf %170, %188 : vector<2x256xf32>
    %c3_90 = arith.constant 3 : index
    %c8_91 = arith.constant 8 : index
    %190 = memref.load %arg2[%c3_90, %c8_91] : memref<4x9xf32, #tpu.memory_space<smem>>
    %191 = vector.broadcast %190 : f32 to vector<2x256xf32>
    %192 = arith.mulf %191, %177 : vector<2x256xf32>
    %193 = arith.addf %174, %192 : vector<2x256xf32>
    %c0_92 = arith.constant 0 : index
    %194 = memref.load %arg3[%c0_92] : memref<4xf32, #tpu.memory_space<smem>>
    %195 = vector.broadcast %194 : f32 to vector<2x256xf32>
    %196 = arith.addf %181, %195 : vector<2x256xf32>
    %cst_93 = arith.constant 0.000000e+00 : f32
    %197 = vector.broadcast %cst_93 : f32 to vector<2x256xf32>
    %198 = arith.maximumf %196, %197 : vector<2x256xf32>
    %c1_94 = arith.constant 1 : index
    %199 = memref.load %arg3[%c1_94] : memref<4xf32, #tpu.memory_space<smem>>
    %200 = vector.broadcast %199 : f32 to vector<2x256xf32>
    %201 = arith.addf %185, %200 : vector<2x256xf32>
    %cst_95 = arith.constant 0.000000e+00 : f32
    %202 = vector.broadcast %cst_95 : f32 to vector<2x256xf32>
    %203 = arith.maximumf %201, %202 : vector<2x256xf32>
    %c2_96 = arith.constant 2 : index
    %204 = memref.load %arg3[%c2_96] : memref<4xf32, #tpu.memory_space<smem>>
    %205 = vector.broadcast %204 : f32 to vector<2x256xf32>
    %206 = arith.addf %189, %205 : vector<2x256xf32>
    %cst_97 = arith.constant 0.000000e+00 : f32
    %207 = vector.broadcast %cst_97 : f32 to vector<2x256xf32>
    %208 = arith.maximumf %206, %207 : vector<2x256xf32>
    %c3_98 = arith.constant 3 : index
    %209 = memref.load %arg3[%c3_98] : memref<4xf32, #tpu.memory_space<smem>>
    %210 = vector.broadcast %209 : f32 to vector<2x256xf32>
    %211 = arith.addf %193, %210 : vector<2x256xf32>
    %cst_99 = arith.constant 0.000000e+00 : f32
    %212 = vector.broadcast %cst_99 : f32 to vector<2x256xf32>
    %213 = arith.maximumf %211, %212 : vector<2x256xf32>
    %cst_100 = arith.constant 0.000000e+00 : f32
    %214 = vector.broadcast %cst_100 : f32 to vector<4x2x512xf32>
    %c0_101 = arith.constant 0 : index
    %c0_102 = arith.constant 0 : index
    %c0_103 = arith.constant 0 : index
    %215 = vector.load %arg22[%c0_101, %c0_102, %c0_103] : memref<4x2x512xf32, #tpu.memory_space<vmem>>, vector<4x2x512xf32>
    tpu.vector_store %arg22[%c0_101, %c0_102, %c0_103], %214 {strides = array<i32>} : memref<4x2x512xf32, #tpu.memory_space<vmem>>, vector<4x2x512xf32>,
    %c0_104 = arith.constant 0 : index
    %c0_105 = arith.constant 0 : index
    %c128_106 = arith.constant 128 : index
    %216 = vector.load %arg22[%c0_104, %c0_105, %c128_106] : memref<4x2x512xf32, #tpu.memory_space<vmem>>, vector<1x2x256xf32>
    %217 = vector.shape_cast %216 : vector<1x2x256xf32> to vector<2x256xf32>
    %218 = vector.shape_cast %198 : vector<2x256xf32> to vector<1x2x256xf32>
    tpu.vector_store %arg22[%c0_104, %c0_105, %c128_106], %218 {strides = array<i32>} : memref<4x2x512xf32, #tpu.memory_space<vmem>>, vector<1x2x256xf32>,
    %c1_107 = arith.constant 1 : index
    %c0_108 = arith.constant 0 : index
    %c128_109 = arith.constant 128 : index
    %219 = vector.load %arg22[%c1_107, %c0_108, %c128_109] : memref<4x2x512xf32, #tpu.memory_space<vmem>>, vector<1x2x256xf32>
    %220 = vector.shape_cast %219 : vector<1x2x256xf32> to vector<2x256xf32>
    %221 = vector.shape_cast %203 : vector<2x256xf32> to vector<1x2x256xf32>
    tpu.vector_store %arg22[%c1_107, %c0_108, %c128_109], %221 {strides = array<i32>} : memref<4x2x512xf32, #tpu.memory_space<vmem>>, vector<1x2x256xf32>,
    %c2_110 = arith.constant 2 : index
    %c0_111 = arith.constant 0 : index
    %c128_112 = arith.constant 128 : index
    %222 = vector.load %arg22[%c2_110, %c0_111, %c128_112] : memref<4x2x512xf32, #tpu.memory_space<vmem>>, vector<1x2x256xf32>
    %223 = vector.shape_cast %222 : vector<1x2x256xf32> to vector<2x256xf32>
    %224 = vector.shape_cast %208 : vector<2x256xf32> to vector<1x2x256xf32>
    tpu.vector_store %arg22[%c2_110, %c0_111, %c128_112], %224 {strides = array<i32>} : memref<4x2x512xf32, #tpu.memory_space<vmem>>, vector<1x2x256xf32>,
    %c3_113 = arith.constant 3 : index
    %c0_114 = arith.constant 0 : index
    %c128_115 = arith.constant 128 : index
    %225 = vector.load %arg22[%c3_113, %c0_114, %c128_115] : memref<4x2x512xf32, #tpu.memory_space<vmem>>, vector<1x2x256xf32>
    %226 = vector.shape_cast %225 : vector<1x2x256xf32> to vector<2x256xf32>
    %227 = vector.shape_cast %213 : vector<2x256xf32> to vector<1x2x256xf32>
    tpu.vector_store %arg22[%c3_113, %c0_114, %c128_115], %227 {strides = array<i32>} : memref<4x2x512xf32, #tpu.memory_space<vmem>>, vector<1x2x256xf32>,
    %228 = vector.shape_cast %18 : vector<2x256xi1> to vector<1x2x256xi1>
    %229 = vector.shape_cast %20 : vector<2x256xi1> to vector<1x2x256xi1>
    %cst_116 = arith.constant 0.000000e+00 : f32
    %230 = vector.broadcast %cst_116 : f32 to vector<2x256xf32>
    %cst_117 = arith.constant 0.000000e+00 : f32
    %231 = vector.broadcast %cst_117 : f32 to vector<2x256xf32>
    %c0_118 = arith.constant 0 : index
    %c0_119 = arith.constant 0 : index
    %c111_120 = arith.constant 111 : index
    %232 = vector.load %arg22[%c0_118, %c0_119, %c111_120] : memref<4x2x512xf32, #tpu.memory_space<vmem>>, vector<4x2x256xf32>
    %cst_121 = arith.constant 0.000000e+00 : f32
    %233 = vector.shape_cast %228 : vector<1x2x256xi1> to vector<1x2x256xi1>
    %234 = vector.broadcast %233 : vector<1x2x256xi1> to vector<4x2x256xi1>
    %235 = vector.broadcast %cst_121 : f32 to vector<4x2x256xf32>
    %236 = arith.select %234, %232, %235 : vector<4x2x256xi1>, vector<4x2x256xf32>
    %237 = vector.extract_strided_slice %236 {offsets = [0, 0, 0], sizes = [1, 2, 256], strides = [1, 1, 1]} : vector<4x2x256xf32> to vector<1x2x256xf32>
    %238 = vector.shape_cast %237 : vector<1x2x256xf32> to vector<2x256xf32>
    %c0_122 = arith.constant 0 : index
    %c0_123 = arith.constant 0 : index
    %239 = memref.load %arg4[%c0_122, %c0_123] : memref<2x36xf32, #tpu.memory_space<smem>>
    %240 = vector.broadcast %239 : f32 to vector<2x256xf32>
    %241 = arith.mulf %240, %238 : vector<2x256xf32>
    %242 = arith.addf %230, %241 : vector<2x256xf32>
    %c1_124 = arith.constant 1 : index
    %c0_125 = arith.constant 0 : index
    %243 = memref.load %arg4[%c1_124, %c0_125] : memref<2x36xf32, #tpu.memory_space<smem>>
    %244 = vector.broadcast %243 : f32 to vector<2x256xf32>
    %245 = arith.mulf %244, %238 : vector<2x256xf32>
    %246 = arith.addf %231, %245 : vector<2x256xf32>
    %247 = vector.extract_strided_slice %236 {offsets = [1, 0, 0], sizes = [1, 2, 256], strides = [1, 1, 1]} : vector<4x2x256xf32> to vector<1x2x256xf32>
    %248 = vector.shape_cast %247 : vector<1x2x256xf32> to vector<2x256xf32>
    %c0_126 = arith.constant 0 : index
    %c9 = arith.constant 9 : index
    %249 = memref.load %arg4[%c0_126, %c9] : memref<2x36xf32, #tpu.memory_space<smem>>
    %250 = vector.broadcast %249 : f32 to vector<2x256xf32>
    %251 = arith.mulf %250, %248 : vector<2x256xf32>
    %252 = arith.addf %242, %251 : vector<2x256xf32>
    %c1_127 = arith.constant 1 : index
    %c9_128 = arith.constant 9 : index
    %253 = memref.load %arg4[%c1_127, %c9_128] : memref<2x36xf32, #tpu.memory_space<smem>>
    %254 = vector.broadcast %253 : f32 to vector<2x256xf32>
    %255 = arith.mulf %254, %248 : vector<2x256xf32>
    %256 = arith.addf %246, %255 : vector<2x256xf32>
    %257 = vector.extract_strided_slice %236 {offsets = [2, 0, 0], sizes = [1, 2, 256], strides = [1, 1, 1]} : vector<4x2x256xf32> to vector<1x2x256xf32>
    %258 = vector.shape_cast %257 : vector<1x2x256xf32> to vector<2x256xf32>
    %c0_129 = arith.constant 0 : index
    %c18 = arith.constant 18 : index
    %259 = memref.load %arg4[%c0_129, %c18] : memref<2x36xf32, #tpu.memory_space<smem>>
    %260 = vector.broadcast %259 : f32 to vector<2x256xf32>
    %261 = arith.mulf %260, %258 : vector<2x256xf32>
    %262 = arith.addf %252, %261 : vector<2x256xf32>
    %c1_130 = arith.constant 1 : index
    %c18_131 = arith.constant 18 : index
    %263 = memref.load %arg4[%c1_130, %c18_131] : memref<2x36xf32, #tpu.memory_space<smem>>
    %264 = vector.broadcast %263 : f32 to vector<2x256xf32>
    %265 = arith.mulf %264, %258 : vector<2x256xf32>
    %266 = arith.addf %256, %265 : vector<2x256xf32>
    %267 = vector.extract_strided_slice %236 {offsets = [3, 0, 0], sizes = [1, 2, 256], strides = [1, 1, 1]} : vector<4x2x256xf32> to vector<1x2x256xf32>
    %268 = vector.shape_cast %267 : vector<1x2x256xf32> to vector<2x256xf32>
    %c0_132 = arith.constant 0 : index
    %c27 = arith.constant 27 : index
    %269 = memref.load %arg4[%c0_132, %c27] : memref<2x36xf32, #tpu.memory_space<smem>>
    %270 = vector.broadcast %269 : f32 to vector<2x256xf32>
    %271 = arith.mulf %270, %268 : vector<2x256xf32>
    %272 = arith.addf %262, %271 : vector<2x256xf32>
    %c1_133 = arith.constant 1 : index
    %c27_134 = arith.constant 27 : index
    %273 = memref.load %arg4[%c1_133, %c27_134] : memref<2x36xf32, #tpu.memory_space<smem>>
    %274 = vector.broadcast %273 : f32 to vector<2x256xf32>
    %275 = arith.mulf %274, %268 : vector<2x256xf32>
    %276 = arith.addf %266, %275 : vector<2x256xf32>
    %c0_135 = arith.constant 0 : index
    %c0_136 = arith.constant 0 : index
    %c112_137 = arith.constant 112 : index
    %277 = vector.load %arg22[%c0_135, %c0_136, %c112_137] : memref<4x2x512xf32, #tpu.memory_space<vmem>>, vector<4x2x256xf32>
    %278 = vector.extract_strided_slice %277 {offsets = [0, 0, 0], sizes = [1, 2, 256], strides = [1, 1, 1]} : vector<4x2x256xf32> to vector<1x2x256xf32>
    %279 = vector.shape_cast %278 : vector<1x2x256xf32> to vector<2x256xf32>
    %c0_138 = arith.constant 0 : index
    %c1_139 = arith.constant 1 : index
    %280 = memref.load %arg4[%c0_138, %c1_139] : memref<2x36xf32, #tpu.memory_space<smem>>
    %281 = vector.broadcast %280 : f32 to vector<2x256xf32>
    %282 = arith.mulf %281, %279 : vector<2x256xf32>
    %283 = arith.addf %272, %282 : vector<2x256xf32>
    %c1_140 = arith.constant 1 : index
    %c1_141 = arith.constant 1 : index
    %284 = memref.load %arg4[%c1_140, %c1_141] : memref<2x36xf32, #tpu.memory_space<smem>>
    %285 = vector.broadcast %284 : f32 to vector<2x256xf32>
    %286 = arith.mulf %285, %279 : vector<2x256xf32>
    %287 = arith.addf %276, %286 : vector<2x256xf32>
    %288 = vector.extract_strided_slice %277 {offsets = [1, 0, 0], sizes = [1, 2, 256], strides = [1, 1, 1]} : vector<4x2x256xf32> to vector<1x2x256xf32>
    %289 = vector.shape_cast %288 : vector<1x2x256xf32> to vector<2x256xf32>
    %c0_142 = arith.constant 0 : index
    %c10 = arith.constant 10 : index
    %290 = memref.load %arg4[%c0_142, %c10] : memref<2x36xf32, #tpu.memory_space<smem>>
    %291 = vector.broadcast %290 : f32 to vector<2x256xf32>
    %292 = arith.mulf %291, %289 : vector<2x256xf32>
    %293 = arith.addf %283, %292 : vector<2x256xf32>
    %c1_143 = arith.constant 1 : index
    %c10_144 = arith.constant 10 : index
    %294 = memref.load %arg4[%c1_143, %c10_144] : memref<2x36xf32, #tpu.memory_space<smem>>
    %295 = vector.broadcast %294 : f32 to vector<2x256xf32>
    %296 = arith.mulf %295, %289 : vector<2x256xf32>
    %297 = arith.addf %287, %296 : vector<2x256xf32>
    %298 = vector.extract_strided_slice %277 {offsets = [2, 0, 0], sizes = [1, 2, 256], strides = [1, 1, 1]} : vector<4x2x256xf32> to vector<1x2x256xf32>
    %299 = vector.shape_cast %298 : vector<1x2x256xf32> to vector<2x256xf32>
    %c0_145 = arith.constant 0 : index
    %c19 = arith.constant 19 : index
    %300 = memref.load %arg4[%c0_145, %c19] : memref<2x36xf32, #tpu.memory_space<smem>>
    %301 = vector.broadcast %300 : f32 to vector<2x256xf32>
    %302 = arith.mulf %301, %299 : vector<2x256xf32>
    %303 = arith.addf %293, %302 : vector<2x256xf32>
    %c1_146 = arith.constant 1 : index
    %c19_147 = arith.constant 19 : index
    %304 = memref.load %arg4[%c1_146, %c19_147] : memref<2x36xf32, #tpu.memory_space<smem>>
    %305 = vector.broadcast %304 : f32 to vector<2x256xf32>
    %306 = arith.mulf %305, %299 : vector<2x256xf32>
    %307 = arith.addf %297, %306 : vector<2x256xf32>
    %308 = vector.extract_strided_slice %277 {offsets = [3, 0, 0], sizes = [1, 2, 256], strides = [1, 1, 1]} : vector<4x2x256xf32> to vector<1x2x256xf32>
    %309 = vector.shape_cast %308 : vector<1x2x256xf32> to vector<2x256xf32>
    %c0_148 = arith.constant 0 : index
    %c28 = arith.constant 28 : index
    %310 = memref.load %arg4[%c0_148, %c28] : memref<2x36xf32, #tpu.memory_space<smem>>
    %311 = vector.broadcast %310 : f32 to vector<2x256xf32>
    %312 = arith.mulf %311, %309 : vector<2x256xf32>
    %313 = arith.addf %303, %312 : vector<2x256xf32>
    %c1_149 = arith.constant 1 : index
    %c28_150 = arith.constant 28 : index
    %314 = memref.load %arg4[%c1_149, %c28_150] : memref<2x36xf32, #tpu.memory_space<smem>>
    %315 = vector.broadcast %314 : f32 to vector<2x256xf32>
    %316 = arith.mulf %315, %309 : vector<2x256xf32>
    %317 = arith.addf %307, %316 : vector<2x256xf32>
    %c0_151 = arith.constant 0 : index
    %c0_152 = arith.constant 0 : index
    %c113_153 = arith.constant 113 : index
    %318 = vector.load %arg22[%c0_151, %c0_152, %c113_153] : memref<4x2x512xf32, #tpu.memory_space<vmem>>, vector<4x2x256xf32>
    %cst_154 = arith.constant 0.000000e+00 : f32
    %319 = vector.shape_cast %229 : vector<1x2x256xi1> to vector<1x2x256xi1>
    %320 = vector.broadcast %319 : vector<1x2x256xi1> to vector<4x2x256xi1>
    %321 = vector.broadcast %cst_154 : f32 to vector<4x2x256xf32>
    %322 = arith.select %320, %318, %321 : vector<4x2x256xi1>, vector<4x2x256xf32>
    %323 = vector.extract_strided_slice %322 {offsets = [0, 0, 0], sizes = [1, 2, 256], strides = [1, 1, 1]} : vector<4x2x256xf32> to vector<1x2x256xf32>
    %324 = vector.shape_cast %323 : vector<1x2x256xf32> to vector<2x256xf32>
    %c0_155 = arith.constant 0 : index
    %c2_156 = arith.constant 2 : index
    %325 = memref.load %arg4[%c0_155, %c2_156] : memref<2x36xf32, #tpu.memory_space<smem>>
    %326 = vector.broadcast %325 : f32 to vector<2x256xf32>
    %327 = arith.mulf %326, %324 : vector<2x256xf32>
    %328 = arith.addf %313, %327 : vector<2x256xf32>
    %c1_157 = arith.constant 1 : index
    %c2_158 = arith.constant 2 : index
    %329 = memref.load %arg4[%c1_157, %c2_158] : memref<2x36xf32, #tpu.memory_space<smem>>
    %330 = vector.broadcast %329 : f32 to vector<2x256xf32>
    %331 = arith.mulf %330, %324 : vector<2x256xf32>
    %332 = arith.addf %317, %331 : vector<2x256xf32>
    %333 = vector.extract_strided_slice %322 {offsets = [1, 0, 0], sizes = [1, 2, 256], strides = [1, 1, 1]} : vector<4x2x256xf32> to vector<1x2x256xf32>
    %334 = vector.shape_cast %333 : vector<1x2x256xf32> to vector<2x256xf32>
    %c0_159 = arith.constant 0 : index
    %c11 = arith.constant 11 : index
    %335 = memref.load %arg4[%c0_159, %c11] : memref<2x36xf32, #tpu.memory_space<smem>>
    %336 = vector.broadcast %335 : f32 to vector<2x256xf32>
    %337 = arith.mulf %336, %334 : vector<2x256xf32>
    %338 = arith.addf %328, %337 : vector<2x256xf32>
    %c1_160 = arith.constant 1 : index
    %c11_161 = arith.constant 11 : index
    %339 = memref.load %arg4[%c1_160, %c11_161] : memref<2x36xf32, #tpu.memory_space<smem>>
    %340 = vector.broadcast %339 : f32 to vector<2x256xf32>
    %341 = arith.mulf %340, %334 : vector<2x256xf32>
    %342 = arith.addf %332, %341 : vector<2x256xf32>
    %343 = vector.extract_strided_slice %322 {offsets = [2, 0, 0], sizes = [1, 2, 256], strides = [1, 1, 1]} : vector<4x2x256xf32> to vector<1x2x256xf32>
    %344 = vector.shape_cast %343 : vector<1x2x256xf32> to vector<2x256xf32>
    %c0_162 = arith.constant 0 : index
    %c20 = arith.constant 20 : index
    %345 = memref.load %arg4[%c0_162, %c20] : memref<2x36xf32, #tpu.memory_space<smem>>
    %346 = vector.broadcast %345 : f32 to vector<2x256xf32>
    %347 = arith.mulf %346, %344 : vector<2x256xf32>
    %348 = arith.addf %338, %347 : vector<2x256xf32>
    %c1_163 = arith.constant 1 : index
    %c20_164 = arith.constant 20 : index
    %349 = memref.load %arg4[%c1_163, %c20_164] : memref<2x36xf32, #tpu.memory_space<smem>>
    %350 = vector.broadcast %349 : f32 to vector<2x256xf32>
    %351 = arith.mulf %350, %344 : vector<2x256xf32>
    %352 = arith.addf %342, %351 : vector<2x256xf32>
    %353 = vector.extract_strided_slice %322 {offsets = [3, 0, 0], sizes = [1, 2, 256], strides = [1, 1, 1]} : vector<4x2x256xf32> to vector<1x2x256xf32>
    %354 = vector.shape_cast %353 : vector<1x2x256xf32> to vector<2x256xf32>
    %c0_165 = arith.constant 0 : index
    %c29 = arith.constant 29 : index
    %355 = memref.load %arg4[%c0_165, %c29] : memref<2x36xf32, #tpu.memory_space<smem>>
    %356 = vector.broadcast %355 : f32 to vector<2x256xf32>
    %357 = arith.mulf %356, %354 : vector<2x256xf32>
    %358 = arith.addf %348, %357 : vector<2x256xf32>
    %c1_166 = arith.constant 1 : index
    %c29_167 = arith.constant 29 : index
    %359 = memref.load %arg4[%c1_166, %c29_167] : memref<2x36xf32, #tpu.memory_space<smem>>
    %360 = vector.broadcast %359 : f32 to vector<2x256xf32>
    %361 = arith.mulf %360, %354 : vector<2x256xf32>
    %362 = arith.addf %352, %361 : vector<2x256xf32>
    %c0_168 = arith.constant 0 : index
    %c0_169 = arith.constant 0 : index
    %c127_170 = arith.constant 127 : index
    %363 = vector.load %arg22[%c0_168, %c0_169, %c127_170] : memref<4x2x512xf32, #tpu.memory_space<vmem>>, vector<4x2x256xf32>
    %cst_171 = arith.constant 0.000000e+00 : f32
    %364 = vector.shape_cast %228 : vector<1x2x256xi1> to vector<1x2x256xi1>
    %365 = vector.broadcast %364 : vector<1x2x256xi1> to vector<4x2x256xi1>
    %366 = vector.broadcast %cst_171 : f32 to vector<4x2x256xf32>
    %367 = arith.select %365, %363, %366 : vector<4x2x256xi1>, vector<4x2x256xf32>
    %368 = vector.extract_strided_slice %367 {offsets = [0, 0, 0], sizes = [1, 2, 256], strides = [1, 1, 1]} : vector<4x2x256xf32> to vector<1x2x256xf32>
    %369 = vector.shape_cast %368 : vector<1x2x256xf32> to vector<2x256xf32>
    %c0_172 = arith.constant 0 : index
    %c3_173 = arith.constant 3 : index
    %370 = memref.load %arg4[%c0_172, %c3_173] : memref<2x36xf32, #tpu.memory_space<smem>>
    %371 = vector.broadcast %370 : f32 to vector<2x256xf32>
    %372 = arith.mulf %371, %369 : vector<2x256xf32>
    %373 = arith.addf %358, %372 : vector<2x256xf32>
    %c1_174 = arith.constant 1 : index
    %c3_175 = arith.constant 3 : index
    %374 = memref.load %arg4[%c1_174, %c3_175] : memref<2x36xf32, #tpu.memory_space<smem>>
    %375 = vector.broadcast %374 : f32 to vector<2x256xf32>
    %376 = arith.mulf %375, %369 : vector<2x256xf32>
    %377 = arith.addf %362, %376 : vector<2x256xf32>
    %378 = vector.extract_strided_slice %367 {offsets = [1, 0, 0], sizes = [1, 2, 256], strides = [1, 1, 1]} : vector<4x2x256xf32> to vector<1x2x256xf32>
    %379 = vector.shape_cast %378 : vector<1x2x256xf32> to vector<2x256xf32>
    %c0_176 = arith.constant 0 : index
    %c12 = arith.constant 12 : index
    %380 = memref.load %arg4[%c0_176, %c12] : memref<2x36xf32, #tpu.memory_space<smem>>
    %381 = vector.broadcast %380 : f32 to vector<2x256xf32>
    %382 = arith.mulf %381, %379 : vector<2x256xf32>
    %383 = arith.addf %373, %382 : vector<2x256xf32>
    %c1_177 = arith.constant 1 : index
    %c12_178 = arith.constant 12 : index
    %384 = memref.load %arg4[%c1_177, %c12_178] : memref<2x36xf32, #tpu.memory_space<smem>>
    %385 = vector.broadcast %384 : f32 to vector<2x256xf32>
    %386 = arith.mulf %385, %379 : vector<2x256xf32>
    %387 = arith.addf %377, %386 : vector<2x256xf32>
    %388 = vector.extract_strided_slice %367 {offsets = [2, 0, 0], sizes = [1, 2, 256], strides = [1, 1, 1]} : vector<4x2x256xf32> to vector<1x2x256xf32>
    %389 = vector.shape_cast %388 : vector<1x2x256xf32> to vector<2x256xf32>
    %c0_179 = arith.constant 0 : index
    %c21 = arith.constant 21 : index
    %390 = memref.load %arg4[%c0_179, %c21] : memref<2x36xf32, #tpu.memory_space<smem>>
    %391 = vector.broadcast %390 : f32 to vector<2x256xf32>
    %392 = arith.mulf %391, %389 : vector<2x256xf32>
    %393 = arith.addf %383, %392 : vector<2x256xf32>
    %c1_180 = arith.constant 1 : index
    %c21_181 = arith.constant 21 : index
    %394 = memref.load %arg4[%c1_180, %c21_181] : memref<2x36xf32, #tpu.memory_space<smem>>
    %395 = vector.broadcast %394 : f32 to vector<2x256xf32>
    %396 = arith.mulf %395, %389 : vector<2x256xf32>
    %397 = arith.addf %387, %396 : vector<2x256xf32>
    %398 = vector.extract_strided_slice %367 {offsets = [3, 0, 0], sizes = [1, 2, 256], strides = [1, 1, 1]} : vector<4x2x256xf32> to vector<1x2x256xf32>
    %399 = vector.shape_cast %398 : vector<1x2x256xf32> to vector<2x256xf32>
    %c0_182 = arith.constant 0 : index
    %c30 = arith.constant 30 : index
    %400 = memref.load %arg4[%c0_182, %c30] : memref<2x36xf32, #tpu.memory_space<smem>>
    %401 = vector.broadcast %400 : f32 to vector<2x256xf32>
    %402 = arith.mulf %401, %399 : vector<2x256xf32>
    %403 = arith.addf %393, %402 : vector<2x256xf32>
    %c1_183 = arith.constant 1 : index
    %c30_184 = arith.constant 30 : index
    %404 = memref.load %arg4[%c1_183, %c30_184] : memref<2x36xf32, #tpu.memory_space<smem>>
    %405 = vector.broadcast %404 : f32 to vector<2x256xf32>
    %406 = arith.mulf %405, %399 : vector<2x256xf32>
    %407 = arith.addf %397, %406 : vector<2x256xf32>
    %c0_185 = arith.constant 0 : index
    %c0_186 = arith.constant 0 : index
    %c128_187 = arith.constant 128 : index
    %408 = vector.load %arg22[%c0_185, %c0_186, %c128_187] : memref<4x2x512xf32, #tpu.memory_space<vmem>>, vector<4x2x256xf32>
    %409 = vector.extract_strided_slice %408 {offsets = [0, 0, 0], sizes = [1, 2, 256], strides = [1, 1, 1]} : vector<4x2x256xf32> to vector<1x2x256xf32>
    %410 = vector.shape_cast %409 : vector<1x2x256xf32> to vector<2x256xf32>
    %c0_188 = arith.constant 0 : index
    %c4_189 = arith.constant 4 : index
    %411 = memref.load %arg4[%c0_188, %c4_189] : memref<2x36xf32, #tpu.memory_space<smem>>
    %412 = vector.broadcast %411 : f32 to vector<2x256xf32>
    %413 = arith.mulf %412, %410 : vector<2x256xf32>
    %414 = arith.addf %403, %413 : vector<2x256xf32>
    %c1_190 = arith.constant 1 : index
    %c4_191 = arith.constant 4 : index
    %415 = memref.load %arg4[%c1_190, %c4_191] : memref<2x36xf32, #tpu.memory_space<smem>>
    %416 = vector.broadcast %415 : f32 to vector<2x256xf32>
    %417 = arith.mulf %416, %410 : vector<2x256xf32>
    %418 = arith.addf %407, %417 : vector<2x256xf32>
    %419 = vector.extract_strided_slice %408 {offsets = [1, 0, 0], sizes = [1, 2, 256], strides = [1, 1, 1]} : vector<4x2x256xf32> to vector<1x2x256xf32>
    %420 = vector.shape_cast %419 : vector<1x2x256xf32> to vector<2x256xf32>
    %c0_192 = arith.constant 0 : index
    %c13 = arith.constant 13 : index
    %421 = memref.load %arg4[%c0_192, %c13] : memref<2x36xf32, #tpu.memory_space<smem>>
    %422 = vector.broadcast %421 : f32 to vector<2x256xf32>
    %423 = arith.mulf %422, %420 : vector<2x256xf32>
    %424 = arith.addf %414, %423 : vector<2x256xf32>
    %c1_193 = arith.constant 1 : index
    %c13_194 = arith.constant 13 : index
    %425 = memref.load %arg4[%c1_193, %c13_194] : memref<2x36xf32, #tpu.memory_space<smem>>
    %426 = vector.broadcast %425 : f32 to vector<2x256xf32>
    %427 = arith.mulf %426, %420 : vector<2x256xf32>
    %428 = arith.addf %418, %427 : vector<2x256xf32>
    %429 = vector.extract_strided_slice %408 {offsets = [2, 0, 0], sizes = [1, 2, 256], strides = [1, 1, 1]} : vector<4x2x256xf32> to vector<1x2x256xf32>
    %430 = vector.shape_cast %429 : vector<1x2x256xf32> to vector<2x256xf32>
    %c0_195 = arith.constant 0 : index
    %c22 = arith.constant 22 : index
    %431 = memref.load %arg4[%c0_195, %c22] : memref<2x36xf32, #tpu.memory_space<smem>>
    %432 = vector.broadcast %431 : f32 to vector<2x256xf32>
    %433 = arith.mulf %432, %430 : vector<2x256xf32>
    %434 = arith.addf %424, %433 : vector<2x256xf32>
    %c1_196 = arith.constant 1 : index
    %c22_197 = arith.constant 22 : index
    %435 = memref.load %arg4[%c1_196, %c22_197] : memref<2x36xf32, #tpu.memory_space<smem>>
    %436 = vector.broadcast %435 : f32 to vector<2x256xf32>
    %437 = arith.mulf %436, %430 : vector<2x256xf32>
    %438 = arith.addf %428, %437 : vector<2x256xf32>
    %439 = vector.extract_strided_slice %408 {offsets = [3, 0, 0], sizes = [1, 2, 256], strides = [1, 1, 1]} : vector<4x2x256xf32> to vector<1x2x256xf32>
    %440 = vector.shape_cast %439 : vector<1x2x256xf32> to vector<2x256xf32>
    %c0_198 = arith.constant 0 : index
    %c31 = arith.constant 31 : index
    %441 = memref.load %arg4[%c0_198, %c31] : memref<2x36xf32, #tpu.memory_space<smem>>
    %442 = vector.broadcast %441 : f32 to vector<2x256xf32>
    %443 = arith.mulf %442, %440 : vector<2x256xf32>
    %444 = arith.addf %434, %443 : vector<2x256xf32>
    %c1_199 = arith.constant 1 : index
    %c31_200 = arith.constant 31 : index
    %445 = memref.load %arg4[%c1_199, %c31_200] : memref<2x36xf32, #tpu.memory_space<smem>>
    %446 = vector.broadcast %445 : f32 to vector<2x256xf32>
    %447 = arith.mulf %446, %440 : vector<2x256xf32>
    %448 = arith.addf %438, %447 : vector<2x256xf32>
    %c0_201 = arith.constant 0 : index
    %c0_202 = arith.constant 0 : index
    %c129_203 = arith.constant 129 : index
    %449 = vector.load %arg22[%c0_201, %c0_202, %c129_203] : memref<4x2x512xf32, #tpu.memory_space<vmem>>, vector<4x2x256xf32>
    %cst_204 = arith.constant 0.000000e+00 : f32
    %450 = vector.shape_cast %229 : vector<1x2x256xi1> to vector<1x2x256xi1>
    %451 = vector.broadcast %450 : vector<1x2x256xi1> to vector<4x2x256xi1>
    %452 = vector.broadcast %cst_204 : f32 to vector<4x2x256xf32>
    %453 = arith.select %451, %449, %452 : vector<4x2x256xi1>, vector<4x2x256xf32>
    %454 = vector.extract_strided_slice %453 {offsets = [0, 0, 0], sizes = [1, 2, 256], strides = [1, 1, 1]} : vector<4x2x256xf32> to vector<1x2x256xf32>
    %455 = vector.shape_cast %454 : vector<1x2x256xf32> to vector<2x256xf32>
    %c0_205 = arith.constant 0 : index
    %c5_206 = arith.constant 5 : index
    %456 = memref.load %arg4[%c0_205, %c5_206] : memref<2x36xf32, #tpu.memory_space<smem>>
    %457 = vector.broadcast %456 : f32 to vector<2x256xf32>
    %458 = arith.mulf %457, %455 : vector<2x256xf32>
    %459 = arith.addf %444, %458 : vector<2x256xf32>
    %c1_207 = arith.constant 1 : index
    %c5_208 = arith.constant 5 : index
    %460 = memref.load %arg4[%c1_207, %c5_208] : memref<2x36xf32, #tpu.memory_space<smem>>
    %461 = vector.broadcast %460 : f32 to vector<2x256xf32>
    %462 = arith.mulf %461, %455 : vector<2x256xf32>
    %463 = arith.addf %448, %462 : vector<2x256xf32>
    %464 = vector.extract_strided_slice %453 {offsets = [1, 0, 0], sizes = [1, 2, 256], strides = [1, 1, 1]} : vector<4x2x256xf32> to vector<1x2x256xf32>
    %465 = vector.shape_cast %464 : vector<1x2x256xf32> to vector<2x256xf32>
    %c0_209 = arith.constant 0 : index
    %c14 = arith.constant 14 : index
    %466 = memref.load %arg4[%c0_209, %c14] : memref<2x36xf32, #tpu.memory_space<smem>>
    %467 = vector.broadcast %466 : f32 to vector<2x256xf32>
    %468 = arith.mulf %467, %465 : vector<2x256xf32>
    %469 = arith.addf %459, %468 : vector<2x256xf32>
    %c1_210 = arith.constant 1 : index
    %c14_211 = arith.constant 14 : index
    %470 = memref.load %arg4[%c1_210, %c14_211] : memref<2x36xf32, #tpu.memory_space<smem>>
    %471 = vector.broadcast %470 : f32 to vector<2x256xf32>
    %472 = arith.mulf %471, %465 : vector<2x256xf32>
    %473 = arith.addf %463, %472 : vector<2x256xf32>
    %474 = vector.extract_strided_slice %453 {offsets = [2, 0, 0], sizes = [1, 2, 256], strides = [1, 1, 1]} : vector<4x2x256xf32> to vector<1x2x256xf32>
    %475 = vector.shape_cast %474 : vector<1x2x256xf32> to vector<2x256xf32>
    %c0_212 = arith.constant 0 : index
    %c23 = arith.constant 23 : index
    %476 = memref.load %arg4[%c0_212, %c23] : memref<2x36xf32, #tpu.memory_space<smem>>
    %477 = vector.broadcast %476 : f32 to vector<2x256xf32>
    %478 = arith.mulf %477, %475 : vector<2x256xf32>
    %479 = arith.addf %469, %478 : vector<2x256xf32>
    %c1_213 = arith.constant 1 : index
    %c23_214 = arith.constant 23 : index
    %480 = memref.load %arg4[%c1_213, %c23_214] : memref<2x36xf32, #tpu.memory_space<smem>>
    %481 = vector.broadcast %480 : f32 to vector<2x256xf32>
    %482 = arith.mulf %481, %475 : vector<2x256xf32>
    %483 = arith.addf %473, %482 : vector<2x256xf32>
    %484 = vector.extract_strided_slice %453 {offsets = [3, 0, 0], sizes = [1, 2, 256], strides = [1, 1, 1]} : vector<4x2x256xf32> to vector<1x2x256xf32>
    %485 = vector.shape_cast %484 : vector<1x2x256xf32> to vector<2x256xf32>
    %c0_215 = arith.constant 0 : index
    %c32 = arith.constant 32 : index
    %486 = memref.load %arg4[%c0_215, %c32] : memref<2x36xf32, #tpu.memory_space<smem>>
    %487 = vector.broadcast %486 : f32 to vector<2x256xf32>
    %488 = arith.mulf %487, %485 : vector<2x256xf32>
    %489 = arith.addf %479, %488 : vector<2x256xf32>
    %c1_216 = arith.constant 1 : index
    %c32_217 = arith.constant 32 : index
    %490 = memref.load %arg4[%c1_216, %c32_217] : memref<2x36xf32, #tpu.memory_space<smem>>
    %491 = vector.broadcast %490 : f32 to vector<2x256xf32>
    %492 = arith.mulf %491, %485 : vector<2x256xf32>
    %493 = arith.addf %483, %492 : vector<2x256xf32>
    %c0_218 = arith.constant 0 : index
    %c0_219 = arith.constant 0 : index
    %c143_220 = arith.constant 143 : index
    %494 = vector.load %arg22[%c0_218, %c0_219, %c143_220] : memref<4x2x512xf32, #tpu.memory_space<vmem>>, vector<4x2x256xf32>
    %cst_221 = arith.constant 0.000000e+00 : f32
    %495 = vector.shape_cast %228 : vector<1x2x256xi1> to vector<1x2x256xi1>
    %496 = vector.broadcast %495 : vector<1x2x256xi1> to vector<4x2x256xi1>
    %497 = vector.broadcast %cst_221 : f32 to vector<4x2x256xf32>
    %498 = arith.select %496, %494, %497 : vector<4x2x256xi1>, vector<4x2x256xf32>
    %499 = vector.extract_strided_slice %498 {offsets = [0, 0, 0], sizes = [1, 2, 256], strides = [1, 1, 1]} : vector<4x2x256xf32> to vector<1x2x256xf32>
    %500 = vector.shape_cast %499 : vector<1x2x256xf32> to vector<2x256xf32>
    %c0_222 = arith.constant 0 : index
    %c6_223 = arith.constant 6 : index
    %501 = memref.load %arg4[%c0_222, %c6_223] : memref<2x36xf32, #tpu.memory_space<smem>>
    %502 = vector.broadcast %501 : f32 to vector<2x256xf32>
    %503 = arith.mulf %502, %500 : vector<2x256xf32>
    %504 = arith.addf %489, %503 : vector<2x256xf32>
    %c1_224 = arith.constant 1 : index
    %c6_225 = arith.constant 6 : index
    %505 = memref.load %arg4[%c1_224, %c6_225] : memref<2x36xf32, #tpu.memory_space<smem>>
    %506 = vector.broadcast %505 : f32 to vector<2x256xf32>
    %507 = arith.mulf %506, %500 : vector<2x256xf32>
    %508 = arith.addf %493, %507 : vector<2x256xf32>
    %509 = vector.extract_strided_slice %498 {offsets = [1, 0, 0], sizes = [1, 2, 256], strides = [1, 1, 1]} : vector<4x2x256xf32> to vector<1x2x256xf32>
    %510 = vector.shape_cast %509 : vector<1x2x256xf32> to vector<2x256xf32>
    %c0_226 = arith.constant 0 : index
    %c15 = arith.constant 15 : index
    %511 = memref.load %arg4[%c0_226, %c15] : memref<2x36xf32, #tpu.memory_space<smem>>
    %512 = vector.broadcast %511 : f32 to vector<2x256xf32>
    %513 = arith.mulf %512, %510 : vector<2x256xf32>
    %514 = arith.addf %504, %513 : vector<2x256xf32>
    %c1_227 = arith.constant 1 : index
    %c15_228 = arith.constant 15 : index
    %515 = memref.load %arg4[%c1_227, %c15_228] : memref<2x36xf32, #tpu.memory_space<smem>>
    %516 = vector.broadcast %515 : f32 to vector<2x256xf32>
    %517 = arith.mulf %516, %510 : vector<2x256xf32>
    %518 = arith.addf %508, %517 : vector<2x256xf32>
    %519 = vector.extract_strided_slice %498 {offsets = [2, 0, 0], sizes = [1, 2, 256], strides = [1, 1, 1]} : vector<4x2x256xf32> to vector<1x2x256xf32>
    %520 = vector.shape_cast %519 : vector<1x2x256xf32> to vector<2x256xf32>
    %c0_229 = arith.constant 0 : index
    %c24 = arith.constant 24 : index
    %521 = memref.load %arg4[%c0_229, %c24] : memref<2x36xf32, #tpu.memory_space<smem>>
    %522 = vector.broadcast %521 : f32 to vector<2x256xf32>
    %523 = arith.mulf %522, %520 : vector<2x256xf32>
    %524 = arith.addf %514, %523 : vector<2x256xf32>
    %c1_230 = arith.constant 1 : index
    %c24_231 = arith.constant 24 : index
    %525 = memref.load %arg4[%c1_230, %c24_231] : memref<2x36xf32, #tpu.memory_space<smem>>
    %526 = vector.broadcast %525 : f32 to vector<2x256xf32>
    %527 = arith.mulf %526, %520 : vector<2x256xf32>
    %528 = arith.addf %518, %527 : vector<2x256xf32>
    %529 = vector.extract_strided_slice %498 {offsets = [3, 0, 0], sizes = [1, 2, 256], strides = [1, 1, 1]} : vector<4x2x256xf32> to vector<1x2x256xf32>
    %530 = vector.shape_cast %529 : vector<1x2x256xf32> to vector<2x256xf32>
    %c0_232 = arith.constant 0 : index
    %c33 = arith.constant 33 : index
    %531 = memref.load %arg4[%c0_232, %c33] : memref<2x36xf32, #tpu.memory_space<smem>>
    %532 = vector.broadcast %531 : f32 to vector<2x256xf32>
    %533 = arith.mulf %532, %530 : vector<2x256xf32>
    %534 = arith.addf %524, %533 : vector<2x256xf32>
    %c1_233 = arith.constant 1 : index
    %c33_234 = arith.constant 33 : index
    %535 = memref.load %arg4[%c1_233, %c33_234] : memref<2x36xf32, #tpu.memory_space<smem>>
    %536 = vector.broadcast %535 : f32 to vector<2x256xf32>
    %537 = arith.mulf %536, %530 : vector<2x256xf32>
    %538 = arith.addf %528, %537 : vector<2x256xf32>
    %c0_235 = arith.constant 0 : index
    %c0_236 = arith.constant 0 : index
    %c144_237 = arith.constant 144 : index
    %539 = vector.load %arg22[%c0_235, %c0_236, %c144_237] : memref<4x2x512xf32, #tpu.memory_space<vmem>>, vector<4x2x256xf32>
    %540 = vector.extract_strided_slice %539 {offsets = [0, 0, 0], sizes = [1, 2, 256], strides = [1, 1, 1]} : vector<4x2x256xf32> to vector<1x2x256xf32>
    %541 = vector.shape_cast %540 : vector<1x2x256xf32> to vector<2x256xf32>
    %c0_238 = arith.constant 0 : index
    %c7_239 = arith.constant 7 : index
    %542 = memref.load %arg4[%c0_238, %c7_239] : memref<2x36xf32, #tpu.memory_space<smem>>
    %543 = vector.broadcast %542 : f32 to vector<2x256xf32>
    %544 = arith.mulf %543, %541 : vector<2x256xf32>
    %545 = arith.addf %534, %544 : vector<2x256xf32>
    %c1_240 = arith.constant 1 : index
    %c7_241 = arith.constant 7 : index
    %546 = memref.load %arg4[%c1_240, %c7_241] : memref<2x36xf32, #tpu.memory_space<smem>>
    %547 = vector.broadcast %546 : f32 to vector<2x256xf32>
    %548 = arith.mulf %547, %541 : vector<2x256xf32>
    %549 = arith.addf %538, %548 : vector<2x256xf32>
    %550 = vector.extract_strided_slice %539 {offsets = [1, 0, 0], sizes = [1, 2, 256], strides = [1, 1, 1]} : vector<4x2x256xf32> to vector<1x2x256xf32>
    %551 = vector.shape_cast %550 : vector<1x2x256xf32> to vector<2x256xf32>
    %c0_242 = arith.constant 0 : index
    %c16 = arith.constant 16 : index
    %552 = memref.load %arg4[%c0_242, %c16] : memref<2x36xf32, #tpu.memory_space<smem>>
    %553 = vector.broadcast %552 : f32 to vector<2x256xf32>
    %554 = arith.mulf %553, %551 : vector<2x256xf32>
    %555 = arith.addf %545, %554 : vector<2x256xf32>
    %c1_243 = arith.constant 1 : index
    %c16_244 = arith.constant 16 : index
    %556 = memref.load %arg4[%c1_243, %c16_244] : memref<2x36xf32, #tpu.memory_space<smem>>
    %557 = vector.broadcast %556 : f32 to vector<2x256xf32>
    %558 = arith.mulf %557, %551 : vector<2x256xf32>
    %559 = arith.addf %549, %558 : vector<2x256xf32>
    %560 = vector.extract_strided_slice %539 {offsets = [2, 0, 0], sizes = [1, 2, 256], strides = [1, 1, 1]} : vector<4x2x256xf32> to vector<1x2x256xf32>
    %561 = vector.shape_cast %560 : vector<1x2x256xf32> to vector<2x256xf32>
    %c0_245 = arith.constant 0 : index
    %c25 = arith.constant 25 : index
    %562 = memref.load %arg4[%c0_245, %c25] : memref<2x36xf32, #tpu.memory_space<smem>>
    %563 = vector.broadcast %562 : f32 to vector<2x256xf32>
    %564 = arith.mulf %563, %561 : vector<2x256xf32>
    %565 = arith.addf %555, %564 : vector<2x256xf32>
    %c1_246 = arith.constant 1 : index
    %c25_247 = arith.constant 25 : index
    %566 = memref.load %arg4[%c1_246, %c25_247] : memref<2x36xf32, #tpu.memory_space<smem>>
    %567 = vector.broadcast %566 : f32 to vector<2x256xf32>
    %568 = arith.mulf %567, %561 : vector<2x256xf32>
    %569 = arith.addf %559, %568 : vector<2x256xf32>
    %570 = vector.extract_strided_slice %539 {offsets = [3, 0, 0], sizes = [1, 2, 256], strides = [1, 1, 1]} : vector<4x2x256xf32> to vector<1x2x256xf32>
    %571 = vector.shape_cast %570 : vector<1x2x256xf32> to vector<2x256xf32>
    %c0_248 = arith.constant 0 : index
    %c34 = arith.constant 34 : index
    %572 = memref.load %arg4[%c0_248, %c34] : memref<2x36xf32, #tpu.memory_space<smem>>
    %573 = vector.broadcast %572 : f32 to vector<2x256xf32>
    %574 = arith.mulf %573, %571 : vector<2x256xf32>
    %575 = arith.addf %565, %574 : vector<2x256xf32>
    %c1_249 = arith.constant 1 : index
    %c34_250 = arith.constant 34 : index
    %576 = memref.load %arg4[%c1_249, %c34_250] : memref<2x36xf32, #tpu.memory_space<smem>>
    %577 = vector.broadcast %576 : f32 to vector<2x256xf32>
    %578 = arith.mulf %577, %571 : vector<2x256xf32>
    %579 = arith.addf %569, %578 : vector<2x256xf32>
    %c0_251 = arith.constant 0 : index
    %c0_252 = arith.constant 0 : index
    %c145_253 = arith.constant 145 : index
    %580 = vector.load %arg22[%c0_251, %c0_252, %c145_253] : memref<4x2x512xf32, #tpu.memory_space<vmem>>, vector<4x2x256xf32>
    %cst_254 = arith.constant 0.000000e+00 : f32
    %581 = vector.shape_cast %229 : vector<1x2x256xi1> to vector<1x2x256xi1>
    %582 = vector.broadcast %581 : vector<1x2x256xi1> to vector<4x2x256xi1>
    %583 = vector.broadcast %cst_254 : f32 to vector<4x2x256xf32>
    %584 = arith.select %582, %580, %583 : vector<4x2x256xi1>, vector<4x2x256xf32>
    %585 = vector.extract_strided_slice %584 {offsets = [0, 0, 0], sizes = [1, 2, 256], strides = [1, 1, 1]} : vector<4x2x256xf32> to vector<1x2x256xf32>
    %586 = vector.shape_cast %585 : vector<1x2x256xf32> to vector<2x256xf32>
    %c0_255 = arith.constant 0 : index
    %c8_256 = arith.constant 8 : index
    %587 = memref.load %arg4[%c0_255, %c8_256] : memref<2x36xf32, #tpu.memory_space<smem>>
    %588 = vector.broadcast %587 : f32 to vector<2x256xf32>
    %589 = arith.mulf %588, %586 : vector<2x256xf32>
    %590 = arith.addf %575, %589 : vector<2x256xf32>
    %c1_257 = arith.constant 1 : index
    %c8_258 = arith.constant 8 : index
    %591 = memref.load %arg4[%c1_257, %c8_258] : memref<2x36xf32, #tpu.memory_space<smem>>
    %592 = vector.broadcast %591 : f32 to vector<2x256xf32>
    %593 = arith.mulf %592, %586 : vector<2x256xf32>
    %594 = arith.addf %579, %593 : vector<2x256xf32>
    %595 = vector.extract_strided_slice %584 {offsets = [1, 0, 0], sizes = [1, 2, 256], strides = [1, 1, 1]} : vector<4x2x256xf32> to vector<1x2x256xf32>
    %596 = vector.shape_cast %595 : vector<1x2x256xf32> to vector<2x256xf32>
    %c0_259 = arith.constant 0 : index
    %c17 = arith.constant 17 : index
    %597 = memref.load %arg4[%c0_259, %c17] : memref<2x36xf32, #tpu.memory_space<smem>>
    %598 = vector.broadcast %597 : f32 to vector<2x256xf32>
    %599 = arith.mulf %598, %596 : vector<2x256xf32>
    %600 = arith.addf %590, %599 : vector<2x256xf32>
    %c1_260 = arith.constant 1 : index
    %c17_261 = arith.constant 17 : index
    %601 = memref.load %arg4[%c1_260, %c17_261] : memref<2x36xf32, #tpu.memory_space<smem>>
    %602 = vector.broadcast %601 : f32 to vector<2x256xf32>
    %603 = arith.mulf %602, %596 : vector<2x256xf32>
    %604 = arith.addf %594, %603 : vector<2x256xf32>
    %605 = vector.extract_strided_slice %584 {offsets = [2, 0, 0], sizes = [1, 2, 256], strides = [1, 1, 1]} : vector<4x2x256xf32> to vector<1x2x256xf32>
    %606 = vector.shape_cast %605 : vector<1x2x256xf32> to vector<2x256xf32>
    %c0_262 = arith.constant 0 : index
    %c26 = arith.constant 26 : index
    %607 = memref.load %arg4[%c0_262, %c26] : memref<2x36xf32, #tpu.memory_space<smem>>
    %608 = vector.broadcast %607 : f32 to vector<2x256xf32>
    %609 = arith.mulf %608, %606 : vector<2x256xf32>
    %610 = arith.addf %600, %609 : vector<2x256xf32>
    %c1_263 = arith.constant 1 : index
    %c26_264 = arith.constant 26 : index
    %611 = memref.load %arg4[%c1_263, %c26_264] : memref<2x36xf32, #tpu.memory_space<smem>>
    %612 = vector.broadcast %611 : f32 to vector<2x256xf32>
    %613 = arith.mulf %612, %606 : vector<2x256xf32>
    %614 = arith.addf %604, %613 : vector<2x256xf32>
    %615 = vector.extract_strided_slice %584 {offsets = [3, 0, 0], sizes = [1, 2, 256], strides = [1, 1, 1]} : vector<4x2x256xf32> to vector<1x2x256xf32>
    %616 = vector.shape_cast %615 : vector<1x2x256xf32> to vector<2x256xf32>
    %c0_265 = arith.constant 0 : index
    %c35 = arith.constant 35 : index
    %617 = memref.load %arg4[%c0_265, %c35] : memref<2x36xf32, #tpu.memory_space<smem>>
    %618 = vector.broadcast %617 : f32 to vector<2x256xf32>
    %619 = arith.mulf %618, %616 : vector<2x256xf32>
    %620 = arith.addf %610, %619 : vector<2x256xf32>
    %c1_266 = arith.constant 1 : index
    %c35_267 = arith.constant 35 : index
    %621 = memref.load %arg4[%c1_266, %c35_267] : memref<2x36xf32, #tpu.memory_space<smem>>
    %622 = vector.broadcast %621 : f32 to vector<2x256xf32>
    %623 = arith.mulf %622, %616 : vector<2x256xf32>
    %624 = arith.addf %614, %623 : vector<2x256xf32>
    %c0_268 = arith.constant 0 : index
    %625 = memref.load %arg5[%c0_268] : memref<2xf32, #tpu.memory_space<smem>>
    %626 = vector.broadcast %625 : f32 to vector<2x256xf32>
    %627 = arith.addf %620, %626 : vector<2x256xf32>
    %cst_269 = arith.constant 0.000000e+00 : f32
    %628 = vector.broadcast %cst_269 : f32 to vector<2x256xf32>
    %629 = arith.maximumf %627, %628 : vector<2x256xf32>
    %c1_270 = arith.constant 1 : index
    %630 = memref.load %arg5[%c1_270] : memref<2xf32, #tpu.memory_space<smem>>
    %631 = vector.broadcast %630 : f32 to vector<2x256xf32>
    %632 = arith.addf %624, %631 : vector<2x256xf32>
    %cst_271 = arith.constant 0.000000e+00 : f32
    %633 = vector.broadcast %cst_271 : f32 to vector<2x256xf32>
    %634 = arith.maximumf %632, %633 : vector<2x256xf32>
    %c0_272 = arith.constant 0 : index
    %c0_273 = arith.constant 0 : index
    %635 = vector.load %arg1[%c0_272, %c0_273] : memref<2x4xf32, #tpu.memory_space<vmem>>, vector<2x4xf32>
    %c0_274 = arith.constant 0 : index
    %c0_275 = arith.constant 0 : index
    %636 = vector.load %arg6[%c0_274, %c0_275] : memref<4x32xf32, #tpu.memory_space<vmem>>, vector<4x32xf32>
    %cst_276 = arith.constant dense<0.000000e+00> : vector<2x32xf32>
    %637 = tpu.matmul %635, %636, %cst_276 {dimension_numbers = #tpu.dot_dimension_numbers<[1], [0], [0], [1], [0, 0, 1, 1], [], []>} : vector<2x4xf32>, vector<4x32xf32>, vector<2x32xf32> -> vector<2x32xf32>
    %c0_277 = arith.constant 0 : index
    %c0_278 = arith.constant 0 : index
    %638 = vector.load %arg7[%c0_277, %c0_278] : memref<1x32xf32, #tpu.memory_space<vmem>>, vector<1x32xf32>
    %639 = vector.broadcast %638 : vector<1x32xf32> to vector<2x32xf32>
    %640 = arith.addf %637, %639 : vector<2x32xf32>
    %cst_279 = arith.constant 0.000000e+00 : f32
    %641 = vector.broadcast %cst_279 : f32 to vector<2x32xf32>
    %642 = arith.maximumf %640, %641 : vector<2x32xf32>
    %643 = arith.truncf %629 : vector<2x256xf32> to vector<2x256xbf16>
    %c0_280 = arith.constant 0 : index
    %c0_281 = arith.constant 0 : index
    %644 = vector.load %arg8[%c0_280, %c0_281] : memref<256x1024xi8, #tpu.memory_space<vmem>>, vector<256x1024xi8>
    %645 = arith.sitofp %644 : vector<256x1024xi8> to vector<256x1024xbf16>
    %cst_282 = arith.constant dense<0.000000e+00> : vector<2x1024xf32>
    %646 = tpu.matmul %643, %645, %cst_282 {dimension_numbers = #tpu.dot_dimension_numbers<[1], [0], [0], [1], [0, 0, 1, 1], [], []>} : vector<2x256xbf16>, vector<256x1024xbf16>, vector<2x1024xf32> -> vector<2x1024xf32>
    %647 = arith.truncf %634 : vector<2x256xf32> to vector<2x256xbf16>
    %c0_283 = arith.constant 0 : index
    %c0_284 = arith.constant 0 : index
    %648 = vector.load %arg9[%c0_283, %c0_284] : memref<256x1024xi8, #tpu.memory_space<vmem>>, vector<256x1024xi8>
    %649 = arith.sitofp %648 : vector<256x1024xi8> to vector<256x1024xbf16>
    %cst_285 = arith.constant dense<0.000000e+00> : vector<2x1024xf32>
    %650 = tpu.matmul %647, %649, %cst_285 {dimension_numbers = #tpu.dot_dimension_numbers<[1], [0], [0], [1], [0, 0, 1, 1], [], []>} : vector<2x256xbf16>, vector<256x1024xbf16>, vector<2x1024xf32> -> vector<2x1024xf32>
    %651 = arith.addf %646, %650 : vector<2x1024xf32>
    %652 = arith.truncf %642 : vector<2x32xf32> to vector<2x32xbf16>
    %c0_286 = arith.constant 0 : index
    %c0_287 = arith.constant 0 : index
    %653 = vector.load %arg10[%c0_286, %c0_287] : memref<32x1024xi8, #tpu.memory_space<vmem>>, vector<32x1024xi8>
    %654 = arith.sitofp %653 : vector<32x1024xi8> to vector<32x1024xbf16>
    %cst_288 = arith.constant dense<0.000000e+00> : vector<2x1024xf32>
    %655 = tpu.matmul %652, %654, %cst_288 {dimension_numbers = #tpu.dot_dimension_numbers<[1], [0], [0], [1], [0, 0, 1, 1], [], []>} : vector<2x32xbf16>, vector<32x1024xbf16>, vector<2x1024xf32> -> vector<2x1024xf32>
    %656 = arith.addf %651, %655 : vector<2x1024xf32>
    %c0_289 = arith.constant 0 : index
    %c0_290 = arith.constant 0 : index
    %657 = vector.load %arg11[%c0_289, %c0_290] : memref<1x1024xf32, #tpu.memory_space<vmem>>, vector<1x1024xf32>
    %658 = vector.broadcast %657 : vector<1x1024xf32> to vector<2x1024xf32>
    %659 = arith.mulf %656, %658 : vector<2x1024xf32>
    %c0_291 = arith.constant 0 : index
    %c0_292 = arith.constant 0 : index
    %660 = vector.load %arg12[%c0_291, %c0_292] : memref<1x1024xf32, #tpu.memory_space<vmem>>, vector<1x1024xf32>
    %661 = vector.broadcast %660 : vector<1x1024xf32> to vector<2x1024xf32>
    %662 = arith.addf %659, %661 : vector<2x1024xf32>
    %cst_293 = arith.constant 0.000000e+00 : f32
    %663 = vector.broadcast %cst_293 : f32 to vector<2x1024xf32>
    %664 = arith.maximumf %662, %663 : vector<2x1024xf32>
    %665 = arith.truncf %664 : vector<2x1024xf32> to vector<2x1024xbf16>
    %c0_294 = arith.constant 0 : index
    %c0_295 = arith.constant 0 : index
    %666 = vector.load %arg13[%c0_294, %c0_295] : memref<1024x1024xi8, #tpu.memory_space<vmem>>, vector<1024x1024xi8>
    %667 = arith.sitofp %666 : vector<1024x1024xi8> to vector<1024x1024xbf16>
    %cst_296 = arith.constant dense<0.000000e+00> : vector<2x1024xf32>
    %668 = tpu.matmul %665, %667, %cst_296 {dimension_numbers = #tpu.dot_dimension_numbers<[1], [0], [0], [1], [0, 0, 1, 1], [], []>} : vector<2x1024xbf16>, vector<1024x1024xbf16>, vector<2x1024xf32> -> vector<2x1024xf32>
    %c0_297 = arith.constant 0 : index
    %c0_298 = arith.constant 0 : index
    %669 = vector.load %arg14[%c0_297, %c0_298] : memref<1x1024xf32, #tpu.memory_space<vmem>>, vector<1x1024xf32>
    %670 = vector.broadcast %669 : vector<1x1024xf32> to vector<2x1024xf32>
    %671 = arith.mulf %668, %670 : vector<2x1024xf32>
    %c0_299 = arith.constant 0 : index
    %c0_300 = arith.constant 0 : index
    %672 = vector.load %arg15[%c0_299, %c0_300] : memref<1x1024xf32, #tpu.memory_space<vmem>>, vector<1x1024xf32>
    %673 = vector.broadcast %672 : vector<1x1024xf32> to vector<2x1024xf32>
    %674 = arith.addf %671, %673 : vector<2x1024xf32>
    %cst_301 = arith.constant 0.000000e+00 : f32
    %675 = vector.broadcast %cst_301 : f32 to vector<2x1024xf32>
    %676 = arith.maximumf %674, %675 : vector<2x1024xf32>
    %677 = arith.truncf %676 : vector<2x1024xf32> to vector<2x1024xbf16>
    %c0_302 = arith.constant 0 : index
    %c0_303 = arith.constant 0 : index
    %678 = vector.load %arg16[%c0_302, %c0_303] : memref<1024x64xbf16, #tpu.memory_space<vmem>>, vector<1024x64xbf16>
    %cst_304 = arith.constant dense<0.000000e+00> : vector<2x64xf32>
    %679 = tpu.matmul %677, %678, %cst_304 {dimension_numbers = #tpu.dot_dimension_numbers<[1], [0], [0], [1], [0, 0, 1, 1], [], []>} : vector<2x1024xbf16>, vector<1024x64xbf16>, vector<2x64xf32> -> vector<2x64xf32>
    %c0_305 = arith.constant 0 : index
    %c0_306 = arith.constant 0 : index
    %680 = vector.load %arg17[%c0_305, %c0_306] : memref<1x64xf32, #tpu.memory_space<vmem>>, vector<1x64xf32>
    %681 = vector.broadcast %680 : vector<1x64xf32> to vector<2x64xf32>
    %682 = arith.addf %679, %681 : vector<2x64xf32>
    %cst_307 = arith.constant 0.000000e+00 : f32
    %683 = vector.broadcast %cst_307 : f32 to vector<2x64xf32>
    %684 = arith.maximumf %682, %683 : vector<2x64xf32>
    %685 = arith.truncf %684 : vector<2x64xf32> to vector<2x64xbf16>
    %c0_308 = arith.constant 0 : index
    %c0_309 = arith.constant 0 : index
    %686 = vector.load %arg18[%c0_308, %c0_309] : memref<64x128xbf16, #tpu.memory_space<vmem>>, vector<64x128xbf16>
    %cst_310 = arith.constant dense<0.000000e+00> : vector<2x128xf32>
    %687 = tpu.matmul %685, %686, %cst_310 {dimension_numbers = #tpu.dot_dimension_numbers<[1], [0], [0], [1], [0, 0, 1, 1], [], []>} : vector<2x64xbf16>, vector<64x128xbf16>, vector<2x128xf32> -> vector<2x128xf32>
    %c0_311 = arith.constant 0 : index
    %c0_312 = arith.constant 0 : index
    %688 = vector.load %arg19[%c0_311, %c0_312] : memref<1x128xf32, #tpu.memory_space<vmem>>, vector<1x128xf32>
    %689 = vector.broadcast %688 : vector<1x128xf32> to vector<2x128xf32>
    %690 = arith.addf %687, %689 : vector<2x128xf32>
    %691 = tpu.iota {dimensions = array<i32: 1>} : vector<2x128xi32>
    %c4_i32 = arith.constant 4 : i32
    %692 = vector.broadcast %c4_i32 : i32 to vector<2x128xi32>
    %693 = arith.cmpi slt, %691, %692 : vector<2x128xi32>
    %cst_313 = arith.constant 0xFF800000 : f32
    %694 = vector.broadcast %cst_313 : f32 to vector<2x128xf32>
    %695 = arith.select %693, %690, %694 : vector<2x128xi1>, vector<2x128xf32>
    %cst_314 = arith.constant dense<0xFF800000> : vector<2xf32>
    %696 = vector.multi_reduction <maximumf>, %695, %cst_314 [1] : vector<2x128xf32> to vector<2xf32>
    %697 = vector.shape_cast %696 : vector<2xf32> to vector<2x1xf32>
    %698 = vector.broadcast %697 : vector<2x1xf32> to vector<2x128xf32>
    %699 = arith.subf %695, %698 : vector<2x128xf32>
    %700 = math.exp %699 : vector<2x128xf32>
    %cst_315 = arith.constant dense<0.000000e+00> : vector<2xf32>
    %701 = vector.multi_reduction <add>, %700, %cst_315 [1] : vector<2x128xf32> to vector<2xf32>
    %702 = vector.shape_cast %701 : vector<2xf32> to vector<2x1xf32>
    %703 = vector.broadcast %702 : vector<2x1xf32> to vector<2x128xf32>
    %704 = arith.divf %700, %703 : vector<2x128xf32>
    %c4_i32_316 = arith.constant 4 : i32
    %705 = vector.broadcast %c4_i32_316 : i32 to vector<2x128xi32>
    %706 = arith.cmpi eq, %691, %705 : vector<2x128xi32>
    %707 = arith.select %706, %690, %704 : vector<2x128xi1>, vector<2x128xf32>
    %c0_317 = arith.constant 0 : index
    %c0_318 = arith.constant 0 : index
    %708 = vector.load %arg20[%c0_317, %c0_318] : memref<2x128xf32, #tpu.memory_space<vmem>>, vector<2x128xf32>
    tpu.vector_store %arg20[%c0_317, %c0_318], %707 {strides = array<i32>} : memref<2x128xf32, #tpu.memory_space<vmem>>, vector<2x128xf32>,
    return
  }
}

</mosaic_0001>

<llo_original>
// kernel: tron_net_forward.1
$region0: #{tron_net_forward.1}
  #allocation0 [shape = 'u32[]', space=smem, size = 0x4, offset = 0x4, fixed_abs, tag = 'smem constant byte address 0x4 - core index']
  #allocation1 [shape = 'u32[72,128]{1,0:T(1,128)}', space=vmem, size = 0x9000, scoped, tag = 'internal scratch']
  #allocation2 [shape = 'f32[2,512]{1,0:T(2,128)}', space=vmem, size = 0x1000, scoped, tag = 'scratch operand']
  #allocation3 [shape = 'f32[4,2,512]{2,1,0:T(2,128)}', space=vmem, size = 0x4000, scoped, tag = 'scratch operand']
  %s0 = inlined_call_operand.vmem [shape: f32[2,256], index: 0, kind: input, shape index: {}]
  %s1 = inlined_call_operand.vmem [shape: f32[2,4], index: 1, kind: input, shape index: {}]
  %s2 = inlined_call_operand.vmem [shape: f32[4,9], index: 2, kind: input, shape index: {}]
  %s3 = inlined_call_operand.vmem [shape: f32[4], index: 3, kind: input, shape index: {}]
  %s4 = inlined_call_operand.vmem [shape: f32[2,36], index: 4, kind: input, shape index: {}]
  %s5 = inlined_call_operand.vmem [shape: f32[2], index: 5, kind: input, shape index: {}]
  %s6 = inlined_call_operand.vmem [shape: f32[4,32], index: 6, kind: input, shape index: {}]
  %s7 = inlined_call_operand.vmem [shape: f32[1,32], index: 7, kind: input, shape index: {}]
  %s8 = inlined_call_operand.vmem [shape: s8[256,1024], index: 8, kind: input, shape index: {}]
  %s9 = inlined_call_operand.hbm [shape: s8[256,1024], index: 9, kind: input, shape index: {}]
  %s10 = inlined_call_operand.vmem [shape: s8[32,1024], index: 10, kind: input, shape index: {}]
  %s11 = inlined_call_operand.vmem [shape: f32[1,1024], index: 11, kind: input, shape index: {}]
  %s12 = inlined_call_operand.vmem [shape: f32[1,1024], index: 12, kind: input, shape index: {}]
  %s13 = inlined_call_operand.hbm [shape: s8[1024,1024], index: 13, kind: input, shape index: {}]
  %s14 = inlined_call_operand.vmem [shape: f32[1,1024], index: 14, kind: input, shape index: {}]
  %s15 = inlined_call_operand.vmem [shape: f32[1,1024], index: 15, kind: input, shape index: {}]
  %s16 = inlined_call_operand.vmem [shape: bf16[1024,64], index: 16, kind: input, shape index: {}]
  %s17 = inlined_call_operand.vmem [shape: f32[1,64], index: 17, kind: input, shape index: {}]
  %s18 = inlined_call_operand.vmem [shape: bf16[64,128], index: 18, kind: input, shape index: {}]
  %s19 = inlined_call_operand.vmem [shape: f32[1,128], index: 19, kind: input, shape index: {}]
  %s20 = inlined_call_operand.vmem [shape: f32[2,128], index: 20, kind: output, shape index: {}]
  %s21 = sld [smem:[#allocation0]]
  $region114: #{tron_net_forward.1} parent=0
    _
  %s23 = ssub.s32 1, %s21
  %s24 = scalar_select 0, %s23, %s21
  $region1: #{tron_net_forward.1} parent=0
    #allocation4 [shape = 'u8[2048]{0}', space=smem, size = 0x800, scoped, tag = 'input window, operand 2, single buffered']
    #allocation5 [shape = 's32[1]{0}', space=sflag, size = 0x4, scoped, tag = 'scoped memory for tron_net_forward.1']
    #allocation6 [shape = 's32[1]{0}', space=sflag, size = 0x4, scoped, tag = 'scoped memory for tron_net_forward.1']
    #allocation7 [shape = 'u8[512]{0}', space=smem, size = 0x200, scoped, tag = 'input window, operand 3, single buffered']
    #allocation8 [shape = 's32[1]{0}', space=sflag, size = 0x4, scoped, tag = 'scoped memory for tron_net_forward.1']
    #allocation9 [shape = 'u8[1024]{0}', space=smem, size = 0x400, scoped, tag = 'input window, operand 4, single buffered']
    #allocation10 [shape = 'u8[512]{0}', space=smem, size = 0x200, scoped, tag = 'input window, operand 5, single buffered']
    #allocation11 [shape = 's32[1]{0}', space=sflag, size = 0x4, scoped, tag = 'scoped memory for tron_net_forward.1']
    #allocation12 [shape = 'u8[262144]{0}', space=vmem, size = 0x40000, scoped, tag = 'input window, operand 9, single buffered']
    #allocation13 [shape = 'u8[1048576]{0}', space=vmem, size = 0x100000, scoped, tag = 'input window, operand 13, single buffered']
    #allocation14 [shape = 's32[1]{0}', space=sflag, size = 0x4, scoped, tag = 'scoped memory for tron_net_forward.1']
    %25 = vsyncpa [#allocation6], 0
    %26 = vsyncpa [#allocation8], 0
    %27 = vsyncpa [#allocation11], 0
    %28 = vsyncpa [#allocation5], 0
    %29 = vsyncpa [#allocation14], 0
    // Predicated region
    $region2: #{tron_net_forward.1} parent=1 // pred_check
      _
    $region3: #{tron_net_forward.1} parent=1 // pred_check_branch
      %31 = sbr.rel (0) target = $region5
    $region4: #{tron_net_forward.1} parent=1 // pred_region
      _
    $region5: #{tron_net_forward.1} parent=1 // pred_fallthru
      _
    // Predicated region
    $region6: #{tron_net_forward.1} parent=1 // pred_check
      _
    $region7: #{tron_net_forward.1} parent=1 // pred_check_branch
      %33 = sbr.rel (0) target = $region9
    $region8: #{tron_net_forward.1} parent=1 // pred_region
      _
    $region9: #{tron_net_forward.1} parent=1 // pred_fallthru
      _
    // Predicated region
    $region10: #{tron_net_forward.1} parent=1 // pred_check
      _
    $region11: #{tron_net_forward.1} parent=1 // pred_check_branch
      %35 = sbr.rel (0) target = $region13
    $region12: #{tron_net_forward.1} parent=1 // pred_region
      %37 = vsyncadd [#allocation6], 0
      %s39 = sshll.u32 %s2, 4
      %s40 = int_to_ptr.vmem [resolvable:$true] %s39
      %42 = dma.vmem_to_smem %s40, 64, [#allocation4], [#allocation6]
    $region13: #{tron_net_forward.1} parent=1 // pred_fallthru
      _
    // Predicated region
    $region14: #{tron_net_forward.1} parent=1 // pred_check
      _
    $region15: #{tron_net_forward.1} parent=1 // pred_check_branch
      %44 = sbr.rel (0) target = $region17
    $region16: #{tron_net_forward.1} parent=1 // pred_region
      %46 = vsyncadd [#allocation8], 0
      %s48 = sshll.u32 %s3, 4
      %s49 = int_to_ptr.vmem [resolvable:$true] %s48
      %51 = dma.vmem_to_smem %s49, 16, [#allocation7], [#allocation8]
    $region17: #{tron_net_forward.1} parent=1 // pred_fallthru
      _
    // Predicated region
    $region18: #{tron_net_forward.1} parent=1 // pred_check
      _
    $region19: #{tron_net_forward.1} parent=1 // pred_check_branch
      %53 = sbr.rel (0) target = $region21
    $region20: #{tron_net_forward.1} parent=1 // pred_region
      %55 = vsyncadd [#allocation8], 0
      %s57 = sshll.u32 %s4, 4
      %s58 = int_to_ptr.vmem [resolvable:$true] %s57
      %60 = dma.vmem_to_smem %s58, 32, [#allocation9], [#allocation8]
    $region21: #{tron_net_forward.1} parent=1 // pred_fallthru
      _
    // Predicated region
    $region22: #{tron_net_forward.1} parent=1 // pred_check
      _
    $region23: #{tron_net_forward.1} parent=1 // pred_check_branch
      %62 = sbr.rel (0) target = $region25
    $region24: #{tron_net_forward.1} parent=1 // pred_region
      %64 = vsyncadd [#allocation11], 0
      %s66 = sshll.u32 %s5, 4
      %s67 = int_to_ptr.vmem [resolvable:$true] %s66
      %69 = dma.vmem_to_smem %s67, 16, [#allocation10], [#allocation11]
    $region25: #{tron_net_forward.1} parent=1 // pred_fallthru
      _
    // Predicated region
    $region26: #{tron_net_forward.1} parent=1 // pred_check
      _
    $region27: #{tron_net_forward.1} parent=1 // pred_check_branch
      %71 = sbr.rel (0) target = $region29
    $region28: #{tron_net_forward.1} parent=1 // pred_region
      _
    $region29: #{tron_net_forward.1} parent=1 // pred_fallthru
      _
    // Predicated region
    $region30: #{tron_net_forward.1} parent=1 // pred_check
      _
    $region31: #{tron_net_forward.1} parent=1 // pred_check_branch
      %73 = sbr.rel (0) target = $region33
    $region32: #{tron_net_forward.1} parent=1 // pred_region
      _
    $region33: #{tron_net_forward.1} parent=1 // pred_fallthru
      _
    // Predicated region
    $region34: #{tron_net_forward.1} parent=1 // pred_check
      _
    $region35: #{tron_net_forward.1} parent=1 // pred_check_branch
      %75 = sbr.rel (0) target = $region37
    $region36: #{tron_net_forward.1} parent=1 // pred_region
      _
    $region37: #{tron_net_forward.1} parent=1 // pred_fallthru
      _
    // Predicated region
    $region38: #{tron_net_forward.1} parent=1 // pred_check
      _
    $region39: #{tron_net_forward.1} parent=1 // pred_check_branch
      %77 = sbr.rel (0) target = $region41
    $region40: #{tron_net_forward.1} parent=1 // pred_region
      %79 = vsyncadd [#allocation5], 0
      %s80 = sshll.u32 %s9, 4
      %s81 = int_to_ptr.hbm [resolvable:$true] %s80
      %s82 = sshll.u32 [#allocation12], 4
      %s83 = int_to_ptr.vmem [resolvable:$true] %s82
      %88 = dma.hbm_to_vmem [thread:$0]  %s81, 8192, %s83, [#allocation5], 1024, 1024, 64
    $region41: #{tron_net_forward.1} parent=1 // pred_fallthru
      _
    // Predicated region
    $region42: #{tron_net_forward.1} parent=1 // pred_check
      _
    $region43: #{tron_net_forward.1} parent=1 // pred_check_branch
      %90 = sbr.rel (0) target = $region45
    $region44: #{tron_net_forward.1} parent=1 // pred_region
      _
    $region45: #{tron_net_forward.1} parent=1 // pred_fallthru
      _
    // Predicated region
    $region46: #{tron_net_forward.1} parent=1 // pred_check
      _
    $region47: #{tron_net_forward.1} parent=1 // pred_check_branch
      %92 = sbr.rel (0) target = $region49
    $region48: #{tron_net_forward.1} parent=1 // pred_region
      _
    $region49: #{tron_net_forward.1} parent=1 // pred_fallthru
      _
    // Predicated region
    $region50: #{tron_net_forward.1} parent=1 // pred_check
      _
    $region51: #{tron_net_forward.1} parent=1 // pred_check_branch
      %94 = sbr.rel (0) target = $region53
    $region52: #{tron_net_forward.1} parent=1 // pred_region
      _
    $region53: #{tron_net_forward.1} parent=1 // pred_fallthru
      _
    // Predicated region
    $region54: #{tron_net_forward.1} parent=1 // pred_check
      _
    $region55: #{tron_net_forward.1} parent=1 // pred_check_branch
      %96 = sbr.rel (0) target = $region57
    $region56: #{tron_net_forward.1} parent=1 // pred_region
      %98 = vsyncadd [#allocation14], 0
      %s99 = sshll.u32 %s13, 4
      %s100 = int_to_ptr.hbm [resolvable:$true] %s99
      %s101 = sshll.u32 [#allocation13], 4
      %s102 = int_to_ptr.vmem [resolvable:$true] %s101
      %107 = dma.hbm_to_vmem [thread:$0]  %s100, 32768, %s102, [#allocation14], 1024, 1024, 64
    $region57: #{tron_net_forward.1} parent=1 // pred_fallthru
      _
    // Predicated region
    $region58: #{tron_net_forward.1} parent=1 // pred_check
      _
    $region59: #{tron_net_forward.1} parent=1 // pred_check_branch
      %109 = sbr.rel (0) target = $region61
    $region60: #{tron_net_forward.1} parent=1 // pred_region
      _
    $region61: #{tron_net_forward.1} parent=1 // pred_fallthru
      _
    // Predicated region
    $region62: #{tron_net_forward.1} parent=1 // pred_check
      _
    $region63: #{tron_net_forward.1} parent=1 // pred_check_branch
      %111 = sbr.rel (0) target = $region65
    $region64: #{tron_net_forward.1} parent=1 // pred_region
      _
    $region65: #{tron_net_forward.1} parent=1 // pred_fallthru
      _
    // Predicated region
    $region66: #{tron_net_forward.1} parent=1 // pred_check
      _
    $region67: #{tron_net_forward.1} parent=1 // pred_check_branch
      %113 = sbr.rel (0) target = $region69
    $region68: #{tron_net_forward.1} parent=1 // pred_region
      _
    $region69: #{tron_net_forward.1} parent=1 // pred_fallthru
      _
    // Predicated region
    $region70: #{tron_net_forward.1} parent=1 // pred_check
      _
    $region71: #{tron_net_forward.1} parent=1 // pred_check_branch
      %115 = sbr.rel (0) target = $region73
    $region72: #{tron_net_forward.1} parent=1 // pred_region
      _
    $region73: #{tron_net_forward.1} parent=1 // pred_fallthru
      _
    // Predicated region
    $region74: #{tron_net_forward.1} parent=1 // pred_check
      _
    $region75: #{tron_net_forward.1} parent=1 // pred_check_branch
      %117 = sbr.rel (0) target = $region77
    $region76: #{tron_net_forward.1} parent=1 // pred_region
      _
    $region77: #{tron_net_forward.1} parent=1 // pred_fallthru
      _
    // Predicated region
    $region78: #{tron_net_forward.1} parent=1 // pred_check
      _
    $region79: #{tron_net_forward.1} parent=1 // pred_check_branch
      %119 = sbr.rel (0) target = $region81
    $region80: #{tron_net_forward.1} parent=1 // pred_region
      _
    $region81: #{tron_net_forward.1} parent=1 // pred_fallthru
      _
    // Predicated region
    $region82: #{tron_net_forward.1} parent=1 // pred_check
      _
    $region83: #{tron_net_forward.1} parent=1 // pred_check_branch
      %121 = sbr.rel (0) target = $region85
    $region84: #{tron_net_forward.1} parent=1 // pred_region
      %123 = dma.done [#allocation6], 64
    $region85: #{tron_net_forward.1} parent=1 // pred_fallthru
      _
    // Predicated region
    $region86: #{tron_net_forward.1} parent=1 // pred_check
      _
    $region87: #{tron_net_forward.1} parent=1 // pred_check_branch
      %125 = sbr.rel (0) target = $region89
    $region88: #{tron_net_forward.1} parent=1 // pred_region
      %127 = dma.done [#allocation8], 16
    $region89: #{tron_net_forward.1} parent=1 // pred_fallthru
      _
    // Predicated region
    $region90: #{tron_net_forward.1} parent=1 // pred_check
      _
    $region91: #{tron_net_forward.1} parent=1 // pred_check_branch
      %129 = sbr.rel (0) target = $region93
    $region92: #{tron_net_forward.1} parent=1 // pred_region
      %131 = dma.done [#allocation8], 32
    $region93: #{tron_net_forward.1} parent=1 // pred_fallthru
      _
    // Predicated region
    $region94: #{tron_net_forward.1} parent=1 // pred_check
      _
    $region95: #{tron_net_forward.1} parent=1 // pred_check_branch
      %133 = sbr.rel (0) target = $region97
    $region96: #{tron_net_forward.1} parent=1 // pred_region
      %135 = dma.done [#allocation11], 16
    $region97: #{tron_net_forward.1} parent=1 // pred_fallthru
      _
    // Predicated region
    $region98: #{tron_net_forward.1} parent=1 // pred_check
      _
    $region99: #{tron_net_forward.1} parent=1 // pred_check_branch
      %137 = sbr.rel (0) target = $region101
    $region100: #{tron_net_forward.1} parent=1 // pred_region
      %139 = dma.done [#allocation5], 8192
    $region101: #{tron_net_forward.1} parent=1 // pred_fallthru
      _
    // Predicated region
    $region102: #{tron_net_forward.1} parent=1 // pred_check
      _
    $region103: #{tron_net_forward.1} parent=1 // pred_check_branch
      %141 = sbr.rel (0) target = $region105
    $region104: #{tron_net_forward.1} parent=1 // pred_region
      %143 = dma.done [#allocation14], 32768
    $region105: #{tron_net_forward.1} parent=1 // pred_fallthru
      _
    %144 = sfence
    %v146 = vlaneseq
    %v147 = vand.u32 %v146, 127
    %v148 = vadd.s32 %v147, 128
    %vm149 = vcmp.lt.s32.totalorder %v147, 0
    %v150 = vsub.s32 0, %v147
    %v151 = vsel %vm149, %v150, %v147
    %v152 = vshrl.u32 %v151, 4
    %v153 = vand.u32 %v151, 15
    %v154 = vsub.s32 0, %v153
    %v155 = vsel %vm149, %v154, %v153
    %vm156 = vcmp.lt.s32.totalorder %v148, 0
    %v157 = vsub.s32 0, %v148
    %v158 = vsel %vm156, %v157, %v148
    %v159 = vshrl.u32 %v158, 4
    %v160 = vand.u32 %v158, 15
    %v161 = vsub.s32 0, %v160
    %v162 = vsel %vm156, %v161, %v160
    %vm163 = vcmp.ne.s32.totalorder %v155, 0
    %vm164 = vcmp.ne.s32.totalorder %v162, 0
    %vm165 = vcmp.lt.s32.totalorder %v155, 0
    %vm166 = vcmp.lt.s32.totalorder %v162, 0
    %vm167 = vmand %vm165, %vm163
    %vm168 = vmand %vm166, %vm164
    %v169 = vadd.s32 %v155, 16
    %v170 = vadd.s32 %v162, 16
    %v171 = vsel %vm167, %v169, %v155
    %v172 = vsel %vm168, %v170, %v162
    %vm173 = vcmp.ne.s32.totalorder %v171, 0
    %vm174 = vcmp.ne.s32.totalorder %v172, 0
    %vm175 = vcmp.ne.s32.totalorder %v171, 15
    %vm176 = vcmp.ne.s32.totalorder %v172, 15
    %177 = vst [vmem:[#allocation2] sm:$0xff] 0.0
    %v178 = vld [vmem:[%s0] sm:$0xf]
    %179 = vst [vmem:[#allocation2 + $0x2] sm:$0xf] %v178
    %v180 = vld [vmem:[#allocation2] sm:$0x3f]
    %182 = vst [vmem:[#allocation1] ss:$4 sm:$0xff] %v180
    %v183 = vld.sshfl [vmem:[#allocation1] sm:$0xff pattern:$0x73625140]
    %v184 = vld.sshfl [vmem:[#allocation1 + $0x8] sm:$0xff pattern:$0x73625140]
    %v185 = vld.sshfl [vmem:[#allocation1 + $0x10] sm:$0xff pattern:$0x73625140]
    %186 = vrot.lane.b32.xlu0 %v183, 17
    %v187 = vpop.permute.xlu0 %186
    %188 = vrot.lane.b32.xlu0 %v184, 17
    %v189 = vpop.permute.xlu0 %188
    %190 = vrot.lane.b32.xlu0 %v185, 17
    %v191 = vpop.permute.xlu0 %190
    %vm192 = vcmask 138240
    %v193 = vsel %vm192, %v187, %v189
    %v194 = vsel %vm192, %v189, %v191
    %v197 = vsel %vm173, %v193, 0.0
    %v198 = vsel %vm174, %v194, 0.0
    %s199 = sld [smem:[#allocation4]]
    %v200 = vstv %s199
    %v201 = vmul.f32 %v200, %v197
    %v202 = vmul.f32 %v200, %v198
    %v203 = vadd.f32 %v201, 0.0
    %v204 = vadd.f32 %v202, 0.0
    %s205 = sld [smem:[#allocation4 + $0x80]]
    %v206 = vstv %s205
    %v207 = vmul.f32 %v206, %v197
    %v208 = vmul.f32 %v206, %v198
    %v209 = vadd.f32 %v207, 0.0
    %v210 = vadd.f32 %v208, 0.0
    %s211 = sld [smem:[#allocation4 + $0x100]]
    %v212 = vstv %s211
    %v213 = vmul.f32 %v212, %v197
    %v214 = vmul.f32 %v212, %v198
    %v215 = vadd.f32 %v213, 0.0
    %v216 = vadd.f32 %v214, 0.0
    %s217 = sld [smem:[#allocation4 + $0x180]]
    %v218 = vstv %s217
    %v219 = vmul.f32 %v218, %v197
    %v220 = vmul.f32 %v218, %v198
    %v221 = vadd.f32 %v219, 0.0
    %v222 = vadd.f32 %v220, 0.0
    %v223 = vld [vmem:[#allocation2] sm:$0x3f]
    %s224 = sld [smem:[#allocation4 + $0x1]]
    %v225 = vstv %s224
    %v226 = vmul.f32 %v225, %v223
    %228 = vst [vmem:[#allocation1] ss:$4 sm:$0xff] %v226
    %v229 = vld.sshfl [vmem:[#allocation1] sm:$0xff pattern:$0x73625140]
    %v230 = vld.sshfl [vmem:[#allocation1 + $0x8] sm:$0xff pattern:$0x73625140]
    %v231 = vld.sshfl [vmem:[#allocation1 + $0x10] sm:$0xff pattern:$0x73625140]
    %232 = vrot.lane.b32.xlu0 %v229, 16
    %v233 = vpop.permute.xlu0 %232
    %234 = vrot.lane.b32.xlu0 %v230, 16
    %v235 = vpop.permute.xlu0 %234
    %236 = vrot.lane.b32.xlu0 %v231, 16
    %v237 = vpop.permute.xlu0 %236
    %vm238 = vcmask 130048
    %v239 = vsel %vm238, %v233, %v235
    %v240 = vsel %vm238, %v235, %v237
    %v243 = vadd.f32 %v203, %v239
    %v244 = vadd.f32 %v204, %v240
    %s245 = sld [smem:[#allocation4 + $0x81]]
    %v246 = vstv %s245
    %v247 = vmul.f32 %v246, %v223
    %249 = vst [vmem:[#allocation1] ss:$4 sm:$0xff] %v247
    %v250 = vld.sshfl [vmem:[#allocation1] sm:$0xff pattern:$0x73625140]
    %v251 = vld.sshfl [vmem:[#allocation1 + $0x8] sm:$0xff pattern:$0x73625140]
    %v252 = vld.sshfl [vmem:[#allocation1 + $0x10] sm:$0xff pattern:$0x73625140]
    %253 = vrot.lane.b32.xlu0 %v250, 16
    %v254 = vpop.permute.xlu0 %253
    %255 = vrot.lane.b32.xlu0 %v251, 16
    %v256 = vpop.permute.xlu0 %255
    %257 = vrot.lane.b32.xlu0 %v252, 16
    %v258 = vpop.permute.xlu0 %257
    %v259 = vsel %vm238, %v254, %v256
    %v260 = vsel %vm238, %v256, %v258
    %v263 = vadd.f32 %v209, %v259
    %v264 = vadd.f32 %v210, %v260
    %s265 = sld [smem:[#allocation4 + $0x101]]
    %v266 = vstv %s265
    %v267 = vmul.f32 %v266, %v223
    %269 = vst [vmem:[#allocation1] ss:$4 sm:$0xff] %v267
    %v270 = vld.sshfl [vmem:[#allocation1] sm:$0xff pattern:$0x73625140]
    %v271 = vld.sshfl [vmem:[#allocation1 + $0x8] sm:$0xff pattern:$0x73625140]
    %v272 = vld.sshfl [vmem:[#allocation1 + $0x10] sm:$0xff pattern:$0x73625140]
    %273 = vrot.lane.b32.xlu0 %v270, 16
    %v274 = vpop.permute.xlu0 %273
    %275 = vrot.lane.b32.xlu0 %v271, 16
    %v276 = vpop.permute.xlu0 %275
    %277 = vrot.lane.b32.xlu0 %v272, 16
    %v278 = vpop.permute.xlu0 %277
    %v279 = vsel %vm238, %v274, %v276
    %v280 = vsel %vm238, %v276, %v278
    %v283 = vadd.f32 %v215, %v279
    %v284 = vadd.f32 %v216, %v280
    %s285 = sld [smem:[#allocation4 + $0x181]]
    %v286 = vstv %s285
    %v287 = vmul.f32 %v286, %v223
    %289 = vst [vmem:[#allocation1] ss:$4 sm:$0xff] %v287
    %v290 = vld.sshfl [vmem:[#allocation1] sm:$0xff pattern:$0x73625140]
    %v291 = vld.sshfl [vmem:[#allocation1 + $0x8] sm:$0xff pattern:$0x73625140]
    %v292 = vld.sshfl [vmem:[#allocation1 + $0x10] sm:$0xff pattern:$0x73625140]
    %293 = vrot.lane.b32.xlu0 %v290, 16
    %v294 = vpop.permute.xlu0 %293
    %295 = vrot.lane.b32.xlu0 %v291, 16
    %v296 = vpop.permute.xlu0 %295
    %297 = vrot.lane.b32.xlu0 %v292, 16
    %v298 = vpop.permute.xlu0 %297
    %v299 = vsel %vm238, %v294, %v296
    %v300 = vsel %vm238, %v296, %v298
    %v303 = vadd.f32 %v221, %v299
    %v304 = vadd.f32 %v222, %v300
    %v305 = vld [vmem:[#allocation2] sm:$0x3f]
    %307 = vst [vmem:[#allocation1] ss:$4 sm:$0xff] %v305
    %v308 = vld.sshfl [vmem:[#allocation1] sm:$0xff pattern:$0x73625140]
    %v309 = vld.sshfl [vmem:[#allocation1 + $0x8] sm:$0xff pattern:$0x73625140]
    %v310 = vld.sshfl [vmem:[#allocation1 + $0x10] sm:$0xff pattern:$0x73625140]
    %311 = vrot.lane.b32.xlu0 %v308, 15
    %v312 = vpop.permute.xlu0 %311
    %313 = vrot.lane.b32.xlu0 %v309, 15
    %v314 = vpop.permute.xlu0 %313
    %315 = vrot.lane.b32.xlu0 %v310, 15
    %v316 = vpop.permute.xlu0 %315
    %vm317 = vcmask 121856
    %v318 = vsel %vm317, %v312, %v314
    %v319 = vsel %vm317, %v314, %v316
    %v322 = vsel %vm175, %v318, 0.0
    %v323 = vsel %vm176, %v319, 0.0
    %s324 = sld [smem:[#allocation4 + $0x2]]
    %v325 = vstv %s324
    %v326 = vmul.f32 %v325, %v322
    %v327 = vmul.f32 %v325, %v323
    %v328 = vadd.f32 %v243, %v326
    %v329 = vadd.f32 %v244, %v327
    %s330 = sld [smem:[#allocation4 + $0x82]]
    %v331 = vstv %s330
    %v332 = vmul.f32 %v331, %v322
    %v333 = vmul.f32 %v331, %v323
    %v334 = vadd.f32 %v263, %v332
    %v335 = vadd.f32 %v264, %v333
    %s336 = sld [smem:[#allocation4 + $0x102]]
    %v337 = vstv %s336
    %v338 = vmul.f32 %v337, %v322
    %v339 = vmul.f32 %v337, %v323
    %v340 = vadd.f32 %v283, %v338
    %v341 = vadd.f32 %v284, %v339
    %s342 = sld [smem:[#allocation4 + $0x182]]
    %v343 = vstv %s342
    %v344 = vmul.f32 %v343, %v322
    %v345 = vmul.f32 %v343, %v323
    %v346 = vadd.f32 %v303, %v344
    %v347 = vadd.f32 %v304, %v345
    %v348 = vld [vmem:[#allocation2] sm:$0x3f]
    %350 = vst [vmem:[#allocation1] ss:$4 sm:$0xff] %v348
    %v351 = vld.sshfl [vmem:[#allocation1] sm:$0xff pattern:$0x73625140]
    %v352 = vld.sshfl [vmem:[#allocation1 + $0x8] sm:$0xff pattern:$0x73625140]
    %v353 = vld.sshfl [vmem:[#allocation1 + $0x10] sm:$0xff pattern:$0x73625140]
    %354 = vrot.lane.b32.xlu0 %v351, 1
    %v355 = vpop.permute.xlu0 %354
    %356 = vrot.lane.b32.xlu0 %v352, 1
    %v357 = vpop.permute.xlu0 %356
    %358 = vrot.lane.b32.xlu0 %v353, 1
    %v359 = vpop.permute.xlu0 %358
    %vm360 = vcmask 7168
    %v361 = vsel %vm360, %v355, %v357
    %v362 = vsel %vm360, %v357, %v359
    %v365 = vsel %vm173, %v361, 0.0
    %v366 = vsel %vm174, %v362, 0.0
    %s367 = sld [smem:[#allocation4 + $0x3]]
    %v368 = vstv %s367
    %v369 = vmul.f32 %v368, %v365
    %v370 = vmul.f32 %v368, %v366
    %v371 = vadd.f32 %v328, %v369
    %v372 = vadd.f32 %v329, %v370
    %s373 = sld [smem:[#allocation4 + $0x83]]
    %v374 = vstv %s373
    %v375 = vmul.f32 %v374, %v365
    %v376 = vmul.f32 %v374, %v366
    %v377 = vadd.f32 %v334, %v375
    %v378 = vadd.f32 %v335, %v376
    %s379 = sld [smem:[#allocation4 + $0x103]]
    %v380 = vstv %s379
    %v381 = vmul.f32 %v380, %v365
    %v382 = vmul.f32 %v380, %v366
    %v383 = vadd.f32 %v340, %v381
    %v384 = vadd.f32 %v341, %v382
    %s385 = sld [smem:[#allocation4 + $0x183]]
    %v386 = vstv %s385
    %v387 = vmul.f32 %v386, %v365
    %v388 = vmul.f32 %v386, %v366
    %v389 = vadd.f32 %v346, %v387
    %v390 = vadd.f32 %v347, %v388
    %v391 = vld [vmem:[#allocation2 + $0x2] sm:$0xf]
    %s392 = sld [smem:[#allocation4 + $0x4]]
    %v393 = vstv %s392
    %v394 = vmul.f32 %v393, %v391
    %396 = vst [vmem:[#allocation1] ss:$4 sm:$0xff] %v394
    %v397 = vld.sshfl [vmem:[#allocation1] sm:$0xff pattern:$0x73625140]
    %v398 = vld.sshfl [vmem:[#allocation1 + $0x8] sm:$0xff pattern:$0x73625140]
    %v401 = vadd.f32 %v371, %v397
    %v402 = vadd.f32 %v372, %v398
    %s403 = sld [smem:[#allocation4 + $0x84]]
    %v404 = vstv %s403
    %v405 = vmul.f32 %v404, %v391
    %407 = vst [vmem:[#allocation1] ss:$4 sm:$0xff] %v405
    %v408 = vld.sshfl [vmem:[#allocation1] sm:$0xff pattern:$0x73625140]
    %v409 = vld.sshfl [vmem:[#allocation1 + $0x8] sm:$0xff pattern:$0x73625140]
    %v412 = vadd.f32 %v377, %v408
    %v413 = vadd.f32 %v378, %v409
    %s414 = sld [smem:[#allocation4 + $0x104]]
    %v415 = vstv %s414
    %v416 = vmul.f32 %v415, %v391
    %418 = vst [vmem:[#allocation1] ss:$4 sm:$0xff] %v416
    %v419 = vld.sshfl [vmem:[#allocation1] sm:$0xff pattern:$0x73625140]
    %v420 = vld.sshfl [vmem:[#allocation1 + $0x8] sm:$0xff pattern:$0x73625140]
    %v423 = vadd.f32 %v383, %v419
    %v424 = vadd.f32 %v384, %v420
    %s425 = sld [smem:[#allocation4 + $0x184]]
    %v426 = vstv %s425
    %v427 = vmul.f32 %v426, %v391
    %429 = vst [vmem:[#allocation1] ss:$4 sm:$0xff] %v427
    %v430 = vld.sshfl [vmem:[#allocation1] sm:$0xff pattern:$0x73625140]
    %v431 = vld.sshfl [vmem:[#allocation1 + $0x8] sm:$0xff pattern:$0x73625140]
    %v434 = vadd.f32 %v389, %v430
    %v435 = vadd.f32 %v390, %v431
    %v436 = vld [vmem:[#allocation2 + $0x2] sm:$0x3f]
    %438 = vst [vmem:[#allocation1] ss:$4 sm:$0xff] %v436
    %v439 = vld.sshfl [vmem:[#allocation1] sm:$0xff pattern:$0x73625140]
    %v440 = vld.sshfl [vmem:[#allocation1 + $0x8] sm:$0xff pattern:$0x73625140]
    %v441 = vld.sshfl [vmem:[#allocation1 + $0x10] sm:$0xff pattern:$0x73625140]
    %442 = vrot.lane.b32.xlu0 %v439, 127
    %v443 = vpop.permute.xlu0 %442
    %444 = vrot.lane.b32.xlu0 %v440, 127
    %v445 = vpop.permute.xlu0 %444
    %446 = vrot.lane.b32.xlu0 %v441, 127
    %v447 = vpop.permute.xlu0 %446
    %vm448 = vcmask 1039360
    %v449 = vsel %vm448, %v443, %v445
    %v450 = vsel %vm448, %v445, %v447
    %v453 = vsel %vm175, %v449, 0.0
    %v454 = vsel %vm176, %v450, 0.0
    %s455 = sld [smem:[#allocation4 + $0x5]]
    %v456 = vstv %s455
    %v457 = vmul.f32 %v456, %v453
    %v458 = vmul.f32 %v456, %v454
    %v459 = vadd.f32 %v401, %v457
    %v460 = vadd.f32 %v402, %v458
    %s461 = sld [smem:[#allocation4 + $0x85]]
    %v462 = vstv %s461
    %v463 = vmul.f32 %v462, %v453
    %v464 = vmul.f32 %v462, %v454
    %v465 = vadd.f32 %v412, %v463
    %v466 = vadd.f32 %v413, %v464
    %s467 = sld [smem:[#allocation4 + $0x105]]
    %v468 = vstv %s467
    %v469 = vmul.f32 %v468, %v453
    %v470 = vmul.f32 %v468, %v454
    %v471 = vadd.f32 %v423, %v469
    %v472 = vadd.f32 %v424, %v470
    %s473 = sld [smem:[#allocation4 + $0x185]]
    %v474 = vstv %s473
    %v475 = vmul.f32 %v474, %v453
    %v476 = vmul.f32 %v474, %v454
    %v477 = vadd.f32 %v434, %v475
    %v478 = vadd.f32 %v435, %v476
    %v479 = vld [vmem:[#allocation2 + $0x2] sm:$0x3f]
    %481 = vst [vmem:[#allocation1] ss:$4 sm:$0xff] %v479
    %v482 = vld.sshfl [vmem:[#allocation1] sm:$0xff pattern:$0x73625140]
    %v483 = vld.sshfl [vmem:[#allocation1 + $0x8] sm:$0xff pattern:$0x73625140]
    %v484 = vld.sshfl [vmem:[#allocation1 + $0x10] sm:$0xff pattern:$0x73625140]
    %485 = vrot.lane.b32.xlu0 %v482, 113
    %v486 = vpop.permute.xlu0 %485
    %487 = vrot.lane.b32.xlu0 %v483, 113
    %v488 = vpop.permute.xlu0 %487
    %489 = vrot.lane.b32.xlu0 %v484, 113
    %v490 = vpop.permute.xlu0 %489
    %vm491 = vcmask 924672
    %v492 = vsel %vm491, %v486, %v488
    %v493 = vsel %vm491, %v488, %v490
    %v496 = vsel %vm173, %v492, 0.0
    %v497 = vsel %vm174, %v493, 0.0
    %s498 = sld [smem:[#allocation4 + $0x6]]
    %v499 = vstv %s498
    %v500 = vmul.f32 %v499, %v496
    %v501 = vmul.f32 %v499, %v497
    %v502 = vadd.f32 %v459, %v500
    %v503 = vadd.f32 %v460, %v501
    %s504 = sld [smem:[#allocation4 + $0x86]]
    %v505 = vstv %s504
    %v506 = vmul.f32 %v505, %v496
    %v507 = vmul.f32 %v505, %v497
    %v508 = vadd.f32 %v465, %v506
    %v509 = vadd.f32 %v466, %v507
    %s510 = sld [smem:[#allocation4 + $0x106]]
    %v511 = vstv %s510
    %v512 = vmul.f32 %v511, %v496
    %v513 = vmul.f32 %v511, %v497
    %v514 = vadd.f32 %v471, %v512
    %v515 = vadd.f32 %v472, %v513
    %s516 = sld [smem:[#allocation4 + $0x186]]
    %v517 = vstv %s516
    %v518 = vmul.f32 %v517, %v496
    %v519 = vmul.f32 %v517, %v497
    %v520 = vadd.f32 %v477, %v518
    %v521 = vadd.f32 %v478, %v519
    %v522 = vld [vmem:[#allocation2 + $0x2] sm:$0x3f]
    %s523 = sld [smem:[#allocation4 + $0x7]]
    %v524 = vstv %s523
    %v525 = vmul.f32 %v524, %v522
    %527 = vst [vmem:[#allocation1] ss:$4 sm:$0xff] %v525
    %v528 = vld.sshfl [vmem:[#allocation1] sm:$0xff pattern:$0x73625140]
    %v529 = vld.sshfl [vmem:[#allocation1 + $0x8] sm:$0xff pattern:$0x73625140]
    %v530 = vld.sshfl [vmem:[#allocation1 + $0x10] sm:$0xff pattern:$0x73625140]
    %531 = vrot.lane.b32.xlu0 %v528, 112
    %v532 = vpop.permute.xlu0 %531
    %533 = vrot.lane.b32.xlu0 %v529, 112
    %v534 = vpop.permute.xlu0 %533
    %535 = vrot.lane.b32.xlu0 %v530, 112
    %v536 = vpop.permute.xlu0 %535
    %vm537 = vcmask 916480
    %v538 = vsel %vm537, %v532, %v534
    %v539 = vsel %vm537, %v534, %v536
    %v542 = vadd.f32 %v502, %v538
    %v543 = vadd.f32 %v503, %v539
    %s544 = sld [smem:[#allocation4 + $0x87]]
    %v545 = vstv %s544
    %v546 = vmul.f32 %v545, %v522
    %548 = vst [vmem:[#allocation1] ss:$4 sm:$0xff] %v546
    %v549 = vld.sshfl [vmem:[#allocation1] sm:$0xff pattern:$0x73625140]
    %v550 = vld.sshfl [vmem:[#allocation1 + $0x8] sm:$0xff pattern:$0x73625140]
    %v551 = vld.sshfl [vmem:[#allocation1 + $0x10] sm:$0xff pattern:$0x73625140]
    %552 = vrot.lane.b32.xlu0 %v549, 112
    %v553 = vpop.permute.xlu0 %552
    %554 = vrot.lane.b32.xlu0 %v550, 112
    %v555 = vpop.permute.xlu0 %554
    %556 = vrot.lane.b32.xlu0 %v551, 112
    %v557 = vpop.permute.xlu0 %556
    %v558 = vsel %vm537, %v553, %v555
    %v559 = vsel %vm537, %v555, %v557
    %v562 = vadd.f32 %v508, %v558
    %v563 = vadd.f32 %v509, %v559
    %s564 = sld [smem:[#allocation4 + $0x107]]
    %v565 = vstv %s564
    %v566 = vmul.f32 %v565, %v522
    %568 = vst [vmem:[#allocation1] ss:$4 sm:$0xff] %v566
    %v569 = vld.sshfl [vmem:[#allocation1] sm:$0xff pattern:$0x73625140]
    %v570 = vld.sshfl [vmem:[#allocation1 + $0x8] sm:$0xff pattern:$0x73625140]
    %v571 = vld.sshfl [vmem:[#allocation1 + $0x10] sm:$0xff pattern:$0x73625140]
    %572 = vrot.lane.b32.xlu0 %v569, 112
    %v573 = vpop.permute.xlu0 %572
    %574 = vrot.lane.b32.xlu0 %v570, 112
    %v575 = vpop.permute.xlu0 %574
    %576 = vrot.lane.b32.xlu0 %v571, 112
    %v577 = vpop.permute.xlu0 %576
    %v578 = vsel %vm537, %v573, %v575
    %v579 = vsel %vm537, %v575, %v577
    %v582 = vadd.f32 %v514, %v578
    %v583 = vadd.f32 %v515, %v579
    %s584 = sld [smem:[#allocation4 + $0x187]]
    %v585 = vstv %s584
    %v586 = vmul.f32 %v585, %v522
    %588 = vst [vmem:[#allocation1] ss:$4 sm:$0xff] %v586
    %v589 = vld.sshfl [vmem:[#allocation1] sm:$0xff pattern:$0x73625140]
    %v590 = vld.sshfl [vmem:[#allocation1 + $0x8] sm:$0xff pattern:$0x73625140]
    %v591 = vld.sshfl [vmem:[#allocation1 + $0x10] sm:$0xff pattern:$0x73625140]
    %592 = vrot.lane.b32.xlu0 %v589, 112
    %v593 = vpop.permute.xlu0 %592
    %594 = vrot.lane.b32.xlu0 %v590, 112
    %v595 = vpop.permute.xlu0 %594
    %596 = vrot.lane.b32.xlu0 %v591, 112
    %v597 = vpop.permute.xlu0 %596
    %v598 = vsel %vm537, %v593, %v595
    %v599 = vsel %vm537, %v595, %v597
    %v602 = vadd.f32 %v520, %v598
    %v603 = vadd.f32 %v521, %v599
    %v604 = vld [vmem:[#allocation2 + $0x2] sm:$0x3f]
    %606 = vst [vmem:[#allocation1] ss:$4 sm:$0xff] %v604
    %v607 = vld.sshfl [vmem:[#allocation1] sm:$0xff pattern:$0x73625140]
    %v608 = vld.sshfl [vmem:[#allocation1 + $0x8] sm:$0xff pattern:$0x73625140]
    %v609 = vld.sshfl [vmem:[#allocation1 + $0x10] sm:$0xff pattern:$0x73625140]
    %610 = vrot.lane.b32.xlu0 %v607, 111
    %v611 = vpop.permute.xlu0 %610
    %612 = vrot.lane.b32.xlu0 %v608, 111
    %v613 = vpop.permute.xlu0 %612
    %614 = vrot.lane.b32.xlu0 %v609, 111
    %v615 = vpop.permute.xlu0 %614
    %vm616 = vcmask 908288
    %v617 = vsel %vm616, %v611, %v613
    %v618 = vsel %vm616, %v613, %v615
    %v621 = vsel %vm175, %v617, 0.0
    %v622 = vsel %vm176, %v618, 0.0
    %s623 = sld [smem:[#allocation4 + $0x8]]
    %v624 = vstv %s623
    %v625 = vmul.f32 %v624, %v621
    %v626 = vmul.f32 %v624, %v622
    %v627 = vadd.f32 %v542, %v625
    %v628 = vadd.f32 %v543, %v626
    %s629 = sld [smem:[#allocation4 + $0x88]]
    %v630 = vstv %s629
    %v631 = vmul.f32 %v630, %v621
    %v632 = vmul.f32 %v630, %v622
    %v633 = vadd.f32 %v562, %v631
    %v634 = vadd.f32 %v563, %v632
    %s635 = sld [smem:[#allocation4 + $0x108]]
    %v636 = vstv %s635
    %v637 = vmul.f32 %v636, %v621
    %v638 = vmul.f32 %v636, %v622
    %v639 = vadd.f32 %v582, %v637
    %v640 = vadd.f32 %v583, %v638
    %s641 = sld [smem:[#allocation4 + $0x188]]
    %v642 = vstv %s641
    %v643 = vmul.f32 %v642, %v621
    %v644 = vmul.f32 %v642, %v622
    %v645 = vadd.f32 %v602, %v643
    %v646 = vadd.f32 %v603, %v644
    %s647 = sld [smem:[#allocation7]]
    %v648 = vstv %s647
    %v649 = vadd.f32 %v627, %v648
    %v650 = vadd.f32 %v628, %v648
    %v651 = vmax.f32 %v649, 0.0
    %v652 = vmax.f32 %v650, 0.0
    %s653 = sld [smem:[#allocation7 + $0x1]]
    %v654 = vstv %s653
    %v655 = vadd.f32 %v633, %v654
    %v656 = vadd.f32 %v634, %v654
    %v657 = vmax.f32 %v655, 0.0
    %v658 = vmax.f32 %v656, 0.0
    %s659 = sld [smem:[#allocation7 + $0x2]]
    %v660 = vstv %s659
    %v661 = vadd.f32 %v639, %v660
    %v662 = vadd.f32 %v640, %v660
    %v663 = vmax.f32 %v661, 0.0
    %v664 = vmax.f32 %v662, 0.0
    %s665 = sld [smem:[#allocation7 + $0x3]]
    %v666 = vstv %s665
    %v667 = vadd.f32 %v645, %v666
    %v668 = vadd.f32 %v646, %v666
    %v669 = vmax.f32 %v667, 0.0
    %v670 = vmax.f32 %v668, 0.0
    %671 = vst [vmem:[#allocation3] sm:$0xff] 0.0
    %672 = vst [vmem:[#allocation3 + $0x8] sm:$0xff] 0.0
    %673 = vst [vmem:[#allocation3 + $0x10] sm:$0xff] 0.0
    %674 = vst [vmem:[#allocation3 + $0x18] sm:$0xff] 0.0
    %v677 = vrot.slane %v652, 6
    %vm678 = vcmask 1041408
    %v679 = vsel %vm678, %v651, %v677
    %681 = vst [vmem:[#allocation3 + $0x2] sm:$0xf] %v679
    %v684 = vrot.slane %v658, 6
    %v685 = vsel %vm678, %v657, %v684
    %s687 = scalar_lea.vmem [#allocation3], 8
    %688 = vst [vmem:[%s687 + $0x2] sm:$0xf] %v685
    %v691 = vrot.slane %v664, 6
    %v692 = vsel %vm678, %v663, %v691
    %s694 = scalar_lea.vmem [#allocation3], 16
    %695 = vst [vmem:[%s694 + $0x2] sm:$0xf] %v692
    %v698 = vrot.slane %v670, 6
    %v699 = vsel %vm678, %v669, %v698
    %s701 = scalar_lea.vmem [#allocation3], 24
    %702 = vst [vmem:[%s701 + $0x2] sm:$0xf] %v699
    %v703 = vld [vmem:[#allocation3] sm:$0x3f]
    %v704 = vld [vmem:[#allocation3 + $0x8] sm:$0x3f]
    %v705 = vld [vmem:[#allocation3 + $0x10] sm:$0x3f]
    %v706 = vld [vmem:[#allocation3 + $0x18] sm:$0x3f]
    %v707 = vsel %vm173, 1, 0
    %v708 = vsel %vm174, 1, 0
    %vm709 = vcmp.eq.s32.totalorder %v707, 1
    %vm710 = vcmp.eq.s32.totalorder %v708, 1
    %715 = vst [vmem:[#allocation1] ss:$4 sm:$0xff] %v703
    %v716 = vld.sshfl [vmem:[#allocation1] sm:$0xff pattern:$0x73625140]
    %v717 = vld.sshfl [vmem:[#allocation1 + $0x8] sm:$0xff pattern:$0x73625140]
    %v718 = vld.sshfl [vmem:[#allocation1 + $0x10] sm:$0xff pattern:$0x73625140]
    %s719 = scalar_lea.vmem [#allocation1], 32
    %720 = vst [vmem:[%s719] ss:$4 sm:$0xff] %v704
    %v721 = vld.sshfl [vmem:[#allocation1 + $0x20] sm:$0xff pattern:$0x73625140]
    %v722 = vld.sshfl [vmem:[#allocation1 + $0x28] sm:$0xff pattern:$0x73625140]
    %v723 = vld.sshfl [vmem:[#allocation1 + $0x30] sm:$0xff pattern:$0x73625140]
    %724 = vst [vmem:[#allocation1] ss:$4 sm:$0xff] %v705
    %v725 = vld.sshfl [vmem:[#allocation1] sm:$0xff pattern:$0x73625140]
    %v726 = vld.sshfl [vmem:[#allocation1 + $0x8] sm:$0xff pattern:$0x73625140]
    %v727 = vld.sshfl [vmem:[#allocation1 + $0x10] sm:$0xff pattern:$0x73625140]
    %728 = vst [vmem:[%s719] ss:$4 sm:$0xff] %v706
    %v729 = vld.sshfl [vmem:[#allocation1 + $0x20] sm:$0xff pattern:$0x73625140]
    %v730 = vld.sshfl [vmem:[#allocation1 + $0x28] sm:$0xff pattern:$0x73625140]
    %v731 = vld.sshfl [vmem:[#allocation1 + $0x30] sm:$0xff pattern:$0x73625140]
    %732 = vrot.lane.b32.xlu0 %v716, 17
    %v733 = vpop.permute.xlu0 %732
    %734 = vrot.lane.b32.xlu0 %v717, 17
    %v735 = vpop.permute.xlu0 %734
    %736 = vrot.lane.b32.xlu0 %v718, 17
    %v737 = vpop.permute.xlu0 %736
    %738 = vrot.lane.b32.xlu0 %v721, 17
    %v739 = vpop.permute.xlu0 %738
    %740 = vrot.lane.b32.xlu0 %v722, 17
    %v741 = vpop.permute.xlu0 %740
    %742 = vrot.lane.b32.xlu0 %v723, 17
    %v743 = vpop.permute.xlu0 %742
    %744 = vrot.lane.b32.xlu0 %v725, 17
    %v745 = vpop.permute.xlu0 %744
    %746 = vrot.lane.b32.xlu0 %v726, 17
    %v747 = vpop.permute.xlu0 %746
    %748 = vrot.lane.b32.xlu0 %v727, 17
    %v749 = vpop.permute.xlu0 %748
    %750 = vrot.lane.b32.xlu0 %v729, 17
    %v751 = vpop.permute.xlu0 %750
    %752 = vrot.lane.b32.xlu0 %v730, 17
    %v753 = vpop.permute.xlu0 %752
    %754 = vrot.lane.b32.xlu0 %v731, 17
    %v755 = vpop.permute.xlu0 %754
    %v756 = vsel %vm192, %v733, %v735
    %v757 = vsel %vm192, %v735, %v737
    %v758 = vsel %vm192, %v739, %v741
    %v759 = vsel %vm192, %v741, %v743
    %v760 = vsel %vm192, %v745, %v747
    %v761 = vsel %vm192, %v747, %v749
    %v762 = vsel %vm192, %v751, %v753
    %v763 = vsel %vm192, %v753, %v755
    %v772 = vsel %vm709, %v756, 0.0
    %v773 = vsel %vm710, %v757, 0.0
    %v774 = vsel %vm709, %v758, 0.0
    %v775 = vsel %vm710, %v759, 0.0
    %v776 = vsel %vm709, %v760, 0.0
    %v777 = vsel %vm710, %v761, 0.0
    %v778 = vsel %vm709, %v762, 0.0
    %v779 = vsel %vm710, %v763, 0.0
    %s780 = sld [smem:[#allocation9]]
    %v781 = vstv %s780
    %v782 = vmul.f32 %v781, %v772
    %v783 = vmul.f32 %v781, %v773
    %v784 = vadd.f32 %v782, 0.0
    %v785 = vadd.f32 %v783, 0.0
    %s786 = sld [smem:[#allocation9 + $0x80]]
    %v787 = vstv %s786
    %v788 = vmul.f32 %v787, %v772
    %v789 = vmul.f32 %v787, %v773
    %v790 = vadd.f32 %v788, 0.0
    %v791 = vadd.f32 %v789, 0.0
    %s792 = sld [smem:[#allocation9 + $0x9]]
    %v793 = vstv %s792
    %v794 = vmul.f32 %v793, %v774
    %v795 = vmul.f32 %v793, %v775
    %v796 = vadd.f32 %v784, %v794
    %v797 = vadd.f32 %v785, %v795
    %s798 = sld [smem:[#allocation9 + $0x89]]
    %v799 = vstv %s798
    %v800 = vmul.f32 %v799, %v774
    %v801 = vmul.f32 %v799, %v775
    %v802 = vadd.f32 %v790, %v800
    %v803 = vadd.f32 %v791, %v801
    %s804 = sld [smem:[#allocation9 + $0x12]]
    %v805 = vstv %s804
    %v806 = vmul.f32 %v805, %v776
    %v807 = vmul.f32 %v805, %v777
    %v808 = vadd.f32 %v796, %v806
    %v809 = vadd.f32 %v797, %v807
    %s810 = sld [smem:[#allocation9 + $0x92]]
    %v811 = vstv %s810
    %v812 = vmul.f32 %v811, %v776
    %v813 = vmul.f32 %v811, %v777
    %v814 = vadd.f32 %v802, %v812
    %v815 = vadd.f32 %v803, %v813
    %s816 = sld [smem:[#allocation9 + $0x1b]]
    %v817 = vstv %s816
    %v818 = vmul.f32 %v817, %v778
    %v819 = vmul.f32 %v817, %v779
    %v820 = vadd.f32 %v808, %v818
    %v821 = vadd.f32 %v809, %v819
    %s822 = sld [smem:[#allocation9 + $0x9b]]
    %v823 = vstv %s822
    %v824 = vmul.f32 %v823, %v778
    %v825 = vmul.f32 %v823, %v779
    %v826 = vadd.f32 %v814, %v824
    %v827 = vadd.f32 %v815, %v825
    %v828 = vld [vmem:[#allocation3] sm:$0x3f]
    %v829 = vld [vmem:[#allocation3 + $0x8] sm:$0x3f]
    %v830 = vld [vmem:[#allocation3 + $0x10] sm:$0x3f]
    %v831 = vld [vmem:[#allocation3 + $0x18] sm:$0x3f]
    %s832 = sld [smem:[#allocation9 + $0x1]]
    %v833 = vstv %s832
    %v834 = vmul.f32 %v833, %v828
    %836 = vst [vmem:[#allocation1] ss:$4 sm:$0xff] %v834
    %v837 = vld.sshfl [vmem:[#allocation1] sm:$0xff pattern:$0x73625140]
    %v838 = vld.sshfl [vmem:[#allocation1 + $0x8] sm:$0xff pattern:$0x73625140]
    %v839 = vld.sshfl [vmem:[#allocation1 + $0x10] sm:$0xff pattern:$0x73625140]
    %840 = vrot.lane.b32.xlu0 %v837, 16
    %v841 = vpop.permute.xlu0 %840
    %842 = vrot.lane.b32.xlu0 %v838, 16
    %v843 = vpop.permute.xlu0 %842
    %844 = vrot.lane.b32.xlu0 %v839, 16
    %v845 = vpop.permute.xlu0 %844
    %v846 = vsel %vm238, %v841, %v843
    %v847 = vsel %vm238, %v843, %v845
    %v850 = vadd.f32 %v820, %v846
    %v851 = vadd.f32 %v821, %v847
    %s852 = sld [smem:[#allocation9 + $0x81]]
    %v853 = vstv %s852
    %v854 = vmul.f32 %v853, %v828
    %856 = vst [vmem:[#allocation1] ss:$4 sm:$0xff] %v854
    %v857 = vld.sshfl [vmem:[#allocation1] sm:$0xff pattern:$0x73625140]
    %v858 = vld.sshfl [vmem:[#allocation1 + $0x8] sm:$0xff pattern:$0x73625140]
    %v859 = vld.sshfl [vmem:[#allocation1 + $0x10] sm:$0xff pattern:$0x73625140]
    %860 = vrot.lane.b32.xlu0 %v857, 16
    %v861 = vpop.permute.xlu0 %860
    %862 = vrot.lane.b32.xlu0 %v858, 16
    %v863 = vpop.permute.xlu0 %862
    %864 = vrot.lane.b32.xlu0 %v859, 16
    %v865 = vpop.permute.xlu0 %864
    %v866 = vsel %vm238, %v861, %v863
    %v867 = vsel %vm238, %v863, %v865
    %v870 = vadd.f32 %v826, %v866
    %v871 = vadd.f32 %v827, %v867
    %s872 = sld [smem:[#allocation9 + $0xa]]
    %v873 = vstv %s872
    %v874 = vmul.f32 %v873, %v829
    %876 = vst [vmem:[#allocation1] ss:$4 sm:$0xff] %v874
    %v877 = vld.sshfl [vmem:[#allocation1] sm:$0xff pattern:$0x73625140]
    %v878 = vld.sshfl [vmem:[#allocation1 + $0x8] sm:$0xff pattern:$0x73625140]
    %v879 = vld.sshfl [vmem:[#allocation1 + $0x10] sm:$0xff pattern:$0x73625140]
    %880 = vrot.lane.b32.xlu0 %v877, 16
    %v881 = vpop.permute.xlu0 %880
    %882 = vrot.lane.b32.xlu0 %v878, 16
    %v883 = vpop.permute.xlu0 %882
    %884 = vrot.lane.b32.xlu0 %v879, 16
    %v885 = vpop.permute.xlu0 %884
    %v886 = vsel %vm238, %v881, %v883
    %v887 = vsel %vm238, %v883, %v885
    %v890 = vadd.f32 %v850, %v886
    %v891 = vadd.f32 %v851, %v887
    %s892 = sld [smem:[#allocation9 + $0x8a]]
    %v893 = vstv %s892
    %v894 = vmul.f32 %v893, %v829
    %896 = vst [vmem:[#allocation1] ss:$4 sm:$0xff] %v894
    %v897 = vld.sshfl [vmem:[#allocation1] sm:$0xff pattern:$0x73625140]
    %v898 = vld.sshfl [vmem:[#allocation1 + $0x8] sm:$0xff pattern:$0x73625140]
    %v899 = vld.sshfl [vmem:[#allocation1 + $0x10] sm:$0xff pattern:$0x73625140]
    %900 = vrot.lane.b32.xlu0 %v897, 16
    %v901 = vpop.permute.xlu0 %900
    %902 = vrot.lane.b32.xlu0 %v898, 16
    %v903 = vpop.permute.xlu0 %902
    %904 = vrot.lane.b32.xlu0 %v899, 16
    %v905 = vpop.permute.xlu0 %904
    %v906 = vsel %vm238, %v901, %v903
    %v907 = vsel %vm238, %v903, %v905
    %v910 = vadd.f32 %v870, %v906
    %v911 = vadd.f32 %v871, %v907
    %s912 = sld [smem:[#allocation9 + $0x13]]
    %v913 = vstv %s912
    %v914 = vmul.f32 %v913, %v830
    %916 = vst [vmem:[#allocation1] ss:$4 sm:$0xff] %v914
    %v917 = vld.sshfl [vmem:[#allocation1] sm:$0xff pattern:$0x73625140]
    %v918 = vld.sshfl [vmem:[#allocation1 + $0x8] sm:$0xff pattern:$0x73625140]
    %v919 = vld.sshfl [vmem:[#allocation1 + $0x10] sm:$0xff pattern:$0x73625140]
    %920 = vrot.lane.b32.xlu0 %v917, 16
    %v921 = vpop.permute.xlu0 %920
    %922 = vrot.lane.b32.xlu0 %v918, 16
    %v923 = vpop.permute.xlu0 %922
    %924 = vrot.lane.b32.xlu0 %v919, 16
    %v925 = vpop.permute.xlu0 %924
    %v926 = vsel %vm238, %v921, %v923
    %v927 = vsel %vm238, %v923, %v925
    %v930 = vadd.f32 %v890, %v926
    %v931 = vadd.f32 %v891, %v927
    %s932 = sld [smem:[#allocation9 + $0x93]]
    %v933 = vstv %s932
    %v934 = vmul.f32 %v933, %v830
    %936 = vst [vmem:[#allocation1] ss:$4 sm:$0xff] %v934
    %v937 = vld.sshfl [vmem:[#allocation1] sm:$0xff pattern:$0x73625140]
    %v938 = vld.sshfl [vmem:[#allocation1 + $0x8] sm:$0xff pattern:$0x73625140]
    %v939 = vld.sshfl [vmem:[#allocation1 + $0x10] sm:$0xff pattern:$0x73625140]
    %940 = vrot.lane.b32.xlu0 %v937, 16
    %v941 = vpop.permute.xlu0 %940
    %942 = vrot.lane.b32.xlu0 %v938, 16
    %v943 = vpop.permute.xlu0 %942
    %944 = vrot.lane.b32.xlu0 %v939, 16
    %v945 = vpop.permute.xlu0 %944
    %v946 = vsel %vm238, %v941, %v943
    %v947 = vsel %vm238, %v943, %v945
    %v950 = vadd.f32 %v910, %v946
    %v951 = vadd.f32 %v911, %v947
    %s952 = sld [smem:[#allocation9 + $0x1c]]
    %v953 = vstv %s952
    %v954 = vmul.f32 %v953, %v831
    %956 = vst [vmem:[#allocation1] ss:$4 sm:$0xff] %v954
    %v957 = vld.sshfl [vmem:[#allocation1] sm:$0xff pattern:$0x73625140]
    %v958 = vld.sshfl [vmem:[#allocation1 + $0x8] sm:$0xff pattern:$0x73625140]
    %v959 = vld.sshfl [vmem:[#allocation1 + $0x10] sm:$0xff pattern:$0x73625140]
    %960 = vrot.lane.b32.xlu0 %v957, 16
    %v961 = vpop.permute.xlu0 %960
    %962 = vrot.lane.b32.xlu0 %v958, 16
    %v963 = vpop.permute.xlu0 %962
    %964 = vrot.lane.b32.xlu0 %v959, 16
    %v965 = vpop.permute.xlu0 %964
    %v966 = vsel %vm238, %v961, %v963
    %v967 = vsel %vm238, %v963, %v965
    %v970 = vadd.f32 %v930, %v966
    %v971 = vadd.f32 %v931, %v967
    %s972 = sld [smem:[#allocation9 + $0x9c]]
    %v973 = vstv %s972
    %v974 = vmul.f32 %v973, %v831
    %976 = vst [vmem:[#allocation1] ss:$4 sm:$0xff] %v974
    %v977 = vld.sshfl [vmem:[#allocation1] sm:$0xff pattern:$0x73625140]
    %v978 = vld.sshfl [vmem:[#allocation1 + $0x8] sm:$0xff pattern:$0x73625140]
    %v979 = vld.sshfl [vmem:[#allocation1 + $0x10] sm:$0xff pattern:$0x73625140]
    %980 = vrot.lane.b32.xlu0 %v977, 16
    %v981 = vpop.permute.xlu0 %980
    %982 = vrot.lane.b32.xlu0 %v978, 16
    %v983 = vpop.permute.xlu0 %982
    %984 = vrot.lane.b32.xlu0 %v979, 16
    %v985 = vpop.permute.xlu0 %984
    %v986 = vsel %vm238, %v981, %v983
    %v987 = vsel %vm238, %v983, %v985
    %v990 = vadd.f32 %v950, %v986
    %v991 = vadd.f32 %v951, %v987
    %v992 = vld [vmem:[#allocation3] sm:$0x3f]
    %v993 = vld [vmem:[#allocation3 + $0x8] sm:$0x3f]
    %v994 = vld [vmem:[#allocation3 + $0x10] sm:$0x3f]
    %v995 = vld [vmem:[#allocation3 + $0x18] sm:$0x3f]
    %v996 = vsel %vm175, 1, 0
    %v997 = vsel %vm176, 1, 0
    %vm998 = vcmp.eq.s32.totalorder %v996, 1
    %vm999 = vcmp.eq.s32.totalorder %v997, 1
    %1004 = vst [vmem:[#allocation1] ss:$4 sm:$0xff] %v992
    %v1005 = vld.sshfl [vmem:[#allocation1] sm:$0xff pattern:$0x73625140]
    %v1006 = vld.sshfl [vmem:[#allocation1 + $0x8] sm:$0xff pattern:$0x73625140]
    %v1007 = vld.sshfl [vmem:[#allocation1 + $0x10] sm:$0xff pattern:$0x73625140]
    %s1008 = scalar_lea.vmem [#allocation1], 32
    %1009 = vst [vmem:[%s1008] ss:$4 sm:$0xff] %v993
    %v1010 = vld.sshfl [vmem:[#allocation1 + $0x20] sm:$0xff pattern:$0x73625140]
    %v1011 = vld.sshfl [vmem:[#allocation1 + $0x28] sm:$0xff pattern:$0x73625140]
    %v1012 = vld.sshfl [vmem:[#allocation1 + $0x30] sm:$0xff pattern:$0x73625140]
    %1013 = vst [vmem:[#allocation1] ss:$4 sm:$0xff] %v994
    %v1014 = vld.sshfl [vmem:[#allocation1] sm:$0xff pattern:$0x73625140]
    %v1015 = vld.sshfl [vmem:[#allocation1 + $0x8] sm:$0xff pattern:$0x73625140]
    %v1016 = vld.sshfl [vmem:[#allocation1 + $0x10] sm:$0xff pattern:$0x73625140]
    %1017 = vst [vmem:[%s1008] ss:$4 sm:$0xff] %v995
    %v1018 = vld.sshfl [vmem:[#allocation1 + $0x20] sm:$0xff pattern:$0x73625140]
    %v1019 = vld.sshfl [vmem:[#allocation1 + $0x28] sm:$0xff pattern:$0x73625140]
    %v1020 = vld.sshfl [vmem:[#allocation1 + $0x30] sm:$0xff pattern:$0x73625140]
    %1021 = vrot.lane.b32.xlu0 %v1005, 15
    %v1022 = vpop.permute.xlu0 %1021
    %1023 = vrot.lane.b32.xlu0 %v1006, 15
    %v1024 = vpop.permute.xlu0 %1023
    %1025 = vrot.lane.b32.xlu0 %v1007, 15
    %v1026 = vpop.permute.xlu0 %1025
    %1027 = vrot.lane.b32.xlu0 %v1010, 15
    %v1028 = vpop.permute.xlu0 %1027
    %1029 = vrot.lane.b32.xlu0 %v1011, 15
    %v1030 = vpop.permute.xlu0 %1029
    %1031 = vrot.lane.b32.xlu0 %v1012, 15
    %v1032 = vpop.permute.xlu0 %1031
    %1033 = vrot.lane.b32.xlu0 %v1014, 15
    %v1034 = vpop.permute.xlu0 %1033
    %1035 = vrot.lane.b32.xlu0 %v1015, 15
    %v1036 = vpop.permute.xlu0 %1035
    %1037 = vrot.lane.b32.xlu0 %v1016, 15
    %v1038 = vpop.permute.xlu0 %1037
    %1039 = vrot.lane.b32.xlu0 %v1018, 15
    %v1040 = vpop.permute.xlu0 %1039
    %1041 = vrot.lane.b32.xlu0 %v1019, 15
    %v1042 = vpop.permute.xlu0 %1041
    %1043 = vrot.lane.b32.xlu0 %v1020, 15
    %v1044 = vpop.permute.xlu0 %1043
    %v1045 = vsel %vm317, %v1022, %v1024
    %v1046 = vsel %vm317, %v1024, %v1026
    %v1047 = vsel %vm317, %v1028, %v1030
    %v1048 = vsel %vm317, %v1030, %v1032
    %v1049 = vsel %vm317, %v1034, %v1036
    %v1050 = vsel %vm317, %v1036, %v1038
    %v1051 = vsel %vm317, %v1040, %v1042
    %v1052 = vsel %vm317, %v1042, %v1044
    %v1061 = vsel %vm998, %v1045, 0.0
    %v1062 = vsel %vm999, %v1046, 0.0
    %v1063 = vsel %vm998, %v1047, 0.0
    %v1064 = vsel %vm999, %v1048, 0.0
    %v1065 = vsel %vm998, %v1049, 0.0
    %v1066 = vsel %vm999, %v1050, 0.0
    %v1067 = vsel %vm998, %v1051, 0.0
    %v1068 = vsel %vm999, %v1052, 0.0
    %s1069 = sld [smem:[#allocation9 + $0x2]]
    %v1070 = vstv %s1069
    %v1071 = vmul.f32 %v1070, %v1061
    %v1072 = vmul.f32 %v1070, %v1062
    %v1073 = vadd.f32 %v970, %v1071
    %v1074 = vadd.f32 %v971, %v1072
    %s1075 = sld [smem:[#allocation9 + $0x82]]
    %v1076 = vstv %s1075
    %v1077 = vmul.f32 %v1076, %v1061
    %v1078 = vmul.f32 %v1076, %v1062
    %v1079 = vadd.f32 %v990, %v1077
    %v1080 = vadd.f32 %v991, %v1078
    %s1081 = sld [smem:[#allocation9 + $0xb]]
    %v1082 = vstv %s1081
    %v1083 = vmul.f32 %v1082, %v1063
    %v1084 = vmul.f32 %v1082, %v1064
    %v1085 = vadd.f32 %v1073, %v1083
    %v1086 = vadd.f32 %v1074, %v1084
    %s1087 = sld [smem:[#allocation9 + $0x8b]]
    %v1088 = vstv %s1087
    %v1089 = vmul.f32 %v1088, %v1063
    %v1090 = vmul.f32 %v1088, %v1064
    %v1091 = vadd.f32 %v1079, %v1089
    %v1092 = vadd.f32 %v1080, %v1090
    %s1093 = sld [smem:[#allocation9 + $0x14]]
    %v1094 = vstv %s1093
    %v1095 = vmul.f32 %v1094, %v1065
    %v1096 = vmul.f32 %v1094, %v1066
    %v1097 = vadd.f32 %v1085, %v1095
    %v1098 = vadd.f32 %v1086, %v1096
    %s1099 = sld [smem:[#allocation9 + $0x94]]
    %v1100 = vstv %s1099
    %v1101 = vmul.f32 %v1100, %v1065
    %v1102 = vmul.f32 %v1100, %v1066
    %v1103 = vadd.f32 %v1091, %v1101
    %v1104 = vadd.f32 %v1092, %v1102
    %s1105 = sld [smem:[#allocation9 + $0x1d]]
    %v1106 = vstv %s1105
    %v1107 = vmul.f32 %v1106, %v1067
    %v1108 = vmul.f32 %v1106, %v1068
    %v1109 = vadd.f32 %v1097, %v1107
    %v1110 = vadd.f32 %v1098, %v1108
    %s1111 = sld [smem:[#allocation9 + $0x9d]]
    %v1112 = vstv %s1111
    %v1113 = vmul.f32 %v1112, %v1067
    %v1114 = vmul.f32 %v1112, %v1068
    %v1115 = vadd.f32 %v1103, %v1113
    %v1116 = vadd.f32 %v1104, %v1114
    %v1117 = vld [vmem:[#allocation3] sm:$0x3f]
    %v1118 = vld [vmem:[#allocation3 + $0x8] sm:$0x3f]
    %v1119 = vld [vmem:[#allocation3 + $0x10] sm:$0x3f]
    %v1120 = vld [vmem:[#allocation3 + $0x18] sm:$0x3f]
    %1125 = vst [vmem:[#allocation1] ss:$4 sm:$0xff] %v1117
    %v1126 = vld.sshfl [vmem:[#allocation1] sm:$0xff pattern:$0x73625140]
    %v1127 = vld.sshfl [vmem:[#allocation1 + $0x8] sm:$0xff pattern:$0x73625140]
    %v1128 = vld.sshfl [vmem:[#allocation1 + $0x10] sm:$0xff pattern:$0x73625140]
    %s1129 = scalar_lea.vmem [#allocation1], 32
    %1130 = vst [vmem:[%s1129] ss:$4 sm:$0xff] %v1118
    %v1131 = vld.sshfl [vmem:[#allocation1 + $0x20] sm:$0xff pattern:$0x73625140]
    %v1132 = vld.sshfl [vmem:[#allocation1 + $0x28] sm:$0xff pattern:$0x73625140]
    %v1133 = vld.sshfl [vmem:[#allocation1 + $0x30] sm:$0xff pattern:$0x73625140]
    %1134 = vst [vmem:[#allocation1] ss:$4 sm:$0xff] %v1119
    %v1135 = vld.sshfl [vmem:[#allocation1] sm:$0xff pattern:$0x73625140]
    %v1136 = vld.sshfl [vmem:[#allocation1 + $0x8] sm:$0xff pattern:$0x73625140]
    %v1137 = vld.sshfl [vmem:[#allocation1 + $0x10] sm:$0xff pattern:$0x73625140]
    %1138 = vst [vmem:[%s1129] ss:$4 sm:$0xff] %v1120
    %v1139 = vld.sshfl [vmem:[#allocation1 + $0x20] sm:$0xff pattern:$0x73625140]
    %v1140 = vld.sshfl [vmem:[#allocation1 + $0x28] sm:$0xff pattern:$0x73625140]
    %v1141 = vld.sshfl [vmem:[#allocation1 + $0x30] sm:$0xff pattern:$0x73625140]
    %1142 = vrot.lane.b32.xlu0 %v1126, 1
    %v1143 = vpop.permute.xlu0 %1142
    %1144 = vrot.lane.b32.xlu0 %v1127, 1
    %v1145 = vpop.permute.xlu0 %1144
    %1146 = vrot.lane.b32.xlu0 %v1128, 1
    %v1147 = vpop.permute.xlu0 %1146
    %1148 = vrot.lane.b32.xlu0 %v1131, 1
    %v1149 = vpop.permute.xlu0 %1148
    %1150 = vrot.lane.b32.xlu0 %v1132, 1
    %v1151 = vpop.permute.xlu0 %1150
    %1152 = vrot.lane.b32.xlu0 %v1133, 1
    %v1153 = vpop.permute.xlu0 %1152
    %1154 = vrot.lane.b32.xlu0 %v1135, 1
    %v1155 = vpop.permute.xlu0 %1154
    %1156 = vrot.lane.b32.xlu0 %v1136, 1
    %v1157 = vpop.permute.xlu0 %1156
    %1158 = vrot.lane.b32.xlu0 %v1137, 1
    %v1159 = vpop.permute.xlu0 %1158
    %1160 = vrot.lane.b32.xlu0 %v1139, 1
    %v1161 = vpop.permute.xlu0 %1160
    %1162 = vrot.lane.b32.xlu0 %v1140, 1
    %v1163 = vpop.permute.xlu0 %1162
    %1164 = vrot.lane.b32.xlu0 %v1141, 1
    %v1165 = vpop.permute.xlu0 %1164
    %v1166 = vsel %vm360, %v1143, %v1145
    %v1167 = vsel %vm360, %v1145, %v1147
    %v1168 = vsel %vm360, %v1149, %v1151
    %v1169 = vsel %vm360, %v1151, %v1153
    %v1170 = vsel %vm360, %v1155, %v1157
    %v1171 = vsel %vm360, %v1157, %v1159
    %v1172 = vsel %vm360, %v1161, %v1163
    %v1173 = vsel %vm360, %v1163, %v1165
    %v1182 = vsel %vm709, %v1166, 0.0
    %v1183 = vsel %vm710, %v1167, 0.0
    %v1184 = vsel %vm709, %v1168, 0.0
    %v1185 = vsel %vm710, %v1169, 0.0
    %v1186 = vsel %vm709, %v1170, 0.0
    %v1187 = vsel %vm710, %v1171, 0.0
    %v1188 = vsel %vm709, %v1172, 0.0
    %v1189 = vsel %vm710, %v1173, 0.0
    %s1190 = sld [smem:[#allocation9 + $0x3]]
    %v1191 = vstv %s1190
    %v1192 = vmul.f32 %v1191, %v1182
    %v1193 = vmul.f32 %v1191, %v1183
    %v1194 = vadd.f32 %v1109, %v1192
    %v1195 = vadd.f32 %v1110, %v1193
    %s1196 = sld [smem:[#allocation9 + $0x83]]
    %v1197 = vstv %s1196
    %v1198 = vmul.f32 %v1197, %v1182
    %v1199 = vmul.f32 %v1197, %v1183
    %v1200 = vadd.f32 %v1115, %v1198
    %v1201 = vadd.f32 %v1116, %v1199
    %s1202 = sld [smem:[#allocation9 + $0xc]]
    %v1203 = vstv %s1202
    %v1204 = vmul.f32 %v1203, %v1184
    %v1205 = vmul.f32 %v1203, %v1185
    %v1206 = vadd.f32 %v1194, %v1204
    %v1207 = vadd.f32 %v1195, %v1205
    %s1208 = sld [smem:[#allocation9 + $0x8c]]
    %v1209 = vstv %s1208
    %v1210 = vmul.f32 %v1209, %v1184
    %v1211 = vmul.f32 %v1209, %v1185
    %v1212 = vadd.f32 %v1200, %v1210
    %v1213 = vadd.f32 %v1201, %v1211
    %s1214 = sld [smem:[#allocation9 + $0x15]]
    %v1215 = vstv %s1214
    %v1216 = vmul.f32 %v1215, %v1186
    %v1217 = vmul.f32 %v1215, %v1187
    %v1218 = vadd.f32 %v1206, %v1216
    %v1219 = vadd.f32 %v1207, %v1217
    %s1220 = sld [smem:[#allocation9 + $0x95]]
    %v1221 = vstv %s1220
    %v1222 = vmul.f32 %v1221, %v1186
    %v1223 = vmul.f32 %v1221, %v1187
    %v1224 = vadd.f32 %v1212, %v1222
    %v1225 = vadd.f32 %v1213, %v1223
    %s1226 = sld [smem:[#allocation9 + $0x1e]]
    %v1227 = vstv %s1226
    %v1228 = vmul.f32 %v1227, %v1188
    %v1229 = vmul.f32 %v1227, %v1189
    %v1230 = vadd.f32 %v1218, %v1228
    %v1231 = vadd.f32 %v1219, %v1229
    %s1232 = sld [smem:[#allocation9 + $0x9e]]
    %v1233 = vstv %s1232
    %v1234 = vmul.f32 %v1233, %v1188
    %v1235 = vmul.f32 %v1233, %v1189
    %v1236 = vadd.f32 %v1224, %v1234
    %v1237 = vadd.f32 %v1225, %v1235
    %v1238 = vld [vmem:[#allocation3 + $0x2] sm:$0xf]
    %v1239 = vld [vmem:[#allocation3 + $0xa] sm:$0xf]
    %v1240 = vld [vmem:[#allocation3 + $0x12] sm:$0xf]
    %v1241 = vld [vmem:[#allocation3 + $0x1a] sm:$0xf]
    %s1242 = sld [smem:[#allocation9 + $0x4]]
    %v1243 = vstv %s1242
    %v1244 = vmul.f32 %v1243, %v1238
    %1246 = vst [vmem:[#allocation1] ss:$4 sm:$0xff] %v1244
    %v1247 = vld.sshfl [vmem:[#allocation1] sm:$0xff pattern:$0x73625140]
    %v1248 = vld.sshfl [vmem:[#allocation1 + $0x8] sm:$0xff pattern:$0x73625140]
    %v1251 = vadd.f32 %v1230, %v1247
    %v1252 = vadd.f32 %v1231, %v1248
    %s1253 = sld [smem:[#allocation9 + $0x84]]
    %v1254 = vstv %s1253
    %v1255 = vmul.f32 %v1254, %v1238
    %1257 = vst [vmem:[#allocation1] ss:$4 sm:$0xff] %v1255
    %v1258 = vld.sshfl [vmem:[#allocation1] sm:$0xff pattern:$0x73625140]
    %v1259 = vld.sshfl [vmem:[#allocation1 + $0x8] sm:$0xff pattern:$0x73625140]
    %v1262 = vadd.f32 %v1236, %v1258
    %v1263 = vadd.f32 %v1237, %v1259
    %s1264 = sld [smem:[#allocation9 + $0xd]]
    %v1265 = vstv %s1264
    %v1266 = vmul.f32 %v1265, %v1239
    %1268 = vst [vmem:[#allocation1] ss:$4 sm:$0xff] %v1266
    %v1269 = vld.sshfl [vmem:[#allocation1] sm:$0xff pattern:$0x73625140]
    %v1270 = vld.sshfl [vmem:[#allocation1 + $0x8] sm:$0xff pattern:$0x73625140]
    %v1273 = vadd.f32 %v1251, %v1269
    %v1274 = vadd.f32 %v1252, %v1270
    %s1275 = sld [smem:[#allocation9 + $0x8d]]
    %v1276 = vstv %s1275
    %v1277 = vmul.f32 %v1276, %v1239
    %1279 = vst [vmem:[#allocation1] ss:$4 sm:$0xff] %v1277
    %v1280 = vld.sshfl [vmem:[#allocation1] sm:$0xff pattern:$0x73625140]
    %v1281 = vld.sshfl [vmem:[#allocation1 + $0x8] sm:$0xff pattern:$0x73625140]
    %v1284 = vadd.f32 %v1262, %v1280
    %v1285 = vadd.f32 %v1263, %v1281
    %s1286 = sld [smem:[#allocation9 + $0x16]]
    %v1287 = vstv %s1286
    %v1288 = vmul.f32 %v1287, %v1240
    %1290 = vst [vmem:[#allocation1] ss:$4 sm:$0xff] %v1288
    %v1291 = vld.sshfl [vmem:[#allocation1] sm:$0xff pattern:$0x73625140]
    %v1292 = vld.sshfl [vmem:[#allocation1 + $0x8] sm:$0xff pattern:$0x73625140]
    %v1295 = vadd.f32 %v1273, %v1291
    %v1296 = vadd.f32 %v1274, %v1292
    %s1297 = sld [smem:[#allocation9 + $0x96]]
    %v1298 = vstv %s1297
    %v1299 = vmul.f32 %v1298, %v1240
    %1301 = vst [vmem:[#allocation1] ss:$4 sm:$0xff] %v1299
    %v1302 = vld.sshfl [vmem:[#allocation1] sm:$0xff pattern:$0x73625140]
    %v1303 = vld.sshfl [vmem:[#allocation1 + $0x8] sm:$0xff pattern:$0x73625140]
    %v1306 = vadd.f32 %v1284, %v1302
    %v1307 = vadd.f32 %v1285, %v1303
    %s1308 = sld [smem:[#allocation9 + $0x1f]]
    %v1309 = vstv %s1308
    %v1310 = vmul.f32 %v1309, %v1241
    %1312 = vst [vmem:[#allocation1] ss:$4 sm:$0xff] %v1310
    %v1313 = vld.sshfl [vmem:[#allocation1] sm:$0xff pattern:$0x73625140]
    %v1314 = vld.sshfl [vmem:[#allocation1 + $0x8] sm:$0xff pattern:$0x73625140]
    %v1317 = vadd.f32 %v1295, %v1313
    %v1318 = vadd.f32 %v1296, %v1314
    %s1319 = sld [smem:[#allocation9 + $0x9f]]
    %v1320 = vstv %s1319
    %v1321 = vmul.f32 %v1320, %v1241
    %1323 = vst [vmem:[#allocation1] ss:$4 sm:$0xff] %v1321
    %v1324 = vld.sshfl [vmem:[#allocation1] sm:$0xff pattern:$0x73625140]
    %v1325 = vld.sshfl [vmem:[#allocation1 + $0x8] sm:$0xff pattern:$0x73625140]
    %v1328 = vadd.f32 %v1306, %v1324
    %v1329 = vadd.f32 %v1307, %v1325
    %v1330 = vld [vmem:[#allocation3 + $0x2] sm:$0x3f]
    %v1331 = vld [vmem:[#allocation3 + $0xa] sm:$0x3f]
    %v1332 = vld [vmem:[#allocation3 + $0x12] sm:$0x3f]
    %v1333 = vld [vmem:[#allocation3 + $0x1a] sm:$0x3f]
    %1338 = vst [vmem:[#allocation1] ss:$4 sm:$0xff] %v1330
    %v1339 = vld.sshfl [vmem:[#allocation1] sm:$0xff pattern:$0x73625140]
    %v1340 = vld.sshfl [vmem:[#allocation1 + $0x8] sm:$0xff pattern:$0x73625140]
    %v1341 = vld.sshfl [vmem:[#allocation1 + $0x10] sm:$0xff pattern:$0x73625140]
    %s1342 = scalar_lea.vmem [#allocation1], 32
    %1343 = vst [vmem:[%s1342] ss:$4 sm:$0xff] %v1331
    %v1344 = vld.sshfl [vmem:[#allocation1 + $0x20] sm:$0xff pattern:$0x73625140]
    %v1345 = vld.sshfl [vmem:[#allocation1 + $0x28] sm:$0xff pattern:$0x73625140]
    %v1346 = vld.sshfl [vmem:[#allocation1 + $0x30] sm:$0xff pattern:$0x73625140]
    %1347 = vst [vmem:[#allocation1] ss:$4 sm:$0xff] %v1332
    %v1348 = vld.sshfl [vmem:[#allocation1] sm:$0xff pattern:$0x73625140]
    %v1349 = vld.sshfl [vmem:[#allocation1 + $0x8] sm:$0xff pattern:$0x73625140]
    %v1350 = vld.sshfl [vmem:[#allocation1 + $0x10] sm:$0xff pattern:$0x73625140]
    %1351 = vst [vmem:[%s1342] ss:$4 sm:$0xff] %v1333
    %v1352 = vld.sshfl [vmem:[#allocation1 + $0x20] sm:$0xff pattern:$0x73625140]
    %v1353 = vld.sshfl [vmem:[#allocation1 + $0x28] sm:$0xff pattern:$0x73625140]
    %v1354 = vld.sshfl [vmem:[#allocation1 + $0x30] sm:$0xff pattern:$0x73625140]
    %1355 = vrot.lane.b32.xlu0 %v1339, 127
    %v1356 = vpop.permute.xlu0 %1355
    %1357 = vrot.lane.b32.xlu0 %v1340, 127
    %v1358 = vpop.permute.xlu0 %1357
    %1359 = vrot.lane.b32.xlu0 %v1341, 127
    %v1360 = vpop.permute.xlu0 %1359
    %1361 = vrot.lane.b32.xlu0 %v1344, 127
    %v1362 = vpop.permute.xlu0 %1361
    %1363 = vrot.lane.b32.xlu0 %v1345, 127
    %v1364 = vpop.permute.xlu0 %1363
    %1365 = vrot.lane.b32.xlu0 %v1346, 127
    %v1366 = vpop.permute.xlu0 %1365
    %1367 = vrot.lane.b32.xlu0 %v1348, 127
    %v1368 = vpop.permute.xlu0 %1367
    %1369 = vrot.lane.b32.xlu0 %v1349, 127
    %v1370 = vpop.permute.xlu0 %1369
    %1371 = vrot.lane.b32.xlu0 %v1350, 127
    %v1372 = vpop.permute.xlu0 %1371
    %1373 = vrot.lane.b32.xlu0 %v1352, 127
    %v1374 = vpop.permute.xlu0 %1373
    %1375 = vrot.lane.b32.xlu0 %v1353, 127
    %v1376 = vpop.permute.xlu0 %1375
    %1377 = vrot.lane.b32.xlu0 %v1354, 127
    %v1378 = vpop.permute.xlu0 %1377
    %v1379 = vsel %vm448, %v1356, %v1358
    %v1380 = vsel %vm448, %v1358, %v1360
    %v1381 = vsel %vm448, %v1362, %v1364
    %v1382 = vsel %vm448, %v1364, %v1366
    %v1383 = vsel %vm448, %v1368, %v1370
    %v1384 = vsel %vm448, %v1370, %v1372
    %v1385 = vsel %vm448, %v1374, %v1376
    %v1386 = vsel %vm448, %v1376, %v1378
    %v1395 = vsel %vm998, %v1379, 0.0
    %v1396 = vsel %vm999, %v1380, 0.0
    %v1397 = vsel %vm998, %v1381, 0.0
    %v1398 = vsel %vm999, %v1382, 0.0
    %v1399 = vsel %vm998, %v1383, 0.0
    %v1400 = vsel %vm999, %v1384, 0.0
    %v1401 = vsel %vm998, %v1385, 0.0
    %v1402 = vsel %vm999, %v1386, 0.0
    %s1403 = sld [smem:[#allocation9 + $0x5]]
    %v1404 = vstv %s1403
    %v1405 = vmul.f32 %v1404, %v1395
    %v1406 = vmul.f32 %v1404, %v1396
    %v1407 = vadd.f32 %v1317, %v1405
    %v1408 = vadd.f32 %v1318, %v1406
    %s1409 = sld [smem:[#allocation9 + $0x85]]
    %v1410 = vstv %s1409
    %v1411 = vmul.f32 %v1410, %v1395
    %v1412 = vmul.f32 %v1410, %v1396
    %v1413 = vadd.f32 %v1328, %v1411
    %v1414 = vadd.f32 %v1329, %v1412
    %s1415 = sld [smem:[#allocation9 + $0xe]]
    %v1416 = vstv %s1415
    %v1417 = vmul.f32 %v1416, %v1397
    %v1418 = vmul.f32 %v1416, %v1398
    %v1419 = vadd.f32 %v1407, %v1417
    %v1420 = vadd.f32 %v1408, %v1418
    %s1421 = sld [smem:[#allocation9 + $0x8e]]
    %v1422 = vstv %s1421
    %v1423 = vmul.f32 %v1422, %v1397
    %v1424 = vmul.f32 %v1422, %v1398
    %v1425 = vadd.f32 %v1413, %v1423
    %v1426 = vadd.f32 %v1414, %v1424
    %s1427 = sld [smem:[#allocation9 + $0x17]]
    %v1428 = vstv %s1427
    %v1429 = vmul.f32 %v1428, %v1399
    %v1430 = vmul.f32 %v1428, %v1400
    %v1431 = vadd.f32 %v1419, %v1429
    %v1432 = vadd.f32 %v1420, %v1430
    %s1433 = sld [smem:[#allocation9 + $0x97]]
    %v1434 = vstv %s1433
    %v1435 = vmul.f32 %v1434, %v1399
    %v1436 = vmul.f32 %v1434, %v1400
    %v1437 = vadd.f32 %v1425, %v1435
    %v1438 = vadd.f32 %v1426, %v1436
    %s1439 = sld [smem:[#allocation9 + $0x20]]
    %v1440 = vstv %s1439
    %v1441 = vmul.f32 %v1440, %v1401
    %v1442 = vmul.f32 %v1440, %v1402
    %v1443 = vadd.f32 %v1431, %v1441
    %v1444 = vadd.f32 %v1432, %v1442
    %s1445 = sld [smem:[#allocation9 + $0xa0]]
    %v1446 = vstv %s1445
    %v1447 = vmul.f32 %v1446, %v1401
    %v1448 = vmul.f32 %v1446, %v1402
    %v1449 = vadd.f32 %v1437, %v1447
    %v1450 = vadd.f32 %v1438, %v1448
    %v1451 = vld [vmem:[#allocation3 + $0x2] sm:$0x3f]
    %v1452 = vld [vmem:[#allocation3 + $0xa] sm:$0x3f]
    %v1453 = vld [vmem:[#allocation3 + $0x12] sm:$0x3f]
    %v1454 = vld [vmem:[#allocation3 + $0x1a] sm:$0x3f]
    %1459 = vst [vmem:[#allocation1] ss:$4 sm:$0xff] %v1451
    %v1460 = vld.sshfl [vmem:[#allocation1] sm:$0xff pattern:$0x73625140]
    %v1461 = vld.sshfl [vmem:[#allocation1 + $0x8] sm:$0xff pattern:$0x73625140]
    %v1462 = vld.sshfl [vmem:[#allocation1 + $0x10] sm:$0xff pattern:$0x73625140]
    %s1463 = scalar_lea.vmem [#allocation1], 32
    %1464 = vst [vmem:[%s1463] ss:$4 sm:$0xff] %v1452
    %v1465 = vld.sshfl [vmem:[#allocation1 + $0x20] sm:$0xff pattern:$0x73625140]
    %v1466 = vld.sshfl [vmem:[#allocation1 + $0x28] sm:$0xff pattern:$0x73625140]
    %v1467 = vld.sshfl [vmem:[#allocation1 + $0x30] sm:$0xff pattern:$0x73625140]
    %1468 = vst [vmem:[#allocation1] ss:$4 sm:$0xff] %v1453
    %v1469 = vld.sshfl [vmem:[#allocation1] sm:$0xff pattern:$0x73625140]
    %v1470 = vld.sshfl [vmem:[#allocation1 + $0x8] sm:$0xff pattern:$0x73625140]
    %v1471 = vld.sshfl [vmem:[#allocation1 + $0x10] sm:$0xff pattern:$0x73625140]
    %1472 = vst [vmem:[%s1463] ss:$4 sm:$0xff] %v1454
    %v1473 = vld.sshfl [vmem:[#allocation1 + $0x20] sm:$0xff pattern:$0x73625140]
    %v1474 = vld.sshfl [vmem:[#allocation1 + $0x28] sm:$0xff pattern:$0x73625140]
    %v1475 = vld.sshfl [vmem:[#allocation1 + $0x30] sm:$0xff pattern:$0x73625140]
    %1476 = vrot.lane.b32.xlu0 %v1460, 113
    %v1477 = vpop.permute.xlu0 %1476
    %1478 = vrot.lane.b32.xlu0 %v1461, 113
    %v1479 = vpop.permute.xlu0 %1478
    %1480 = vrot.lane.b32.xlu0 %v1462, 113
    %v1481 = vpop.permute.xlu0 %1480
    %1482 = vrot.lane.b32.xlu0 %v1465, 113
    %v1483 = vpop.permute.xlu0 %1482
    %1484 = vrot.lane.b32.xlu0 %v1466, 113
    %v1485 = vpop.permute.xlu0 %1484
    %1486 = vrot.lane.b32.xlu0 %v1467, 113
    %v1487 = vpop.permute.xlu0 %1486
    %1488 = vrot.lane.b32.xlu0 %v1469, 113
    %v1489 = vpop.permute.xlu0 %1488
    %1490 = vrot.lane.b32.xlu0 %v1470, 113
    %v1491 = vpop.permute.xlu0 %1490
    %1492 = vrot.lane.b32.xlu0 %v1471, 113
    %v1493 = vpop.permute.xlu0 %1492
    %1494 = vrot.lane.b32.xlu0 %v1473, 113
    %v1495 = vpop.permute.xlu0 %1494
    %1496 = vrot.lane.b32.xlu0 %v1474, 113
    %v1497 = vpop.permute.xlu0 %1496
    %1498 = vrot.lane.b32.xlu0 %v1475, 113
    %v1499 = vpop.permute.xlu0 %1498
    %v1500 = vsel %vm491, %v1477, %v1479
    %v1501 = vsel %vm491, %v1479, %v1481
    %v1502 = vsel %vm491, %v1483, %v1485
    %v1503 = vsel %vm491, %v1485, %v1487
    %v1504 = vsel %vm491, %v1489, %v1491
    %v1505 = vsel %vm491, %v1491, %v1493
    %v1506 = vsel %vm491, %v1495, %v1497
    %v1507 = vsel %vm491, %v1497, %v1499
    %v1516 = vsel %vm709, %v1500, 0.0
    %v1517 = vsel %vm710, %v1501, 0.0
    %v1518 = vsel %vm709, %v1502, 0.0
    %v1519 = vsel %vm710, %v1503, 0.0
    %v1520 = vsel %vm709, %v1504, 0.0
    %v1521 = vsel %vm710, %v1505, 0.0
    %v1522 = vsel %vm709, %v1506, 0.0
    %v1523 = vsel %vm710, %v1507, 0.0
    %s1524 = sld [smem:[#allocation9 + $0x6]]
    %v1525 = vstv %s1524
    %v1526 = vmul.f32 %v1525, %v1516
    %v1527 = vmul.f32 %v1525, %v1517
    %v1528 = vadd.f32 %v1443, %v1526
    %v1529 = vadd.f32 %v1444, %v1527
    %s1530 = sld [smem:[#allocation9 + $0x86]]
    %v1531 = vstv %s1530
    %v1532 = vmul.f32 %v1531, %v1516
    %v1533 = vmul.f32 %v1531, %v1517
    %v1534 = vadd.f32 %v1449, %v1532
    %v1535 = vadd.f32 %v1450, %v1533
    %s1536 = sld [smem:[#allocation9 + $0xf]]
    %v1537 = vstv %s1536
    %v1538 = vmul.f32 %v1537, %v1518
    %v1539 = vmul.f32 %v1537, %v1519
    %v1540 = vadd.f32 %v1528, %v1538
    %v1541 = vadd.f32 %v1529, %v1539
    %s1542 = sld [smem:[#allocation9 + $0x8f]]
    %v1543 = vstv %s1542
    %v1544 = vmul.f32 %v1543, %v1518
    %v1545 = vmul.f32 %v1543, %v1519
    %v1546 = vadd.f32 %v1534, %v1544
    %v1547 = vadd.f32 %v1535, %v1545
    %s1548 = sld [smem:[#allocation9 + $0x18]]
    %v1549 = vstv %s1548
    %v1550 = vmul.f32 %v1549, %v1520
    %v1551 = vmul.f32 %v1549, %v1521
    %v1552 = vadd.f32 %v1540, %v1550
    %v1553 = vadd.f32 %v1541, %v1551
    %s1554 = sld [smem:[#allocation9 + $0x98]]
    %v1555 = vstv %s1554
    %v1556 = vmul.f32 %v1555, %v1520
    %v1557 = vmul.f32 %v1555, %v1521
    %v1558 = vadd.f32 %v1546, %v1556
    %v1559 = vadd.f32 %v1547, %v1557
    %s1560 = sld [smem:[#allocation9 + $0x21]]
    %v1561 = vstv %s1560
    %v1562 = vmul.f32 %v1561, %v1522
    %v1563 = vmul.f32 %v1561, %v1523
    %v1564 = vadd.f32 %v1552, %v1562
    %v1565 = vadd.f32 %v1553, %v1563
    %s1566 = sld [smem:[#allocation9 + $0xa1]]
    %v1567 = vstv %s1566
    %v1568 = vmul.f32 %v1567, %v1522
    %v1569 = vmul.f32 %v1567, %v1523
    %v1570 = vadd.f32 %v1558, %v1568
    %v1571 = vadd.f32 %v1559, %v1569
    %v1572 = vld [vmem:[#allocation3 + $0x2] sm:$0x3f]
    %v1573 = vld [vmem:[#allocation3 + $0xa] sm:$0x3f]
    %v1574 = vld [vmem:[#allocation3 + $0x12] sm:$0x3f]
    %v1575 = vld [vmem:[#allocation3 + $0x1a] sm:$0x3f]
    %s1576 = sld [smem:[#allocation9 + $0x7]]
    %v1577 = vstv %s1576
    %v1578 = vmul.f32 %v1577, %v1572
    %1580 = vst [vmem:[#allocation1] ss:$4 sm:$0xff] %v1578
    %v1581 = vld.sshfl [vmem:[#allocation1] sm:$0xff pattern:$0x73625140]
    %v1582 = vld.sshfl [vmem:[#allocation1 + $0x8] sm:$0xff pattern:$0x73625140]
    %v1583 = vld.sshfl [vmem:[#allocation1 + $0x10] sm:$0xff pattern:$0x73625140]
    %1584 = vrot.lane.b32.xlu0 %v1581, 112
    %v1585 = vpop.permute.xlu0 %1584
    %1586 = vrot.lane.b32.xlu0 %v1582, 112
    %v1587 = vpop.permute.xlu0 %1586
    %1588 = vrot.lane.b32.xlu0 %v1583, 112
    %v1589 = vpop.permute.xlu0 %1588
    %v1590 = vsel %vm537, %v1585, %v1587
    %v1591 = vsel %vm537, %v1587, %v1589
    %v1594 = vadd.f32 %v1564, %v1590
    %v1595 = vadd.f32 %v1565, %v1591
    %s1596 = sld [smem:[#allocation9 + $0x87]]
    %v1597 = vstv %s1596
    %v1598 = vmul.f32 %v1597, %v1572
    %1600 = vst [vmem:[#allocation1] ss:$4 sm:$0xff] %v1598
    %v1601 = vld.sshfl [vmem:[#allocation1] sm:$0xff pattern:$0x73625140]
    %v1602 = vld.sshfl [vmem:[#allocation1 + $0x8] sm:$0xff pattern:$0x73625140]
    %v1603 = vld.sshfl [vmem:[#allocation1 + $0x10] sm:$0xff pattern:$0x73625140]
    %1604 = vrot.lane.b32.xlu0 %v1601, 112
    %v1605 = vpop.permute.xlu0 %1604
    %1606 = vrot.lane.b32.xlu0 %v1602, 112
    %v1607 = vpop.permute.xlu0 %1606
    %1608 = vrot.lane.b32.xlu0 %v1603, 112
    %v1609 = vpop.permute.xlu0 %1608
    %v1610 = vsel %vm537, %v1605, %v1607
    %v1611 = vsel %vm537, %v1607, %v1609
    %v1614 = vadd.f32 %v1570, %v1610
    %v1615 = vadd.f32 %v1571, %v1611
    %s1616 = sld [smem:[#allocation9 + $0x10]]
    %v1617 = vstv %s1616
    %v1618 = vmul.f32 %v1617, %v1573
    %1620 = vst [vmem:[#allocation1] ss:$4 sm:$0xff] %v1618
    %v1621 = vld.sshfl [vmem:[#allocation1] sm:$0xff pattern:$0x73625140]
    %v1622 = vld.sshfl [vmem:[#allocation1 + $0x8] sm:$0xff pattern:$0x73625140]
    %v1623 = vld.sshfl [vmem:[#allocation1 + $0x10] sm:$0xff pattern:$0x73625140]
    %1624 = vrot.lane.b32.xlu0 %v1621, 112
    %v1625 = vpop.permute.xlu0 %1624
    %1626 = vrot.lane.b32.xlu0 %v1622, 112
    %v1627 = vpop.permute.xlu0 %1626
    %1628 = vrot.lane.b32.xlu0 %v1623, 112
    %v1629 = vpop.permute.xlu0 %1628
    %v1630 = vsel %vm537, %v1625, %v1627
    %v1631 = vsel %vm537, %v1627, %v1629
    %v1634 = vadd.f32 %v1594, %v1630
    %v1635 = vadd.f32 %v1595, %v1631
    %s1636 = sld [smem:[#allocation9 + $0x90]]
    %v1637 = vstv %s1636
    %v1638 = vmul.f32 %v1637, %v1573
    %1640 = vst [vmem:[#allocation1] ss:$4 sm:$0xff] %v1638
    %v1641 = vld.sshfl [vmem:[#allocation1] sm:$0xff pattern:$0x73625140]
    %v1642 = vld.sshfl [vmem:[#allocation1 + $0x8] sm:$0xff pattern:$0x73625140]
    %v1643 = vld.sshfl [vmem:[#allocation1 + $0x10] sm:$0xff pattern:$0x73625140]
    %1644 = vrot.lane.b32.xlu0 %v1641, 112
    %v1645 = vpop.permute.xlu0 %1644
    %1646 = vrot.lane.b32.xlu0 %v1642, 112
    %v1647 = vpop.permute.xlu0 %1646
    %1648 = vrot.lane.b32.xlu0 %v1643, 112
    %v1649 = vpop.permute.xlu0 %1648
    %v1650 = vsel %vm537, %v1645, %v1647
    %v1651 = vsel %vm537, %v1647, %v1649
    %v1654 = vadd.f32 %v1614, %v1650
    %v1655 = vadd.f32 %v1615, %v1651
    %s1656 = sld [smem:[#allocation9 + $0x19]]
    %v1657 = vstv %s1656
    %v1658 = vmul.f32 %v1657, %v1574
    %1660 = vst [vmem:[#allocation1] ss:$4 sm:$0xff] %v1658
    %v1661 = vld.sshfl [vmem:[#allocation1] sm:$0xff pattern:$0x73625140]
    %v1662 = vld.sshfl [vmem:[#allocation1 + $0x8] sm:$0xff pattern:$0x73625140]
    %v1663 = vld.sshfl [vmem:[#allocation1 + $0x10] sm:$0xff pattern:$0x73625140]
    %1664 = vrot.lane.b32.xlu0 %v1661, 112
    %v1665 = vpop.permute.xlu0 %1664
    %1666 = vrot.lane.b32.xlu0 %v1662, 112
    %v1667 = vpop.permute.xlu0 %1666
    %1668 = vrot.lane.b32.xlu0 %v1663, 112
    %v1669 = vpop.permute.xlu0 %1668
    %v1670 = vsel %vm537, %v1665, %v1667
    %v1671 = vsel %vm537, %v1667, %v1669
    %v1674 = vadd.f32 %v1634, %v1670
    %v1675 = vadd.f32 %v1635, %v1671
    %s1676 = sld [smem:[#allocation9 + $0x99]]
    %v1677 = vstv %s1676
    %v1678 = vmul.f32 %v1677, %v1574
    %1680 = vst [vmem:[#allocation1] ss:$4 sm:$0xff] %v1678
    %v1681 = vld.sshfl [vmem:[#allocation1] sm:$0xff pattern:$0x73625140]
    %v1682 = vld.sshfl [vmem:[#allocation1 + $0x8] sm:$0xff pattern:$0x73625140]
    %v1683 = vld.sshfl [vmem:[#allocation1 + $0x10] sm:$0xff pattern:$0x73625140]
    %1684 = vrot.lane.b32.xlu0 %v1681, 112
    %v1685 = vpop.permute.xlu0 %1684
    %1686 = vrot.lane.b32.xlu0 %v1682, 112
    %v1687 = vpop.permute.xlu0 %1686
    %1688 = vrot.lane.b32.xlu0 %v1683, 112
    %v1689 = vpop.permute.xlu0 %1688
    %v1690 = vsel %vm537, %v1685, %v1687
    %v1691 = vsel %vm537, %v1687, %v1689
    %v1694 = vadd.f32 %v1654, %v1690
    %v1695 = vadd.f32 %v1655, %v1691
    %s1696 = sld [smem:[#allocation9 + $0x22]]
    %v1697 = vstv %s1696
    %v1698 = vmul.f32 %v1697, %v1575
    %1700 = vst [vmem:[#allocation1] ss:$4 sm:$0xff] %v1698
    %v1701 = vld.sshfl [vmem:[#allocation1] sm:$0xff pattern:$0x73625140]
    %v1702 = vld.sshfl [vmem:[#allocation1 + $0x8] sm:$0xff pattern:$0x73625140]
    %v1703 = vld.sshfl [vmem:[#allocation1 + $0x10] sm:$0xff pattern:$0x73625140]
    %1704 = vrot.lane.b32.xlu0 %v1701, 112
    %v1705 = vpop.permute.xlu0 %1704
    %1706 = vrot.lane.b32.xlu0 %v1702, 112
    %v1707 = vpop.permute.xlu0 %1706
    %1708 = vrot.lane.b32.xlu0 %v1703, 112
    %v1709 = vpop.permute.xlu0 %1708
    %v1710 = vsel %vm537, %v1705, %v1707
    %v1711 = vsel %vm537, %v1707, %v1709
    %v1714 = vadd.f32 %v1674, %v1710
    %v1715 = vadd.f32 %v1675, %v1711
    %s1716 = sld [smem:[#allocation9 + $0xa2]]
    %v1717 = vstv %s1716
    %v1718 = vmul.f32 %v1717, %v1575
    %1720 = vst [vmem:[#allocation1] ss:$4 sm:$0xff] %v1718
    %v1721 = vld.sshfl [vmem:[#allocation1] sm:$0xff pattern:$0x73625140]
    %v1722 = vld.sshfl [vmem:[#allocation1 + $0x8] sm:$0xff pattern:$0x73625140]
    %v1723 = vld.sshfl [vmem:[#allocation1 + $0x10] sm:$0xff pattern:$0x73625140]
    %1724 = vrot.lane.b32.xlu0 %v1721, 112
    %v1725 = vpop.permute.xlu0 %1724
    %1726 = vrot.lane.b32.xlu0 %v1722, 112
    %v1727 = vpop.permute.xlu0 %1726
    %1728 = vrot.lane.b32.xlu0 %v1723, 112
    %v1729 = vpop.permute.xlu0 %1728
    %v1730 = vsel %vm537, %v1725, %v1727
    %v1731 = vsel %vm537, %v1727, %v1729
    %v1734 = vadd.f32 %v1694, %v1730
    %v1735 = vadd.f32 %v1695, %v1731
    %v1736 = vld [vmem:[#allocation3 + $0x2] sm:$0x3f]
    %v1737 = vld [vmem:[#allocation3 + $0xa] sm:$0x3f]
    %v1738 = vld [vmem:[#allocation3 + $0x12] sm:$0x3f]
    %v1739 = vld [vmem:[#allocation3 + $0x1a] sm:$0x3f]
    %1744 = vst [vmem:[#allocation1] ss:$4 sm:$0xff] %v1736
    %v1745 = vld.sshfl [vmem:[#allocation1] sm:$0xff pattern:$0x73625140]
    %v1746 = vld.sshfl [vmem:[#allocation1 + $0x8] sm:$0xff pattern:$0x73625140]
    %v1747 = vld.sshfl [vmem:[#allocation1 + $0x10] sm:$0xff pattern:$0x73625140]
    %s1748 = scalar_lea.vmem [#allocation1], 32
    %1749 = vst [vmem:[%s1748] ss:$4 sm:$0xff] %v1737
    %v1750 = vld.sshfl [vmem:[#allocation1 + $0x20] sm:$0xff pattern:$0x73625140]
    %v1751 = vld.sshfl [vmem:[#allocation1 + $0x28] sm:$0xff pattern:$0x73625140]
    %v1752 = vld.sshfl [vmem:[#allocation1 + $0x30] sm:$0xff pattern:$0x73625140]
    %1753 = vst [vmem:[#allocation1] ss:$4 sm:$0xff] %v1738
    %v1754 = vld.sshfl [vmem:[#allocation1] sm:$0xff pattern:$0x73625140]
    %v1755 = vld.sshfl [vmem:[#allocation1 + $0x8] sm:$0xff pattern:$0x73625140]
    %v1756 = vld.sshfl [vmem:[#allocation1 + $0x10] sm:$0xff pattern:$0x73625140]
    %1757 = vst [vmem:[%s1748] ss:$4 sm:$0xff] %v1739
    %v1758 = vld.sshfl [vmem:[#allocation1 + $0x20] sm:$0xff pattern:$0x73625140]
    %v1759 = vld.sshfl [vmem:[#allocation1 + $0x28] sm:$0xff pattern:$0x73625140]
    %v1760 = vld.sshfl [vmem:[#allocation1 + $0x30] sm:$0xff pattern:$0x73625140]
    %1761 = vrot.lane.b32.xlu0 %v1745, 111
    %v1762 = vpop.permute.xlu0 %1761
    %1763 = vrot.lane.b32.xlu0 %v1746, 111
    %v1764 = vpop.permute.xlu0 %1763
    %1765 = vrot.lane.b32.xlu0 %v1747, 111
    %v1766 = vpop.permute.xlu0 %1765
    %1767 = vrot.lane.b32.xlu0 %v1750, 111
    %v1768 = vpop.permute.xlu0 %1767
    %1769 = vrot.lane.b32.xlu0 %v1751, 111
    %v1770 = vpop.permute.xlu0 %1769
    %1771 = vrot.lane.b32.xlu0 %v1752, 111
    %v1772 = vpop.permute.xlu0 %1771
    %1773 = vrot.lane.b32.xlu0 %v1754, 111
    %v1774 = vpop.permute.xlu0 %1773
    %1775 = vrot.lane.b32.xlu0 %v1755, 111
    %v1776 = vpop.permute.xlu0 %1775
    %1777 = vrot.lane.b32.xlu0 %v1756, 111
    %v1778 = vpop.permute.xlu0 %1777
    %1779 = vrot.lane.b32.xlu0 %v1758, 111
    %v1780 = vpop.permute.xlu0 %1779
    %1781 = vrot.lane.b32.xlu0 %v1759, 111
    %v1782 = vpop.permute.xlu0 %1781
    %1783 = vrot.lane.b32.xlu0 %v1760, 111
    %v1784 = vpop.permute.xlu0 %1783
    %v1785 = vsel %vm616, %v1762, %v1764
    %v1786 = vsel %vm616, %v1764, %v1766
    %v1787 = vsel %vm616, %v1768, %v1770
    %v1788 = vsel %vm616, %v1770, %v1772
    %v1789 = vsel %vm616, %v1774, %v1776
    %v1790 = vsel %vm616, %v1776, %v1778
    %v1791 = vsel %vm616, %v1780, %v1782
    %v1792 = vsel %vm616, %v1782, %v1784
    %v1801 = vsel %vm998, %v1785, 0.0
    %v1802 = vsel %vm999, %v1786, 0.0
    %v1803 = vsel %vm998, %v1787, 0.0
    %v1804 = vsel %vm999, %v1788, 0.0
    %v1805 = vsel %vm998, %v1789, 0.0
    %v1806 = vsel %vm999, %v1790, 0.0
    %v1807 = vsel %vm998, %v1791, 0.0
    %v1808 = vsel %vm999, %v1792, 0.0
    %s1809 = sld [smem:[#allocation9 + $0x8]]
    %v1810 = vstv %s1809
    %v1811 = vmul.f32 %v1810, %v1801
    %v1812 = vmul.f32 %v1810, %v1802
    %v1813 = vadd.f32 %v1714, %v1811
    %v1814 = vadd.f32 %v1715, %v1812
    %s1815 = sld [smem:[#allocation9 + $0x88]]
    %v1816 = vstv %s1815
    %v1817 = vmul.f32 %v1816, %v1801
    %v1818 = vmul.f32 %v1816, %v1802
    %v1819 = vadd.f32 %v1734, %v1817
    %v1820 = vadd.f32 %v1735, %v1818
    %s1821 = sld [smem:[#allocation9 + $0x11]]
    %v1822 = vstv %s1821
    %v1823 = vmul.f32 %v1822, %v1803
    %v1824 = vmul.f32 %v1822, %v1804
    %v1825 = vadd.f32 %v1813, %v1823
    %v1826 = vadd.f32 %v1814, %v1824
    %s1827 = sld [smem:[#allocation9 + $0x91]]
    %v1828 = vstv %s1827
    %v1829 = vmul.f32 %v1828, %v1803
    %v1830 = vmul.f32 %v1828, %v1804
    %v1831 = vadd.f32 %v1819, %v1829
    %v1832 = vadd.f32 %v1820, %v1830
    %s1833 = sld [smem:[#allocation9 + $0x1a]]
    %v1834 = vstv %s1833
    %v1835 = vmul.f32 %v1834, %v1805
    %v1836 = vmul.f32 %v1834, %v1806
    %v1837 = vadd.f32 %v1825, %v1835
    %v1838 = vadd.f32 %v1826, %v1836
    %s1839 = sld [smem:[#allocation9 + $0x9a]]
    %v1840 = vstv %s1839
    %v1841 = vmul.f32 %v1840, %v1805
    %v1842 = vmul.f32 %v1840, %v1806
    %v1843 = vadd.f32 %v1831, %v1841
    %v1844 = vadd.f32 %v1832, %v1842
    %s1845 = sld [smem:[#allocation9 + $0x23]]
    %v1846 = vstv %s1845
    %v1847 = vmul.f32 %v1846, %v1807
    %v1848 = vmul.f32 %v1846, %v1808
    %v1849 = vadd.f32 %v1837, %v1847
    %v1850 = vadd.f32 %v1838, %v1848
    %s1851 = sld [smem:[#allocation9 + $0xa3]]
    %v1852 = vstv %s1851
    %v1853 = vmul.f32 %v1852, %v1807
    %v1854 = vmul.f32 %v1852, %v1808
    %v1855 = vadd.f32 %v1843, %v1853
    %v1856 = vadd.f32 %v1844, %v1854
    %s1857 = sld [smem:[#allocation10]]
    %v1858 = vstv %s1857
    %v1859 = vadd.f32 %v1849, %v1858
    %v1860 = vadd.f32 %v1850, %v1858
    %v1861 = vmax.f32 %v1859, 0.0
    %v1862 = vmax.f32 %v1860, 0.0
    %s1863 = sld [smem:[#allocation10 + $0x1]]
    %v1864 = vstv %s1863
    %v1865 = vadd.f32 %v1855, %v1864
    %v1866 = vadd.f32 %v1856, %v1864
    %v1867 = vmax.f32 %v1865, 0.0
    %v1868 = vmax.f32 %v1866, 0.0
    %v1869 = vld [vmem:[%s1] sm:$0x3]
    %v1870 = vld [vmem:[%s6] sm:$0xf]
    %v1871 = vld [vmem:[%s7] sm:$0x1]
    %v1873 = vperm.slane %v1871, 0
    %vm1875 = vcmask 31744
    %v1877 = vsel %vm1875, %v1869, 0
    %vm1879 = vcmask 1043456
    %v1881 = vsel %vm1879, %v1870, 0
    %1883 = vmatpush.msra.mxu0 0.0
    %1884 = vmatpush.msra.mxu0 0.0
    %1885 = vmatpush.msra.mxu0 0.0
    %1886 = vmatpush.msra.mxu0 0.0
    %1887 = vmatpush.msra.mxu0 0.0
    %1888 = vmatpush.msra.mxu0 0.0
    %1889 = vmatpush.msra.mxu0 0.0
    %1890 = vmatpush.msra.mxu0 0.0
    %1891 = vmatpush.msra.mxu0 0.0
    %1892 = vmatpush.msra.mxu0 0.0
    %1893 = vmatpush.msra.mxu0 0.0
    %1894 = vmatpush.msra.mxu0 0.0
    %1895 = vmatpush.msra.mxu0 0.0
    %1896 = vmatpush.msra.mxu0 0.0
    %1897 = vmatpush.msra.mxu0 0.0
    %1898 = vmatpush.msra.mxu0 %v1881
    %1899 = vmatmul.f32.gmra.mxu0 %v1877
    %v1900 = vpop.f32.mrf.mxu0
    %v1901 = vadd.f32 %v1873, %v1900
    %1902 = vdwg.mxu0
    %v1903 = vmax.f32 %v1901, 0.0
    %v1904 = vpack.c.bf16 %v1861, %v1861
    %v1905 = vpack.c.bf16 %v1862, %v1862
    %v1906 = vld [vmem:[%s8] sm:$0xff]
    %v1907 = vld [vmem:[%s8 + $0x8] sm:$0xff]
    %v1908 = vld [vmem:[%s8 + $0x10] sm:$0xff]
    %v1909 = vld [vmem:[%s8 + $0x18] sm:$0xff]
    %v1910 = vld [vmem:[%s8 + $0x20] sm:$0xff]
    %v1911 = vld [vmem:[%s8 + $0x28] sm:$0xff]
    %v1912 = vld [vmem:[%s8 + $0x30] sm:$0xff]
    %v1913 = vld [vmem:[%s8 + $0x38] sm:$0xff]
    %v1914 = vld [vmem:[%s8 + $0x40] sm:$0xff]
    %v1915 = vld [vmem:[%s8 + $0x48] sm:$0xff]
    %v1916 = vld [vmem:[%s8 + $0x50] sm:$0xff]
    %v1917 = vld [vmem:[%s8 + $0x58] sm:$0xff]
    %v1918 = vld [vmem:[%s8 + $0x60] sm:$0xff]
    %v1919 = vld [vmem:[%s8 + $0x68] sm:$0xff]
    %v1920 = vld [vmem:[%s8 + $0x70] sm:$0xff]
    %v1921 = vld [vmem:[%s8 + $0x78] sm:$0xff]
    %v1922 = vld [vmem:[%s8 + $0x80] sm:$0xff]
    %v1923 = vld [vmem:[%s8 + $0x88] sm:$0xff]
    %v1924 = vld [vmem:[%s8 + $0x90] sm:$0xff]
    %v1925 = vld [vmem:[%s8 + $0x98] sm:$0xff]
    %v1926 = vld [vmem:[%s8 + $0xa0] sm:$0xff]
    %v1927 = vld [vmem:[%s8 + $0xa8] sm:$0xff]
    %v1928 = vld [vmem:[%s8 + $0xb0] sm:$0xff]
    %v1929 = vld [vmem:[%s8 + $0xb8] sm:$0xff]
    %v1930 = vld [vmem:[%s8 + $0xc0] sm:$0xff]
    %v1931 = vld [vmem:[%s8 + $0xc8] sm:$0xff]
    %v1932 = vld [vmem:[%s8 + $0xd0] sm:$0xff]
    %v1933 = vld [vmem:[%s8 + $0xd8] sm:$0xff]
    %v1934 = vld [vmem:[%s8 + $0xe0] sm:$0xff]
    %v1935 = vld [vmem:[%s8 + $0xe8] sm:$0xff]
    %v1936 = vld [vmem:[%s8 + $0xf0] sm:$0xff]
    %v1937 = vld [vmem:[%s8 + $0xf8] sm:$0xff]
    %v1938 = vld [vmem:[%s8 + $0x100] sm:$0xff]
    %v1939 = vld [vmem:[%s8 + $0x108] sm:$0xff]
    %v1940 = vld [vmem:[%s8 + $0x110] sm:$0xff]
    %v1941 = vld [vmem:[%s8 + $0x118] sm:$0xff]
    %v1942 = vld [vmem:[%s8 + $0x120] sm:$0xff]
    %v1943 = vld [vmem:[%s8 + $0x128] sm:$0xff]
    %v1944 = vld [vmem:[%s8 + $0x130] sm:$0xff]
    %v1945 = vld [vmem:[%s8 + $0x138] sm:$0xff]
    %v1946 = vld [vmem:[%s8 + $0x140] sm:$0xff]
    %v1947 = vld [vmem:[%s8 + $0x148] sm:$0xff]
    %v1948 = vld [vmem:[%s8 + $0x150] sm:$0xff]
    %v1949 = vld [vmem:[%s8 + $0x158] sm:$0xff]
    %v1950 = vld [vmem:[%s8 + $0x160] sm:$0xff]
    %v1951 = vld [vmem:[%s8 + $0x168] sm:$0xff]
    %v1952 = vld [vmem:[%s8 + $0x170] sm:$0xff]
    %v1953 = vld [vmem:[%s8 + $0x178] sm:$0xff]
    %v1954 = vld [vmem:[%s8 + $0x180] sm:$0xff]
    %v1955 = vld [vmem:[%s8 + $0x188] sm:$0xff]
    %v1956 = vld [vmem:[%s8 + $0x190] sm:$0xff]
    %v1957 = vld [vmem:[%s8 + $0x198] sm:$0xff]
    %v1958 = vld [vmem:[%s8 + $0x1a0] sm:$0xff]
    %v1959 = vld [vmem:[%s8 + $0x1a8] sm:$0xff]
    %v1960 = vld [vmem:[%s8 + $0x1b0] sm:$0xff]
    %v1961 = vld [vmem:[%s8 + $0x1b8] sm:$0xff]
    %v1962 = vld [vmem:[%s8 + $0x1c0] sm:$0xff]
    %v1963 = vld [vmem:[%s8 + $0x1c8] sm:$0xff]
    %v1964 = vld [vmem:[%s8 + $0x1d0] sm:$0xff]
    %v1965 = vld [vmem:[%s8 + $0x1d8] sm:$0xff]
    %v1966 = vld [vmem:[%s8 + $0x1e0] sm:$0xff]
    %v1967 = vld [vmem:[%s8 + $0x1e8] sm:$0xff]
    %v1968 = vld [vmem:[%s8 + $0x1f0] sm:$0xff]
    %v1969 = vld [vmem:[%s8 + $0x1f8] sm:$0xff]
    %v1970 = vunpack.c.0.s8 %v1906
    %v1971 = vunpack.c.0.s8 %v1907
    %v1972 = vunpack.c.0.s8 %v1908
    %v1973 = vunpack.c.0.s8 %v1909
    %v1974 = vunpack.c.0.s8 %v1910
    %v1975 = vunpack.c.0.s8 %v1911
    %v1976 = vunpack.c.0.s8 %v1912
    %v1977 = vunpack.c.0.s8 %v1913
    %v1978 = vunpack.c.1.s8 %v1906
    %v1979 = vunpack.c.1.s8 %v1907
    %v1980 = vunpack.c.1.s8 %v1908
    %v1981 = vunpack.c.1.s8 %v1909
    %v1982 = vunpack.c.1.s8 %v1910
    %v1983 = vunpack.c.1.s8 %v1911
    %v1984 = vunpack.c.1.s8 %v1912
    %v1985 = vunpack.c.1.s8 %v1913
    %v1986 = vunpack.c.2.s8 %v1906
    %v1987 = vunpack.c.2.s8 %v1907
    %v1988 = vunpack.c.2.s8 %v1908
    %v1989 = vunpack.c.2.s8 %v1909
    %v1990 = vunpack.c.2.s8 %v1910
    %v1991 = vunpack.c.2.s8 %v1911
    %v1992 = vunpack.c.2.s8 %v1912
    %v1993 = vunpack.c.2.s8 %v1913
    %v1994 = vunpack.c.3.s8 %v1906
    %v1995 = vunpack.c.3.s8 %v1907
    %v1996 = vunpack.c.3.s8 %v1908
    %v1997 = vunpack.c.3.s8 %v1909
    %v1998 = vunpack.c.3.s8 %v1910
    %v1999 = vunpack.c.3.s8 %v1911
    %v2000 = vunpack.c.3.s8 %v1912
    %v2001 = vunpack.c.3.s8 %v1913
    %v2002 = vunpack.c.0.s8 %v1914
    %v2003 = vunpack.c.0.s8 %v1915
    %v2004 = vunpack.c.0.s8 %v1916
    %v2005 = vunpack.c.0.s8 %v1917
    %v2006 = vunpack.c.0.s8 %v1918
    %v2007 = vunpack.c.0.s8 %v1919
    %v2008 = vunpack.c.0.s8 %v1920
    %v2009 = vunpack.c.0.s8 %v1921
    %v2010 = vunpack.c.1.s8 %v1914
    %v2011 = vunpack.c.1.s8 %v1915
    %v2012 = vunpack.c.1.s8 %v1916
    %v2013 = vunpack.c.1.s8 %v1917
    %v2014 = vunpack.c.1.s8 %v1918
    %v2015 = vunpack.c.1.s8 %v1919
    %v2016 = vunpack.c.1.s8 %v1920
    %v2017 = vunpack.c.1.s8 %v1921
    %v2018 = vunpack.c.2.s8 %v1914
    %v2019 = vunpack.c.2.s8 %v1915
    %v2020 = vunpack.c.2.s8 %v1916
    %v2021 = vunpack.c.2.s8 %v1917
    %v2022 = vunpack.c.2.s8 %v1918
    %v2023 = vunpack.c.2.s8 %v1919
    %v2024 = vunpack.c.2.s8 %v1920
    %v2025 = vunpack.c.2.s8 %v1921
    %v2026 = vunpack.c.3.s8 %v1914
    %v2027 = vunpack.c.3.s8 %v1915
    %v2028 = vunpack.c.3.s8 %v1916
    %v2029 = vunpack.c.3.s8 %v1917
    %v2030 = vunpack.c.3.s8 %v1918
    %v2031 = vunpack.c.3.s8 %v1919
    %v2032 = vunpack.c.3.s8 %v1920
    %v2033 = vunpack.c.3.s8 %v1921
    %v2034 = vunpack.c.0.s8 %v1922
    %v2035 = vunpack.c.0.s8 %v1923
    %v2036 = vunpack.c.0.s8 %v1924
    %v2037 = vunpack.c.0.s8 %v1925
    %v2038 = vunpack.c.0.s8 %v1926
    %v2039 = vunpack.c.0.s8 %v1927
    %v2040 = vunpack.c.0.s8 %v1928
    %v2041 = vunpack.c.0.s8 %v1929
    %v2042 = vunpack.c.1.s8 %v1922
    %v2043 = vunpack.c.1.s8 %v1923
    %v2044 = vunpack.c.1.s8 %v1924
    %v2045 = vunpack.c.1.s8 %v1925
    %v2046 = vunpack.c.1.s8 %v1926
    %v2047 = vunpack.c.1.s8 %v1927
    %v2048 = vunpack.c.1.s8 %v1928
    %v2049 = vunpack.c.1.s8 %v1929
    %v2050 = vunpack.c.2.s8 %v1922
    %v2051 = vunpack.c.2.s8 %v1923
    %v2052 = vunpack.c.2.s8 %v1924
    %v2053 = vunpack.c.2.s8 %v1925
    %v2054 = vunpack.c.2.s8 %v1926
    %v2055 = vunpack.c.2.s8 %v1927
    %v2056 = vunpack.c.2.s8 %v1928
    %v2057 = vunpack.c.2.s8 %v1929
    %v2058 = vunpack.c.3.s8 %v1922
    %v2059 = vunpack.c.3.s8 %v1923
    %v2060 = vunpack.c.3.s8 %v1924
    %v2061 = vunpack.c.3.s8 %v1925
    %v2062 = vunpack.c.3.s8 %v1926
    %v2063 = vunpack.c.3.s8 %v1927
    %v2064 = vunpack.c.3.s8 %v1928
    %v2065 = vunpack.c.3.s8 %v1929
    %v2066 = vunpack.c.0.s8 %v1930
    %v2067 = vunpack.c.0.s8 %v1931
    %v2068 = vunpack.c.0.s8 %v1932
    %v2069 = vunpack.c.0.s8 %v1933
    %v2070 = vunpack.c.0.s8 %v1934
    %v2071 = vunpack.c.0.s8 %v1935
    %v2072 = vunpack.c.0.s8 %v1936
    %v2073 = vunpack.c.0.s8 %v1937
    %v2074 = vunpack.c.1.s8 %v1930
    %v2075 = vunpack.c.1.s8 %v1931
    %v2076 = vunpack.c.1.s8 %v1932
    %v2077 = vunpack.c.1.s8 %v1933
    %v2078 = vunpack.c.1.s8 %v1934
    %v2079 = vunpack.c.1.s8 %v1935
    %v2080 = vunpack.c.1.s8 %v1936
    %v2081 = vunpack.c.1.s8 %v1937
    %v2082 = vunpack.c.2.s8 %v1930
    %v2083 = vunpack.c.2.s8 %v1931
    %v2084 = vunpack.c.2.s8 %v1932
    %v2085 = vunpack.c.2.s8 %v1933
    %v2086 = vunpack.c.2.s8 %v1934
    %v2087 = vunpack.c.2.s8 %v1935
    %v2088 = vunpack.c.2.s8 %v1936
    %v2089 = vunpack.c.2.s8 %v1937
    %v2090 = vunpack.c.3.s8 %v1930
    %v2091 = vunpack.c.3.s8 %v1931
    %v2092 = vunpack.c.3.s8 %v1932
    %v2093 = vunpack.c.3.s8 %v1933
    %v2094 = vunpack.c.3.s8 %v1934
    %v2095 = vunpack.c.3.s8 %v1935
    %v2096 = vunpack.c.3.s8 %v1936
    %v2097 = vunpack.c.3.s8 %v1937
    %v2098 = vunpack.c.0.s8 %v1938
    %v2099 = vunpack.c.0.s8 %v1939
    %v2100 = vunpack.c.0.s8 %v1940
    %v2101 = vunpack.c.0.s8 %v1941
    %v2102 = vunpack.c.0.s8 %v1942
    %v2103 = vunpack.c.0.s8 %v1943
    %v2104 = vunpack.c.0.s8 %v1944
    %v2105 = vunpack.c.0.s8 %v1945
    %v2106 = vunpack.c.1.s8 %v1938
    %v2107 = vunpack.c.1.s8 %v1939
    %v2108 = vunpack.c.1.s8 %v1940
    %v2109 = vunpack.c.1.s8 %v1941
    %v2110 = vunpack.c.1.s8 %v1942
    %v2111 = vunpack.c.1.s8 %v1943
    %v2112 = vunpack.c.1.s8 %v1944
    %v2113 = vunpack.c.1.s8 %v1945
    %v2114 = vunpack.c.2.s8 %v1938
    %v2115 = vunpack.c.2.s8 %v1939
    %v2116 = vunpack.c.2.s8 %v1940
    %v2117 = vunpack.c.2.s8 %v1941
    %v2118 = vunpack.c.2.s8 %v1942
    %v2119 = vunpack.c.2.s8 %v1943
    %v2120 = vunpack.c.2.s8 %v1944
    %v2121 = vunpack.c.2.s8 %v1945
    %v2122 = vunpack.c.3.s8 %v1938
    %v2123 = vunpack.c.3.s8 %v1939
    %v2124 = vunpack.c.3.s8 %v1940
    %v2125 = vunpack.c.3.s8 %v1941
    %v2126 = vunpack.c.3.s8 %v1942
    %v2127 = vunpack.c.3.s8 %v1943
    %v2128 = vunpack.c.3.s8 %v1944
    %v2129 = vunpack.c.3.s8 %v1945
    %v2130 = vunpack.c.0.s8 %v1946
    %v2131 = vunpack.c.0.s8 %v1947
    %v2132 = vunpack.c.0.s8 %v1948
    %v2133 = vunpack.c.0.s8 %v1949
    %v2134 = vunpack.c.0.s8 %v1950
    %v2135 = vunpack.c.0.s8 %v1951
    %v2136 = vunpack.c.0.s8 %v1952
    %v2137 = vunpack.c.0.s8 %v1953
    %v2138 = vunpack.c.1.s8 %v1946
    %v2139 = vunpack.c.1.s8 %v1947
    %v2140 = vunpack.c.1.s8 %v1948
    %v2141 = vunpack.c.1.s8 %v1949
    %v2142 = vunpack.c.1.s8 %v1950
    %v2143 = vunpack.c.1.s8 %v1951
    %v2144 = vunpack.c.1.s8 %v1952
    %v2145 = vunpack.c.1.s8 %v1953
    %v2146 = vunpack.c.2.s8 %v1946
    %v2147 = vunpack.c.2.s8 %v1947
    %v2148 = vunpack.c.2.s8 %v1948
    %v2149 = vunpack.c.2.s8 %v1949
    %v2150 = vunpack.c.2.s8 %v1950
    %v2151 = vunpack.c.2.s8 %v1951
    %v2152 = vunpack.c.2.s8 %v1952
    %v2153 = vunpack.c.2.s8 %v1953
    %v2154 = vunpack.c.3.s8 %v1946
    %v2155 = vunpack.c.3.s8 %v1947
    %v2156 = vunpack.c.3.s8 %v1948
    %v2157 = vunpack.c.3.s8 %v1949
    %v2158 = vunpack.c.3.s8 %v1950
    %v2159 = vunpack.c.3.s8 %v1951
    %v2160 = vunpack.c.3.s8 %v1952
    %v2161 = vunpack.c.3.s8 %v1953
    %v2162 = vunpack.c.0.s8 %v1954
    %v2163 = vunpack.c.0.s8 %v1955
    %v2164 = vunpack.c.0.s8 %v1956
    %v2165 = vunpack.c.0.s8 %v1957
    %v2166 = vunpack.c.0.s8 %v1958
    %v2167 = vunpack.c.0.s8 %v1959
    %v2168 = vunpack.c.0.s8 %v1960
    %v2169 = vunpack.c.0.s8 %v1961
    %v2170 = vunpack.c.1.s8 %v1954
    %v2171 = vunpack.c.1.s8 %v1955
    %v2172 = vunpack.c.1.s8 %v1956
    %v2173 = vunpack.c.1.s8 %v1957
    %v2174 = vunpack.c.1.s8 %v1958
    %v2175 = vunpack.c.1.s8 %v1959
    %v2176 = vunpack.c.1.s8 %v1960
    %v2177 = vunpack.c.1.s8 %v1961
    %v2178 = vunpack.c.2.s8 %v1954
    %v2179 = vunpack.c.2.s8 %v1955
    %v2180 = vunpack.c.2.s8 %v1956
    %v2181 = vunpack.c.2.s8 %v1957
    %v2182 = vunpack.c.2.s8 %v1958
    %v2183 = vunpack.c.2.s8 %v1959
    %v2184 = vunpack.c.2.s8 %v1960
    %v2185 = vunpack.c.2.s8 %v1961
    %v2186 = vunpack.c.3.s8 %v1954
    %v2187 = vunpack.c.3.s8 %v1955
    %v2188 = vunpack.c.3.s8 %v1956
    %v2189 = vunpack.c.3.s8 %v1957
    %v2190 = vunpack.c.3.s8 %v1958
    %v2191 = vunpack.c.3.s8 %v1959
    %v2192 = vunpack.c.3.s8 %v1960
    %v2193 = vunpack.c.3.s8 %v1961
    %v2194 = vunpack.c.0.s8 %v1962
    %v2195 = vunpack.c.0.s8 %v1963
    %v2196 = vunpack.c.0.s8 %v1964
    %v2197 = vunpack.c.0.s8 %v1965
    %v2198 = vunpack.c.0.s8 %v1966
    %v2199 = vunpack.c.0.s8 %v1967
    %v2200 = vunpack.c.0.s8 %v1968
    %v2201 = vunpack.c.0.s8 %v1969
    %v2202 = vunpack.c.1.s8 %v1962
    %v2203 = vunpack.c.1.s8 %v1963
    %v2204 = vunpack.c.1.s8 %v1964
    %v2205 = vunpack.c.1.s8 %v1965
    %v2206 = vunpack.c.1.s8 %v1966
    %v2207 = vunpack.c.1.s8 %v1967
    %v2208 = vunpack.c.1.s8 %v1968
    %v2209 = vunpack.c.1.s8 %v1969
    %v2210 = vunpack.c.2.s8 %v1962
    %v2211 = vunpack.c.2.s8 %v1963
    %v2212 = vunpack.c.2.s8 %v1964
    %v2213 = vunpack.c.2.s8 %v1965
    %v2214 = vunpack.c.2.s8 %v1966
    %v2215 = vunpack.c.2.s8 %v1967
    %v2216 = vunpack.c.2.s8 %v1968
    %v2217 = vunpack.c.2.s8 %v1969
    %v2218 = vunpack.c.3.s8 %v1962
    %v2219 = vunpack.c.3.s8 %v1963
    %v2220 = vunpack.c.3.s8 %v1964
    %v2221 = vunpack.c.3.s8 %v1965
    %v2222 = vunpack.c.3.s8 %v1966
    %v2223 = vunpack.c.3.s8 %v1967
    %v2224 = vunpack.c.3.s8 %v1968
    %v2225 = vunpack.c.3.s8 %v1969
    %v2226 = vcvt.s32.f32 %v1970
    %v2227 = vcvt.s32.f32 %v1971
    %v2228 = vcvt.s32.f32 %v1972
    %v2229 = vcvt.s32.f32 %v1973
    %v2230 = vcvt.s32.f32 %v1974
    %v2231 = vcvt.s32.f32 %v1975
    %v2232 = vcvt.s32.f32 %v1976
    %v2233 = vcvt.s32.f32 %v1977
    %v2234 = vcvt.s32.f32 %v1978
    %v2235 = vcvt.s32.f32 %v1979
    %v2236 = vcvt.s32.f32 %v1980
    %v2237 = vcvt.s32.f32 %v1981
    %v2238 = vcvt.s32.f32 %v1982
    %v2239 = vcvt.s32.f32 %v1983
    %v2240 = vcvt.s32.f32 %v1984
    %v2241 = vcvt.s32.f32 %v1985
    %v2242 = vcvt.s32.f32 %v1986
    %v2243 = vcvt.s32.f32 %v1987
    %v2244 = vcvt.s32.f32 %v1988
    %v2245 = vcvt.s32.f32 %v1989
    %v2246 = vcvt.s32.f32 %v1990
    %v2247 = vcvt.s32.f32 %v1991
    %v2248 = vcvt.s32.f32 %v1992
    %v2249 = vcvt.s32.f32 %v1993
    %v2250 = vcvt.s32.f32 %v1994
    %v2251 = vcvt.s32.f32 %v1995
    %v2252 = vcvt.s32.f32 %v1996
    %v2253 = vcvt.s32.f32 %v1997
    %v2254 = vcvt.s32.f32 %v1998
    %v2255 = vcvt.s32.f32 %v1999
    %v2256 = vcvt.s32.f32 %v2000
    %v2257 = vcvt.s32.f32 %v2001
    %v2258 = vcvt.s32.f32 %v2002
    %v2259 = vcvt.s32.f32 %v2003
    %v2260 = vcvt.s32.f32 %v2004
    %v2261 = vcvt.s32.f32 %v2005
    %v2262 = vcvt.s32.f32 %v2006
    %v2263 = vcvt.s32.f32 %v2007
    %v2264 = vcvt.s32.f32 %v2008
    %v2265 = vcvt.s32.f32 %v2009
    %v2266 = vcvt.s32.f32 %v2010
    %v2267 = vcvt.s32.f32 %v2011
    %v2268 = vcvt.s32.f32 %v2012
    %v2269 = vcvt.s32.f32 %v2013
    %v2270 = vcvt.s32.f32 %v2014
    %v2271 = vcvt.s32.f32 %v2015
    %v2272 = vcvt.s32.f32 %v2016
    %v2273 = vcvt.s32.f32 %v2017
    %v2274 = vcvt.s32.f32 %v2018
    %v2275 = vcvt.s32.f32 %v2019
    %v2276 = vcvt.s32.f32 %v2020
    %v2277 = vcvt.s32.f32 %v2021
    %v2278 = vcvt.s32.f32 %v2022
    %v2279 = vcvt.s32.f32 %v2023
    %v2280 = vcvt.s32.f32 %v2024
    %v2281 = vcvt.s32.f32 %v2025
    %v2282 = vcvt.s32.f32 %v2026
    %v2283 = vcvt.s32.f32 %v2027
    %v2284 = vcvt.s32.f32 %v2028
    %v2285 = vcvt.s32.f32 %v2029
    %v2286 = vcvt.s32.f32 %v2030
    %v2287 = vcvt.s32.f32 %v2031
    %v2288 = vcvt.s32.f32 %v2032
    %v2289 = vcvt.s32.f32 %v2033
    %v2290 = vcvt.s32.f32 %v2034
    %v2291 = vcvt.s32.f32 %v2035
    %v2292 = vcvt.s32.f32 %v2036
    %v2293 = vcvt.s32.f32 %v2037
    %v2294 = vcvt.s32.f32 %v2038
    %v2295 = vcvt.s32.f32 %v2039
    %v2296 = vcvt.s32.f32 %v2040
    %v2297 = vcvt.s32.f32 %v2041
    %v2298 = vcvt.s32.f32 %v2042
    %v2299 = vcvt.s32.f32 %v2043
    %v2300 = vcvt.s32.f32 %v2044
    %v2301 = vcvt.s32.f32 %v2045
    %v2302 = vcvt.s32.f32 %v2046
    %v2303 = vcvt.s32.f32 %v2047
    %v2304 = vcvt.s32.f32 %v2048
    %v2305 = vcvt.s32.f32 %v2049
    %v2306 = vcvt.s32.f32 %v2050
    %v2307 = vcvt.s32.f32 %v2051
    %v2308 = vcvt.s32.f32 %v2052
    %v2309 = vcvt.s32.f32 %v2053
    %v2310 = vcvt.s32.f32 %v2054
    %v2311 = vcvt.s32.f32 %v2055
    %v2312 = vcvt.s32.f32 %v2056
    %v2313 = vcvt.s32.f32 %v2057
    %v2314 = vcvt.s32.f32 %v2058
    %v2315 = vcvt.s32.f32 %v2059
    %v2316 = vcvt.s32.f32 %v2060
    %v2317 = vcvt.s32.f32 %v2061
    %v2318 = vcvt.s32.f32 %v2062
    %v2319 = vcvt.s32.f32 %v2063
    %v2320 = vcvt.s32.f32 %v2064
    %v2321 = vcvt.s32.f32 %v2065
    %v2322 = vcvt.s32.f32 %v2066
    %v2323 = vcvt.s32.f32 %v2067
    %v2324 = vcvt.s32.f32 %v2068
    %v2325 = vcvt.s32.f32 %v2069
    %v2326 = vcvt.s32.f32 %v2070
    %v2327 = vcvt.s32.f32 %v2071
    %v2328 = vcvt.s32.f32 %v2072
    %v2329 = vcvt.s32.f32 %v2073
    %v2330 = vcvt.s32.f32 %v2074
    %v2331 = vcvt.s32.f32 %v2075
    %v2332 = vcvt.s32.f32 %v2076
    %v2333 = vcvt.s32.f32 %v2077
    %v2334 = vcvt.s32.f32 %v2078
    %v2335 = vcvt.s32.f32 %v2079
    %v2336 = vcvt.s32.f32 %v2080
    %v2337 = vcvt.s32.f32 %v2081
    %v2338 = vcvt.s32.f32 %v2082
    %v2339 = vcvt.s32.f32 %v2083
    %v2340 = vcvt.s32.f32 %v2084
    %v2341 = vcvt.s32.f32 %v2085
    %v2342 = vcvt.s32.f32 %v2086
    %v2343 = vcvt.s32.f32 %v2087
    %v2344 = vcvt.s32.f32 %v2088
    %v2345 = vcvt.s32.f32 %v2089
    %v2346 = vcvt.s32.f32 %v2090
    %v2347 = vcvt.s32.f32 %v2091
    %v2348 = vcvt.s32.f32 %v2092
    %v2349 = vcvt.s32.f32 %v2093
    %v2350 = vcvt.s32.f32 %v2094
    %v2351 = vcvt.s32.f32 %v2095
    %v2352 = vcvt.s32.f32 %v2096
    %v2353 = vcvt.s32.f32 %v2097
    %v2354 = vcvt.s32.f32 %v2098
    %v2355 = vcvt.s32.f32 %v2099
    %v2356 = vcvt.s32.f32 %v2100
    %v2357 = vcvt.s32.f32 %v2101
    %v2358 = vcvt.s32.f32 %v2102
    %v2359 = vcvt.s32.f32 %v2103
    %v2360 = vcvt.s32.f32 %v2104
    %v2361 = vcvt.s32.f32 %v2105
    %v2362 = vcvt.s32.f32 %v2106
    %v2363 = vcvt.s32.f32 %v2107
    %v2364 = vcvt.s32.f32 %v2108
    %v2365 = vcvt.s32.f32 %v2109
    %v2366 = vcvt.s32.f32 %v2110
    %v2367 = vcvt.s32.f32 %v2111
    %v2368 = vcvt.s32.f32 %v2112
    %v2369 = vcvt.s32.f32 %v2113
    %v2370 = vcvt.s32.f32 %v2114
    %v2371 = vcvt.s32.f32 %v2115
    %v2372 = vcvt.s32.f32 %v2116
    %v2373 = vcvt.s32.f32 %v2117
    %v2374 = vcvt.s32.f32 %v2118
    %v2375 = vcvt.s32.f32 %v2119
    %v2376 = vcvt.s32.f32 %v2120
    %v2377 = vcvt.s32.f32 %v2121
    %v2378 = vcvt.s32.f32 %v2122
    %v2379 = vcvt.s32.f32 %v2123
    %v2380 = vcvt.s32.f32 %v2124
    %v2381 = vcvt.s32.f32 %v2125
    %v2382 = vcvt.s32.f32 %v2126
    %v2383 = vcvt.s32.f32 %v2127
    %v2384 = vcvt.s32.f32 %v2128
    %v2385 = vcvt.s32.f32 %v2129
    %v2386 = vcvt.s32.f32 %v2130
    %v2387 = vcvt.s32.f32 %v2131
    %v2388 = vcvt.s32.f32 %v2132
    %v2389 = vcvt.s32.f32 %v2133
    %v2390 = vcvt.s32.f32 %v2134
    %v2391 = vcvt.s32.f32 %v2135
    %v2392 = vcvt.s32.f32 %v2136
    %v2393 = vcvt.s32.f32 %v2137
    %v2394 = vcvt.s32.f32 %v2138
    %v2395 = vcvt.s32.f32 %v2139
    %v2396 = vcvt.s32.f32 %v2140
    %v2397 = vcvt.s32.f32 %v2141
    %v2398 = vcvt.s32.f32 %v2142
    %v2399 = vcvt.s32.f32 %v2143
    %v2400 = vcvt.s32.f32 %v2144
    %v2401 = vcvt.s32.f32 %v2145
    %v2402 = vcvt.s32.f32 %v2146
    %v2403 = vcvt.s32.f32 %v2147
    %v2404 = vcvt.s32.f32 %v2148
    %v2405 = vcvt.s32.f32 %v2149
    %v2406 = vcvt.s32.f32 %v2150
    %v2407 = vcvt.s32.f32 %v2151
    %v2408 = vcvt.s32.f32 %v2152
    %v2409 = vcvt.s32.f32 %v2153
    %v2410 = vcvt.s32.f32 %v2154
    %v2411 = vcvt.s32.f32 %v2155
    %v2412 = vcvt.s32.f32 %v2156
    %v2413 = vcvt.s32.f32 %v2157
    %v2414 = vcvt.s32.f32 %v2158
    %v2415 = vcvt.s32.f32 %v2159
    %v2416 = vcvt.s32.f32 %v2160
    %v2417 = vcvt.s32.f32 %v2161
    %v2418 = vcvt.s32.f32 %v2162
    %v2419 = vcvt.s32.f32 %v2163
    %v2420 = vcvt.s32.f32 %v2164
    %v2421 = vcvt.s32.f32 %v2165
    %v2422 = vcvt.s32.f32 %v2166
    %v2423 = vcvt.s32.f32 %v2167
    %v2424 = vcvt.s32.f32 %v2168
    %v2425 = vcvt.s32.f32 %v2169
    %v2426 = vcvt.s32.f32 %v2170
    %v2427 = vcvt.s32.f32 %v2171
    %v2428 = vcvt.s32.f32 %v2172
    %v2429 = vcvt.s32.f32 %v2173
    %v2430 = vcvt.s32.f32 %v2174
    %v2431 = vcvt.s32.f32 %v2175
    %v2432 = vcvt.s32.f32 %v2176
    %v2433 = vcvt.s32.f32 %v2177
    %v2434 = vcvt.s32.f32 %v2178
    %v2435 = vcvt.s32.f32 %v2179
    %v2436 = vcvt.s32.f32 %v2180
    %v2437 = vcvt.s32.f32 %v2181
    %v2438 = vcvt.s32.f32 %v2182
    %v2439 = vcvt.s32.f32 %v2183
    %v2440 = vcvt.s32.f32 %v2184
    %v2441 = vcvt.s32.f32 %v2185
    %v2442 = vcvt.s32.f32 %v2186
    %v2443 = vcvt.s32.f32 %v2187
    %v2444 = vcvt.s32.f32 %v2188
    %v2445 = vcvt.s32.f32 %v2189
    %v2446 = vcvt.s32.f32 %v2190
    %v2447 = vcvt.s32.f32 %v2191
    %v2448 = vcvt.s32.f32 %v2192
    %v2449 = vcvt.s32.f32 %v2193
    %v2450 = vcvt.s32.f32 %v2194
    %v2451 = vcvt.s32.f32 %v2195
    %v2452 = vcvt.s32.f32 %v2196
    %v2453 = vcvt.s32.f32 %v2197
    %v2454 = vcvt.s32.f32 %v2198
    %v2455 = vcvt.s32.f32 %v2199
    %v2456 = vcvt.s32.f32 %v2200
    %v2457 = vcvt.s32.f32 %v2201
    %v2458 = vcvt.s32.f32 %v2202
    %v2459 = vcvt.s32.f32 %v2203
    %v2460 = vcvt.s32.f32 %v2204
    %v2461 = vcvt.s32.f32 %v2205
    %v2462 = vcvt.s32.f32 %v2206
    %v2463 = vcvt.s32.f32 %v2207
    %v2464 = vcvt.s32.f32 %v2208
    %v2465 = vcvt.s32.f32 %v2209
    %v2466 = vcvt.s32.f32 %v2210
    %v2467 = vcvt.s32.f32 %v2211
    %v2468 = vcvt.s32.f32 %v2212
    %v2469 = vcvt.s32.f32 %v2213
    %v2470 = vcvt.s32.f32 %v2214
    %v2471 = vcvt.s32.f32 %v2215
    %v2472 = vcvt.s32.f32 %v2216
    %v2473 = vcvt.s32.f32 %v2217
    %v2474 = vcvt.s32.f32 %v2218
    %v2475 = vcvt.s32.f32 %v2219
    %v2476 = vcvt.s32.f32 %v2220
    %v2477 = vcvt.s32.f32 %v2221
    %v2478 = vcvt.s32.f32 %v2222
    %v2479 = vcvt.s32.f32 %v2223
    %v2480 = vcvt.s32.f32 %v2224
    %v2481 = vcvt.s32.f32 %v2225
    %v2482 = vpack.c.bf16 %v2234, %v2226
    %v2483 = vpack.c.bf16 %v2235, %v2227
    %v2484 = vpack.c.bf16 %v2236, %v2228
    %v2485 = vpack.c.bf16 %v2237, %v2229
    %v2486 = vpack.c.bf16 %v2238, %v2230
    %v2487 = vpack.c.bf16 %v2239, %v2231
    %v2488 = vpack.c.bf16 %v2240, %v2232
    %v2489 = vpack.c.bf16 %v2241, %v2233
    %v2490 = vpack.c.bf16 %v2250, %v2242
    %v2491 = vpack.c.bf16 %v2251, %v2243
    %v2492 = vpack.c.bf16 %v2252, %v2244
    %v2493 = vpack.c.bf16 %v2253, %v2245
    %v2494 = vpack.c.bf16 %v2254, %v2246
    %v2495 = vpack.c.bf16 %v2255, %v2247
    %v2496 = vpack.c.bf16 %v2256, %v2248
    %v2497 = vpack.c.bf16 %v2257, %v2249
    %v2498 = vpack.c.bf16 %v2266, %v2258
    %v2499 = vpack.c.bf16 %v2267, %v2259
    %v2500 = vpack.c.bf16 %v2268, %v2260
    %v2501 = vpack.c.bf16 %v2269, %v2261
    %v2502 = vpack.c.bf16 %v2270, %v2262
    %v2503 = vpack.c.bf16 %v2271, %v2263
    %v2504 = vpack.c.bf16 %v2272, %v2264
    %v2505 = vpack.c.bf16 %v2273, %v2265
    %v2506 = vpack.c.bf16 %v2282, %v2274
    %v2507 = vpack.c.bf16 %v2283, %v2275
    %v2508 = vpack.c.bf16 %v2284, %v2276
    %v2509 = vpack.c.bf16 %v2285, %v2277
    %v2510 = vpack.c.bf16 %v2286, %v2278
    %v2511 = vpack.c.bf16 %v2287, %v2279
    %v2512 = vpack.c.bf16 %v2288, %v2280
    %v2513 = vpack.c.bf16 %v2289, %v2281
    %v2514 = vpack.c.bf16 %v2298, %v2290
    %v2515 = vpack.c.bf16 %v2299, %v2291
    %v2516 = vpack.c.bf16 %v2300, %v2292
    %v2517 = vpack.c.bf16 %v2301, %v2293
    %v2518 = vpack.c.bf16 %v2302, %v2294
    %v2519 = vpack.c.bf16 %v2303, %v2295
    %v2520 = vpack.c.bf16 %v2304, %v2296
    %v2521 = vpack.c.bf16 %v2305, %v2297
    %v2522 = vpack.c.bf16 %v2314, %v2306
    %v2523 = vpack.c.bf16 %v2315, %v2307
    %v2524 = vpack.c.bf16 %v2316, %v2308
    %v2525 = vpack.c.bf16 %v2317, %v2309
    %v2526 = vpack.c.bf16 %v2318, %v2310
    %v2527 = vpack.c.bf16 %v2319, %v2311
    %v2528 = vpack.c.bf16 %v2320, %v2312
    %v2529 = vpack.c.bf16 %v2321, %v2313
    %v2530 = vpack.c.bf16 %v2330, %v2322
    %v2531 = vpack.c.bf16 %v2331, %v2323
    %v2532 = vpack.c.bf16 %v2332, %v2324
    %v2533 = vpack.c.bf16 %v2333, %v2325
    %v2534 = vpack.c.bf16 %v2334, %v2326
    %v2535 = vpack.c.bf16 %v2335, %v2327
    %v2536 = vpack.c.bf16 %v2336, %v2328
    %v2537 = vpack.c.bf16 %v2337, %v2329
    %v2538 = vpack.c.bf16 %v2346, %v2338
    %v2539 = vpack.c.bf16 %v2347, %v2339
    %v2540 = vpack.c.bf16 %v2348, %v2340
    %v2541 = vpack.c.bf16 %v2349, %v2341
    %v2542 = vpack.c.bf16 %v2350, %v2342
    %v2543 = vpack.c.bf16 %v2351, %v2343
    %v2544 = vpack.c.bf16 %v2352, %v2344
    %v2545 = vpack.c.bf16 %v2353, %v2345
    %v2546 = vpack.c.bf16 %v2362, %v2354
    %v2547 = vpack.c.bf16 %v2363, %v2355
    %v2548 = vpack.c.bf16 %v2364, %v2356
    %v2549 = vpack.c.bf16 %v2365, %v2357
    %v2550 = vpack.c.bf16 %v2366, %v2358
    %v2551 = vpack.c.bf16 %v2367, %v2359
    %v2552 = vpack.c.bf16 %v2368, %v2360
    %v2553 = vpack.c.bf16 %v2369, %v2361
    %v2554 = vpack.c.bf16 %v2378, %v2370
    %v2555 = vpack.c.bf16 %v2379, %v2371
    %v2556 = vpack.c.bf16 %v2380, %v2372
    %v2557 = vpack.c.bf16 %v2381, %v2373
    %v2558 = vpack.c.bf16 %v2382, %v2374
    %v2559 = vpack.c.bf16 %v2383, %v2375
    %v2560 = vpack.c.bf16 %v2384, %v2376
    %v2561 = vpack.c.bf16 %v2385, %v2377
    %v2562 = vpack.c.bf16 %v2394, %v2386
    %v2563 = vpack.c.bf16 %v2395, %v2387
    %v2564 = vpack.c.bf16 %v2396, %v2388
    %v2565 = vpack.c.bf16 %v2397, %v2389
    %v2566 = vpack.c.bf16 %v2398, %v2390
    %v2567 = vpack.c.bf16 %v2399, %v2391
    %v2568 = vpack.c.bf16 %v2400, %v2392
    %v2569 = vpack.c.bf16 %v2401, %v2393
    %v2570 = vpack.c.bf16 %v2410, %v2402
    %v2571 = vpack.c.bf16 %v2411, %v2403
    %v2572 = vpack.c.bf16 %v2412, %v2404
    %v2573 = vpack.c.bf16 %v2413, %v2405
    %v2574 = vpack.c.bf16 %v2414, %v2406
    %v2575 = vpack.c.bf16 %v2415, %v2407
    %v2576 = vpack.c.bf16 %v2416, %v2408
    %v2577 = vpack.c.bf16 %v2417, %v2409
    %v2578 = vpack.c.bf16 %v2426, %v2418
    %v2579 = vpack.c.bf16 %v2427, %v2419
    %v2580 = vpack.c.bf16 %v2428, %v2420
    %v2581 = vpack.c.bf16 %v2429, %v2421
    %v2582 = vpack.c.bf16 %v2430, %v2422
    %v2583 = vpack.c.bf16 %v2431, %v2423
    %v2584 = vpack.c.bf16 %v2432, %v2424
    %v2585 = vpack.c.bf16 %v2433, %v2425
    %v2586 = vpack.c.bf16 %v2442, %v2434
    %v2587 = vpack.c.bf16 %v2443, %v2435
    %v2588 = vpack.c.bf16 %v2444, %v2436
    %v2589 = vpack.c.bf16 %v2445, %v2437
    %v2590 = vpack.c.bf16 %v2446, %v2438
    %v2591 = vpack.c.bf16 %v2447, %v2439
    %v2592 = vpack.c.bf16 %v2448, %v2440
    %v2593 = vpack.c.bf16 %v2449, %v2441
    %v2594 = vpack.c.bf16 %v2458, %v2450
    %v2595 = vpack.c.bf16 %v2459, %v2451
    %v2596 = vpack.c.bf16 %v2460, %v2452
    %v2597 = vpack.c.bf16 %v2461, %v2453
    %v2598 = vpack.c.bf16 %v2462, %v2454
    %v2599 = vpack.c.bf16 %v2463, %v2455
    %v2600 = vpack.c.bf16 %v2464, %v2456
    %v2601 = vpack.c.bf16 %v2465, %v2457
    %v2602 = vpack.c.bf16 %v2474, %v2466
    %v2603 = vpack.c.bf16 %v2475, %v2467
    %v2604 = vpack.c.bf16 %v2476, %v2468
    %v2605 = vpack.c.bf16 %v2477, %v2469
    %v2606 = vpack.c.bf16 %v2478, %v2470
    %v2607 = vpack.c.bf16 %v2479, %v2471
    %v2608 = vpack.c.bf16 %v2480, %v2472
    %v2609 = vpack.c.bf16 %v2481, %v2473
    %v2610 = vpack.c.bf16 %v1867, %v1867
    %v2611 = vpack.c.bf16 %v1868, %v1868
    %v2612 = vld [vmem:[#allocation12] sm:$0xff]
    %v2613 = vld [vmem:[#allocation12 + $0x8] sm:$0xff]
    %v2614 = vld [vmem:[#allocation12 + $0x10] sm:$0xff]
    %v2615 = vld [vmem:[#allocation12 + $0x18] sm:$0xff]
    %v2616 = vld [vmem:[#allocation12 + $0x20] sm:$0xff]
    %v2617 = vld [vmem:[#allocation12 + $0x28] sm:$0xff]
    %v2618 = vld [vmem:[#allocation12 + $0x30] sm:$0xff]
    %v2619 = vld [vmem:[#allocation12 + $0x38] sm:$0xff]
    %v2620 = vld [vmem:[#allocation12 + $0x40] sm:$0xff]
    %v2621 = vld [vmem:[#allocation12 + $0x48] sm:$0xff]
    %v2622 = vld [vmem:[#allocation12 + $0x50] sm:$0xff]
    %v2623 = vld [vmem:[#allocation12 + $0x58] sm:$0xff]
    %v2624 = vld [vmem:[#allocation12 + $0x60] sm:$0xff]
    %v2625 = vld [vmem:[#allocation12 + $0x68] sm:$0xff]
    %v2626 = vld [vmem:[#allocation12 + $0x70] sm:$0xff]
    %v2627 = vld [vmem:[#allocation12 + $0x78] sm:$0xff]
    %v2628 = vld [vmem:[#allocation12 + $0x80] sm:$0xff]
    %v2629 = vld [vmem:[#allocation12 + $0x88] sm:$0xff]
    %v2630 = vld [vmem:[#allocation12 + $0x90] sm:$0xff]
    %v2631 = vld [vmem:[#allocation12 + $0x98] sm:$0xff]
    %v2632 = vld [vmem:[#allocation12 + $0xa0] sm:$0xff]
    %v2633 = vld [vmem:[#allocation12 + $0xa8] sm:$0xff]
    %v2634 = vld [vmem:[#allocation12 + $0xb0] sm:$0xff]
    %v2635 = vld [vmem:[#allocation12 + $0xb8] sm:$0xff]
    %v2636 = vld [vmem:[#allocation12 + $0xc0] sm:$0xff]
    %v2637 = vld [vmem:[#allocation12 + $0xc8] sm:$0xff]
    %v2638 = vld [vmem:[#allocation12 + $0xd0] sm:$0xff]
    %v2639 = vld [vmem:[#allocation12 + $0xd8] sm:$0xff]
    %v2640 = vld [vmem:[#allocation12 + $0xe0] sm:$0xff]
    %v2641 = vld [vmem:[#allocation12 + $0xe8] sm:$0xff]
    %v2642 = vld [vmem:[#allocation12 + $0xf0] sm:$0xff]
    %v2643 = vld [vmem:[#allocation12 + $0xf8] sm:$0xff]
    %v2644 = vld [vmem:[#allocation12 + $0x100] sm:$0xff]
    %v2645 = vld [vmem:[#allocation12 + $0x108] sm:$0xff]
    %v2646 = vld [vmem:[#allocation12 + $0x110] sm:$0xff]
    %v2647 = vld [vmem:[#allocation12 + $0x118] sm:$0xff]
    %v2648 = vld [vmem:[#allocation12 + $0x120] sm:$0xff]
    %v2649 = vld [vmem:[#allocation12 + $0x128] sm:$0xff]
    %v2650 = vld [vmem:[#allocation12 + $0x130] sm:$0xff]
    %v2651 = vld [vmem:[#allocation12 + $0x138] sm:$0xff]
    %v2652 = vld [vmem:[#allocation12 + $0x140] sm:$0xff]
    %v2653 = vld [vmem:[#allocation12 + $0x148] sm:$0xff]
    %v2654 = vld [vmem:[#allocation12 + $0x150] sm:$0xff]
    %v2655 = vld [vmem:[#allocation12 + $0x158] sm:$0xff]
    %v2656 = vld [vmem:[#allocation12 + $0x160] sm:$0xff]
    %v2657 = vld [vmem:[#allocation12 + $0x168] sm:$0xff]
    %v2658 = vld [vmem:[#allocation12 + $0x170] sm:$0xff]
    %v2659 = vld [vmem:[#allocation12 + $0x178] sm:$0xff]
    %v2660 = vld [vmem:[#allocation12 + $0x180] sm:$0xff]
    %v2661 = vld [vmem:[#allocation12 + $0x188] sm:$0xff]
    %v2662 = vld [vmem:[#allocation12 + $0x190] sm:$0xff]
    %v2663 = vld [vmem:[#allocation12 + $0x198] sm:$0xff]
    %v2664 = vld [vmem:[#allocation12 + $0x1a0] sm:$0xff]
    %v2665 = vld [vmem:[#allocation12 + $0x1a8] sm:$0xff]
    %v2666 = vld [vmem:[#allocation12 + $0x1b0] sm:$0xff]
    %v2667 = vld [vmem:[#allocation12 + $0x1b8] sm:$0xff]
    %v2668 = vld [vmem:[#allocation12 + $0x1c0] sm:$0xff]
    %v2669 = vld [vmem:[#allocation12 + $0x1c8] sm:$0xff]
    %v2670 = vld [vmem:[#allocation12 + $0x1d0] sm:$0xff]
    %v2671 = vld [vmem:[#allocation12 + $0x1d8] sm:$0xff]
    %v2672 = vld [vmem:[#allocation12 + $0x1e0] sm:$0xff]
    %v2673 = vld [vmem:[#allocation12 + $0x1e8] sm:$0xff]
    %v2674 = vld [vmem:[#allocation12 + $0x1f0] sm:$0xff]
    %v2675 = vld [vmem:[#allocation12 + $0x1f8] sm:$0xff]
    %v2676 = vunpack.c.0.s8 %v2612
    %v2677 = vunpack.c.0.s8 %v2613
    %v2678 = vunpack.c.0.s8 %v2614
    %v2679 = vunpack.c.0.s8 %v2615
    %v2680 = vunpack.c.0.s8 %v2616
    %v2681 = vunpack.c.0.s8 %v2617
    %v2682 = vunpack.c.0.s8 %v2618
    %v2683 = vunpack.c.0.s8 %v2619
    %v2684 = vunpack.c.1.s8 %v2612
    %v2685 = vunpack.c.1.s8 %v2613
    %v2686 = vunpack.c.1.s8 %v2614
    %v2687 = vunpack.c.1.s8 %v2615
    %v2688 = vunpack.c.1.s8 %v2616
    %v2689 = vunpack.c.1.s8 %v2617
    %v2690 = vunpack.c.1.s8 %v2618
    %v2691 = vunpack.c.1.s8 %v2619
    %v2692 = vunpack.c.2.s8 %v2612
    %v2693 = vunpack.c.2.s8 %v2613
    %v2694 = vunpack.c.2.s8 %v2614
    %v2695 = vunpack.c.2.s8 %v2615
    %v2696 = vunpack.c.2.s8 %v2616
    %v2697 = vunpack.c.2.s8 %v2617
    %v2698 = vunpack.c.2.s8 %v2618
    %v2699 = vunpack.c.2.s8 %v2619
    %v2700 = vunpack.c.3.s8 %v2612
    %v2701 = vunpack.c.3.s8 %v2613
    %v2702 = vunpack.c.3.s8 %v2614
    %v2703 = vunpack.c.3.s8 %v2615
    %v2704 = vunpack.c.3.s8 %v2616
    %v2705 = vunpack.c.3.s8 %v2617
    %v2706 = vunpack.c.3.s8 %v2618
    %v2707 = vunpack.c.3.s8 %v2619
    %v2708 = vunpack.c.0.s8 %v2620
    %v2709 = vunpack.c.0.s8 %v2621
    %v2710 = vunpack.c.0.s8 %v2622
    %v2711 = vunpack.c.0.s8 %v2623
    %v2712 = vunpack.c.0.s8 %v2624
    %v2713 = vunpack.c.0.s8 %v2625
    %v2714 = vunpack.c.0.s8 %v2626
    %v2715 = vunpack.c.0.s8 %v2627
    %v2716 = vunpack.c.1.s8 %v2620
    %v2717 = vunpack.c.1.s8 %v2621
    %v2718 = vunpack.c.1.s8 %v2622
    %v2719 = vunpack.c.1.s8 %v2623
    %v2720 = vunpack.c.1.s8 %v2624
    %v2721 = vunpack.c.1.s8 %v2625
    %v2722 = vunpack.c.1.s8 %v2626
    %v2723 = vunpack.c.1.s8 %v2627
    %v2724 = vunpack.c.2.s8 %v2620
    %v2725 = vunpack.c.2.s8 %v2621
    %v2726 = vunpack.c.2.s8 %v2622
    %v2727 = vunpack.c.2.s8 %v2623
    %v2728 = vunpack.c.2.s8 %v2624
    %v2729 = vunpack.c.2.s8 %v2625
    %v2730 = vunpack.c.2.s8 %v2626
    %v2731 = vunpack.c.2.s8 %v2627
    %v2732 = vunpack.c.3.s8 %v2620
    %v2733 = vunpack.c.3.s8 %v2621
    %v2734 = vunpack.c.3.s8 %v2622
    %v2735 = vunpack.c.3.s8 %v2623
    %v2736 = vunpack.c.3.s8 %v2624
    %v2737 = vunpack.c.3.s8 %v2625
    %v2738 = vunpack.c.3.s8 %v2626
    %v2739 = vunpack.c.3.s8 %v2627
    %v2740 = vunpack.c.0.s8 %v2628
    %v2741 = vunpack.c.0.s8 %v2629
    %v2742 = vunpack.c.0.s8 %v2630
    %v2743 = vunpack.c.0.s8 %v2631
    %v2744 = vunpack.c.0.s8 %v2632
    %v2745 = vunpack.c.0.s8 %v2633
    %v2746 = vunpack.c.0.s8 %v2634
    %v2747 = vunpack.c.0.s8 %v2635
    %v2748 = vunpack.c.1.s8 %v2628
    %v2749 = vunpack.c.1.s8 %v2629
    %v2750 = vunpack.c.1.s8 %v2630
    %v2751 = vunpack.c.1.s8 %v2631
    %v2752 = vunpack.c.1.s8 %v2632
    %v2753 = vunpack.c.1.s8 %v2633
    %v2754 = vunpack.c.1.s8 %v2634
    %v2755 = vunpack.c.1.s8 %v2635
    %v2756 = vunpack.c.2.s8 %v2628
    %v2757 = vunpack.c.2.s8 %v2629
    %v2758 = vunpack.c.2.s8 %v2630
    %v2759 = vunpack.c.2.s8 %v2631
    %v2760 = vunpack.c.2.s8 %v2632
    %v2761 = vunpack.c.2.s8 %v2633
    %v2762 = vunpack.c.2.s8 %v2634
    %v2763 = vunpack.c.2.s8 %v2635
    %v2764 = vunpack.c.3.s8 %v2628
    %v2765 = vunpack.c.3.s8 %v2629
    %v2766 = vunpack.c.3.s8 %v2630
    %v2767 = vunpack.c.3.s8 %v2631
    %v2768 = vunpack.c.3.s8 %v2632
    %v2769 = vunpack.c.3.s8 %v2633
    %v2770 = vunpack.c.3.s8 %v2634
    %v2771 = vunpack.c.3.s8 %v2635
    %v2772 = vunpack.c.0.s8 %v2636
    %v2773 = vunpack.c.0.s8 %v2637
    %v2774 = vunpack.c.0.s8 %v2638
    %v2775 = vunpack.c.0.s8 %v2639
    %v2776 = vunpack.c.0.s8 %v2640
    %v2777 = vunpack.c.0.s8 %v2641
    %v2778 = vunpack.c.0.s8 %v2642
    %v2779 = vunpack.c.0.s8 %v2643
    %v2780 = vunpack.c.1.s8 %v2636
    %v2781 = vunpack.c.1.s8 %v2637
    %v2782 = vunpack.c.1.s8 %v2638
    %v2783 = vunpack.c.1.s8 %v2639
    %v2784 = vunpack.c.1.s8 %v2640
    %v2785 = vunpack.c.1.s8 %v2641
    %v2786 = vunpack.c.1.s8 %v2642
    %v2787 = vunpack.c.1.s8 %v2643
    %v2788 = vunpack.c.2.s8 %v2636
    %v2789 = vunpack.c.2.s8 %v2637
    %v2790 = vunpack.c.2.s8 %v2638
    %v2791 = vunpack.c.2.s8 %v2639
    %v2792 = vunpack.c.2.s8 %v2640
    %v2793 = vunpack.c.2.s8 %v2641
    %v2794 = vunpack.c.2.s8 %v2642
    %v2795 = vunpack.c.2.s8 %v2643
    %v2796 = vunpack.c.3.s8 %v2636
    %v2797 = vunpack.c.3.s8 %v2637
    %v2798 = vunpack.c.3.s8 %v2638
    %v2799 = vunpack.c.3.s8 %v2639
    %v2800 = vunpack.c.3.s8 %v2640
    %v2801 = vunpack.c.3.s8 %v2641
    %v2802 = vunpack.c.3.s8 %v2642
    %v2803 = vunpack.c.3.s8 %v2643
    %v2804 = vunpack.c.0.s8 %v2644
    %v2805 = vunpack.c.0.s8 %v2645
    %v2806 = vunpack.c.0.s8 %v2646
    %v2807 = vunpack.c.0.s8 %v2647
    %v2808 = vunpack.c.0.s8 %v2648
    %v2809 = vunpack.c.0.s8 %v2649
    %v2810 = vunpack.c.0.s8 %v2650
    %v2811 = vunpack.c.0.s8 %v2651
    %v2812 = vunpack.c.1.s8 %v2644
    %v2813 = vunpack.c.1.s8 %v2645
    %v2814 = vunpack.c.1.s8 %v2646
    %v2815 = vunpack.c.1.s8 %v2647
    %v2816 = vunpack.c.1.s8 %v2648
    %v2817 = vunpack.c.1.s8 %v2649
    %v2818 = vunpack.c.1.s8 %v2650
    %v2819 = vunpack.c.1.s8 %v2651
    %v2820 = vunpack.c.2.s8 %v2644
    %v2821 = vunpack.c.2.s8 %v2645
    %v2822 = vunpack.c.2.s8 %v2646
    %v2823 = vunpack.c.2.s8 %v2647
    %v2824 = vunpack.c.2.s8 %v2648
    %v2825 = vunpack.c.2.s8 %v2649
    %v2826 = vunpack.c.2.s8 %v2650
    %v2827 = vunpack.c.2.s8 %v2651
    %v2828 = vunpack.c.3.s8 %v2644
    %v2829 = vunpack.c.3.s8 %v2645
    %v2830 = vunpack.c.3.s8 %v2646
    %v2831 = vunpack.c.3.s8 %v2647
    %v2832 = vunpack.c.3.s8 %v2648
    %v2833 = vunpack.c.3.s8 %v2649
    %v2834 = vunpack.c.3.s8 %v2650
    %v2835 = vunpack.c.3.s8 %v2651
    %v2836 = vunpack.c.0.s8 %v2652
    %v2837 = vunpack.c.0.s8 %v2653
    %v2838 = vunpack.c.0.s8 %v2654
    %v2839 = vunpack.c.0.s8 %v2655
    %v2840 = vunpack.c.0.s8 %v2656
    %v2841 = vunpack.c.0.s8 %v2657
    %v2842 = vunpack.c.0.s8 %v2658
    %v2843 = vunpack.c.0.s8 %v2659
    %v2844 = vunpack.c.1.s8 %v2652
    %v2845 = vunpack.c.1.s8 %v2653
    %v2846 = vunpack.c.1.s8 %v2654
    %v2847 = vunpack.c.1.s8 %v2655
    %v2848 = vunpack.c.1.s8 %v2656
    %v2849 = vunpack.c.1.s8 %v2657
    %v2850 = vunpack.c.1.s8 %v2658
    %v2851 = vunpack.c.1.s8 %v2659
    %v2852 = vunpack.c.2.s8 %v2652
    %v2853 = vunpack.c.2.s8 %v2653
    %v2854 = vunpack.c.2.s8 %v2654
    %v2855 = vunpack.c.2.s8 %v2655
    %v2856 = vunpack.c.2.s8 %v2656
    %v2857 = vunpack.c.2.s8 %v2657
    %v2858 = vunpack.c.2.s8 %v2658
    %v2859 = vunpack.c.2.s8 %v2659
    %v2860 = vunpack.c.3.s8 %v2652
    %v2861 = vunpack.c.3.s8 %v2653
    %v2862 = vunpack.c.3.s8 %v2654
    %v2863 = vunpack.c.3.s8 %v2655
    %v2864 = vunpack.c.3.s8 %v2656
    %v2865 = vunpack.c.3.s8 %v2657
    %v2866 = vunpack.c.3.s8 %v2658
    %v2867 = vunpack.c.3.s8 %v2659
    %v2868 = vunpack.c.0.s8 %v2660
    %v2869 = vunpack.c.0.s8 %v2661
    %v2870 = vunpack.c.0.s8 %v2662
    %v2871 = vunpack.c.0.s8 %v2663
    %v2872 = vunpack.c.0.s8 %v2664
    %v2873 = vunpack.c.0.s8 %v2665
    %v2874 = vunpack.c.0.s8 %v2666
    %v2875 = vunpack.c.0.s8 %v2667
    %v2876 = vunpack.c.1.s8 %v2660
    %v2877 = vunpack.c.1.s8 %v2661
    %v2878 = vunpack.c.1.s8 %v2662
    %v2879 = vunpack.c.1.s8 %v2663
    %v2880 = vunpack.c.1.s8 %v2664
    %v2881 = vunpack.c.1.s8 %v2665
    %v2882 = vunpack.c.1.s8 %v2666
    %v2883 = vunpack.c.1.s8 %v2667
    %v2884 = vunpack.c.2.s8 %v2660
    %v2885 = vunpack.c.2.s8 %v2661
    %v2886 = vunpack.c.2.s8 %v2662
    %v2887 = vunpack.c.2.s8 %v2663
    %v2888 = vunpack.c.2.s8 %v2664
    %v2889 = vunpack.c.2.s8 %v2665
    %v2890 = vunpack.c.2.s8 %v2666
    %v2891 = vunpack.c.2.s8 %v2667
    %v2892 = vunpack.c.3.s8 %v2660
    %v2893 = vunpack.c.3.s8 %v2661
    %v2894 = vunpack.c.3.s8 %v2662
    %v2895 = vunpack.c.3.s8 %v2663
    %v2896 = vunpack.c.3.s8 %v2664
    %v2897 = vunpack.c.3.s8 %v2665
    %v2898 = vunpack.c.3.s8 %v2666
    %v2899 = vunpack.c.3.s8 %v2667
    %v2900 = vunpack.c.0.s8 %v2668
    %v2901 = vunpack.c.0.s8 %v2669
    %v2902 = vunpack.c.0.s8 %v2670
    %v2903 = vunpack.c.0.s8 %v2671
    %v2904 = vunpack.c.0.s8 %v2672
    %v2905 = vunpack.c.0.s8 %v2673
    %v2906 = vunpack.c.0.s8 %v2674
    %v2907 = vunpack.c.0.s8 %v2675
    %v2908 = vunpack.c.1.s8 %v2668
    %v2909 = vunpack.c.1.s8 %v2669
    %v2910 = vunpack.c.1.s8 %v2670
    %v2911 = vunpack.c.1.s8 %v2671
    %v2912 = vunpack.c.1.s8 %v2672
    %v2913 = vunpack.c.1.s8 %v2673
    %v2914 = vunpack.c.1.s8 %v2674
    %v2915 = vunpack.c.1.s8 %v2675
    %v2916 = vunpack.c.2.s8 %v2668
    %v2917 = vunpack.c.2.s8 %v2669
    %v2918 = vunpack.c.2.s8 %v2670
    %v2919 = vunpack.c.2.s8 %v2671
    %v2920 = vunpack.c.2.s8 %v2672
    %v2921 = vunpack.c.2.s8 %v2673
    %v2922 = vunpack.c.2.s8 %v2674
    %v2923 = vunpack.c.2.s8 %v2675
    %v2924 = vunpack.c.3.s8 %v2668
    %v2925 = vunpack.c.3.s8 %v2669
    %v2926 = vunpack.c.3.s8 %v2670
    %v2927 = vunpack.c.3.s8 %v2671
    %v2928 = vunpack.c.3.s8 %v2672
    %v2929 = vunpack.c.3.s8 %v2673
    %v2930 = vunpack.c.3.s8 %v2674
    %v2931 = vunpack.c.3.s8 %v2675
    %v2932 = vcvt.s32.f32 %v2676
    %v2933 = vcvt.s32.f32 %v2677
    %v2934 = vcvt.s32.f32 %v2678
    %v2935 = vcvt.s32.f32 %v2679
    %v2936 = vcvt.s32.f32 %v2680
    %v2937 = vcvt.s32.f32 %v2681
    %v2938 = vcvt.s32.f32 %v2682
    %v2939 = vcvt.s32.f32 %v2683
    %v2940 = vcvt.s32.f32 %v2684
    %v2941 = vcvt.s32.f32 %v2685
    %v2942 = vcvt.s32.f32 %v2686
    %v2943 = vcvt.s32.f32 %v2687
    %v2944 = vcvt.s32.f32 %v2688
    %v2945 = vcvt.s32.f32 %v2689
    %v2946 = vcvt.s32.f32 %v2690
    %v2947 = vcvt.s32.f32 %v2691
    %v2948 = vcvt.s32.f32 %v2692
    %v2949 = vcvt.s32.f32 %v2693
    %v2950 = vcvt.s32.f32 %v2694
    %v2951 = vcvt.s32.f32 %v2695
    %v2952 = vcvt.s32.f32 %v2696
    %v2953 = vcvt.s32.f32 %v2697
    %v2954 = vcvt.s32.f32 %v2698
    %v2955 = vcvt.s32.f32 %v2699
    %v2956 = vcvt.s32.f32 %v2700
    %v2957 = vcvt.s32.f32 %v2701
    %v2958 = vcvt.s32.f32 %v2702
    %v2959 = vcvt.s32.f32 %v2703
    %v2960 = vcvt.s32.f32 %v2704
    %v2961 = vcvt.s32.f32 %v2705
    %v2962 = vcvt.s32.f32 %v2706
    %v2963 = vcvt.s32.f32 %v2707
    %v2964 = vcvt.s32.f32 %v2708
    %v2965 = vcvt.s32.f32 %v2709
    %v2966 = vcvt.s32.f32 %v2710
    %v2967 = vcvt.s32.f32 %v2711
    %v2968 = vcvt.s32.f32 %v2712
    %v2969 = vcvt.s32.f32 %v2713
    %v2970 = vcvt.s32.f32 %v2714
    %v2971 = vcvt.s32.f32 %v2715
    %v2972 = vcvt.s32.f32 %v2716
    %v2973 = vcvt.s32.f32 %v2717
    %v2974 = vcvt.s32.f32 %v2718
    %v2975 = vcvt.s32.f32 %v2719
    %v2976 = vcvt.s32.f32 %v2720
    %v2977 = vcvt.s32.f32 %v2721
    %v2978 = vcvt.s32.f32 %v2722
    %v2979 = vcvt.s32.f32 %v2723
    %v2980 = vcvt.s32.f32 %v2724
    %v2981 = vcvt.s32.f32 %v2725
    %v2982 = vcvt.s32.f32 %v2726
    %v2983 = vcvt.s32.f32 %v2727
    %v2984 = vcvt.s32.f32 %v2728
    %v2985 = vcvt.s32.f32 %v2729
    %v2986 = vcvt.s32.f32 %v2730
    %v2987 = vcvt.s32.f32 %v2731
    %v2988 = vcvt.s32.f32 %v2732
    %v2989 = vcvt.s32.f32 %v2733
    %v2990 = vcvt.s32.f32 %v2734
    %v2991 = vcvt.s32.f32 %v2735
    %v2992 = vcvt.s32.f32 %v2736
    %v2993 = vcvt.s32.f32 %v2737
    %v2994 = vcvt.s32.f32 %v2738
    %v2995 = vcvt.s32.f32 %v2739
    %v2996 = vcvt.s32.f32 %v2740
    %v2997 = vcvt.s32.f32 %v2741
    %v2998 = vcvt.s32.f32 %v2742
    %v2999 = vcvt.s32.f32 %v2743
    %v3000 = vcvt.s32.f32 %v2744
    %v3001 = vcvt.s32.f32 %v2745
    %v3002 = vcvt.s32.f32 %v2746
    %v3003 = vcvt.s32.f32 %v2747
    %v3004 = vcvt.s32.f32 %v2748
    %v3005 = vcvt.s32.f32 %v2749
    %v3006 = vcvt.s32.f32 %v2750
    %v3007 = vcvt.s32.f32 %v2751
    %v3008 = vcvt.s32.f32 %v2752
    %v3009 = vcvt.s32.f32 %v2753
    %v3010 = vcvt.s32.f32 %v2754
    %v3011 = vcvt.s32.f32 %v2755
    %v3012 = vcvt.s32.f32 %v2756
    %v3013 = vcvt.s32.f32 %v2757
    %v3014 = vcvt.s32.f32 %v2758
    %v3015 = vcvt.s32.f32 %v2759
    %v3016 = vcvt.s32.f32 %v2760
    %v3017 = vcvt.s32.f32 %v2761
    %v3018 = vcvt.s32.f32 %v2762
    %v3019 = vcvt.s32.f32 %v2763
    %v3020 = vcvt.s32.f32 %v2764
    %v3021 = vcvt.s32.f32 %v2765
    %v3022 = vcvt.s32.f32 %v2766
    %v3023 = vcvt.s32.f32 %v2767
    %v3024 = vcvt.s32.f32 %v2768
    %v3025 = vcvt.s32.f32 %v2769
    %v3026 = vcvt.s32.f32 %v2770
    %v3027 = vcvt.s32.f32 %v2771
    %v3028 = vcvt.s32.f32 %v2772
    %v3029 = vcvt.s32.f32 %v2773
    %v3030 = vcvt.s32.f32 %v2774
    %v3031 = vcvt.s32.f32 %v2775
    %v3032 = vcvt.s32.f32 %v2776
    %v3033 = vcvt.s32.f32 %v2777
    %v3034 = vcvt.s32.f32 %v2778
    %v3035 = vcvt.s32.f32 %v2779
    %v3036 = vcvt.s32.f32 %v2780
    %v3037 = vcvt.s32.f32 %v2781
    %v3038 = vcvt.s32.f32 %v2782
    %v3039 = vcvt.s32.f32 %v2783
    %v3040 = vcvt.s32.f32 %v2784
    %v3041 = vcvt.s32.f32 %v2785
    %v3042 = vcvt.s32.f32 %v2786
    %v3043 = vcvt.s32.f32 %v2787
    %v3044 = vcvt.s32.f32 %v2788
    %v3045 = vcvt.s32.f32 %v2789
    %v3046 = vcvt.s32.f32 %v2790
    %v3047 = vcvt.s32.f32 %v2791
    %v3048 = vcvt.s32.f32 %v2792
    %v3049 = vcvt.s32.f32 %v2793
    %v3050 = vcvt.s32.f32 %v2794
    %v3051 = vcvt.s32.f32 %v2795
    %v3052 = vcvt.s32.f32 %v2796
    %v3053 = vcvt.s32.f32 %v2797
    %v3054 = vcvt.s32.f32 %v2798
    %v3055 = vcvt.s32.f32 %v2799
    %v3056 = vcvt.s32.f32 %v2800
    %v3057 = vcvt.s32.f32 %v2801
    %v3058 = vcvt.s32.f32 %v2802
    %v3059 = vcvt.s32.f32 %v2803
    %v3060 = vcvt.s32.f32 %v2804
    %v3061 = vcvt.s32.f32 %v2805
    %v3062 = vcvt.s32.f32 %v2806
    %v3063 = vcvt.s32.f32 %v2807
    %v3064 = vcvt.s32.f32 %v2808
    %v3065 = vcvt.s32.f32 %v2809
    %v3066 = vcvt.s32.f32 %v2810
    %v3067 = vcvt.s32.f32 %v2811
    %v3068 = vcvt.s32.f32 %v2812
    %v3069 = vcvt.s32.f32 %v2813
    %v3070 = vcvt.s32.f32 %v2814
    %v3071 = vcvt.s32.f32 %v2815
    %v3072 = vcvt.s32.f32 %v2816
    %v3073 = vcvt.s32.f32 %v2817
    %v3074 = vcvt.s32.f32 %v2818
    %v3075 = vcvt.s32.f32 %v2819
    %v3076 = vcvt.s32.f32 %v2820
    %v3077 = vcvt.s32.f32 %v2821
    %v3078 = vcvt.s32.f32 %v2822
    %v3079 = vcvt.s32.f32 %v2823
    %v3080 = vcvt.s32.f32 %v2824
    %v3081 = vcvt.s32.f32 %v2825
    %v3082 = vcvt.s32.f32 %v2826
    %v3083 = vcvt.s32.f32 %v2827
    %v3084 = vcvt.s32.f32 %v2828
    %v3085 = vcvt.s32.f32 %v2829
    %v3086 = vcvt.s32.f32 %v2830
    %v3087 = vcvt.s32.f32 %v2831
    %v3088 = vcvt.s32.f32 %v2832
    %v3089 = vcvt.s32.f32 %v2833
    %v3090 = vcvt.s32.f32 %v2834
    %v3091 = vcvt.s32.f32 %v2835
    %v3092 = vcvt.s32.f32 %v2836
    %v3093 = vcvt.s32.f32 %v2837
    %v3094 = vcvt.s32.f32 %v2838
    %v3095 = vcvt.s32.f32 %v2839
    %v3096 = vcvt.s32.f32 %v2840
    %v3097 = vcvt.s32.f32 %v2841
    %v3098 = vcvt.s32.f32 %v2842
    %v3099 = vcvt.s32.f32 %v2843
    %v3100 = vcvt.s32.f32 %v2844
    %v3101 = vcvt.s32.f32 %v2845
    %v3102 = vcvt.s32.f32 %v2846
    %v3103 = vcvt.s32.f32 %v2847
    %v3104 = vcvt.s32.f32 %v2848
    %v3105 = vcvt.s32.f32 %v2849
    %v3106 = vcvt.s32.f32 %v2850
    %v3107 = vcvt.s32.f32 %v2851
    %v3108 = vcvt.s32.f32 %v2852
    %v3109 = vcvt.s32.f32 %v2853
    %v3110 = vcvt.s32.f32 %v2854
    %v3111 = vcvt.s32.f32 %v2855
    %v3112 = vcvt.s32.f32 %v2856
    %v3113 = vcvt.s32.f32 %v2857
    %v3114 = vcvt.s32.f32 %v2858
    %v3115 = vcvt.s32.f32 %v2859
    %v3116 = vcvt.s32.f32 %v2860
    %v3117 = vcvt.s32.f32 %v2861
    %v3118 = vcvt.s32.f32 %v2862
    %v3119 = vcvt.s32.f32 %v2863
    %v3120 = vcvt.s32.f32 %v2864
    %v3121 = vcvt.s32.f32 %v2865
    %v3122 = vcvt.s32.f32 %v2866
    %v3123 = vcvt.s32.f32 %v2867
    %v3124 = vcvt.s32.f32 %v2868
    %v3125 = vcvt.s32.f32 %v2869
    %v3126 = vcvt.s32.f32 %v2870
    %v3127 = vcvt.s32.f32 %v2871
    %v3128 = vcvt.s32.f32 %v2872
    %v3129 = vcvt.s32.f32 %v2873
    %v3130 = vcvt.s32.f32 %v2874
    %v3131 = vcvt.s32.f32 %v2875
    %v3132 = vcvt.s32.f32 %v2876
    %v3133 = vcvt.s32.f32 %v2877
    %v3134 = vcvt.s32.f32 %v2878
    %v3135 = vcvt.s32.f32 %v2879
    %v3136 = vcvt.s32.f32 %v2880
    %v3137 = vcvt.s32.f32 %v2881
    %v3138 = vcvt.s32.f32 %v2882
    %v3139 = vcvt.s32.f32 %v2883
    %v3140 = vcvt.s32.f32 %v2884
    %v3141 = vcvt.s32.f32 %v2885
    %v3142 = vcvt.s32.f32 %v2886
    %v3143 = vcvt.s32.f32 %v2887
    %v3144 = vcvt.s32.f32 %v2888
    %v3145 = vcvt.s32.f32 %v2889
    %v3146 = vcvt.s32.f32 %v2890
    %v3147 = vcvt.s32.f32 %v2891
    %v3148 = vcvt.s32.f32 %v2892
    %v3149 = vcvt.s32.f32 %v2893
    %v3150 = vcvt.s32.f32 %v2894
    %v3151 = vcvt.s32.f32 %v2895
    %v3152 = vcvt.s32.f32 %v2896
    %v3153 = vcvt.s32.f32 %v2897
    %v3154 = vcvt.s32.f32 %v2898
    %v3155 = vcvt.s32.f32 %v2899
    %v3156 = vcvt.s32.f32 %v2900
    %v3157 = vcvt.s32.f32 %v2901
    %v3158 = vcvt.s32.f32 %v2902
    %v3159 = vcvt.s32.f32 %v2903
    %v3160 = vcvt.s32.f32 %v2904
    %v3161 = vcvt.s32.f32 %v2905
    %v3162 = vcvt.s32.f32 %v2906
    %v3163 = vcvt.s32.f32 %v2907
    %v3164 = vcvt.s32.f32 %v2908
    %v3165 = vcvt.s32.f32 %v2909
    %v3166 = vcvt.s32.f32 %v2910
    %v3167 = vcvt.s32.f32 %v2911
    %v3168 = vcvt.s32.f32 %v2912
    %v3169 = vcvt.s32.f32 %v2913
    %v3170 = vcvt.s32.f32 %v2914
    %v3171 = vcvt.s32.f32 %v2915
    %v3172 = vcvt.s32.f32 %v2916
    %v3173 = vcvt.s32.f32 %v2917
    %v3174 = vcvt.s32.f32 %v2918
    %v3175 = vcvt.s32.f32 %v2919
    %v3176 = vcvt.s32.f32 %v2920
    %v3177 = vcvt.s32.f32 %v2921
    %v3178 = vcvt.s32.f32 %v2922
    %v3179 = vcvt.s32.f32 %v2923
    %v3180 = vcvt.s32.f32 %v2924
    %v3181 = vcvt.s32.f32 %v2925
    %v3182 = vcvt.s32.f32 %v2926
    %v3183 = vcvt.s32.f32 %v2927
    %v3184 = vcvt.s32.f32 %v2928
    %v3185 = vcvt.s32.f32 %v2929
    %v3186 = vcvt.s32.f32 %v2930
    %v3187 = vcvt.s32.f32 %v2931
    %v3188 = vpack.c.bf16 %v2940, %v2932
    %v3189 = vpack.c.bf16 %v2941, %v2933
    %v3190 = vpack.c.bf16 %v2942, %v2934
    %v3191 = vpack.c.bf16 %v2943, %v2935
    %v3192 = vpack.c.bf16 %v2944, %v2936
    %v3193 = vpack.c.bf16 %v2945, %v2937
    %v3194 = vpack.c.bf16 %v2946, %v2938
    %v3195 = vpack.c.bf16 %v2947, %v2939
    %v3196 = vpack.c.bf16 %v2956, %v2948
    %v3197 = vpack.c.bf16 %v2957, %v2949
    %v3198 = vpack.c.bf16 %v2958, %v2950
    %v3199 = vpack.c.bf16 %v2959, %v2951
    %v3200 = vpack.c.bf16 %v2960, %v2952
    %v3201 = vpack.c.bf16 %v2961, %v2953
    %v3202 = vpack.c.bf16 %v2962, %v2954
    %v3203 = vpack.c.bf16 %v2963, %v2955
    %v3204 = vpack.c.bf16 %v2972, %v2964
    %v3205 = vpack.c.bf16 %v2973, %v2965
    %v3206 = vpack.c.bf16 %v2974, %v2966
    %v3207 = vpack.c.bf16 %v2975, %v2967
    %v3208 = vpack.c.bf16 %v2976, %v2968
    %v3209 = vpack.c.bf16 %v2977, %v2969
    %v3210 = vpack.c.bf16 %v2978, %v2970
    %v3211 = vpack.c.bf16 %v2979, %v2971
    %v3212 = vpack.c.bf16 %v2988, %v2980
    %v3213 = vpack.c.bf16 %v2989, %v2981
    %v3214 = vpack.c.bf16 %v2990, %v2982
    %v3215 = vpack.c.bf16 %v2991, %v2983
    %v3216 = vpack.c.bf16 %v2992, %v2984
    %v3217 = vpack.c.bf16 %v2993, %v2985
    %v3218 = vpack.c.bf16 %v2994, %v2986
    %v3219 = vpack.c.bf16 %v2995, %v2987
    %v3220 = vpack.c.bf16 %v3004, %v2996
    %v3221 = vpack.c.bf16 %v3005, %v2997
    %v3222 = vpack.c.bf16 %v3006, %v2998
    %v3223 = vpack.c.bf16 %v3007, %v2999
    %v3224 = vpack.c.bf16 %v3008, %v3000
    %v3225 = vpack.c.bf16 %v3009, %v3001
    %v3226 = vpack.c.bf16 %v3010, %v3002
    %v3227 = vpack.c.bf16 %v3011, %v3003
    %v3228 = vpack.c.bf16 %v3020, %v3012
    %v3229 = vpack.c.bf16 %v3021, %v3013
    %v3230 = vpack.c.bf16 %v3022, %v3014
    %v3231 = vpack.c.bf16 %v3023, %v3015
    %v3232 = vpack.c.bf16 %v3024, %v3016
    %v3233 = vpack.c.bf16 %v3025, %v3017
    %v3234 = vpack.c.bf16 %v3026, %v3018
    %v3235 = vpack.c.bf16 %v3027, %v3019
    %v3236 = vpack.c.bf16 %v3036, %v3028
    %v3237 = vpack.c.bf16 %v3037, %v3029
    %v3238 = vpack.c.bf16 %v3038, %v3030
    %v3239 = vpack.c.bf16 %v3039, %v3031
    %v3240 = vpack.c.bf16 %v3040, %v3032
    %v3241 = vpack.c.bf16 %v3041, %v3033
    %v3242 = vpack.c.bf16 %v3042, %v3034
    %v3243 = vpack.c.bf16 %v3043, %v3035
    %v3244 = vpack.c.bf16 %v3052, %v3044
    %v3245 = vpack.c.bf16 %v3053, %v3045
    %v3246 = vpack.c.bf16 %v3054, %v3046
    %v3247 = vpack.c.bf16 %v3055, %v3047
    %v3248 = vpack.c.bf16 %v3056, %v3048
    %v3249 = vpack.c.bf16 %v3057, %v3049
    %v3250 = vpack.c.bf16 %v3058, %v3050
    %v3251 = vpack.c.bf16 %v3059, %v3051
    %v3252 = vpack.c.bf16 %v3068, %v3060
    %v3253 = vpack.c.bf16 %v3069, %v3061
    %v3254 = vpack.c.bf16 %v3070, %v3062
    %v3255 = vpack.c.bf16 %v3071, %v3063
    %v3256 = vpack.c.bf16 %v3072, %v3064
    %v3257 = vpack.c.bf16 %v3073, %v3065
    %v3258 = vpack.c.bf16 %v3074, %v3066
    %v3259 = vpack.c.bf16 %v3075, %v3067
    %v3260 = vpack.c.bf16 %v3084, %v3076
    %v3261 = vpack.c.bf16 %v3085, %v3077
    %v3262 = vpack.c.bf16 %v3086, %v3078
    %v3263 = vpack.c.bf16 %v3087, %v3079
    %v3264 = vpack.c.bf16 %v3088, %v3080
    %v3265 = vpack.c.bf16 %v3089, %v3081
    %v3266 = vpack.c.bf16 %v3090, %v3082
    %v3267 = vpack.c.bf16 %v3091, %v3083
    %v3268 = vpack.c.bf16 %v3100, %v3092
    %v3269 = vpack.c.bf16 %v3101, %v3093
    %v3270 = vpack.c.bf16 %v3102, %v3094
    %v3271 = vpack.c.bf16 %v3103, %v3095
    %v3272 = vpack.c.bf16 %v3104, %v3096
    %v3273 = vpack.c.bf16 %v3105, %v3097
    %v3274 = vpack.c.bf16 %v3106, %v3098
    %v3275 = vpack.c.bf16 %v3107, %v3099
    %v3276 = vpack.c.bf16 %v3116, %v3108
    %v3277 = vpack.c.bf16 %v3117, %v3109
    %v3278 = vpack.c.bf16 %v3118, %v3110
    %v3279 = vpack.c.bf16 %v3119, %v3111
    %v3280 = vpack.c.bf16 %v3120, %v3112
    %v3281 = vpack.c.bf16 %v3121, %v3113
    %v3282 = vpack.c.bf16 %v3122, %v3114
    %v3283 = vpack.c.bf16 %v3123, %v3115
    %v3284 = vpack.c.bf16 %v3132, %v3124
    %v3285 = vpack.c.bf16 %v3133, %v3125
    %v3286 = vpack.c.bf16 %v3134, %v3126
    %v3287 = vpack.c.bf16 %v3135, %v3127
    %v3288 = vpack.c.bf16 %v3136, %v3128
    %v3289 = vpack.c.bf16 %v3137, %v3129
    %v3290 = vpack.c.bf16 %v3138, %v3130
    %v3291 = vpack.c.bf16 %v3139, %v3131
    %v3292 = vpack.c.bf16 %v3148, %v3140
    %v3293 = vpack.c.bf16 %v3149, %v3141
    %v3294 = vpack.c.bf16 %v3150, %v3142
    %v3295 = vpack.c.bf16 %v3151, %v3143
    %v3296 = vpack.c.bf16 %v3152, %v3144
    %v3297 = vpack.c.bf16 %v3153, %v3145
    %v3298 = vpack.c.bf16 %v3154, %v3146
    %v3299 = vpack.c.bf16 %v3155, %v3147
    %v3300 = vpack.c.bf16 %v3164, %v3156
    %v3301 = vpack.c.bf16 %v3165, %v3157
    %v3302 = vpack.c.bf16 %v3166, %v3158
    %v3303 = vpack.c.bf16 %v3167, %v3159
    %v3304 = vpack.c.bf16 %v3168, %v3160
    %v3305 = vpack.c.bf16 %v3169, %v3161
    %v3306 = vpack.c.bf16 %v3170, %v3162
    %v3307 = vpack.c.bf16 %v3171, %v3163
    %v3308 = vpack.c.bf16 %v3180, %v3172
    %v3309 = vpack.c.bf16 %v3181, %v3173
    %v3310 = vpack.c.bf16 %v3182, %v3174
    %v3311 = vpack.c.bf16 %v3183, %v3175
    %v3312 = vpack.c.bf16 %v3184, %v3176
    %v3313 = vpack.c.bf16 %v3185, %v3177
    %v3314 = vpack.c.bf16 %v3186, %v3178
    %v3315 = vpack.c.bf16 %v3187, %v3179
    %3316 = vmatpush.bf16.msra.mxu0 %v3244
    %3317 = vmatpush.bf16.msra.mxu0 %v3236
    %3318 = vmatpush.bf16.msra.mxu0 %v3228
    %3319 = vmatpush.bf16.msra.mxu0 %v3220
    %3320 = vmatpush.bf16.msra.mxu0 %v3212
    %3321 = vmatpush.bf16.msra.mxu0 %v3204
    %3322 = vmatpush.bf16.msra.mxu0 %v3196
    %3323 = vmatpush.bf16.msra.mxu0 %v3188
    %3324 = vmatmul.bf16.gmra.mxu0 %v2610
    %v3325 = vpop.f32.mrf.mxu0
    %v3326 = vadd.f32 0.0, %v3325
    %v3327 = vpop.f32.mrf.mxu0
    %3328 = vdwg.mxu0
    %3329 = vmatpush.bf16.msra.mxu0 %v3308
    %3330 = vmatpush.bf16.msra.mxu0 %v3300
    %3331 = vmatpush.bf16.msra.mxu0 %v3292
    %3332 = vmatpush.bf16.msra.mxu0 %v3284
    %3333 = vmatpush.bf16.msra.mxu0 %v3276
    %3334 = vmatpush.bf16.msra.mxu0 %v3268
    %3335 = vmatpush.bf16.msra.mxu0 %v3260
    %3336 = vmatpush.bf16.msra.mxu0 %v3252
    %3337 = vmatmul.bf16.gmra.mxu0 %v2611
    %v3338 = vpop.f32.mrf.mxu0
    %v3339 = vadd.f32 %v3326, %v3338
    %v3340 = vpop.f32.mrf.mxu0
    %3341 = vdwg.mxu0
    %3342 = vmatpush.bf16.msra.mxu0 %v3245
    %3343 = vmatpush.bf16.msra.mxu0 %v3237
    %3344 = vmatpush.bf16.msra.mxu0 %v3229
    %3345 = vmatpush.bf16.msra.mxu0 %v3221
    %3346 = vmatpush.bf16.msra.mxu0 %v3213
    %3347 = vmatpush.bf16.msra.mxu0 %v3205
    %3348 = vmatpush.bf16.msra.mxu0 %v3197
    %3349 = vmatpush.bf16.msra.mxu0 %v3189
    %3350 = vmatmul.bf16.gmra.mxu0 %v2610
    %v3351 = vpop.f32.mrf.mxu0
    %v3352 = vadd.f32 0.0, %v3351
    %v3353 = vpop.f32.mrf.mxu0
    %3354 = vdwg.mxu0
    %3355 = vmatpush.bf16.msra.mxu0 %v3309
    %3356 = vmatpush.bf16.msra.mxu0 %v3301
    %3357 = vmatpush.bf16.msra.mxu0 %v3293
    %3358 = vmatpush.bf16.msra.mxu0 %v3285
    %3359 = vmatpush.bf16.msra.mxu0 %v3277
    %3360 = vmatpush.bf16.msra.mxu0 %v3269
    %3361 = vmatpush.bf16.msra.mxu0 %v3261
    %3362 = vmatpush.bf16.msra.mxu0 %v3253
    %3363 = vmatmul.bf16.gmra.mxu0 %v2611
    %v3364 = vpop.f32.mrf.mxu0
    %v3365 = vadd.f32 %v3352, %v3364
    %v3366 = vpop.f32.mrf.mxu0
    %3367 = vdwg.mxu0
    %3368 = vmatpush.bf16.msra.mxu0 %v3246
    %3369 = vmatpush.bf16.msra.mxu0 %v3238
    %3370 = vmatpush.bf16.msra.mxu0 %v3230
    %3371 = vmatpush.bf16.msra.mxu0 %v3222
    %3372 = vmatpush.bf16.msra.mxu0 %v3214
    %3373 = vmatpush.bf16.msra.mxu0 %v3206
    %3374 = vmatpush.bf16.msra.mxu0 %v3198
    %3375 = vmatpush.bf16.msra.mxu0 %v3190
    %3376 = vmatmul.bf16.gmra.mxu0 %v2610
    %v3377 = vpop.f32.mrf.mxu0
    %v3378 = vadd.f32 0.0, %v3377
    %v3379 = vpop.f32.mrf.mxu0
    %3380 = vdwg.mxu0
    %3381 = vmatpush.bf16.msra.mxu0 %v3310
    %3382 = vmatpush.bf16.msra.mxu0 %v3302
    %3383 = vmatpush.bf16.msra.mxu0 %v3294
    %3384 = vmatpush.bf16.msra.mxu0 %v3286
    %3385 = vmatpush.bf16.msra.mxu0 %v3278
    %3386 = vmatpush.bf16.msra.mxu0 %v3270
    %3387 = vmatpush.bf16.msra.mxu0 %v3262
    %3388 = vmatpush.bf16.msra.mxu0 %v3254
    %3389 = vmatmul.bf16.gmra.mxu0 %v2611
    %v3390 = vpop.f32.mrf.mxu0
    %v3391 = vadd.f32 %v3378, %v3390
    %v3392 = vpop.f32.mrf.mxu0
    %3393 = vdwg.mxu0
    %3394 = vmatpush.bf16.msra.mxu0 %v3247
    %3395 = vmatpush.bf16.msra.mxu0 %v3239
    %3396 = vmatpush.bf16.msra.mxu0 %v3231
    %3397 = vmatpush.bf16.msra.mxu0 %v3223
    %3398 = vmatpush.bf16.msra.mxu0 %v3215
    %3399 = vmatpush.bf16.msra.mxu0 %v3207
    %3400 = vmatpush.bf16.msra.mxu0 %v3199
    %3401 = vmatpush.bf16.msra.mxu0 %v3191
    %3402 = vmatmul.bf16.gmra.mxu0 %v2610
    %v3403 = vpop.f32.mrf.mxu0
    %v3404 = vadd.f32 0.0, %v3403
    %v3405 = vpop.f32.mrf.mxu0
    %3406 = vdwg.mxu0
    %3407 = vmatpush.bf16.msra.mxu0 %v3311
    %3408 = vmatpush.bf16.msra.mxu0 %v3303
    %3409 = vmatpush.bf16.msra.mxu0 %v3295
    %3410 = vmatpush.bf16.msra.mxu0 %v3287
    %3411 = vmatpush.bf16.msra.mxu0 %v3279
    %3412 = vmatpush.bf16.msra.mxu0 %v3271
    %3413 = vmatpush.bf16.msra.mxu0 %v3263
    %3414 = vmatpush.bf16.msra.mxu0 %v3255
    %3415 = vmatmul.bf16.gmra.mxu0 %v2611
    %v3416 = vpop.f32.mrf.mxu0
    %v3417 = vadd.f32 %v3404, %v3416
    %v3418 = vpop.f32.mrf.mxu0
    %3419 = vdwg.mxu0
    %3420 = vmatpush.bf16.msra.mxu0 %v3248
    %3421 = vmatpush.bf16.msra.mxu0 %v3240
    %3422 = vmatpush.bf16.msra.mxu0 %v3232
    %3423 = vmatpush.bf16.msra.mxu0 %v3224
    %3424 = vmatpush.bf16.msra.mxu0 %v3216
    %3425 = vmatpush.bf16.msra.mxu0 %v3208
    %3426 = vmatpush.bf16.msra.mxu0 %v3200
    %3427 = vmatpush.bf16.msra.mxu0 %v3192
    %3428 = vmatmul.bf16.gmra.mxu0 %v2610
    %v3429 = vpop.f32.mrf.mxu0
    %v3430 = vadd.f32 0.0, %v3429
    %v3431 = vpop.f32.mrf.mxu0
    %3432 = vdwg.mxu0
    %3433 = vmatpush.bf16.msra.mxu0 %v3312
    %3434 = vmatpush.bf16.msra.mxu0 %v3304
    %3435 = vmatpush.bf16.msra.mxu0 %v3296
    %3436 = vmatpush.bf16.msra.mxu0 %v3288
    %3437 = vmatpush.bf16.msra.mxu0 %v3280
    %3438 = vmatpush.bf16.msra.mxu0 %v3272
    %3439 = vmatpush.bf16.msra.mxu0 %v3264
    %3440 = vmatpush.bf16.msra.mxu0 %v3256
    %3441 = vmatmul.bf16.gmra.mxu0 %v2611
    %v3442 = vpop.f32.mrf.mxu0
    %v3443 = vadd.f32 %v3430, %v3442
    %v3444 = vpop.f32.mrf.mxu0
    %3445 = vdwg.mxu0
    %3446 = vmatpush.bf16.msra.mxu0 %v3249
    %3447 = vmatpush.bf16.msra.mxu0 %v3241
    %3448 = vmatpush.bf16.msra.mxu0 %v3233
    %3449 = vmatpush.bf16.msra.mxu0 %v3225
    %3450 = vmatpush.bf16.msra.mxu0 %v3217
    %3451 = vmatpush.bf16.msra.mxu0 %v3209
    %3452 = vmatpush.bf16.msra.mxu0 %v3201
    %3453 = vmatpush.bf16.msra.mxu0 %v3193
    %3454 = vmatmul.bf16.gmra.mxu0 %v2610
    %v3455 = vpop.f32.mrf.mxu0
    %v3456 = vadd.f32 0.0, %v3455
    %v3457 = vpop.f32.mrf.mxu0
    %3458 = vdwg.mxu0
    %3459 = vmatpush.bf16.msra.mxu0 %v3313
    %3460 = vmatpush.bf16.msra.mxu0 %v3305
    %3461 = vmatpush.bf16.msra.mxu0 %v3297
    %3462 = vmatpush.bf16.msra.mxu0 %v3289
    %3463 = vmatpush.bf16.msra.mxu0 %v3281
    %3464 = vmatpush.bf16.msra.mxu0 %v3273
    %3465 = vmatpush.bf16.msra.mxu0 %v3265
    %3466 = vmatpush.bf16.msra.mxu0 %v3257
    %3467 = vmatmul.bf16.gmra.mxu0 %v2611
    %v3468 = vpop.f32.mrf.mxu0
    %v3469 = vadd.f32 %v3456, %v3468
    %v3470 = vpop.f32.mrf.mxu0
    %3471 = vdwg.mxu0
    %3472 = vmatpush.bf16.msra.mxu0 %v3250
    %3473 = vmatpush.bf16.msra.mxu0 %v3242
    %3474 = vmatpush.bf16.msra.mxu0 %v3234
    %3475 = vmatpush.bf16.msra.mxu0 %v3226
    %3476 = vmatpush.bf16.msra.mxu0 %v3218
    %3477 = vmatpush.bf16.msra.mxu0 %v3210
    %3478 = vmatpush.bf16.msra.mxu0 %v3202
    %3479 = vmatpush.bf16.msra.mxu0 %v3194
    %3480 = vmatmul.bf16.gmra.mxu0 %v2610
    %v3481 = vpop.f32.mrf.mxu0
    %v3482 = vadd.f32 0.0, %v3481
    %v3483 = vpop.f32.mrf.mxu0
    %3484 = vdwg.mxu0
    %3485 = vmatpush.bf16.msra.mxu0 %v3314
    %3486 = vmatpush.bf16.msra.mxu0 %v3306
    %3487 = vmatpush.bf16.msra.mxu0 %v3298
    %3488 = vmatpush.bf16.msra.mxu0 %v3290
    %3489 = vmatpush.bf16.msra.mxu0 %v3282
    %3490 = vmatpush.bf16.msra.mxu0 %v3274
    %3491 = vmatpush.bf16.msra.mxu0 %v3266
    %3492 = vmatpush.bf16.msra.mxu0 %v3258
    %3493 = vmatmul.bf16.gmra.mxu0 %v2611
    %v3494 = vpop.f32.mrf.mxu0
    %v3495 = vadd.f32 %v3482, %v3494
    %v3496 = vpop.f32.mrf.mxu0
    %3497 = vdwg.mxu0
    %3498 = vmatpush.bf16.msra.mxu0 %v3251
    %3499 = vmatpush.bf16.msra.mxu0 %v3243
    %3500 = vmatpush.bf16.msra.mxu0 %v3235
    %3501 = vmatpush.bf16.msra.mxu0 %v3227
    %3502 = vmatpush.bf16.msra.mxu0 %v3219
    %3503 = vmatpush.bf16.msra.mxu0 %v3211
    %3504 = vmatpush.bf16.msra.mxu0 %v3203
    %3505 = vmatpush.bf16.msra.mxu0 %v3195
    %3506 = vmatmul.bf16.gmra.mxu0 %v2610
    %v3507 = vpop.f32.mrf.mxu0
    %v3508 = vadd.f32 0.0, %v3507
    %v3509 = vpop.f32.mrf.mxu0
    %3510 = vdwg.mxu0
    %3511 = vmatpush.bf16.msra.mxu0 %v3315
    %3512 = vmatpush.bf16.msra.mxu0 %v3307
    %3513 = vmatpush.bf16.msra.mxu0 %v3299
    %3514 = vmatpush.bf16.msra.mxu0 %v3291
    %3515 = vmatpush.bf16.msra.mxu0 %v3283
    %3516 = vmatpush.bf16.msra.mxu0 %v3275
    %3517 = vmatpush.bf16.msra.mxu0 %v3267
    %3518 = vmatpush.bf16.msra.mxu0 %v3259
    %3519 = vmatmul.bf16.gmra.mxu0 %v2611
    %v3520 = vpop.f32.mrf.mxu0
    %v3521 = vadd.f32 %v3508, %v3520
    %v3522 = vpop.f32.mrf.mxu0
    %3523 = vdwg.mxu0
    %3524 = vmatpush.bf16.msra.mxu0 %v2538
    %3525 = vmatpush.bf16.msra.mxu0 %v2530
    %3526 = vmatpush.bf16.msra.mxu0 %v2522
    %3527 = vmatpush.bf16.msra.mxu0 %v2514
    %3528 = vmatpush.bf16.msra.mxu0 %v2506
    %3529 = vmatpush.bf16.msra.mxu0 %v2498
    %3530 = vmatpush.bf16.msra.mxu0 %v2490
    %3531 = vmatpush.bf16.msra.mxu0 %v2482
    %3532 = vmatmul.bf16.gmra.mxu0 %v1904
    %v3533 = vpop.f32.mrf.mxu0
    %v3534 = vadd.f32 %v3339, %v3533
    %v3535 = vpop.f32.mrf.mxu0
    %3536 = vdwg.mxu0
    %3537 = vmatpush.bf16.msra.mxu0 %v2602
    %3538 = vmatpush.bf16.msra.mxu0 %v2594
    %3539 = vmatpush.bf16.msra.mxu0 %v2586
    %3540 = vmatpush.bf16.msra.mxu0 %v2578
    %3541 = vmatpush.bf16.msra.mxu0 %v2570
    %3542 = vmatpush.bf16.msra.mxu0 %v2562
    %3543 = vmatpush.bf16.msra.mxu0 %v2554
    %3544 = vmatpush.bf16.msra.mxu0 %v2546
    %3545 = vmatmul.bf16.gmra.mxu0 %v1905
    %v3546 = vpop.f32.mrf.mxu0
    %v3547 = vadd.f32 %v3534, %v3546
    %v3548 = vpop.f32.mrf.mxu0
    %3549 = vdwg.mxu0
    %3550 = vmatpush.bf16.msra.mxu0 %v2539
    %3551 = vmatpush.bf16.msra.mxu0 %v2531
    %3552 = vmatpush.bf16.msra.mxu0 %v2523
    %3553 = vmatpush.bf16.msra.mxu0 %v2515
    %3554 = vmatpush.bf16.msra.mxu0 %v2507
    %3555 = vmatpush.bf16.msra.mxu0 %v2499
    %3556 = vmatpush.bf16.msra.mxu0 %v2491
    %3557 = vmatpush.bf16.msra.mxu0 %v2483
    %3558 = vmatmul.bf16.gmra.mxu0 %v1904
    %v3559 = vpop.f32.mrf.mxu0
    %v3560 = vadd.f32 %v3365, %v3559
    %v3561 = vpop.f32.mrf.mxu0
    %3562 = vdwg.mxu0
    %3563 = vmatpush.bf16.msra.mxu0 %v2603
    %3564 = vmatpush.bf16.msra.mxu0 %v2595
    %3565 = vmatpush.bf16.msra.mxu0 %v2587
    %3566 = vmatpush.bf16.msra.mxu0 %v2579
    %3567 = vmatpush.bf16.msra.mxu0 %v2571
    %3568 = vmatpush.bf16.msra.mxu0 %v2563
    %3569 = vmatpush.bf16.msra.mxu0 %v2555
    %3570 = vmatpush.bf16.msra.mxu0 %v2547
    %3571 = vmatmul.bf16.gmra.mxu0 %v1905
    %v3572 = vpop.f32.mrf.mxu0
    %v3573 = vadd.f32 %v3560, %v3572
    %v3574 = vpop.f32.mrf.mxu0
    %3575 = vdwg.mxu0
    %3576 = vmatpush.bf16.msra.mxu0 %v2540
    %3577 = vmatpush.bf16.msra.mxu0 %v2532
    %3578 = vmatpush.bf16.msra.mxu0 %v2524
    %3579 = vmatpush.bf16.msra.mxu0 %v2516
    %3580 = vmatpush.bf16.msra.mxu0 %v2508
    %3581 = vmatpush.bf16.msra.mxu0 %v2500
    %3582 = vmatpush.bf16.msra.mxu0 %v2492
    %3583 = vmatpush.bf16.msra.mxu0 %v2484
    %3584 = vmatmul.bf16.gmra.mxu0 %v1904
    %v3585 = vpop.f32.mrf.mxu0
    %v3586 = vadd.f32 %v3391, %v3585
    %v3587 = vpop.f32.mrf.mxu0
    %3588 = vdwg.mxu0
    %3589 = vmatpush.bf16.msra.mxu0 %v2604
    %3590 = vmatpush.bf16.msra.mxu0 %v2596
    %3591 = vmatpush.bf16.msra.mxu0 %v2588
    %3592 = vmatpush.bf16.msra.mxu0 %v2580
    %3593 = vmatpush.bf16.msra.mxu0 %v2572
    %3594 = vmatpush.bf16.msra.mxu0 %v2564
    %3595 = vmatpush.bf16.msra.mxu0 %v2556
    %3596 = vmatpush.bf16.msra.mxu0 %v2548
    %3597 = vmatmul.bf16.gmra.mxu0 %v1905
    %v3598 = vpop.f32.mrf.mxu0
    %v3599 = vadd.f32 %v3586, %v3598
    %v3600 = vpop.f32.mrf.mxu0
    %3601 = vdwg.mxu0
    %3602 = vmatpush.bf16.msra.mxu0 %v2541
    %3603 = vmatpush.bf16.msra.mxu0 %v2533
    %3604 = vmatpush.bf16.msra.mxu0 %v2525
    %3605 = vmatpush.bf16.msra.mxu0 %v2517
    %3606 = vmatpush.bf16.msra.mxu0 %v2509
    %3607 = vmatpush.bf16.msra.mxu0 %v2501
    %3608 = vmatpush.bf16.msra.mxu0 %v2493
    %3609 = vmatpush.bf16.msra.mxu0 %v2485
    %3610 = vmatmul.bf16.gmra.mxu0 %v1904
    %v3611 = vpop.f32.mrf.mxu0
    %v3612 = vadd.f32 %v3417, %v3611
    %v3613 = vpop.f32.mrf.mxu0
    %3614 = vdwg.mxu0
    %3615 = vmatpush.bf16.msra.mxu0 %v2605
    %3616 = vmatpush.bf16.msra.mxu0 %v2597
    %3617 = vmatpush.bf16.msra.mxu0 %v2589
    %3618 = vmatpush.bf16.msra.mxu0 %v2581
    %3619 = vmatpush.bf16.msra.mxu0 %v2573
    %3620 = vmatpush.bf16.msra.mxu0 %v2565
    %3621 = vmatpush.bf16.msra.mxu0 %v2557
    %3622 = vmatpush.bf16.msra.mxu0 %v2549
    %3623 = vmatmul.bf16.gmra.mxu0 %v1905
    %v3624 = vpop.f32.mrf.mxu0
    %v3625 = vadd.f32 %v3612, %v3624
    %v3626 = vpop.f32.mrf.mxu0
    %3627 = vdwg.mxu0
    %3628 = vmatpush.bf16.msra.mxu0 %v2542
    %3629 = vmatpush.bf16.msra.mxu0 %v2534
    %3630 = vmatpush.bf16.msra.mxu0 %v2526
    %3631 = vmatpush.bf16.msra.mxu0 %v2518
    %3632 = vmatpush.bf16.msra.mxu0 %v2510
    %3633 = vmatpush.bf16.msra.mxu0 %v2502
    %3634 = vmatpush.bf16.msra.mxu0 %v2494
    %3635 = vmatpush.bf16.msra.mxu0 %v2486
    %3636 = vmatmul.bf16.gmra.mxu0 %v1904
    %v3637 = vpop.f32.mrf.mxu0
    %v3638 = vadd.f32 %v3443, %v3637
    %v3639 = vpop.f32.mrf.mxu0
    %3640 = vdwg.mxu0
    %3641 = vmatpush.bf16.msra.mxu0 %v2606
    %3642 = vmatpush.bf16.msra.mxu0 %v2598
    %3643 = vmatpush.bf16.msra.mxu0 %v2590
    %3644 = vmatpush.bf16.msra.mxu0 %v2582
    %3645 = vmatpush.bf16.msra.mxu0 %v2574
    %3646 = vmatpush.bf16.msra.mxu0 %v2566
    %3647 = vmatpush.bf16.msra.mxu0 %v2558
    %3648 = vmatpush.bf16.msra.mxu0 %v2550
    %3649 = vmatmul.bf16.gmra.mxu0 %v1905
    %v3650 = vpop.f32.mrf.mxu0
    %v3651 = vadd.f32 %v3638, %v3650
    %v3652 = vpop.f32.mrf.mxu0
    %3653 = vdwg.mxu0
    %3654 = vmatpush.bf16.msra.mxu0 %v2543
    %3655 = vmatpush.bf16.msra.mxu0 %v2535
    %3656 = vmatpush.bf16.msra.mxu0 %v2527
    %3657 = vmatpush.bf16.msra.mxu0 %v2519
    %3658 = vmatpush.bf16.msra.mxu0 %v2511
    %3659 = vmatpush.bf16.msra.mxu0 %v2503
    %3660 = vmatpush.bf16.msra.mxu0 %v2495
    %3661 = vmatpush.bf16.msra.mxu0 %v2487
    %3662 = vmatmul.bf16.gmra.mxu0 %v1904
    %v3663 = vpop.f32.mrf.mxu0
    %v3664 = vadd.f32 %v3469, %v3663
    %v3665 = vpop.f32.mrf.mxu0
    %3666 = vdwg.mxu0
    %3667 = vmatpush.bf16.msra.mxu0 %v2607
    %3668 = vmatpush.bf16.msra.mxu0 %v2599
    %3669 = vmatpush.bf16.msra.mxu0 %v2591
    %3670 = vmatpush.bf16.msra.mxu0 %v2583
    %3671 = vmatpush.bf16.msra.mxu0 %v2575
    %3672 = vmatpush.bf16.msra.mxu0 %v2567
    %3673 = vmatpush.bf16.msra.mxu0 %v2559
    %3674 = vmatpush.bf16.msra.mxu0 %v2551
    %3675 = vmatmul.bf16.gmra.mxu0 %v1905
    %v3676 = vpop.f32.mrf.mxu0
    %v3677 = vadd.f32 %v3664, %v3676
    %v3678 = vpop.f32.mrf.mxu0
    %3679 = vdwg.mxu0
    %3680 = vmatpush.bf16.msra.mxu0 %v2544
    %3681 = vmatpush.bf16.msra.mxu0 %v2536
    %3682 = vmatpush.bf16.msra.mxu0 %v2528
    %3683 = vmatpush.bf16.msra.mxu0 %v2520
    %3684 = vmatpush.bf16.msra.mxu0 %v2512
    %3685 = vmatpush.bf16.msra.mxu0 %v2504
    %3686 = vmatpush.bf16.msra.mxu0 %v2496
    %3687 = vmatpush.bf16.msra.mxu0 %v2488
    %3688 = vmatmul.bf16.gmra.mxu0 %v1904
    %v3689 = vpop.f32.mrf.mxu0
    %v3690 = vadd.f32 %v3495, %v3689
    %v3691 = vpop.f32.mrf.mxu0
    %3692 = vdwg.mxu0
    %3693 = vmatpush.bf16.msra.mxu0 %v2608
    %3694 = vmatpush.bf16.msra.mxu0 %v2600
    %3695 = vmatpush.bf16.msra.mxu0 %v2592
    %3696 = vmatpush.bf16.msra.mxu0 %v2584
    %3697 = vmatpush.bf16.msra.mxu0 %v2576
    %3698 = vmatpush.bf16.msra.mxu0 %v2568
    %3699 = vmatpush.bf16.msra.mxu0 %v2560
    %3700 = vmatpush.bf16.msra.mxu0 %v2552
    %3701 = vmatmul.bf16.gmra.mxu0 %v1905
    %v3702 = vpop.f32.mrf.mxu0
    %v3703 = vadd.f32 %v3690, %v3702
    %v3704 = vpop.f32.mrf.mxu0
    %3705 = vdwg.mxu0
    %3706 = vmatpush.bf16.msra.mxu0 %v2545
    %3707 = vmatpush.bf16.msra.mxu0 %v2537
    %3708 = vmatpush.bf16.msra.mxu0 %v2529
    %3709 = vmatpush.bf16.msra.mxu0 %v2521
    %3710 = vmatpush.bf16.msra.mxu0 %v2513
    %3711 = vmatpush.bf16.msra.mxu0 %v2505
    %3712 = vmatpush.bf16.msra.mxu0 %v2497
    %3713 = vmatpush.bf16.msra.mxu0 %v2489
    %3714 = vmatmul.bf16.gmra.mxu0 %v1904
    %v3715 = vpop.f32.mrf.mxu0
    %v3716 = vadd.f32 %v3521, %v3715
    %v3717 = vpop.f32.mrf.mxu0
    %3718 = vdwg.mxu0
    %3719 = vmatpush.bf16.msra.mxu0 %v2609
    %3720 = vmatpush.bf16.msra.mxu0 %v2601
    %3721 = vmatpush.bf16.msra.mxu0 %v2593
    %3722 = vmatpush.bf16.msra.mxu0 %v2585
    %3723 = vmatpush.bf16.msra.mxu0 %v2577
    %3724 = vmatpush.bf16.msra.mxu0 %v2569
    %3725 = vmatpush.bf16.msra.mxu0 %v2561
    %3726 = vmatpush.bf16.msra.mxu0 %v2553
    %3727 = vmatmul.bf16.gmra.mxu0 %v1905
    %v3728 = vpop.f32.mrf.mxu0
    %v3729 = vadd.f32 %v3716, %v3728
    %v3730 = vpop.f32.mrf.mxu0
    %3731 = vdwg.mxu0
    %v3732 = vpack.c.bf16 %v1903, %v1903
    %v3733 = vld [vmem:[%s10] sm:$0xff]
    %v3734 = vld [vmem:[%s10 + $0x8] sm:$0xff]
    %v3735 = vld [vmem:[%s10 + $0x10] sm:$0xff]
    %v3736 = vld [vmem:[%s10 + $0x18] sm:$0xff]
    %v3737 = vld [vmem:[%s10 + $0x20] sm:$0xff]
    %v3738 = vld [vmem:[%s10 + $0x28] sm:$0xff]
    %v3739 = vld [vmem:[%s10 + $0x30] sm:$0xff]
    %v3740 = vld [vmem:[%s10 + $0x38] sm:$0xff]
    %v3741 = vunpack.c.0.s8 %v3733
    %v3742 = vunpack.c.0.s8 %v3734
    %v3743 = vunpack.c.0.s8 %v3735
    %v3744 = vunpack.c.0.s8 %v3736
    %v3745 = vunpack.c.0.s8 %v3737
    %v3746 = vunpack.c.0.s8 %v3738
    %v3747 = vunpack.c.0.s8 %v3739
    %v3748 = vunpack.c.0.s8 %v3740
    %v3749 = vunpack.c.1.s8 %v3733
    %v3750 = vunpack.c.1.s8 %v3734
    %v3751 = vunpack.c.1.s8 %v3735
    %v3752 = vunpack.c.1.s8 %v3736
    %v3753 = vunpack.c.1.s8 %v3737
    %v3754 = vunpack.c.1.s8 %v3738
    %v3755 = vunpack.c.1.s8 %v3739
    %v3756 = vunpack.c.1.s8 %v3740
    %v3757 = vunpack.c.2.s8 %v3733
    %v3758 = vunpack.c.2.s8 %v3734
    %v3759 = vunpack.c.2.s8 %v3735
    %v3760 = vunpack.c.2.s8 %v3736
    %v3761 = vunpack.c.2.s8 %v3737
    %v3762 = vunpack.c.2.s8 %v3738
    %v3763 = vunpack.c.2.s8 %v3739
    %v3764 = vunpack.c.2.s8 %v3740
    %v3765 = vunpack.c.3.s8 %v3733
    %v3766 = vunpack.c.3.s8 %v3734
    %v3767 = vunpack.c.3.s8 %v3735
    %v3768 = vunpack.c.3.s8 %v3736
    %v3769 = vunpack.c.3.s8 %v3737
    %v3770 = vunpack.c.3.s8 %v3738
    %v3771 = vunpack.c.3.s8 %v3739
    %v3772 = vunpack.c.3.s8 %v3740
    %v3773 = vcvt.s32.f32 %v3741
    %v3774 = vcvt.s32.f32 %v3742
    %v3775 = vcvt.s32.f32 %v3743
    %v3776 = vcvt.s32.f32 %v3744
    %v3777 = vcvt.s32.f32 %v3745
    %v3778 = vcvt.s32.f32 %v3746
    %v3779 = vcvt.s32.f32 %v3747
    %v3780 = vcvt.s32.f32 %v3748
    %v3781 = vcvt.s32.f32 %v3749
    %v3782 = vcvt.s32.f32 %v3750
    %v3783 = vcvt.s32.f32 %v3751
    %v3784 = vcvt.s32.f32 %v3752
    %v3785 = vcvt.s32.f32 %v3753
    %v3786 = vcvt.s32.f32 %v3754
    %v3787 = vcvt.s32.f32 %v3755
    %v3788 = vcvt.s32.f32 %v3756
    %v3789 = vcvt.s32.f32 %v3757
    %v3790 = vcvt.s32.f32 %v3758
    %v3791 = vcvt.s32.f32 %v3759
    %v3792 = vcvt.s32.f32 %v3760
    %v3793 = vcvt.s32.f32 %v3761
    %v3794 = vcvt.s32.f32 %v3762
    %v3795 = vcvt.s32.f32 %v3763
    %v3796 = vcvt.s32.f32 %v3764
    %v3797 = vcvt.s32.f32 %v3765
    %v3798 = vcvt.s32.f32 %v3766
    %v3799 = vcvt.s32.f32 %v3767
    %v3800 = vcvt.s32.f32 %v3768
    %v3801 = vcvt.s32.f32 %v3769
    %v3802 = vcvt.s32.f32 %v3770
    %v3803 = vcvt.s32.f32 %v3771
    %v3804 = vcvt.s32.f32 %v3772
    %v3805 = vpack.c.bf16 %v3781, %v3773
    %v3806 = vpack.c.bf16 %v3782, %v3774
    %v3807 = vpack.c.bf16 %v3783, %v3775
    %v3808 = vpack.c.bf16 %v3784, %v3776
    %v3809 = vpack.c.bf16 %v3785, %v3777
    %v3810 = vpack.c.bf16 %v3786, %v3778
    %v3811 = vpack.c.bf16 %v3787, %v3779
    %v3812 = vpack.c.bf16 %v3788, %v3780
    %v3813 = vpack.c.bf16 %v3797, %v3789
    %v3814 = vpack.c.bf16 %v3798, %v3790
    %v3815 = vpack.c.bf16 %v3799, %v3791
    %v3816 = vpack.c.bf16 %v3800, %v3792
    %v3817 = vpack.c.bf16 %v3801, %v3793
    %v3818 = vpack.c.bf16 %v3802, %v3794
    %v3819 = vpack.c.bf16 %v3803, %v3795
    %v3820 = vpack.c.bf16 %v3804, %v3796
    %vm3821 = vcmask 261120
    %v3823 = vsel %vm3821, %v3732, 0
    %3825 = vmatpush.bf16.msra.mxu0 0
    %3826 = vmatpush.bf16.msra.mxu0 0
    %3827 = vmatpush.bf16.msra.mxu0 0
    %3828 = vmatpush.bf16.msra.mxu0 0
    %3829 = vmatpush.bf16.msra.mxu0 0
    %3830 = vmatpush.bf16.msra.mxu0 0
    %3831 = vmatpush.bf16.msra.mxu0 %v3813
    %3832 = vmatpush.bf16.msra.mxu0 %v3805
    %3833 = vmatmul.bf16.gmra.mxu0 %v3823
    %v3834 = vpop.f32.mrf.mxu0
    %v3835 = vadd.f32 0.0, %v3834
    %v3836 = vpop.f32.mrf.mxu0
    %3837 = vdwg.mxu0
    %3838 = vmatpush.bf16.msra.mxu0 0
    %3839 = vmatpush.bf16.msra.mxu0 0
    %3840 = vmatpush.bf16.msra.mxu0 0
    %3841 = vmatpush.bf16.msra.mxu0 0
    %3842 = vmatpush.bf16.msra.mxu0 0
    %3843 = vmatpush.bf16.msra.mxu0 0
    %3844 = vmatpush.bf16.msra.mxu0 %v3814
    %3845 = vmatpush.bf16.msra.mxu0 %v3806
    %3846 = vmatmul.bf16.gmra.mxu0 %v3823
    %v3847 = vpop.f32.mrf.mxu0
    %v3848 = vadd.f32 0.0, %v3847
    %v3849 = vpop.f32.mrf.mxu0
    %3850 = vdwg.mxu0
    %3851 = vmatpush.bf16.msra.mxu0 0
    %3852 = vmatpush.bf16.msra.mxu0 0
    %3853 = vmatpush.bf16.msra.mxu0 0
    %3854 = vmatpush.bf16.msra.mxu0 0
    %3855 = vmatpush.bf16.msra.mxu0 0
    %3856 = vmatpush.bf16.msra.mxu0 0
    %3857 = vmatpush.bf16.msra.mxu0 %v3815
    %3858 = vmatpush.bf16.msra.mxu0 %v3807
    %3859 = vmatmul.bf16.gmra.mxu0 %v3823
    %v3860 = vpop.f32.mrf.mxu0
    %v3861 = vadd.f32 0.0, %v3860
    %v3862 = vpop.f32.mrf.mxu0
    %3863 = vdwg.mxu0
    %3864 = vmatpush.bf16.msra.mxu0 0
    %3865 = vmatpush.bf16.msra.mxu0 0
    %3866 = vmatpush.bf16.msra.mxu0 0
    %3867 = vmatpush.bf16.msra.mxu0 0
    %3868 = vmatpush.bf16.msra.mxu0 0
    %3869 = vmatpush.bf16.msra.mxu0 0
    %3870 = vmatpush.bf16.msra.mxu0 %v3816
    %3871 = vmatpush.bf16.msra.mxu0 %v3808
    %3872 = vmatmul.bf16.gmra.mxu0 %v3823
    %v3873 = vpop.f32.mrf.mxu0
    %v3874 = vadd.f32 0.0, %v3873
    %v3875 = vpop.f32.mrf.mxu0
    %3876 = vdwg.mxu0
    %3877 = vmatpush.bf16.msra.mxu0 0
    %3878 = vmatpush.bf16.msra.mxu0 0
    %3879 = vmatpush.bf16.msra.mxu0 0
    %3880 = vmatpush.bf16.msra.mxu0 0
    %3881 = vmatpush.bf16.msra.mxu0 0
    %3882 = vmatpush.bf16.msra.mxu0 0
    %3883 = vmatpush.bf16.msra.mxu0 %v3817
    %3884 = vmatpush.bf16.msra.mxu0 %v3809
    %3885 = vmatmul.bf16.gmra.mxu0 %v3823
    %v3886 = vpop.f32.mrf.mxu0
    %v3887 = vadd.f32 0.0, %v3886
    %v3888 = vpop.f32.mrf.mxu0
    %3889 = vdwg.mxu0
    %3890 = vmatpush.bf16.msra.mxu0 0
    %3891 = vmatpush.bf16.msra.mxu0 0
    %3892 = vmatpush.bf16.msra.mxu0 0
    %3893 = vmatpush.bf16.msra.mxu0 0
    %3894 = vmatpush.bf16.msra.mxu0 0
    %3895 = vmatpush.bf16.msra.mxu0 0
    %3896 = vmatpush.bf16.msra.mxu0 %v3818
    %3897 = vmatpush.bf16.msra.mxu0 %v3810
    %3898 = vmatmul.bf16.gmra.mxu0 %v3823
    %v3899 = vpop.f32.mrf.mxu0
    %v3900 = vadd.f32 0.0, %v3899
    %v3901 = vpop.f32.mrf.mxu0
    %3902 = vdwg.mxu0
    %3903 = vmatpush.bf16.msra.mxu0 0
    %3904 = vmatpush.bf16.msra.mxu0 0
    %3905 = vmatpush.bf16.msra.mxu0 0
    %3906 = vmatpush.bf16.msra.mxu0 0
    %3907 = vmatpush.bf16.msra.mxu0 0
    %3908 = vmatpush.bf16.msra.mxu0 0
    %3909 = vmatpush.bf16.msra.mxu0 %v3819
    %3910 = vmatpush.bf16.msra.mxu0 %v3811
    %3911 = vmatmul.bf16.gmra.mxu0 %v3823
    %v3912 = vpop.f32.mrf.mxu0
    %v3913 = vadd.f32 0.0, %v3912
    %v3914 = vpop.f32.mrf.mxu0
    %3915 = vdwg.mxu0
    %3916 = vmatpush.bf16.msra.mxu0 0
    %3917 = vmatpush.bf16.msra.mxu0 0
    %3918 = vmatpush.bf16.msra.mxu0 0
    %3919 = vmatpush.bf16.msra.mxu0 0
    %3920 = vmatpush.bf16.msra.mxu0 0
    %3921 = vmatpush.bf16.msra.mxu0 0
    %3922 = vmatpush.bf16.msra.mxu0 %v3820
    %3923 = vmatpush.bf16.msra.mxu0 %v3812
    %3924 = vmatmul.bf16.gmra.mxu0 %v3823
    %v3925 = vpop.f32.mrf.mxu0
    %v3926 = vadd.f32 0.0, %v3925
    %v3927 = vpop.f32.mrf.mxu0
    %3928 = vdwg.mxu0
    %v3929 = vadd.f32 %v3547, %v3835
    %v3930 = vadd.f32 %v3573, %v3848
    %v3931 = vadd.f32 %v3599, %v3861
    %v3932 = vadd.f32 %v3625, %v3874
    %v3933 = vadd.f32 %v3651, %v3887
    %v3934 = vadd.f32 %v3677, %v3900
    %v3935 = vadd.f32 %v3703, %v3913
    %v3936 = vadd.f32 %v3729, %v3926
    %v3937 = vld [vmem:[%s11] sm:$0xff]
    %v3939 = vperm.slane %v3937, 0
    %v3940 = vperm.slane %v3937, 1
    %v3941 = vperm.slane %v3937, 2
    %v3942 = vperm.slane %v3937, 3
    %v3943 = vperm.slane %v3937, 4
    %v3944 = vperm.slane %v3937, 5
    %v3945 = vperm.slane %v3937, 6
    %v3946 = vperm.slane %v3937, 7
    %v3955 = vmul.f32 %v3929, %v3939
    %v3956 = vmul.f32 %v3930, %v3940
    %v3957 = vmul.f32 %v3931, %v3941
    %v3958 = vmul.f32 %v3932, %v3942
    %v3959 = vmul.f32 %v3933, %v3943
    %v3960 = vmul.f32 %v3934, %v3944
    %v3961 = vmul.f32 %v3935, %v3945
    %v3962 = vmul.f32 %v3936, %v3946
    %v3963 = vld [vmem:[%s12] sm:$0xff]
    %v3965 = vperm.slane %v3963, 0
    %v3966 = vperm.slane %v3963, 1
    %v3967 = vperm.slane %v3963, 2
    %v3968 = vperm.slane %v3963, 3
    %v3969 = vperm.slane %v3963, 4
    %v3970 = vperm.slane %v3963, 5
    %v3971 = vperm.slane %v3963, 6
    %v3972 = vperm.slane %v3963, 7
    %v3981 = vadd.f32 %v3955, %v3965
    %v3982 = vadd.f32 %v3956, %v3966
    %v3983 = vadd.f32 %v3957, %v3967
    %v3984 = vadd.f32 %v3958, %v3968
    %v3985 = vadd.f32 %v3959, %v3969
    %v3986 = vadd.f32 %v3960, %v3970
    %v3987 = vadd.f32 %v3961, %v3971
    %v3988 = vadd.f32 %v3962, %v3972
    %v3989 = vmax.f32 %v3981, 0.0
    %v3990 = vmax.f32 %v3982, 0.0
    %v3991 = vmax.f32 %v3983, 0.0
    %v3992 = vmax.f32 %v3984, 0.0
    %v3993 = vmax.f32 %v3985, 0.0
    %v3994 = vmax.f32 %v3986, 0.0
    %v3995 = vmax.f32 %v3987, 0.0
    %v3996 = vmax.f32 %v3988, 0.0
    %v3997 = vpack.c.bf16 %v3989, %v3989
    %v3998 = vpack.c.bf16 %v3990, %v3990
    %v3999 = vpack.c.bf16 %v3991, %v3991
    %v4000 = vpack.c.bf16 %v3992, %v3992
    %v4001 = vpack.c.bf16 %v3993, %v3993
    %v4002 = vpack.c.bf16 %v3994, %v3994
    %v4003 = vpack.c.bf16 %v3995, %v3995
    %v4004 = vpack.c.bf16 %v3996, %v3996
    %v4005 = vld [vmem:[#allocation13] sm:$0xff]
    %v4006 = vld [vmem:[#allocation13 + $0x8] sm:$0xff]
    %v4007 = vld [vmem:[#allocation13 + $0x10] sm:$0xff]
    %v4008 = vld [vmem:[#allocation13 + $0x18] sm:$0xff]
    %v4009 = vld [vmem:[#allocation13 + $0x20] sm:$0xff]
    %v4010 = vld [vmem:[#allocation13 + $0x28] sm:$0xff]
    %v4011 = vld [vmem:[#allocation13 + $0x30] sm:$0xff]
    %v4012 = vld [vmem:[#allocation13 + $0x38] sm:$0xff]
    %v4013 = vld [vmem:[#allocation13 + $0x40] sm:$0xff]
    %v4014 = vld [vmem:[#allocation13 + $0x48] sm:$0xff]
    %v4015 = vld [vmem:[#allocation13 + $0x50] sm:$0xff]
    %v4016 = vld [vmem:[#allocation13 + $0x58] sm:$0xff]
    %v4017 = vld [vmem:[#allocation13 + $0x60] sm:$0xff]
    %v4018 = vld [vmem:[#allocation13 + $0x68] sm:$0xff]
    %v4019 = vld [vmem:[#allocation13 + $0x70] sm:$0xff]
    %v4020 = vld [vmem:[#allocation13 + $0x78] sm:$0xff]
    %v4021 = vld [vmem:[#allocation13 + $0x80] sm:$0xff]
    %v4022 = vld [vmem:[#allocation13 + $0x88] sm:$0xff]
    %v4023 = vld [vmem:[#allocation13 + $0x90] sm:$0xff]
    %v4024 = vld [vmem:[#allocation13 + $0x98] sm:$0xff]
    %v4025 = vld [vmem:[#allocation13 + $0xa0] sm:$0xff]
    %v4026 = vld [vmem:[#allocation13 + $0xa8] sm:$0xff]
    %v4027 = vld [vmem:[#allocation13 + $0xb0] sm:$0xff]
    %v4028 = vld [vmem:[#allocation13 + $0xb8] sm:$0xff]
    %v4029 = vld [vmem:[#allocation13 + $0xc0] sm:$0xff]
    %v4030 = vld [vmem:[#allocation13 + $0xc8] sm:$0xff]
    %v4031 = vld [vmem:[#allocation13 + $0xd0] sm:$0xff]
    %v4032 = vld [vmem:[#allocation13 + $0xd8] sm:$0xff]
    %v4033 = vld [vmem:[#allocation13 + $0xe0] sm:$0xff]
    %v4034 = vld [vmem:[#allocation13 + $0xe8] sm:$0xff]
    %v4035 = vld [vmem:[#allocation13 + $0xf0] sm:$0xff]
    %v4036 = vld [vmem:[#allocation13 + $0xf8] sm:$0xff]
    %v4037 = vld [vmem:[#allocation13 + $0x100] sm:$0xff]
    %v4038 = vld [vmem:[#allocation13 + $0x108] sm:$0xff]
    %v4039 = vld [vmem:[#allocation13 + $0x110] sm:$0xff]
    %v4040 = vld [vmem:[#allocation13 + $0x118] sm:$0xff]
    %v4041 = vld [vmem:[#allocation13 + $0x120] sm:$0xff]
    %v4042 = vld [vmem:[#allocation13 + $0x128] sm:$0xff]
    %v4043 = vld [vmem:[#allocation13 + $0x130] sm:$0xff]
    %v4044 = vld [vmem:[#allocation13 + $0x138] sm:$0xff]
    %v4045 = vld [vmem:[#allocation13 + $0x140] sm:$0xff]
    %v4046 = vld [vmem:[#allocation13 + $0x148] sm:$0xff]
    %v4047 = vld [vmem:[#allocation13 + $0x150] sm:$0xff]
    %v4048 = vld [vmem:[#allocation13 + $0x158] sm:$0xff]
    %v4049 = vld [vmem:[#allocation13 + $0x160] sm:$0xff]
    %v4050 = vld [vmem:[#allocation13 + $0x168] sm:$0xff]
    %v4051 = vld [vmem:[#allocation13 + $0x170] sm:$0xff]
    %v4052 = vld [vmem:[#allocation13 + $0x178] sm:$0xff]
    %v4053 = vld [vmem:[#allocation13 + $0x180] sm:$0xff]
    %v4054 = vld [vmem:[#allocation13 + $0x188] sm:$0xff]
    %v4055 = vld [vmem:[#allocation13 + $0x190] sm:$0xff]
    %v4056 = vld [vmem:[#allocation13 + $0x198] sm:$0xff]
    %v4057 = vld [vmem:[#allocation13 + $0x1a0] sm:$0xff]
    %v4058 = vld [vmem:[#allocation13 + $0x1a8] sm:$0xff]
    %v4059 = vld [vmem:[#allocation13 + $0x1b0] sm:$0xff]
    %v4060 = vld [vmem:[#allocation13 + $0x1b8] sm:$0xff]
    %v4061 = vld [vmem:[#allocation13 + $0x1c0] sm:$0xff]
    %v4062 = vld [vmem:[#allocation13 + $0x1c8] sm:$0xff]
    %v4063 = vld [vmem:[#allocation13 + $0x1d0] sm:$0xff]
    %v4064 = vld [vmem:[#allocation13 + $0x1d8] sm:$0xff]
    %v4065 = vld [vmem:[#allocation13 + $0x1e0] sm:$0xff]
    %v4066 = vld [vmem:[#allocation13 + $0x1e8] sm:$0xff]
    %v4067 = vld [vmem:[#allocation13 + $0x1f0] sm:$0xff]
    %v4068 = vld [vmem:[#allocation13 + $0x1f8] sm:$0xff]
    %v4069 = vld [vmem:[#allocation13 + $0x200] sm:$0xff]
    %v4070 = vld [vmem:[#allocation13 + $0x208] sm:$0xff]
    %v4071 = vld [vmem:[#allocation13 + $0x210] sm:$0xff]
    %v4072 = vld [vmem:[#allocation13 + $0x218] sm:$0xff]
    %v4073 = vld [vmem:[#allocation13 + $0x220] sm:$0xff]
    %v4074 = vld [vmem:[#allocation13 + $0x228] sm:$0xff]
    %v4075 = vld [vmem:[#allocation13 + $0x230] sm:$0xff]
    %v4076 = vld [vmem:[#allocation13 + $0x238] sm:$0xff]
    %v4077 = vld [vmem:[#allocation13 + $0x240] sm:$0xff]
    %v4078 = vld [vmem:[#allocation13 + $0x248] sm:$0xff]
    %v4079 = vld [vmem:[#allocation13 + $0x250] sm:$0xff]
    %v4080 = vld [vmem:[#allocation13 + $0x258] sm:$0xff]
    %v4081 = vld [vmem:[#allocation13 + $0x260] sm:$0xff]
    %v4082 = vld [vmem:[#allocation13 + $0x268] sm:$0xff]
    %v4083 = vld [vmem:[#allocation13 + $0x270] sm:$0xff]
    %v4084 = vld [vmem:[#allocation13 + $0x278] sm:$0xff]
    %v4085 = vld [vmem:[#allocation13 + $0x280] sm:$0xff]
    %v4086 = vld [vmem:[#allocation13 + $0x288] sm:$0xff]
    %v4087 = vld [vmem:[#allocation13 + $0x290] sm:$0xff]
    %v4088 = vld [vmem:[#allocation13 + $0x298] sm:$0xff]
    %v4089 = vld [vmem:[#allocation13 + $0x2a0] sm:$0xff]
    %v4090 = vld [vmem:[#allocation13 + $0x2a8] sm:$0xff]
    %v4091 = vld [vmem:[#allocation13 + $0x2b0] sm:$0xff]
    %v4092 = vld [vmem:[#allocation13 + $0x2b8] sm:$0xff]
    %v4093 = vld [vmem:[#allocation13 + $0x2c0] sm:$0xff]
    %v4094 = vld [vmem:[#allocation13 + $0x2c8] sm:$0xff]
    %v4095 = vld [vmem:[#allocation13 + $0x2d0] sm:$0xff]
    %v4096 = vld [vmem:[#allocation13 + $0x2d8] sm:$0xff]
    %v4097 = vld [vmem:[#allocation13 + $0x2e0] sm:$0xff]
    %v4098 = vld [vmem:[#allocation13 + $0x2e8] sm:$0xff]
    %v4099 = vld [vmem:[#allocation13 + $0x2f0] sm:$0xff]
    %v4100 = vld [vmem:[#allocation13 + $0x2f8] sm:$0xff]
    %v4101 = vld [vmem:[#allocation13 + $0x300] sm:$0xff]
    %v4102 = vld [vmem:[#allocation13 + $0x308] sm:$0xff]
    %v4103 = vld [vmem:[#allocation13 + $0x310] sm:$0xff]
    %v4104 = vld [vmem:[#allocation13 + $0x318] sm:$0xff]
    %v4105 = vld [vmem:[#allocation13 + $0x320] sm:$0xff]
    %v4106 = vld [vmem:[#allocation13 + $0x328] sm:$0xff]
    %v4107 = vld [vmem:[#allocation13 + $0x330] sm:$0xff]
    %v4108 = vld [vmem:[#allocation13 + $0x338] sm:$0xff]
    %v4109 = vld [vmem:[#allocation13 + $0x340] sm:$0xff]
    %v4110 = vld [vmem:[#allocation13 + $0x348] sm:$0xff]
    %v4111 = vld [vmem:[#allocation13 + $0x350] sm:$0xff]
    %v4112 = vld [vmem:[#allocation13 + $0x358] sm:$0xff]
    %v4113 = vld [vmem:[#allocation13 + $0x360] sm:$0xff]
    %v4114 = vld [vmem:[#allocation13 + $0x368] sm:$0xff]
    %v4115 = vld [vmem:[#allocation13 + $0x370] sm:$0xff]
    %v4116 = vld [vmem:[#allocation13 + $0x378] sm:$0xff]
    %v4117 = vld [vmem:[#allocation13 + $0x380] sm:$0xff]
    %v4118 = vld [vmem:[#allocation13 + $0x388] sm:$0xff]
    %v4119 = vld [vmem:[#allocation13 + $0x390] sm:$0xff]
    %v4120 = vld [vmem:[#allocation13 + $0x398] sm:$0xff]
    %v4121 = vld [vmem:[#allocation13 + $0x3a0] sm:$0xff]
    %v4122 = vld [vmem:[#allocation13 + $0x3a8] sm:$0xff]
    %v4123 = vld [vmem:[#allocation13 + $0x3b0] sm:$0xff]
    %v4124 = vld [vmem:[#allocation13 + $0x3b8] sm:$0xff]
    %v4125 = vld [vmem:[#allocation13 + $0x3c0] sm:$0xff]
    %v4126 = vld [vmem:[#allocation13 + $0x3c8] sm:$0xff]
    %v4127 = vld [vmem:[#allocation13 + $0x3d0] sm:$0xff]
    %v4128 = vld [vmem:[#allocation13 + $0x3d8] sm:$0xff]
    %v4129 = vld [vmem:[#allocation13 + $0x3e0] sm:$0xff]
    %v4130 = vld [vmem:[#allocation13 + $0x3e8] sm:$0xff]
    %v4131 = vld [vmem:[#allocation13 + $0x3f0] sm:$0xff]
    %v4132 = vld [vmem:[#allocation13 + $0x3f8] sm:$0xff]
    %v4133 = vld [vmem:[#allocation13 + $0x400] sm:$0xff]
    %v4134 = vld [vmem:[#allocation13 + $0x408] sm:$0xff]
    %v4135 = vld [vmem:[#allocation13 + $0x410] sm:$0xff]
    %v4136 = vld [vmem:[#allocation13 + $0x418] sm:$0xff]
    %v4137 = vld [vmem:[#allocation13 + $0x420] sm:$0xff]
    %v4138 = vld [vmem:[#allocation13 + $0x428] sm:$0xff]
    %v4139 = vld [vmem:[#allocation13 + $0x430] sm:$0xff]
    %v4140 = vld [vmem:[#allocation13 + $0x438] sm:$0xff]
    %v4141 = vld [vmem:[#allocation13 + $0x440] sm:$0xff]
    %v4142 = vld [vmem:[#allocation13 + $0x448] sm:$0xff]
    %v4143 = vld [vmem:[#allocation13 + $0x450] sm:$0xff]
    %v4144 = vld [vmem:[#allocation13 + $0x458] sm:$0xff]
    %v4145 = vld [vmem:[#allocation13 + $0x460] sm:$0xff]
    %v4146 = vld [vmem:[#allocation13 + $0x468] sm:$0xff]
    %v4147 = vld [vmem:[#allocation13 + $0x470] sm:$0xff]
    %v4148 = vld [vmem:[#allocation13 + $0x478] sm:$0xff]
    %v4149 = vld [vmem:[#allocation13 + $0x480] sm:$0xff]
    %v4150 = vld [vmem:[#allocation13 + $0x488] sm:$0xff]
    %v4151 = vld [vmem:[#allocation13 + $0x490] sm:$0xff]
    %v4152 = vld [vmem:[#allocation13 + $0x498] sm:$0xff]
    %v4153 = vld [vmem:[#allocation13 + $0x4a0] sm:$0xff]
    %v4154 = vld [vmem:[#allocation13 + $0x4a8] sm:$0xff]
    %v4155 = vld [vmem:[#allocation13 + $0x4b0] sm:$0xff]
    %v4156 = vld [vmem:[#allocation13 + $0x4b8] sm:$0xff]
    %v4157 = vld [vmem:[#allocation13 + $0x4c0] sm:$0xff]
    %v4158 = vld [vmem:[#allocation13 + $0x4c8] sm:$0xff]
    %v4159 = vld [vmem:[#allocation13 + $0x4d0] sm:$0xff]
    %v4160 = vld [vmem:[#allocation13 + $0x4d8] sm:$0xff]
    %v4161 = vld [vmem:[#allocation13 + $0x4e0] sm:$0xff]
    %v4162 = vld [vmem:[#allocation13 + $0x4e8] sm:$0xff]
    %v4163 = vld [vmem:[#allocation13 + $0x4f0] sm:$0xff]
    %v4164 = vld [vmem:[#allocation13 + $0x4f8] sm:$0xff]
    %v4165 = vld [vmem:[#allocation13 + $0x500] sm:$0xff]
    %v4166 = vld [vmem:[#allocation13 + $0x508] sm:$0xff]
    %v4167 = vld [vmem:[#allocation13 + $0x510] sm:$0xff]
    %v4168 = vld [vmem:[#allocation13 + $0x518] sm:$0xff]
    %v4169 = vld [vmem:[#allocation13 + $0x520] sm:$0xff]
    %v4170 = vld [vmem:[#allocation13 + $0x528] sm:$0xff]
    %v4171 = vld [vmem:[#allocation13 + $0x530] sm:$0xff]
    %v4172 = vld [vmem:[#allocation13 + $0x538] sm:$0xff]
    %v4173 = vld [vmem:[#allocation13 + $0x540] sm:$0xff]
    %v4174 = vld [vmem:[#allocation13 + $0x548] sm:$0xff]
    %v4175 = vld [vmem:[#allocation13 + $0x550] sm:$0xff]
    %v4176 = vld [vmem:[#allocation13 + $0x558] sm:$0xff]
    %v4177 = vld [vmem:[#allocation13 + $0x560] sm:$0xff]
    %v4178 = vld [vmem:[#allocation13 + $0x568] sm:$0xff]
    %v4179 = vld [vmem:[#allocation13 + $0x570] sm:$0xff]
    %v4180 = vld [vmem:[#allocation13 + $0x578] sm:$0xff]
    %v4181 = vld [vmem:[#allocation13 + $0x580] sm:$0xff]
    %v4182 = vld [vmem:[#allocation13 + $0x588] sm:$0xff]
    %v4183 = vld [vmem:[#allocation13 + $0x590] sm:$0xff]
    %v4184 = vld [vmem:[#allocation13 + $0x598] sm:$0xff]
    %v4185 = vld [vmem:[#allocation13 + $0x5a0] sm:$0xff]
    %v4186 = vld [vmem:[#allocation13 + $0x5a8] sm:$0xff]
    %v4187 = vld [vmem:[#allocation13 + $0x5b0] sm:$0xff]
    %v4188 = vld [vmem:[#allocation13 + $0x5b8] sm:$0xff]
    %v4189 = vld [vmem:[#allocation13 + $0x5c0] sm:$0xff]
    %v4190 = vld [vmem:[#allocation13 + $0x5c8] sm:$0xff]
    %v4191 = vld [vmem:[#allocation13 + $0x5d0] sm:$0xff]
    %v4192 = vld [vmem:[#allocation13 + $0x5d8] sm:$0xff]
    %v4193 = vld [vmem:[#allocation13 + $0x5e0] sm:$0xff]
    %v4194 = vld [vmem:[#allocation13 + $0x5e8] sm:$0xff]
    %v4195 = vld [vmem:[#allocation13 + $0x5f0] sm:$0xff]
    %v4196 = vld [vmem:[#allocation13 + $0x5f8] sm:$0xff]
    %v4197 = vld [vmem:[#allocation13 + $0x600] sm:$0xff]
    %v4198 = vld [vmem:[#allocation13 + $0x608] sm:$0xff]
    %v4199 = vld [vmem:[#allocation13 + $0x610] sm:$0xff]
    %v4200 = vld [vmem:[#allocation13 + $0x618] sm:$0xff]
    %v4201 = vld [vmem:[#allocation13 + $0x620] sm:$0xff]
    %v4202 = vld [vmem:[#allocation13 + $0x628] sm:$0xff]
    %v4203 = vld [vmem:[#allocation13 + $0x630] sm:$0xff]
    %v4204 = vld [vmem:[#allocation13 + $0x638] sm:$0xff]
    %v4205 = vld [vmem:[#allocation13 + $0x640] sm:$0xff]
    %v4206 = vld [vmem:[#allocation13 + $0x648] sm:$0xff]
    %v4207 = vld [vmem:[#allocation13 + $0x650] sm:$0xff]
    %v4208 = vld [vmem:[#allocation13 + $0x658] sm:$0xff]
    %v4209 = vld [vmem:[#allocation13 + $0x660] sm:$0xff]
    %v4210 = vld [vmem:[#allocation13 + $0x668] sm:$0xff]
    %v4211 = vld [vmem:[#allocation13 + $0x670] sm:$0xff]
    %v4212 = vld [vmem:[#allocation13 + $0x678] sm:$0xff]
    %v4213 = vld [vmem:[#allocation13 + $0x680] sm:$0xff]
    %v4214 = vld [vmem:[#allocation13 + $0x688] sm:$0xff]
    %v4215 = vld [vmem:[#allocation13 + $0x690] sm:$0xff]
    %v4216 = vld [vmem:[#allocation13 + $0x698] sm:$0xff]
    %v4217 = vld [vmem:[#allocation13 + $0x6a0] sm:$0xff]
    %v4218 = vld [vmem:[#allocation13 + $0x6a8] sm:$0xff]
    %v4219 = vld [vmem:[#allocation13 + $0x6b0] sm:$0xff]
    %v4220 = vld [vmem:[#allocation13 + $0x6b8] sm:$0xff]
    %v4221 = vld [vmem:[#allocation13 + $0x6c0] sm:$0xff]
    %v4222 = vld [vmem:[#allocation13 + $0x6c8] sm:$0xff]
    %v4223 = vld [vmem:[#allocation13 + $0x6d0] sm:$0xff]
    %v4224 = vld [vmem:[#allocation13 + $0x6d8] sm:$0xff]
    %v4225 = vld [vmem:[#allocation13 + $0x6e0] sm:$0xff]
    %v4226 = vld [vmem:[#allocation13 + $0x6e8] sm:$0xff]
    %v4227 = vld [vmem:[#allocation13 + $0x6f0] sm:$0xff]
    %v4228 = vld [vmem:[#allocation13 + $0x6f8] sm:$0xff]
    %v4229 = vld [vmem:[#allocation13 + $0x700] sm:$0xff]
    %v4230 = vld [vmem:[#allocation13 + $0x708] sm:$0xff]
    %v4231 = vld [vmem:[#allocation13 + $0x710] sm:$0xff]
    %v4232 = vld [vmem:[#allocation13 + $0x718] sm:$0xff]
    %v4233 = vld [vmem:[#allocation13 + $0x720] sm:$0xff]
    %v4234 = vld [vmem:[#allocation13 + $0x728] sm:$0xff]
    %v4235 = vld [vmem:[#allocation13 + $0x730] sm:$0xff]
    %v4236 = vld [vmem:[#allocation13 + $0x738] sm:$0xff]
    %v4237 = vld [vmem:[#allocation13 + $0x740] sm:$0xff]
    %v4238 = vld [vmem:[#allocation13 + $0x748] sm:$0xff]
    %v4239 = vld [vmem:[#allocation13 + $0x750] sm:$0xff]
    %v4240 = vld [vmem:[#allocation13 + $0x758] sm:$0xff]
    %v4241 = vld [vmem:[#allocation13 + $0x760] sm:$0xff]
    %v4242 = vld [vmem:[#allocation13 + $0x768] sm:$0xff]
    %v4243 = vld [vmem:[#allocation13 + $0x770] sm:$0xff]
    %v4244 = vld [vmem:[#allocation13 + $0x778] sm:$0xff]
    %v4245 = vld [vmem:[#allocation13 + $0x780] sm:$0xff]
    %v4246 = vld [vmem:[#allocation13 + $0x788] sm:$0xff]
    %v4247 = vld [vmem:[#allocation13 + $0x790] sm:$0xff]
    %v4248 = vld [vmem:[#allocation13 + $0x798] sm:$0xff]
    %v4249 = vld [vmem:[#allocation13 + $0x7a0] sm:$0xff]
    %v4250 = vld [vmem:[#allocation13 + $0x7a8] sm:$0xff]
    %v4251 = vld [vmem:[#allocation13 + $0x7b0] sm:$0xff]
    %v4252 = vld [vmem:[#allocation13 + $0x7b8] sm:$0xff]
    %v4253 = vld [vmem:[#allocation13 + $0x7c0] sm:$0xff]
    %v4254 = vld [vmem:[#allocation13 + $0x7c8] sm:$0xff]
    %v4255 = vld [vmem:[#allocation13 + $0x7d0] sm:$0xff]
    %v4256 = vld [vmem:[#allocation13 + $0x7d8] sm:$0xff]
    %v4257 = vld [vmem:[#allocation13 + $0x7e0] sm:$0xff]
    %v4258 = vld [vmem:[#allocation13 + $0x7e8] sm:$0xff]
    %v4259 = vld [vmem:[#allocation13 + $0x7f0] sm:$0xff]
    %v4260 = vld [vmem:[#allocation13 + $0x7f8] sm:$0xff]
    %v4261 = vunpack.c.0.s8 %v4005
    %v4262 = vunpack.c.0.s8 %v4006
    %v4263 = vunpack.c.0.s8 %v4007
    %v4264 = vunpack.c.0.s8 %v4008
    %v4265 = vunpack.c.0.s8 %v4009
    %v4266 = vunpack.c.0.s8 %v4010
    %v4267 = vunpack.c.0.s8 %v4011
    %v4268 = vunpack.c.0.s8 %v4012
    %v4269 = vunpack.c.1.s8 %v4005
    %v4270 = vunpack.c.1.s8 %v4006
    %v4271 = vunpack.c.1.s8 %v4007
    %v4272 = vunpack.c.1.s8 %v4008
    %v4273 = vunpack.c.1.s8 %v4009
    %v4274 = vunpack.c.1.s8 %v4010
    %v4275 = vunpack.c.1.s8 %v4011
    %v4276 = vunpack.c.1.s8 %v4012
    %v4277 = vunpack.c.2.s8 %v4005
    %v4278 = vunpack.c.2.s8 %v4006
    %v4279 = vunpack.c.2.s8 %v4007
    %v4280 = vunpack.c.2.s8 %v4008
    %v4281 = vunpack.c.2.s8 %v4009
    %v4282 = vunpack.c.2.s8 %v4010
    %v4283 = vunpack.c.2.s8 %v4011
    %v4284 = vunpack.c.2.s8 %v4012
    %v4285 = vunpack.c.3.s8 %v4005
    %v4286 = vunpack.c.3.s8 %v4006
    %v4287 = vunpack.c.3.s8 %v4007
    %v4288 = vunpack.c.3.s8 %v4008
    %v4289 = vunpack.c.3.s8 %v4009
    %v4290 = vunpack.c.3.s8 %v4010
    %v4291 = vunpack.c.3.s8 %v4011
    %v4292 = vunpack.c.3.s8 %v4012
    %v4293 = vunpack.c.0.s8 %v4013
    %v4294 = vunpack.c.0.s8 %v4014
    %v4295 = vunpack.c.0.s8 %v4015
    %v4296 = vunpack.c.0.s8 %v4016
    %v4297 = vunpack.c.0.s8 %v4017
    %v4298 = vunpack.c.0.s8 %v4018
    %v4299 = vunpack.c.0.s8 %v4019
    %v4300 = vunpack.c.0.s8 %v4020
    %v4301 = vunpack.c.1.s8 %v4013
    %v4302 = vunpack.c.1.s8 %v4014
    %v4303 = vunpack.c.1.s8 %v4015
    %v4304 = vunpack.c.1.s8 %v4016
    %v4305 = vunpack.c.1.s8 %v4017
    %v4306 = vunpack.c.1.s8 %v4018
    %v4307 = vunpack.c.1.s8 %v4019
    %v4308 = vunpack.c.1.s8 %v4020
    %v4309 = vunpack.c.2.s8 %v4013
    %v4310 = vunpack.c.2.s8 %v4014
    %v4311 = vunpack.c.2.s8 %v4015
    %v4312 = vunpack.c.2.s8 %v4016
    %v4313 = vunpack.c.2.s8 %v4017
    %v4314 = vunpack.c.2.s8 %v4018
    %v4315 = vunpack.c.2.s8 %v4019
    %v4316 = vunpack.c.2.s8 %v4020
    %v4317 = vunpack.c.3.s8 %v4013
    %v4318 = vunpack.c.3.s8 %v4014
    %v4319 = vunpack.c.3.s8 %v4015
    %v4320 = vunpack.c.3.s8 %v4016
    %v4321 = vunpack.c.3.s8 %v4017
    %v4322 = vunpack.c.3.s8 %v4018
    %v4323 = vunpack.c.3.s8 %v4019
    %v4324 = vunpack.c.3.s8 %v4020
    %v4325 = vunpack.c.0.s8 %v4021
    %v4326 = vunpack.c.0.s8 %v4022
    %v4327 = vunpack.c.0.s8 %v4023
    %v4328 = vunpack.c.0.s8 %v4024
    %v4329 = vunpack.c.0.s8 %v4025
    %v4330 = vunpack.c.0.s8 %v4026
    %v4331 = vunpack.c.0.s8 %v4027
    %v4332 = vunpack.c.0.s8 %v4028
    %v4333 = vunpack.c.1.s8 %v4021
    %v4334 = vunpack.c.1.s8 %v4022
    %v4335 = vunpack.c.1.s8 %v4023
    %v4336 = vunpack.c.1.s8 %v4024
    %v4337 = vunpack.c.1.s8 %v4025
    %v4338 = vunpack.c.1.s8 %v4026
    %v4339 = vunpack.c.1.s8 %v4027
    %v4340 = vunpack.c.1.s8 %v4028
    %v4341 = vunpack.c.2.s8 %v4021
    %v4342 = vunpack.c.2.s8 %v4022
    %v4343 = vunpack.c.2.s8 %v4023
    %v4344 = vunpack.c.2.s8 %v4024
    %v4345 = vunpack.c.2.s8 %v4025
    %v4346 = vunpack.c.2.s8 %v4026
    %v4347 = vunpack.c.2.s8 %v4027
    %v4348 = vunpack.c.2.s8 %v4028
    %v4349 = vunpack.c.3.s8 %v4021
    %v4350 = vunpack.c.3.s8 %v4022
    %v4351 = vunpack.c.3.s8 %v4023
    %v4352 = vunpack.c.3.s8 %v4024
    %v4353 = vunpack.c.3.s8 %v4025
    %v4354 = vunpack.c.3.s8 %v4026
    %v4355 = vunpack.c.3.s8 %v4027
    %v4356 = vunpack.c.3.s8 %v4028
    %v4357 = vunpack.c.0.s8 %v4029
    %v4358 = vunpack.c.0.s8 %v4030
    %v4359 = vunpack.c.0.s8 %v4031
    %v4360 = vunpack.c.0.s8 %v4032
    %v4361 = vunpack.c.0.s8 %v4033
    %v4362 = vunpack.c.0.s8 %v4034
    %v4363 = vunpack.c.0.s8 %v4035
    %v4364 = vunpack.c.0.s8 %v4036
    %v4365 = vunpack.c.1.s8 %v4029
    %v4366 = vunpack.c.1.s8 %v4030
    %v4367 = vunpack.c.1.s8 %v4031
    %v4368 = vunpack.c.1.s8 %v4032
    %v4369 = vunpack.c.1.s8 %v4033
    %v4370 = vunpack.c.1.s8 %v4034
    %v4371 = vunpack.c.1.s8 %v4035
    %v4372 = vunpack.c.1.s8 %v4036
    %v4373 = vunpack.c.2.s8 %v4029
    %v4374 = vunpack.c.2.s8 %v4030
    %v4375 = vunpack.c.2.s8 %v4031
    %v4376 = vunpack.c.2.s8 %v4032
    %v4377 = vunpack.c.2.s8 %v4033
    %v4378 = vunpack.c.2.s8 %v4034
    %v4379 = vunpack.c.2.s8 %v4035
    %v4380 = vunpack.c.2.s8 %v4036
    %v4381 = vunpack.c.3.s8 %v4029
    %v4382 = vunpack.c.3.s8 %v4030
    %v4383 = vunpack.c.3.s8 %v4031
    %v4384 = vunpack.c.3.s8 %v4032
    %v4385 = vunpack.c.3.s8 %v4033
    %v4386 = vunpack.c.3.s8 %v4034
    %v4387 = vunpack.c.3.s8 %v4035
    %v4388 = vunpack.c.3.s8 %v4036
    %v4389 = vunpack.c.0.s8 %v4037
    %v4390 = vunpack.c.0.s8 %v4038
    %v4391 = vunpack.c.0.s8 %v4039
    %v4392 = vunpack.c.0.s8 %v4040
    %v4393 = vunpack.c.0.s8 %v4041
    %v4394 = vunpack.c.0.s8 %v4042
    %v4395 = vunpack.c.0.s8 %v4043
    %v4396 = vunpack.c.0.s8 %v4044
    %v4397 = vunpack.c.1.s8 %v4037
    %v4398 = vunpack.c.1.s8 %v4038
    %v4399 = vunpack.c.1.s8 %v4039
    %v4400 = vunpack.c.1.s8 %v4040
    %v4401 = vunpack.c.1.s8 %v4041
    %v4402 = vunpack.c.1.s8 %v4042
    %v4403 = vunpack.c.1.s8 %v4043
    %v4404 = vunpack.c.1.s8 %v4044
    %v4405 = vunpack.c.2.s8 %v4037
    %v4406 = vunpack.c.2.s8 %v4038
    %v4407 = vunpack.c.2.s8 %v4039
    %v4408 = vunpack.c.2.s8 %v4040
    %v4409 = vunpack.c.2.s8 %v4041
    %v4410 = vunpack.c.2.s8 %v4042
    %v4411 = vunpack.c.2.s8 %v4043
    %v4412 = vunpack.c.2.s8 %v4044
    %v4413 = vunpack.c.3.s8 %v4037
    %v4414 = vunpack.c.3.s8 %v4038
    %v4415 = vunpack.c.3.s8 %v4039
    %v4416 = vunpack.c.3.s8 %v4040
    %v4417 = vunpack.c.3.s8 %v4041
    %v4418 = vunpack.c.3.s8 %v4042
    %v4419 = vunpack.c.3.s8 %v4043
    %v4420 = vunpack.c.3.s8 %v4044
    %v4421 = vunpack.c.0.s8 %v4045
    %v4422 = vunpack.c.0.s8 %v4046
    %v4423 = vunpack.c.0.s8 %v4047
    %v4424 = vunpack.c.0.s8 %v4048
    %v4425 = vunpack.c.0.s8 %v4049
    %v4426 = vunpack.c.0.s8 %v4050
    %v4427 = vunpack.c.0.s8 %v4051
    %v4428 = vunpack.c.0.s8 %v4052
    %v4429 = vunpack.c.1.s8 %v4045
    %v4430 = vunpack.c.1.s8 %v4046
    %v4431 = vunpack.c.1.s8 %v4047
    %v4432 = vunpack.c.1.s8 %v4048
    %v4433 = vunpack.c.1.s8 %v4049
    %v4434 = vunpack.c.1.s8 %v4050
    %v4435 = vunpack.c.1.s8 %v4051
    %v4436 = vunpack.c.1.s8 %v4052
    %v4437 = vunpack.c.2.s8 %v4045
    %v4438 = vunpack.c.2.s8 %v4046
    %v4439 = vunpack.c.2.s8 %v4047
    %v4440 = vunpack.c.2.s8 %v4048
    %v4441 = vunpack.c.2.s8 %v4049
    %v4442 = vunpack.c.2.s8 %v4050
    %v4443 = vunpack.c.2.s8 %v4051
    %v4444 = vunpack.c.2.s8 %v4052
    %v4445 = vunpack.c.3.s8 %v4045
    %v4446 = vunpack.c.3.s8 %v4046
    %v4447 = vunpack.c.3.s8 %v4047
    %v4448 = vunpack.c.3.s8 %v4048
    %v4449 = vunpack.c.3.s8 %v4049
    %v4450 = vunpack.c.3.s8 %v4050
    %v4451 = vunpack.c.3.s8 %v4051
    %v4452 = vunpack.c.3.s8 %v4052
    %v4453 = vunpack.c.0.s8 %v4053
    %v4454 = vunpack.c.0.s8 %v4054
    %v4455 = vunpack.c.0.s8 %v4055
    %v4456 = vunpack.c.0.s8 %v4056
    %v4457 = vunpack.c.0.s8 %v4057
    %v4458 = vunpack.c.0.s8 %v4058
    %v4459 = vunpack.c.0.s8 %v4059
    %v4460 = vunpack.c.0.s8 %v4060
    %v4461 = vunpack.c.1.s8 %v4053
    %v4462 = vunpack.c.1.s8 %v4054
    %v4463 = vunpack.c.1.s8 %v4055
    %v4464 = vunpack.c.1.s8 %v4056
    %v4465 = vunpack.c.1.s8 %v4057
    %v4466 = vunpack.c.1.s8 %v4058
    %v4467 = vunpack.c.1.s8 %v4059
    %v4468 = vunpack.c.1.s8 %v4060
    %v4469 = vunpack.c.2.s8 %v4053
    %v4470 = vunpack.c.2.s8 %v4054
    %v4471 = vunpack.c.2.s8 %v4055
    %v4472 = vunpack.c.2.s8 %v4056
    %v4473 = vunpack.c.2.s8 %v4057
    %v4474 = vunpack.c.2.s8 %v4058
    %v4475 = vunpack.c.2.s8 %v4059
    %v4476 = vunpack.c.2.s8 %v4060
    %v4477 = vunpack.c.3.s8 %v4053
    %v4478 = vunpack.c.3.s8 %v4054
    %v4479 = vunpack.c.3.s8 %v4055
    %v4480 = vunpack.c.3.s8 %v4056
    %v4481 = vunpack.c.3.s8 %v4057
    %v4482 = vunpack.c.3.s8 %v4058
    %v4483 = vunpack.c.3.s8 %v4059
    %v4484 = vunpack.c.3.s8 %v4060
    %v4485 = vunpack.c.0.s8 %v4061
    %v4486 = vunpack.c.0.s8 %v4062
    %v4487 = vunpack.c.0.s8 %v4063
    %v4488 = vunpack.c.0.s8 %v4064
    %v4489 = vunpack.c.0.s8 %v4065
    %v4490 = vunpack.c.0.s8 %v4066
    %v4491 = vunpack.c.0.s8 %v4067
    %v4492 = vunpack.c.0.s8 %v4068
    %v4493 = vunpack.c.1.s8 %v4061
    %v4494 = vunpack.c.1.s8 %v4062
    %v4495 = vunpack.c.1.s8 %v4063
    %v4496 = vunpack.c.1.s8 %v4064
    %v4497 = vunpack.c.1.s8 %v4065
    %v4498 = vunpack.c.1.s8 %v4066
    %v4499 = vunpack.c.1.s8 %v4067
    %v4500 = vunpack.c.1.s8 %v4068
    %v4501 = vunpack.c.2.s8 %v4061
    %v4502 = vunpack.c.2.s8 %v4062
    %v4503 = vunpack.c.2.s8 %v4063
    %v4504 = vunpack.c.2.s8 %v4064
    %v4505 = vunpack.c.2.s8 %v4065
    %v4506 = vunpack.c.2.s8 %v4066
    %v4507 = vunpack.c.2.s8 %v4067
    %v4508 = vunpack.c.2.s8 %v4068
    %v4509 = vunpack.c.3.s8 %v4061
    %v4510 = vunpack.c.3.s8 %v4062
    %v4511 = vunpack.c.3.s8 %v4063
    %v4512 = vunpack.c.3.s8 %v4064
    %v4513 = vunpack.c.3.s8 %v4065
    %v4514 = vunpack.c.3.s8 %v4066
    %v4515 = vunpack.c.3.s8 %v4067
    %v4516 = vunpack.c.3.s8 %v4068
    %v4517 = vunpack.c.0.s8 %v4069
    %v4518 = vunpack.c.0.s8 %v4070
    %v4519 = vunpack.c.0.s8 %v4071
    %v4520 = vunpack.c.0.s8 %v4072
    %v4521 = vunpack.c.0.s8 %v4073
    %v4522 = vunpack.c.0.s8 %v4074
    %v4523 = vunpack.c.0.s8 %v4075
    %v4524 = vunpack.c.0.s8 %v4076
    %v4525 = vunpack.c.1.s8 %v4069
    %v4526 = vunpack.c.1.s8 %v4070
    %v4527 = vunpack.c.1.s8 %v4071
    %v4528 = vunpack.c.1.s8 %v4072
    %v4529 = vunpack.c.1.s8 %v4073
    %v4530 = vunpack.c.1.s8 %v4074
    %v4531 = vunpack.c.1.s8 %v4075
    %v4532 = vunpack.c.1.s8 %v4076
    %v4533 = vunpack.c.2.s8 %v4069
    %v4534 = vunpack.c.2.s8 %v4070
    %v4535 = vunpack.c.2.s8 %v4071
    %v4536 = vunpack.c.2.s8 %v4072
    %v4537 = vunpack.c.2.s8 %v4073
    %v4538 = vunpack.c.2.s8 %v4074
    %v4539 = vunpack.c.2.s8 %v4075
    %v4540 = vunpack.c.2.s8 %v4076
    %v4541 = vunpack.c.3.s8 %v4069
    %v4542 = vunpack.c.3.s8 %v4070
    %v4543 = vunpack.c.3.s8 %v4071
    %v4544 = vunpack.c.3.s8 %v4072
    %v4545 = vunpack.c.3.s8 %v4073
    %v4546 = vunpack.c.3.s8 %v4074
    %v4547 = vunpack.c.3.s8 %v4075
    %v4548 = vunpack.c.3.s8 %v4076
    %v4549 = vunpack.c.0.s8 %v4077
    %v4550 = vunpack.c.0.s8 %v4078
    %v4551 = vunpack.c.0.s8 %v4079
    %v4552 = vunpack.c.0.s8 %v4080
    %v4553 = vunpack.c.0.s8 %v4081
    %v4554 = vunpack.c.0.s8 %v4082
    %v4555 = vunpack.c.0.s8 %v4083
    %v4556 = vunpack.c.0.s8 %v4084
    %v4557 = vunpack.c.1.s8 %v4077
    %v4558 = vunpack.c.1.s8 %v4078
    %v4559 = vunpack.c.1.s8 %v4079
    %v4560 = vunpack.c.1.s8 %v4080
    %v4561 = vunpack.c.1.s8 %v4081
    %v4562 = vunpack.c.1.s8 %v4082
    %v4563 = vunpack.c.1.s8 %v4083
    %v4564 = vunpack.c.1.s8 %v4084
    %v4565 = vunpack.c.2.s8 %v4077
    %v4566 = vunpack.c.2.s8 %v4078
    %v4567 = vunpack.c.2.s8 %v4079
    %v4568 = vunpack.c.2.s8 %v4080
    %v4569 = vunpack.c.2.s8 %v4081
    %v4570 = vunpack.c.2.s8 %v4082
    %v4571 = vunpack.c.2.s8 %v4083
    %v4572 = vunpack.c.2.s8 %v4084
    %v4573 = vunpack.c.3.s8 %v4077
    %v4574 = vunpack.c.3.s8 %v4078
    %v4575 = vunpack.c.3.s8 %v4079
    %v4576 = vunpack.c.3.s8 %v4080
    %v4577 = vunpack.c.3.s8 %v4081
    %v4578 = vunpack.c.3.s8 %v4082
    %v4579 = vunpack.c.3.s8 %v4083
    %v4580 = vunpack.c.3.s8 %v4084
    %v4581 = vunpack.c.0.s8 %v4085
    %v4582 = vunpack.c.0.s8 %v4086
    %v4583 = vunpack.c.0.s8 %v4087
    %v4584 = vunpack.c.0.s8 %v4088
    %v4585 = vunpack.c.0.s8 %v4089
    %v4586 = vunpack.c.0.s8 %v4090
    %v4587 = vunpack.c.0.s8 %v4091
    %v4588 = vunpack.c.0.s8 %v4092
    %v4589 = vunpack.c.1.s8 %v4085
    %v4590 = vunpack.c.1.s8 %v4086
    %v4591 = vunpack.c.1.s8 %v4087
    %v4592 = vunpack.c.1.s8 %v4088
    %v4593 = vunpack.c.1.s8 %v4089
    %v4594 = vunpack.c.1.s8 %v4090
    %v4595 = vunpack.c.1.s8 %v4091
    %v4596 = vunpack.c.1.s8 %v4092
    %v4597 = vunpack.c.2.s8 %v4085
    %v4598 = vunpack.c.2.s8 %v4086
    %v4599 = vunpack.c.2.s8 %v4087
    %v4600 = vunpack.c.2.s8 %v4088
    %v4601 = vunpack.c.2.s8 %v4089
    %v4602 = vunpack.c.2.s8 %v4090
    %v4603 = vunpack.c.2.s8 %v4091
    %v4604 = vunpack.c.2.s8 %v4092
    %v4605 = vunpack.c.3.s8 %v4085
    %v4606 = vunpack.c.3.s8 %v4086
    %v4607 = vunpack.c.3.s8 %v4087
    %v4608 = vunpack.c.3.s8 %v4088
    %v4609 = vunpack.c.3.s8 %v4089
    %v4610 = vunpack.c.3.s8 %v4090
    %v4611 = vunpack.c.3.s8 %v4091
    %v4612 = vunpack.c.3.s8 %v4092
    %v4613 = vunpack.c.0.s8 %v4093
    %v4614 = vunpack.c.0.s8 %v4094
    %v4615 = vunpack.c.0.s8 %v4095
    %v4616 = vunpack.c.0.s8 %v4096
    %v4617 = vunpack.c.0.s8 %v4097
    %v4618 = vunpack.c.0.s8 %v4098
    %v4619 = vunpack.c.0.s8 %v4099
    %v4620 = vunpack.c.0.s8 %v4100
    %v4621 = vunpack.c.1.s8 %v4093
    %v4622 = vunpack.c.1.s8 %v4094
    %v4623 = vunpack.c.1.s8 %v4095
    %v4624 = vunpack.c.1.s8 %v4096
    %v4625 = vunpack.c.1.s8 %v4097
    %v4626 = vunpack.c.1.s8 %v4098
    %v4627 = vunpack.c.1.s8 %v4099
    %v4628 = vunpack.c.1.s8 %v4100
    %v4629 = vunpack.c.2.s8 %v4093
    %v4630 = vunpack.c.2.s8 %v4094
    %v4631 = vunpack.c.2.s8 %v4095
    %v4632 = vunpack.c.2.s8 %v4096
    %v4633 = vunpack.c.2.s8 %v4097
    %v4634 = vunpack.c.2.s8 %v4098
    %v4635 = vunpack.c.2.s8 %v4099
    %v4636 = vunpack.c.2.s8 %v4100
    %v4637 = vunpack.c.3.s8 %v4093
    %v4638 = vunpack.c.3.s8 %v4094
    %v4639 = vunpack.c.3.s8 %v4095
    %v4640 = vunpack.c.3.s8 %v4096
    %v4641 = vunpack.c.3.s8 %v4097
    %v4642 = vunpack.c.3.s8 %v4098
    %v4643 = vunpack.c.3.s8 %v4099
    %v4644 = vunpack.c.3.s8 %v4100
    %v4645 = vunpack.c.0.s8 %v4101
    %v4646 = vunpack.c.0.s8 %v4102
    %v4647 = vunpack.c.0.s8 %v4103
    %v4648 = vunpack.c.0.s8 %v4104
    %v4649 = vunpack.c.0.s8 %v4105
    %v4650 = vunpack.c.0.s8 %v4106
    %v4651 = vunpack.c.0.s8 %v4107
    %v4652 = vunpack.c.0.s8 %v4108
    %v4653 = vunpack.c.1.s8 %v4101
    %v4654 = vunpack.c.1.s8 %v4102
    %v4655 = vunpack.c.1.s8 %v4103
    %v4656 = vunpack.c.1.s8 %v4104
    %v4657 = vunpack.c.1.s8 %v4105
    %v4658 = vunpack.c.1.s8 %v4106
    %v4659 = vunpack.c.1.s8 %v4107
    %v4660 = vunpack.c.1.s8 %v4108
    %v4661 = vunpack.c.2.s8 %v4101
    %v4662 = vunpack.c.2.s8 %v4102
    %v4663 = vunpack.c.2.s8 %v4103
    %v4664 = vunpack.c.2.s8 %v4104
    %v4665 = vunpack.c.2.s8 %v4105
    %v4666 = vunpack.c.2.s8 %v4106
    %v4667 = vunpack.c.2.s8 %v4107
    %v4668 = vunpack.c.2.s8 %v4108
    %v4669 = vunpack.c.3.s8 %v4101
    %v4670 = vunpack.c.3.s8 %v4102
    %v4671 = vunpack.c.3.s8 %v4103
    %v4672 = vunpack.c.3.s8 %v4104
    %v4673 = vunpack.c.3.s8 %v4105
    %v4674 = vunpack.c.3.s8 %v4106
    %v4675 = vunpack.c.3.s8 %v4107
    %v4676 = vunpack.c.3.s8 %v4108
    %v4677 = vunpack.c.0.s8 %v4109
    %v4678 = vunpack.c.0.s8 %v4110
    %v4679 = vunpack.c.0.s8 %v4111
    %v4680 = vunpack.c.0.s8 %v4112
    %v4681 = vunpack.c.0.s8 %v4113
    %v4682 = vunpack.c.0.s8 %v4114
    %v4683 = vunpack.c.0.s8 %v4115
    %v4684 = vunpack.c.0.s8 %v4116
    %v4685 = vunpack.c.1.s8 %v4109
    %v4686 = vunpack.c.1.s8 %v4110
    %v4687 = vunpack.c.1.s8 %v4111
    %v4688 = vunpack.c.1.s8 %v4112
    %v4689 = vunpack.c.1.s8 %v4113
    %v4690 = vunpack.c.1.s8 %v4114
    %v4691 = vunpack.c.1.s8 %v4115
    %v4692 = vunpack.c.1.s8 %v4116
    %v4693 = vunpack.c.2.s8 %v4109
    %v4694 = vunpack.c.2.s8 %v4110
    %v4695 = vunpack.c.2.s8 %v4111
    %v4696 = vunpack.c.2.s8 %v4112
    %v4697 = vunpack.c.2.s8 %v4113
    %v4698 = vunpack.c.2.s8 %v4114
    %v4699 = vunpack.c.2.s8 %v4115
    %v4700 = vunpack.c.2.s8 %v4116
    %v4701 = vunpack.c.3.s8 %v4109
    %v4702 = vunpack.c.3.s8 %v4110
    %v4703 = vunpack.c.3.s8 %v4111
    %v4704 = vunpack.c.3.s8 %v4112
    %v4705 = vunpack.c.3.s8 %v4113
    %v4706 = vunpack.c.3.s8 %v4114
    %v4707 = vunpack.c.3.s8 %v4115
    %v4708 = vunpack.c.3.s8 %v4116
    %v4709 = vunpack.c.0.s8 %v4117
    %v4710 = vunpack.c.0.s8 %v4118
    %v4711 = vunpack.c.0.s8 %v4119
    %v4712 = vunpack.c.0.s8 %v4120
    %v4713 = vunpack.c.0.s8 %v4121
    %v4714 = vunpack.c.0.s8 %v4122
    %v4715 = vunpack.c.0.s8 %v4123
    %v4716 = vunpack.c.0.s8 %v4124
    %v4717 = vunpack.c.1.s8 %v4117
    %v4718 = vunpack.c.1.s8 %v4118
    %v4719 = vunpack.c.1.s8 %v4119
    %v4720 = vunpack.c.1.s8 %v4120
    %v4721 = vunpack.c.1.s8 %v4121
    %v4722 = vunpack.c.1.s8 %v4122
    %v4723 = vunpack.c.1.s8 %v4123
    %v4724 = vunpack.c.1.s8 %v4124
    %v4725 = vunpack.c.2.s8 %v4117
    %v4726 = vunpack.c.2.s8 %v4118
    %v4727 = vunpack.c.2.s8 %v4119
    %v4728 = vunpack.c.2.s8 %v4120
    %v4729 = vunpack.c.2.s8 %v4121
    %v4730 = vunpack.c.2.s8 %v4122
    %v4731 = vunpack.c.2.s8 %v4123
    %v4732 = vunpack.c.2.s8 %v4124
    %v4733 = vunpack.c.3.s8 %v4117
    %v4734 = vunpack.c.3.s8 %v4118
    %v4735 = vunpack.c.3.s8 %v4119
    %v4736 = vunpack.c.3.s8 %v4120
    %v4737 = vunpack.c.3.s8 %v4121
    %v4738 = vunpack.c.3.s8 %v4122
    %v4739 = vunpack.c.3.s8 %v4123
    %v4740 = vunpack.c.3.s8 %v4124
    %v4741 = vunpack.c.0.s8 %v4125
    %v4742 = vunpack.c.0.s8 %v4126
    %v4743 = vunpack.c.0.s8 %v4127
    %v4744 = vunpack.c.0.s8 %v4128
    %v4745 = vunpack.c.0.s8 %v4129
    %v4746 = vunpack.c.0.s8 %v4130
    %v4747 = vunpack.c.0.s8 %v4131
    %v4748 = vunpack.c.0.s8 %v4132
    %v4749 = vunpack.c.1.s8 %v4125
    %v4750 = vunpack.c.1.s8 %v4126
    %v4751 = vunpack.c.1.s8 %v4127
    %v4752 = vunpack.c.1.s8 %v4128
    %v4753 = vunpack.c.1.s8 %v4129
    %v4754 = vunpack.c.1.s8 %v4130
    %v4755 = vunpack.c.1.s8 %v4131
    %v4756 = vunpack.c.1.s8 %v4132
    %v4757 = vunpack.c.2.s8 %v4125
    %v4758 = vunpack.c.2.s8 %v4126
    %v4759 = vunpack.c.2.s8 %v4127
    %v4760 = vunpack.c.2.s8 %v4128
    %v4761 = vunpack.c.2.s8 %v4129
    %v4762 = vunpack.c.2.s8 %v4130
    %v4763 = vunpack.c.2.s8 %v4131
    %v4764 = vunpack.c.2.s8 %v4132
    %v4765 = vunpack.c.3.s8 %v4125
    %v4766 = vunpack.c.3.s8 %v4126
    %v4767 = vunpack.c.3.s8 %v4127
    %v4768 = vunpack.c.3.s8 %v4128
    %v4769 = vunpack.c.3.s8 %v4129
    %v4770 = vunpack.c.3.s8 %v4130
    %v4771 = vunpack.c.3.s8 %v4131
    %v4772 = vunpack.c.3.s8 %v4132
    %v4773 = vunpack.c.0.s8 %v4133
    %v4774 = vunpack.c.0.s8 %v4134
    %v4775 = vunpack.c.0.s8 %v4135
    %v4776 = vunpack.c.0.s8 %v4136
    %v4777 = vunpack.c.0.s8 %v4137
    %v4778 = vunpack.c.0.s8 %v4138
    %v4779 = vunpack.c.0.s8 %v4139
    %v4780 = vunpack.c.0.s8 %v4140
    %v4781 = vunpack.c.1.s8 %v4133
    %v4782 = vunpack.c.1.s8 %v4134
    %v4783 = vunpack.c.1.s8 %v4135
    %v4784 = vunpack.c.1.s8 %v4136
    %v4785 = vunpack.c.1.s8 %v4137
    %v4786 = vunpack.c.1.s8 %v4138
    %v4787 = vunpack.c.1.s8 %v4139
    %v4788 = vunpack.c.1.s8 %v4140
    %v4789 = vunpack.c.2.s8 %v4133
    %v4790 = vunpack.c.2.s8 %v4134
    %v4791 = vunpack.c.2.s8 %v4135
    %v4792 = vunpack.c.2.s8 %v4136
    %v4793 = vunpack.c.2.s8 %v4137
    %v4794 = vunpack.c.2.s8 %v4138
    %v4795 = vunpack.c.2.s8 %v4139
    %v4796 = vunpack.c.2.s8 %v4140
    %v4797 = vunpack.c.3.s8 %v4133
    %v4798 = vunpack.c.3.s8 %v4134
    %v4799 = vunpack.c.3.s8 %v4135
    %v4800 = vunpack.c.3.s8 %v4136
    %v4801 = vunpack.c.3.s8 %v4137
    %v4802 = vunpack.c.3.s8 %v4138
    %v4803 = vunpack.c.3.s8 %v4139
    %v4804 = vunpack.c.3.s8 %v4140
    %v4805 = vunpack.c.0.s8 %v4141
    %v4806 = vunpack.c.0.s8 %v4142
    %v4807 = vunpack.c.0.s8 %v4143
    %v4808 = vunpack.c.0.s8 %v4144
    %v4809 = vunpack.c.0.s8 %v4145
    %v4810 = vunpack.c.0.s8 %v4146
    %v4811 = vunpack.c.0.s8 %v4147
    %v4812 = vunpack.c.0.s8 %v4148
    %v4813 = vunpack.c.1.s8 %v4141
    %v4814 = vunpack.c.1.s8 %v4142
    %v4815 = vunpack.c.1.s8 %v4143
    %v4816 = vunpack.c.1.s8 %v4144
    %v4817 = vunpack.c.1.s8 %v4145
    %v4818 = vunpack.c.1.s8 %v4146
    %v4819 = vunpack.c.1.s8 %v4147
    %v4820 = vunpack.c.1.s8 %v4148
    %v4821 = vunpack.c.2.s8 %v4141
    %v4822 = vunpack.c.2.s8 %v4142
    %v4823 = vunpack.c.2.s8 %v4143
    %v4824 = vunpack.c.2.s8 %v4144
    %v4825 = vunpack.c.2.s8 %v4145
    %v4826 = vunpack.c.2.s8 %v4146
    %v4827 = vunpack.c.2.s8 %v4147
    %v4828 = vunpack.c.2.s8 %v4148
    %v4829 = vunpack.c.3.s8 %v4141
    %v4830 = vunpack.c.3.s8 %v4142
    %v4831 = vunpack.c.3.s8 %v4143
    %v4832 = vunpack.c.3.s8 %v4144
    %v4833 = vunpack.c.3.s8 %v4145
    %v4834 = vunpack.c.3.s8 %v4146
    %v4835 = vunpack.c.3.s8 %v4147
    %v4836 = vunpack.c.3.s8 %v4148
    %v4837 = vunpack.c.0.s8 %v4149
    %v4838 = vunpack.c.0.s8 %v4150
    %v4839 = vunpack.c.0.s8 %v4151
    %v4840 = vunpack.c.0.s8 %v4152
    %v4841 = vunpack.c.0.s8 %v4153
    %v4842 = vunpack.c.0.s8 %v4154
    %v4843 = vunpack.c.0.s8 %v4155
    %v4844 = vunpack.c.0.s8 %v4156
    %v4845 = vunpack.c.1.s8 %v4149
    %v4846 = vunpack.c.1.s8 %v4150
    %v4847 = vunpack.c.1.s8 %v4151
    %v4848 = vunpack.c.1.s8 %v4152
    %v4849 = vunpack.c.1.s8 %v4153
    %v4850 = vunpack.c.1.s8 %v4154
    %v4851 = vunpack.c.1.s8 %v4155
    %v4852 = vunpack.c.1.s8 %v4156
    %v4853 = vunpack.c.2.s8 %v4149
    %v4854 = vunpack.c.2.s8 %v4150
    %v4855 = vunpack.c.2.s8 %v4151
    %v4856 = vunpack.c.2.s8 %v4152
    %v4857 = vunpack.c.2.s8 %v4153
    %v4858 = vunpack.c.2.s8 %v4154
    %v4859 = vunpack.c.2.s8 %v4155
    %v4860 = vunpack.c.2.s8 %v4156
    %v4861 = vunpack.c.3.s8 %v4149
    %v4862 = vunpack.c.3.s8 %v4150
    %v4863 = vunpack.c.3.s8 %v4151
    %v4864 = vunpack.c.3.s8 %v4152
    %v4865 = vunpack.c.3.s8 %v4153
    %v4866 = vunpack.c.3.s8 %v4154
    %v4867 = vunpack.c.3.s8 %v4155
    %v4868 = vunpack.c.3.s8 %v4156
    %v4869 = vunpack.c.0.s8 %v4157
    %v4870 = vunpack.c.0.s8 %v4158
    %v4871 = vunpack.c.0.s8 %v4159
    %v4872 = vunpack.c.0.s8 %v4160
    %v4873 = vunpack.c.0.s8 %v4161
    %v4874 = vunpack.c.0.s8 %v4162
    %v4875 = vunpack.c.0.s8 %v4163
    %v4876 = vunpack.c.0.s8 %v4164
    %v4877 = vunpack.c.1.s8 %v4157
    %v4878 = vunpack.c.1.s8 %v4158
    %v4879 = vunpack.c.1.s8 %v4159
    %v4880 = vunpack.c.1.s8 %v4160
    %v4881 = vunpack.c.1.s8 %v4161
    %v4882 = vunpack.c.1.s8 %v4162
    %v4883 = vunpack.c.1.s8 %v4163
    %v4884 = vunpack.c.1.s8 %v4164
    %v4885 = vunpack.c.2.s8 %v4157
    %v4886 = vunpack.c.2.s8 %v4158
    %v4887 = vunpack.c.2.s8 %v4159
    %v4888 = vunpack.c.2.s8 %v4160
    %v4889 = vunpack.c.2.s8 %v4161
    %v4890 = vunpack.c.2.s8 %v4162
    %v4891 = vunpack.c.2.s8 %v4163
    %v4892 = vunpack.c.2.s8 %v4164
    %v4893 = vunpack.c.3.s8 %v4157
    %v4894 = vunpack.c.3.s8 %v4158
    %v4895 = vunpack.c.3.s8 %v4159
    %v4896 = vunpack.c.3.s8 %v4160
    %v4897 = vunpack.c.3.s8 %v4161
    %v4898 = vunpack.c.3.s8 %v4162
    %v4899 = vunpack.c.3.s8 %v4163
    %v4900 = vunpack.c.3.s8 %v4164
    %v4901 = vunpack.c.0.s8 %v4165
    %v4902 = vunpack.c.0.s8 %v4166
    %v4903 = vunpack.c.0.s8 %v4167
    %v4904 = vunpack.c.0.s8 %v4168
    %v4905 = vunpack.c.0.s8 %v4169
    %v4906 = vunpack.c.0.s8 %v4170
    %v4907 = vunpack.c.0.s8 %v4171
    %v4908 = vunpack.c.0.s8 %v4172
    %v4909 = vunpack.c.1.s8 %v4165
    %v4910 = vunpack.c.1.s8 %v4166
    %v4911 = vunpack.c.1.s8 %v4167
    %v4912 = vunpack.c.1.s8 %v4168
    %v4913 = vunpack.c.1.s8 %v4169
    %v4914 = vunpack.c.1.s8 %v4170
    %v4915 = vunpack.c.1.s8 %v4171
    %v4916 = vunpack.c.1.s8 %v4172
    %v4917 = vunpack.c.2.s8 %v4165
    %v4918 = vunpack.c.2.s8 %v4166
    %v4919 = vunpack.c.2.s8 %v4167
    %v4920 = vunpack.c.2.s8 %v4168
    %v4921 = vunpack.c.2.s8 %v4169
    %v4922 = vunpack.c.2.s8 %v4170
    %v4923 = vunpack.c.2.s8 %v4171
    %v4924 = vunpack.c.2.s8 %v4172
    %v4925 = vunpack.c.3.s8 %v4165
    %v4926 = vunpack.c.3.s8 %v4166
    %v4927 = vunpack.c.3.s8 %v4167
    %v4928 = vunpack.c.3.s8 %v4168
    %v4929 = vunpack.c.3.s8 %v4169
    %v4930 = vunpack.c.3.s8 %v4170
    %v4931 = vunpack.c.3.s8 %v4171
    %v4932 = vunpack.c.3.s8 %v4172
    %v4933 = vunpack.c.0.s8 %v4173
    %v4934 = vunpack.c.0.s8 %v4174
    %v4935 = vunpack.c.0.s8 %v4175
    %v4936 = vunpack.c.0.s8 %v4176
    %v4937 = vunpack.c.0.s8 %v4177
    %v4938 = vunpack.c.0.s8 %v4178
    %v4939 = vunpack.c.0.s8 %v4179
    %v4940 = vunpack.c.0.s8 %v4180
    %v4941 = vunpack.c.1.s8 %v4173
    %v4942 = vunpack.c.1.s8 %v4174
    %v4943 = vunpack.c.1.s8 %v4175
    %v4944 = vunpack.c.1.s8 %v4176
    %v4945 = vunpack.c.1.s8 %v4177
    %v4946 = vunpack.c.1.s8 %v4178
    %v4947 = vunpack.c.1.s8 %v4179
    %v4948 = vunpack.c.1.s8 %v4180
    %v4949 = vunpack.c.2.s8 %v4173
    %v4950 = vunpack.c.2.s8 %v4174
    %v4951 = vunpack.c.2.s8 %v4175
    %v4952 = vunpack.c.2.s8 %v4176
    %v4953 = vunpack.c.2.s8 %v4177
    %v4954 = vunpack.c.2.s8 %v4178
    %v4955 = vunpack.c.2.s8 %v4179
    %v4956 = vunpack.c.2.s8 %v4180
    %v4957 = vunpack.c.3.s8 %v4173
    %v4958 = vunpack.c.3.s8 %v4174
    %v4959 = vunpack.c.3.s8 %v4175
    %v4960 = vunpack.c.3.s8 %v4176
    %v4961 = vunpack.c.3.s8 %v4177
    %v4962 = vunpack.c.3.s8 %v4178
    %v4963 = vunpack.c.3.s8 %v4179
    %v4964 = vunpack.c.3.s8 %v4180
    %v4965 = vunpack.c.0.s8 %v4181
    %v4966 = vunpack.c.0.s8 %v4182
    %v4967 = vunpack.c.0.s8 %v4183
    %v4968 = vunpack.c.0.s8 %v4184
    %v4969 = vunpack.c.0.s8 %v4185
    %v4970 = vunpack.c.0.s8 %v4186
    %v4971 = vunpack.c.0.s8 %v4187
    %v4972 = vunpack.c.0.s8 %v4188
    %v4973 = vunpack.c.1.s8 %v4181
    %v4974 = vunpack.c.1.s8 %v4182
    %v4975 = vunpack.c.1.s8 %v4183
    %v4976 = vunpack.c.1.s8 %v4184
    %v4977 = vunpack.c.1.s8 %v4185
    %v4978 = vunpack.c.1.s8 %v4186
    %v4979 = vunpack.c.1.s8 %v4187
    %v4980 = vunpack.c.1.s8 %v4188
    %v4981 = vunpack.c.2.s8 %v4181
    %v4982 = vunpack.c.2.s8 %v4182
    %v4983 = vunpack.c.2.s8 %v4183
    %v4984 = vunpack.c.2.s8 %v4184
    %v4985 = vunpack.c.2.s8 %v4185
    %v4986 = vunpack.c.2.s8 %v4186
    %v4987 = vunpack.c.2.s8 %v4187
    %v4988 = vunpack.c.2.s8 %v4188
    %v4989 = vunpack.c.3.s8 %v4181
    %v4990 = vunpack.c.3.s8 %v4182
    %v4991 = vunpack.c.3.s8 %v4183
    %v4992 = vunpack.c.3.s8 %v4184
    %v4993 = vunpack.c.3.s8 %v4185
    %v4994 = vunpack.c.3.s8 %v4186
    %v4995 = vunpack.c.3.s8 %v4187
    %v4996 = vunpack.c.3.s8 %v4188
    %v4997 = vunpack.c.0.s8 %v4189
    %v4998 = vunpack.c.0.s8 %v4190
    %v4999 = vunpack.c.0.s8 %v4191
    %v5000 = vunpack.c.0.s8 %v4192
    %v5001 = vunpack.c.0.s8 %v4193
    %v5002 = vunpack.c.0.s8 %v4194
    %v5003 = vunpack.c.0.s8 %v4195
    %v5004 = vunpack.c.0.s8 %v4196
    %v5005 = vunpack.c.1.s8 %v4189
    %v5006 = vunpack.c.1.s8 %v4190
    %v5007 = vunpack.c.1.s8 %v4191
    %v5008 = vunpack.c.1.s8 %v4192
    %v5009 = vunpack.c.1.s8 %v4193
    %v5010 = vunpack.c.1.s8 %v4194
    %v5011 = vunpack.c.1.s8 %v4195
    %v5012 = vunpack.c.1.s8 %v4196
    %v5013 = vunpack.c.2.s8 %v4189
    %v5014 = vunpack.c.2.s8 %v4190
    %v5015 = vunpack.c.2.s8 %v4191
    %v5016 = vunpack.c.2.s8 %v4192
    %v5017 = vunpack.c.2.s8 %v4193
    %v5018 = vunpack.c.2.s8 %v4194
    %v5019 = vunpack.c.2.s8 %v4195
    %v5020 = vunpack.c.2.s8 %v4196
    %v5021 = vunpack.c.3.s8 %v4189
    %v5022 = vunpack.c.3.s8 %v4190
    %v5023 = vunpack.c.3.s8 %v4191
    %v5024 = vunpack.c.3.s8 %v4192
    %v5025 = vunpack.c.3.s8 %v4193
    %v5026 = vunpack.c.3.s8 %v4194
    %v5027 = vunpack.c.3.s8 %v4195
    %v5028 = vunpack.c.3.s8 %v4196
    %v5029 = vunpack.c.0.s8 %v4197
    %v5030 = vunpack.c.0.s8 %v4198
    %v5031 = vunpack.c.0.s8 %v4199
    %v5032 = vunpack.c.0.s8 %v4200
    %v5033 = vunpack.c.0.s8 %v4201
    %v5034 = vunpack.c.0.s8 %v4202
    %v5035 = vunpack.c.0.s8 %v4203
    %v5036 = vunpack.c.0.s8 %v4204
    %v5037 = vunpack.c.1.s8 %v4197
    %v5038 = vunpack.c.1.s8 %v4198
    %v5039 = vunpack.c.1.s8 %v4199
    %v5040 = vunpack.c.1.s8 %v4200
    %v5041 = vunpack.c.1.s8 %v4201
    %v5042 = vunpack.c.1.s8 %v4202
    %v5043 = vunpack.c.1.s8 %v4203
    %v5044 = vunpack.c.1.s8 %v4204
    %v5045 = vunpack.c.2.s8 %v4197
    %v5046 = vunpack.c.2.s8 %v4198
    %v5047 = vunpack.c.2.s8 %v4199
    %v5048 = vunpack.c.2.s8 %v4200
    %v5049 = vunpack.c.2.s8 %v4201
    %v5050 = vunpack.c.2.s8 %v4202
    %v5051 = vunpack.c.2.s8 %v4203
    %v5052 = vunpack.c.2.s8 %v4204
    %v5053 = vunpack.c.3.s8 %v4197
    %v5054 = vunpack.c.3.s8 %v4198
    %v5055 = vunpack.c.3.s8 %v4199
    %v5056 = vunpack.c.3.s8 %v4200
    %v5057 = vunpack.c.3.s8 %v4201
    %v5058 = vunpack.c.3.s8 %v4202
    %v5059 = vunpack.c.3.s8 %v4203
    %v5060 = vunpack.c.3.s8 %v4204
    %v5061 = vunpack.c.0.s8 %v4205
    %v5062 = vunpack.c.0.s8 %v4206
    %v5063 = vunpack.c.0.s8 %v4207
    %v5064 = vunpack.c.0.s8 %v4208
    %v5065 = vunpack.c.0.s8 %v4209
    %v5066 = vunpack.c.0.s8 %v4210
    %v5067 = vunpack.c.0.s8 %v4211
    %v5068 = vunpack.c.0.s8 %v4212
    %v5069 = vunpack.c.1.s8 %v4205
    %v5070 = vunpack.c.1.s8 %v4206
    %v5071 = vunpack.c.1.s8 %v4207
    %v5072 = vunpack.c.1.s8 %v4208
    %v5073 = vunpack.c.1.s8 %v4209
    %v5074 = vunpack.c.1.s8 %v4210
    %v5075 = vunpack.c.1.s8 %v4211
    %v5076 = vunpack.c.1.s8 %v4212
    %v5077 = vunpack.c.2.s8 %v4205
    %v5078 = vunpack.c.2.s8 %v4206
    %v5079 = vunpack.c.2.s8 %v4207
    %v5080 = vunpack.c.2.s8 %v4208
    %v5081 = vunpack.c.2.s8 %v4209
    %v5082 = vunpack.c.2.s8 %v4210
    %v5083 = vunpack.c.2.s8 %v4211
    %v5084 = vunpack.c.2.s8 %v4212
    %v5085 = vunpack.c.3.s8 %v4205
    %v5086 = vunpack.c.3.s8 %v4206
    %v5087 = vunpack.c.3.s8 %v4207
    %v5088 = vunpack.c.3.s8 %v4208
    %v5089 = vunpack.c.3.s8 %v4209
    %v5090 = vunpack.c.3.s8 %v4210
    %v5091 = vunpack.c.3.s8 %v4211
    %v5092 = vunpack.c.3.s8 %v4212
    %v5093 = vunpack.c.0.s8 %v4213
    %v5094 = vunpack.c.0.s8 %v4214
    %v5095 = vunpack.c.0.s8 %v4215
    %v5096 = vunpack.c.0.s8 %v4216
    %v5097 = vunpack.c.0.s8 %v4217
    %v5098 = vunpack.c.0.s8 %v4218
    %v5099 = vunpack.c.0.s8 %v4219
    %v5100 = vunpack.c.0.s8 %v4220
    %v5101 = vunpack.c.1.s8 %v4213
    %v5102 = vunpack.c.1.s8 %v4214
    %v5103 = vunpack.c.1.s8 %v4215
    %v5104 = vunpack.c.1.s8 %v4216
    %v5105 = vunpack.c.1.s8 %v4217
    %v5106 = vunpack.c.1.s8 %v4218
    %v5107 = vunpack.c.1.s8 %v4219
    %v5108 = vunpack.c.1.s8 %v4220
    %v5109 = vunpack.c.2.s8 %v4213
    %v5110 = vunpack.c.2.s8 %v4214
    %v5111 = vunpack.c.2.s8 %v4215
    %v5112 = vunpack.c.2.s8 %v4216
    %v5113 = vunpack.c.2.s8 %v4217
    %v5114 = vunpack.c.2.s8 %v4218
    %v5115 = vunpack.c.2.s8 %v4219
    %v5116 = vunpack.c.2.s8 %v4220
    %v5117 = vunpack.c.3.s8 %v4213
    %v5118 = vunpack.c.3.s8 %v4214
    %v5119 = vunpack.c.3.s8 %v4215
    %v5120 = vunpack.c.3.s8 %v4216
    %v5121 = vunpack.c.3.s8 %v4217
    %v5122 = vunpack.c.3.s8 %v4218
    %v5123 = vunpack.c.3.s8 %v4219
    %v5124 = vunpack.c.3.s8 %v4220
    %v5125 = vunpack.c.0.s8 %v4221
    %v5126 = vunpack.c.0.s8 %v4222
    %v5127 = vunpack.c.0.s8 %v4223
    %v5128 = vunpack.c.0.s8 %v4224
    %v5129 = vunpack.c.0.s8 %v4225
    %v5130 = vunpack.c.0.s8 %v4226
    %v5131 = vunpack.c.0.s8 %v4227
    %v5132 = vunpack.c.0.s8 %v4228
    %v5133 = vunpack.c.1.s8 %v4221
    %v5134 = vunpack.c.1.s8 %v4222
    %v5135 = vunpack.c.1.s8 %v4223
    %v5136 = vunpack.c.1.s8 %v4224
    %v5137 = vunpack.c.1.s8 %v4225
    %v5138 = vunpack.c.1.s8 %v4226
    %v5139 = vunpack.c.1.s8 %v4227
    %v5140 = vunpack.c.1.s8 %v4228
    %v5141 = vunpack.c.2.s8 %v4221
    %v5142 = vunpack.c.2.s8 %v4222
    %v5143 = vunpack.c.2.s8 %v4223
    %v5144 = vunpack.c.2.s8 %v4224
    %v5145 = vunpack.c.2.s8 %v4225
    %v5146 = vunpack.c.2.s8 %v4226
    %v5147 = vunpack.c.2.s8 %v4227
    %v5148 = vunpack.c.2.s8 %v4228
    %v5149 = vunpack.c.3.s8 %v4221
    %v5150 = vunpack.c.3.s8 %v4222
    %v5151 = vunpack.c.3.s8 %v4223
    %v5152 = vunpack.c.3.s8 %v4224
    %v5153 = vunpack.c.3.s8 %v4225
    %v5154 = vunpack.c.3.s8 %v4226
    %v5155 = vunpack.c.3.s8 %v4227
    %v5156 = vunpack.c.3.s8 %v4228
    %v5157 = vunpack.c.0.s8 %v4229
    %v5158 = vunpack.c.0.s8 %v4230
    %v5159 = vunpack.c.0.s8 %v4231
    %v5160 = vunpack.c.0.s8 %v4232
    %v5161 = vunpack.c.0.s8 %v4233
    %v5162 = vunpack.c.0.s8 %v4234
    %v5163 = vunpack.c.0.s8 %v4235
    %v5164 = vunpack.c.0.s8 %v4236
    %v5165 = vunpack.c.1.s8 %v4229
    %v5166 = vunpack.c.1.s8 %v4230
    %v5167 = vunpack.c.1.s8 %v4231
    %v5168 = vunpack.c.1.s8 %v4232
    %v5169 = vunpack.c.1.s8 %v4233
    %v5170 = vunpack.c.1.s8 %v4234
    %v5171 = vunpack.c.1.s8 %v4235
    %v5172 = vunpack.c.1.s8 %v4236
    %v5173 = vunpack.c.2.s8 %v4229
    %v5174 = vunpack.c.2.s8 %v4230
    %v5175 = vunpack.c.2.s8 %v4231
    %v5176 = vunpack.c.2.s8 %v4232
    %v5177 = vunpack.c.2.s8 %v4233
    %v5178 = vunpack.c.2.s8 %v4234
    %v5179 = vunpack.c.2.s8 %v4235
    %v5180 = vunpack.c.2.s8 %v4236
    %v5181 = vunpack.c.3.s8 %v4229
    %v5182 = vunpack.c.3.s8 %v4230
    %v5183 = vunpack.c.3.s8 %v4231
    %v5184 = vunpack.c.3.s8 %v4232
    %v5185 = vunpack.c.3.s8 %v4233
    %v5186 = vunpack.c.3.s8 %v4234
    %v5187 = vunpack.c.3.s8 %v4235
    %v5188 = vunpack.c.3.s8 %v4236
    %v5189 = vunpack.c.0.s8 %v4237
    %v5190 = vunpack.c.0.s8 %v4238
    %v5191 = vunpack.c.0.s8 %v4239
    %v5192 = vunpack.c.0.s8 %v4240
    %v5193 = vunpack.c.0.s8 %v4241
    %v5194 = vunpack.c.0.s8 %v4242
    %v5195 = vunpack.c.0.s8 %v4243
    %v5196 = vunpack.c.0.s8 %v4244
    %v5197 = vunpack.c.1.s8 %v4237
    %v5198 = vunpack.c.1.s8 %v4238
    %v5199 = vunpack.c.1.s8 %v4239
    %v5200 = vunpack.c.1.s8 %v4240
    %v5201 = vunpack.c.1.s8 %v4241
    %v5202 = vunpack.c.1.s8 %v4242
    %v5203 = vunpack.c.1.s8 %v4243
    %v5204 = vunpack.c.1.s8 %v4244
    %v5205 = vunpack.c.2.s8 %v4237
    %v5206 = vunpack.c.2.s8 %v4238
    %v5207 = vunpack.c.2.s8 %v4239
    %v5208 = vunpack.c.2.s8 %v4240
    %v5209 = vunpack.c.2.s8 %v4241
    %v5210 = vunpack.c.2.s8 %v4242
    %v5211 = vunpack.c.2.s8 %v4243
    %v5212 = vunpack.c.2.s8 %v4244
    %v5213 = vunpack.c.3.s8 %v4237
    %v5214 = vunpack.c.3.s8 %v4238
    %v5215 = vunpack.c.3.s8 %v4239
    %v5216 = vunpack.c.3.s8 %v4240
    %v5217 = vunpack.c.3.s8 %v4241
    %v5218 = vunpack.c.3.s8 %v4242
    %v5219 = vunpack.c.3.s8 %v4243
    %v5220 = vunpack.c.3.s8 %v4244
    %v5221 = vunpack.c.0.s8 %v4245
    %v5222 = vunpack.c.0.s8 %v4246
    %v5223 = vunpack.c.0.s8 %v4247
    %v5224 = vunpack.c.0.s8 %v4248
    %v5225 = vunpack.c.0.s8 %v4249
    %v5226 = vunpack.c.0.s8 %v4250
    %v5227 = vunpack.c.0.s8 %v4251
    %v5228 = vunpack.c.0.s8 %v4252
    %v5229 = vunpack.c.1.s8 %v4245
    %v5230 = vunpack.c.1.s8 %v4246
    %v5231 = vunpack.c.1.s8 %v4247
    %v5232 = vunpack.c.1.s8 %v4248
    %v5233 = vunpack.c.1.s8 %v4249
    %v5234 = vunpack.c.1.s8 %v4250
    %v5235 = vunpack.c.1.s8 %v4251
    %v5236 = vunpack.c.1.s8 %v4252
    %v5237 = vunpack.c.2.s8 %v4245
    %v5238 = vunpack.c.2.s8 %v4246
    %v5239 = vunpack.c.2.s8 %v4247
    %v5240 = vunpack.c.2.s8 %v4248
    %v5241 = vunpack.c.2.s8 %v4249
    %v5242 = vunpack.c.2.s8 %v4250
    %v5243 = vunpack.c.2.s8 %v4251
    %v5244 = vunpack.c.2.s8 %v4252
    %v5245 = vunpack.c.3.s8 %v4245
    %v5246 = vunpack.c.3.s8 %v4246
    %v5247 = vunpack.c.3.s8 %v4247
    %v5248 = vunpack.c.3.s8 %v4248
    %v5249 = vunpack.c.3.s8 %v4249
    %v5250 = vunpack.c.3.s8 %v4250
    %v5251 = vunpack.c.3.s8 %v4251
    %v5252 = vunpack.c.3.s8 %v4252
    %v5253 = vunpack.c.0.s8 %v4253
    %v5254 = vunpack.c.0.s8 %v4254
    %v5255 = vunpack.c.0.s8 %v4255
    %v5256 = vunpack.c.0.s8 %v4256
    %v5257 = vunpack.c.0.s8 %v4257
    %v5258 = vunpack.c.0.s8 %v4258
    %v5259 = vunpack.c.0.s8 %v4259
    %v5260 = vunpack.c.0.s8 %v4260
    %v5261 = vunpack.c.1.s8 %v4253
    %v5262 = vunpack.c.1.s8 %v4254
    %v5263 = vunpack.c.1.s8 %v4255
    %v5264 = vunpack.c.1.s8 %v4256
    %v5265 = vunpack.c.1.s8 %v4257
    %v5266 = vunpack.c.1.s8 %v4258
    %v5267 = vunpack.c.1.s8 %v4259
    %v5268 = vunpack.c.1.s8 %v4260
    %v5269 = vunpack.c.2.s8 %v4253
    %v5270 = vunpack.c.2.s8 %v4254
    %v5271 = vunpack.c.2.s8 %v4255
    %v5272 = vunpack.c.2.s8 %v4256
    %v5273 = vunpack.c.2.s8 %v4257
    %v5274 = vunpack.c.2.s8 %v4258
    %v5275 = vunpack.c.2.s8 %v4259
    %v5276 = vunpack.c.2.s8 %v4260
    %v5277 = vunpack.c.3.s8 %v4253
    %v5278 = vunpack.c.3.s8 %v4254
    %v5279 = vunpack.c.3.s8 %v4255
    %v5280 = vunpack.c.3.s8 %v4256
    %v5281 = vunpack.c.3.s8 %v4257
    %v5282 = vunpack.c.3.s8 %v4258
    %v5283 = vunpack.c.3.s8 %v4259
    %v5284 = vunpack.c.3.s8 %v4260
    %v5285 = vcvt.s32.f32 %v4261
    %v5286 = vcvt.s32.f32 %v4262
    %v5287 = vcvt.s32.f32 %v4263
    %v5288 = vcvt.s32.f32 %v4264
    %v5289 = vcvt.s32.f32 %v4265
    %v5290 = vcvt.s32.f32 %v4266
    %v5291 = vcvt.s32.f32 %v4267
    %v5292 = vcvt.s32.f32 %v4268
    %v5293 = vcvt.s32.f32 %v4269
    %v5294 = vcvt.s32.f32 %v4270
    %v5295 = vcvt.s32.f32 %v4271
    %v5296 = vcvt.s32.f32 %v4272
    %v5297 = vcvt.s32.f32 %v4273
    %v5298 = vcvt.s32.f32 %v4274
    %v5299 = vcvt.s32.f32 %v4275
    %v5300 = vcvt.s32.f32 %v4276
    %v5301 = vcvt.s32.f32 %v4277
    %v5302 = vcvt.s32.f32 %v4278
    %v5303 = vcvt.s32.f32 %v4279
    %v5304 = vcvt.s32.f32 %v4280
    %v5305 = vcvt.s32.f32 %v4281
    %v5306 = vcvt.s32.f32 %v4282
    %v5307 = vcvt.s32.f32 %v4283
    %v5308 = vcvt.s32.f32 %v4284
    %v5309 = vcvt.s32.f32 %v4285
    %v5310 = vcvt.s32.f32 %v4286
    %v5311 = vcvt.s32.f32 %v4287
    %v5312 = vcvt.s32.f32 %v4288
    %v5313 = vcvt.s32.f32 %v4289
    %v5314 = vcvt.s32.f32 %v4290
    %v5315 = vcvt.s32.f32 %v4291
    %v5316 = vcvt.s32.f32 %v4292
    %v5317 = vcvt.s32.f32 %v4293
    %v5318 = vcvt.s32.f32 %v4294
    %v5319 = vcvt.s32.f32 %v4295
    %v5320 = vcvt.s32.f32 %v4296
    %v5321 = vcvt.s32.f32 %v4297
    %v5322 = vcvt.s32.f32 %v4298
    %v5323 = vcvt.s32.f32 %v4299
    %v5324 = vcvt.s32.f32 %v4300
    %v5325 = vcvt.s32.f32 %v4301
    %v5326 = vcvt.s32.f32 %v4302
    %v5327 = vcvt.s32.f32 %v4303
    %v5328 = vcvt.s32.f32 %v4304
    %v5329 = vcvt.s32.f32 %v4305
    %v5330 = vcvt.s32.f32 %v4306
    %v5331 = vcvt.s32.f32 %v4307
    %v5332 = vcvt.s32.f32 %v4308
    %v5333 = vcvt.s32.f32 %v4309
    %v5334 = vcvt.s32.f32 %v4310
    %v5335 = vcvt.s32.f32 %v4311
    %v5336 = vcvt.s32.f32 %v4312
    %v5337 = vcvt.s32.f32 %v4313
    %v5338 = vcvt.s32.f32 %v4314
    %v5339 = vcvt.s32.f32 %v4315
    %v5340 = vcvt.s32.f32 %v4316
    %v5341 = vcvt.s32.f32 %v4317
    %v5342 = vcvt.s32.f32 %v4318
    %v5343 = vcvt.s32.f32 %v4319
    %v5344 = vcvt.s32.f32 %v4320
    %v5345 = vcvt.s32.f32 %v4321
    %v5346 = vcvt.s32.f32 %v4322
    %v5347 = vcvt.s32.f32 %v4323
    %v5348 = vcvt.s32.f32 %v4324
    %v5349 = vcvt.s32.f32 %v4325
    %v5350 = vcvt.s32.f32 %v4326
    %v5351 = vcvt.s32.f32 %v4327
    %v5352 = vcvt.s32.f32 %v4328
    %v5353 = vcvt.s32.f32 %v4329
    %v5354 = vcvt.s32.f32 %v4330
    %v5355 = vcvt.s32.f32 %v4331
    %v5356 = vcvt.s32.f32 %v4332
    %v5357 = vcvt.s32.f32 %v4333
    %v5358 = vcvt.s32.f32 %v4334
    %v5359 = vcvt.s32.f32 %v4335
    %v5360 = vcvt.s32.f32 %v4336
    %v5361 = vcvt.s32.f32 %v4337
    %v5362 = vcvt.s32.f32 %v4338
    %v5363 = vcvt.s32.f32 %v4339
    %v5364 = vcvt.s32.f32 %v4340
    %v5365 = vcvt.s32.f32 %v4341
    %v5366 = vcvt.s32.f32 %v4342
    %v5367 = vcvt.s32.f32 %v4343
    %v5368 = vcvt.s32.f32 %v4344
    %v5369 = vcvt.s32.f32 %v4345
    %v5370 = vcvt.s32.f32 %v4346
    %v5371 = vcvt.s32.f32 %v4347
    %v5372 = vcvt.s32.f32 %v4348
    %v5373 = vcvt.s32.f32 %v4349
    %v5374 = vcvt.s32.f32 %v4350
    %v5375 = vcvt.s32.f32 %v4351
    %v5376 = vcvt.s32.f32 %v4352
    %v5377 = vcvt.s32.f32 %v4353
    %v5378 = vcvt.s32.f32 %v4354
    %v5379 = vcvt.s32.f32 %v4355
    %v5380 = vcvt.s32.f32 %v4356
    %v5381 = vcvt.s32.f32 %v4357
    %v5382 = vcvt.s32.f32 %v4358
    %v5383 = vcvt.s32.f32 %v4359
    %v5384 = vcvt.s32.f32 %v4360
    %v5385 = vcvt.s32.f32 %v4361
    %v5386 = vcvt.s32.f32 %v4362
    %v5387 = vcvt.s32.f32 %v4363
    %v5388 = vcvt.s32.f32 %v4364
    %v5389 = vcvt.s32.f32 %v4365
    %v5390 = vcvt.s32.f32 %v4366
    %v5391 = vcvt.s32.f32 %v4367
    %v5392 = vcvt.s32.f32 %v4368
    %v5393 = vcvt.s32.f32 %v4369
    %v5394 = vcvt.s32.f32 %v4370
    %v5395 = vcvt.s32.f32 %v4371
    %v5396 = vcvt.s32.f32 %v4372
    %v5397 = vcvt.s32.f32 %v4373
    %v5398 = vcvt.s32.f32 %v4374
    %v5399 = vcvt.s32.f32 %v4375
    %v5400 = vcvt.s32.f32 %v4376
    %v5401 = vcvt.s32.f32 %v4377
    %v5402 = vcvt.s32.f32 %v4378
    %v5403 = vcvt.s32.f32 %v4379
    %v5404 = vcvt.s32.f32 %v4380
    %v5405 = vcvt.s32.f32 %v4381
    %v5406 = vcvt.s32.f32 %v4382
    %v5407 = vcvt.s32.f32 %v4383
    %v5408 = vcvt.s32.f32 %v4384
    %v5409 = vcvt.s32.f32 %v4385
    %v5410 = vcvt.s32.f32 %v4386
    %v5411 = vcvt.s32.f32 %v4387
    %v5412 = vcvt.s32.f32 %v4388
    %v5413 = vcvt.s32.f32 %v4389
    %v5414 = vcvt.s32.f32 %v4390
    %v5415 = vcvt.s32.f32 %v4391
    %v5416 = vcvt.s32.f32 %v4392
    %v5417 = vcvt.s32.f32 %v4393
    %v5418 = vcvt.s32.f32 %v4394
    %v5419 = vcvt.s32.f32 %v4395
    %v5420 = vcvt.s32.f32 %v4396
    %v5421 = vcvt.s32.f32 %v4397
    %v5422 = vcvt.s32.f32 %v4398
    %v5423 = vcvt.s32.f32 %v4399
    %v5424 = vcvt.s32.f32 %v4400
    %v5425 = vcvt.s32.f32 %v4401
    %v5426 = vcvt.s32.f32 %v4402
    %v5427 = vcvt.s32.f32 %v4403
    %v5428 = vcvt.s32.f32 %v4404
    %v5429 = vcvt.s32.f32 %v4405
    %v5430 = vcvt.s32.f32 %v4406
    %v5431 = vcvt.s32.f32 %v4407
    %v5432 = vcvt.s32.f32 %v4408
    %v5433 = vcvt.s32.f32 %v4409
    %v5434 = vcvt.s32.f32 %v4410
    %v5435 = vcvt.s32.f32 %v4411
    %v5436 = vcvt.s32.f32 %v4412
    %v5437 = vcvt.s32.f32 %v4413
    %v5438 = vcvt.s32.f32 %v4414
    %v5439 = vcvt.s32.f32 %v4415
    %v5440 = vcvt.s32.f32 %v4416
    %v5441 = vcvt.s32.f32 %v4417
    %v5442 = vcvt.s32.f32 %v4418
    %v5443 = vcvt.s32.f32 %v4419
    %v5444 = vcvt.s32.f32 %v4420
    %v5445 = vcvt.s32.f32 %v4421
    %v5446 = vcvt.s32.f32 %v4422
    %v5447 = vcvt.s32.f32 %v4423
    %v5448 = vcvt.s32.f32 %v4424
    %v5449 = vcvt.s32.f32 %v4425
    %v5450 = vcvt.s32.f32 %v4426
    %v5451 = vcvt.s32.f32 %v4427
    %v5452 = vcvt.s32.f32 %v4428
    %v5453 = vcvt.s32.f32 %v4429
    %v5454 = vcvt.s32.f32 %v4430
    %v5455 = vcvt.s32.f32 %v4431
    %v5456 = vcvt.s32.f32 %v4432
    %v5457 = vcvt.s32.f32 %v4433
    %v5458 = vcvt.s32.f32 %v4434
    %v5459 = vcvt.s32.f32 %v4435
    %v5460 = vcvt.s32.f32 %v4436
    %v5461 = vcvt.s32.f32 %v4437
    %v5462 = vcvt.s32.f32 %v4438
    %v5463 = vcvt.s32.f32 %v4439
    %v5464 = vcvt.s32.f32 %v4440
    %v5465 = vcvt.s32.f32 %v4441
    %v5466 = vcvt.s32.f32 %v4442
    %v5467 = vcvt.s32.f32 %v4443
    %v5468 = vcvt.s32.f32 %v4444
    %v5469 = vcvt.s32.f32 %v4445
    %v5470 = vcvt.s32.f32 %v4446
    %v5471 = vcvt.s32.f32 %v4447
    %v5472 = vcvt.s32.f32 %v4448
    %v5473 = vcvt.s32.f32 %v4449
    %v5474 = vcvt.s32.f32 %v4450
    %v5475 = vcvt.s32.f32 %v4451
    %v5476 = vcvt.s32.f32 %v4452
    %v5477 = vcvt.s32.f32 %v4453
    %v5478 = vcvt.s32.f32 %v4454
    %v5479 = vcvt.s32.f32 %v4455
    %v5480 = vcvt.s32.f32 %v4456
    %v5481 = vcvt.s32.f32 %v4457
    %v5482 = vcvt.s32.f32 %v4458
    %v5483 = vcvt.s32.f32 %v4459
    %v5484 = vcvt.s32.f32 %v4460
    %v5485 = vcvt.s32.f32 %v4461
    %v5486 = vcvt.s32.f32 %v4462
    %v5487 = vcvt.s32.f32 %v4463
    %v5488 = vcvt.s32.f32 %v4464
    %v5489 = vcvt.s32.f32 %v4465
    %v5490 = vcvt.s32.f32 %v4466
    %v5491 = vcvt.s32.f32 %v4467
    %v5492 = vcvt.s32.f32 %v4468
    %v5493 = vcvt.s32.f32 %v4469
    %v5494 = vcvt.s32.f32 %v4470
    %v5495 = vcvt.s32.f32 %v4471
    %v5496 = vcvt.s32.f32 %v4472
    %v5497 = vcvt.s32.f32 %v4473
    %v5498 = vcvt.s32.f32 %v4474
    %v5499 = vcvt.s32.f32 %v4475
    %v5500 = vcvt.s32.f32 %v4476
    %v5501 = vcvt.s32.f32 %v4477
    %v5502 = vcvt.s32.f32 %v4478
    %v5503 = vcvt.s32.f32 %v4479
    %v5504 = vcvt.s32.f32 %v4480
    %v5505 = vcvt.s32.f32 %v4481
    %v5506 = vcvt.s32.f32 %v4482
    %v5507 = vcvt.s32.f32 %v4483
    %v5508 = vcvt.s32.f32 %v4484
    %v5509 = vcvt.s32.f32 %v4485
    %v5510 = vcvt.s32.f32 %v4486
    %v5511 = vcvt.s32.f32 %v4487
    %v5512 = vcvt.s32.f32 %v4488
    %v5513 = vcvt.s32.f32 %v4489
    %v5514 = vcvt.s32.f32 %v4490
    %v5515 = vcvt.s32.f32 %v4491
    %v5516 = vcvt.s32.f32 %v4492
    %v5517 = vcvt.s32.f32 %v4493
    %v5518 = vcvt.s32.f32 %v4494
    %v5519 = vcvt.s32.f32 %v4495
    %v5520 = vcvt.s32.f32 %v4496
    %v5521 = vcvt.s32.f32 %v4497
    %v5522 = vcvt.s32.f32 %v4498
    %v5523 = vcvt.s32.f32 %v4499
    %v5524 = vcvt.s32.f32 %v4500
    %v5525 = vcvt.s32.f32 %v4501
    %v5526 = vcvt.s32.f32 %v4502
    %v5527 = vcvt.s32.f32 %v4503
    %v5528 = vcvt.s32.f32 %v4504
    %v5529 = vcvt.s32.f32 %v4505
    %v5530 = vcvt.s32.f32 %v4506
    %v5531 = vcvt.s32.f32 %v4507
    %v5532 = vcvt.s32.f32 %v4508
    %v5533 = vcvt.s32.f32 %v4509
    %v5534 = vcvt.s32.f32 %v4510
    %v5535 = vcvt.s32.f32 %v4511
    %v5536 = vcvt.s32.f32 %v4512
    %v5537 = vcvt.s32.f32 %v4513
    %v5538 = vcvt.s32.f32 %v4514
    %v5539 = vcvt.s32.f32 %v4515
    %v5540 = vcvt.s32.f32 %v4516
    %v5541 = vcvt.s32.f32 %v4517
    %v5542 = vcvt.s32.f32 %v4518
    %v5543 = vcvt.s32.f32 %v4519
    %v5544 = vcvt.s32.f32 %v4520
    %v5545 = vcvt.s32.f32 %v4521
    %v5546 = vcvt.s32.f32 %v4522
    %v5547 = vcvt.s32.f32 %v4523
    %v5548 = vcvt.s32.f32 %v4524
    %v5549 = vcvt.s32.f32 %v4525
    %v5550 = vcvt.s32.f32 %v4526
    %v5551 = vcvt.s32.f32 %v4527
    %v5552 = vcvt.s32.f32 %v4528
    %v5553 = vcvt.s32.f32 %v4529
    %v5554 = vcvt.s32.f32 %v4530
    %v5555 = vcvt.s32.f32 %v4531
    %v5556 = vcvt.s32.f32 %v4532
    %v5557 = vcvt.s32.f32 %v4533
    %v5558 = vcvt.s32.f32 %v4534
    %v5559 = vcvt.s32.f32 %v4535
    %v5560 = vcvt.s32.f32 %v4536
    %v5561 = vcvt.s32.f32 %v4537
    %v5562 = vcvt.s32.f32 %v4538
    %v5563 = vcvt.s32.f32 %v4539
    %v5564 = vcvt.s32.f32 %v4540
    %v5565 = vcvt.s32.f32 %v4541
    %v5566 = vcvt.s32.f32 %v4542
    %v5567 = vcvt.s32.f32 %v4543
    %v5568 = vcvt.s32.f32 %v4544
    %v5569 = vcvt.s32.f32 %v4545
    %v5570 = vcvt.s32.f32 %v4546
    %v5571 = vcvt.s32.f32 %v4547
    %v5572 = vcvt.s32.f32 %v4548
    %v5573 = vcvt.s32.f32 %v4549
    %v5574 = vcvt.s32.f32 %v4550
    %v5575 = vcvt.s32.f32 %v4551
    %v5576 = vcvt.s32.f32 %v4552
    %v5577 = vcvt.s32.f32 %v4553
    %v5578 = vcvt.s32.f32 %v4554
    %v5579 = vcvt.s32.f32 %v4555
    %v5580 = vcvt.s32.f32 %v4556
    %v5581 = vcvt.s32.f32 %v4557
    %v5582 = vcvt.s32.f32 %v4558
    %v5583 = vcvt.s32.f32 %v4559
    %v5584 = vcvt.s32.f32 %v4560
    %v5585 = vcvt.s32.f32 %v4561
    %v5586 = vcvt.s32.f32 %v4562
    %v5587 = vcvt.s32.f32 %v4563
    %v5588 = vcvt.s32.f32 %v4564
    %v5589 = vcvt.s32.f32 %v4565
    %v5590 = vcvt.s32.f32 %v4566
    %v5591 = vcvt.s32.f32 %v4567
    %v5592 = vcvt.s32.f32 %v4568
    %v5593 = vcvt.s32.f32 %v4569
    %v5594 = vcvt.s32.f32 %v4570
    %v5595 = vcvt.s32.f32 %v4571
    %v5596 = vcvt.s32.f32 %v4572
    %v5597 = vcvt.s32.f32 %v4573
    %v5598 = vcvt.s32.f32 %v4574
    %v5599 = vcvt.s32.f32 %v4575
    %v5600 = vcvt.s32.f32 %v4576
    %v5601 = vcvt.s32.f32 %v4577
    %v5602 = vcvt.s32.f32 %v4578
    %v5603 = vcvt.s32.f32 %v4579
    %v5604 = vcvt.s32.f32 %v4580
    %v5605 = vcvt.s32.f32 %v4581
    %v5606 = vcvt.s32.f32 %v4582
    %v5607 = vcvt.s32.f32 %v4583
    %v5608 = vcvt.s32.f32 %v4584
    %v5609 = vcvt.s32.f32 %v4585
    %v5610 = vcvt.s32.f32 %v4586
    %v5611 = vcvt.s32.f32 %v4587
    %v5612 = vcvt.s32.f32 %v4588
    %v5613 = vcvt.s32.f32 %v4589
    %v5614 = vcvt.s32.f32 %v4590
    %v5615 = vcvt.s32.f32 %v4591
    %v5616 = vcvt.s32.f32 %v4592
    %v5617 = vcvt.s32.f32 %v4593
    %v5618 = vcvt.s32.f32 %v4594
    %v5619 = vcvt.s32.f32 %v4595
    %v5620 = vcvt.s32.f32 %v4596
    %v5621 = vcvt.s32.f32 %v4597
    %v5622 = vcvt.s32.f32 %v4598
    %v5623 = vcvt.s32.f32 %v4599
    %v5624 = vcvt.s32.f32 %v4600
    %v5625 = vcvt.s32.f32 %v4601
    %v5626 = vcvt.s32.f32 %v4602
    %v5627 = vcvt.s32.f32 %v4603
    %v5628 = vcvt.s32.f32 %v4604
    %v5629 = vcvt.s32.f32 %v4605
    %v5630 = vcvt.s32.f32 %v4606
    %v5631 = vcvt.s32.f32 %v4607
    %v5632 = vcvt.s32.f32 %v4608
    %v5633 = vcvt.s32.f32 %v4609
    %v5634 = vcvt.s32.f32 %v4610
    %v5635 = vcvt.s32.f32 %v4611
    %v5636 = vcvt.s32.f32 %v4612
    %v5637 = vcvt.s32.f32 %v4613
    %v5638 = vcvt.s32.f32 %v4614
    %v5639 = vcvt.s32.f32 %v4615
    %v5640 = vcvt.s32.f32 %v4616
    %v5641 = vcvt.s32.f32 %v4617
    %v5642 = vcvt.s32.f32 %v4618
    %v5643 = vcvt.s32.f32 %v4619
    %v5644 = vcvt.s32.f32 %v4620
    %v5645 = vcvt.s32.f32 %v4621
    %v5646 = vcvt.s32.f32 %v4622
    %v5647 = vcvt.s32.f32 %v4623
    %v5648 = vcvt.s32.f32 %v4624
    %v5649 = vcvt.s32.f32 %v4625
    %v5650 = vcvt.s32.f32 %v4626
    %v5651 = vcvt.s32.f32 %v4627
    %v5652 = vcvt.s32.f32 %v4628
    %v5653 = vcvt.s32.f32 %v4629
    %v5654 = vcvt.s32.f32 %v4630
    %v5655 = vcvt.s32.f32 %v4631
    %v5656 = vcvt.s32.f32 %v4632
    %v5657 = vcvt.s32.f32 %v4633
    %v5658 = vcvt.s32.f32 %v4634
    %v5659 = vcvt.s32.f32 %v4635
    %v5660 = vcvt.s32.f32 %v4636
    %v5661 = vcvt.s32.f32 %v4637
    %v5662 = vcvt.s32.f32 %v4638
    %v5663 = vcvt.s32.f32 %v4639
    %v5664 = vcvt.s32.f32 %v4640
    %v5665 = vcvt.s32.f32 %v4641
    %v5666 = vcvt.s32.f32 %v4642
    %v5667 = vcvt.s32.f32 %v4643
    %v5668 = vcvt.s32.f32 %v4644
    %v5669 = vcvt.s32.f32 %v4645
    %v5670 = vcvt.s32.f32 %v4646
    %v5671 = vcvt.s32.f32 %v4647
    %v5672 = vcvt.s32.f32 %v4648
    %v5673 = vcvt.s32.f32 %v4649
    %v5674 = vcvt.s32.f32 %v4650
    %v5675 = vcvt.s32.f32 %v4651
    %v5676 = vcvt.s32.f32 %v4652
    %v5677 = vcvt.s32.f32 %v4653
    %v5678 = vcvt.s32.f32 %v4654
    %v5679 = vcvt.s32.f32 %v4655
    %v5680 = vcvt.s32.f32 %v4656
    %v5681 = vcvt.s32.f32 %v4657
    %v5682 = vcvt.s32.f32 %v4658
    %v5683 = vcvt.s32.f32 %v4659
    %v5684 = vcvt.s32.f32 %v4660
    %v5685 = vcvt.s32.f32 %v4661
    %v5686 = vcvt.s32.f32 %v4662
    %v5687 = vcvt.s32.f32 %v4663
    %v5688 = vcvt.s32.f32 %v4664
    %v5689 = vcvt.s32.f32 %v4665
    %v5690 = vcvt.s32.f32 %v4666
    %v5691 = vcvt.s32.f32 %v4667
    %v5692 = vcvt.s32.f32 %v4668
    %v5693 = vcvt.s32.f32 %v4669
    %v5694 = vcvt.s32.f32 %v4670
    %v5695 = vcvt.s32.f32 %v4671
    %v5696 = vcvt.s32.f32 %v4672
    %v5697 = vcvt.s32.f32 %v4673
    %v5698 = vcvt.s32.f32 %v4674
    %v5699 = vcvt.s32.f32 %v4675
    %v5700 = vcvt.s32.f32 %v4676
    %v5701 = vcvt.s32.f32 %v4677
    %v5702 = vcvt.s32.f32 %v4678
    %v5703 = vcvt.s32.f32 %v4679
    %v5704 = vcvt.s32.f32 %v4680
    %v5705 = vcvt.s32.f32 %v4681
    %v5706 = vcvt.s32.f32 %v4682
    %v5707 = vcvt.s32.f32 %v4683
    %v5708 = vcvt.s32.f32 %v4684
    %v5709 = vcvt.s32.f32 %v4685
    %v5710 = vcvt.s32.f32 %v4686
    %v5711 = vcvt.s32.f32 %v4687
    %v5712 = vcvt.s32.f32 %v4688
    %v5713 = vcvt.s32.f32 %v4689
    %v5714 = vcvt.s32.f32 %v4690
    %v5715 = vcvt.s32.f32 %v4691
    %v5716 = vcvt.s32.f32 %v4692
    %v5717 = vcvt.s32.f32 %v4693
    %v5718 = vcvt.s32.f32 %v4694
    %v5719 = vcvt.s32.f32 %v4695
    %v5720 = vcvt.s32.f32 %v4696
    %v5721 = vcvt.s32.f32 %v4697
    %v5722 = vcvt.s32.f32 %v4698
    %v5723 = vcvt.s32.f32 %v4699
    %v5724 = vcvt.s32.f32 %v4700
    %v5725 = vcvt.s32.f32 %v4701
    %v5726 = vcvt.s32.f32 %v4702
    %v5727 = vcvt.s32.f32 %v4703
    %v5728 = vcvt.s32.f32 %v4704
    %v5729 = vcvt.s32.f32 %v4705
    %v5730 = vcvt.s32.f32 %v4706
    %v5731 = vcvt.s32.f32 %v4707
    %v5732 = vcvt.s32.f32 %v4708
    %v5733 = vcvt.s32.f32 %v4709
    %v5734 = vcvt.s32.f32 %v4710
    %v5735 = vcvt.s32.f32 %v4711
    %v5736 = vcvt.s32.f32 %v4712
    %v5737 = vcvt.s32.f32 %v4713
    %v5738 = vcvt.s32.f32 %v4714
    %v5739 = vcvt.s32.f32 %v4715
    %v5740 = vcvt.s32.f32 %v4716
    %v5741 = vcvt.s32.f32 %v4717
    %v5742 = vcvt.s32.f32 %v4718
    %v5743 = vcvt.s32.f32 %v4719
    %v5744 = vcvt.s32.f32 %v4720
    %v5745 = vcvt.s32.f32 %v4721
    %v5746 = vcvt.s32.f32 %v4722
    %v5747 = vcvt.s32.f32 %v4723
    %v5748 = vcvt.s32.f32 %v4724
    %v5749 = vcvt.s32.f32 %v4725
    %v5750 = vcvt.s32.f32 %v4726
    %v5751 = vcvt.s32.f32 %v4727
    %v5752 = vcvt.s32.f32 %v4728
    %v5753 = vcvt.s32.f32 %v4729
    %v5754 = vcvt.s32.f32 %v4730
    %v5755 = vcvt.s32.f32 %v4731
    %v5756 = vcvt.s32.f32 %v4732
    %v5757 = vcvt.s32.f32 %v4733
    %v5758 = vcvt.s32.f32 %v4734
    %v5759 = vcvt.s32.f32 %v4735
    %v5760 = vcvt.s32.f32 %v4736
    %v5761 = vcvt.s32.f32 %v4737
    %v5762 = vcvt.s32.f32 %v4738
    %v5763 = vcvt.s32.f32 %v4739
    %v5764 = vcvt.s32.f32 %v4740
    %v5765 = vcvt.s32.f32 %v4741
    %v5766 = vcvt.s32.f32 %v4742
    %v5767 = vcvt.s32.f32 %v4743
    %v5768 = vcvt.s32.f32 %v4744
    %v5769 = vcvt.s32.f32 %v4745
    %v5770 = vcvt.s32.f32 %v4746
    %v5771 = vcvt.s32.f32 %v4747
    %v5772 = vcvt.s32.f32 %v4748
    %v5773 = vcvt.s32.f32 %v4749
    %v5774 = vcvt.s32.f32 %v4750
    %v5775 = vcvt.s32.f32 %v4751
    %v5776 = vcvt.s32.f32 %v4752
    %v5777 = vcvt.s32.f32 %v4753
    %v5778 = vcvt.s32.f32 %v4754
    %v5779 = vcvt.s32.f32 %v4755
    %v5780 = vcvt.s32.f32 %v4756
    %v5781 = vcvt.s32.f32 %v4757
    %v5782 = vcvt.s32.f32 %v4758
    %v5783 = vcvt.s32.f32 %v4759
    %v5784 = vcvt.s32.f32 %v4760
    %v5785 = vcvt.s32.f32 %v4761
    %v5786 = vcvt.s32.f32 %v4762
    %v5787 = vcvt.s32.f32 %v4763
    %v5788 = vcvt.s32.f32 %v4764
    %v5789 = vcvt.s32.f32 %v4765
    %v5790 = vcvt.s32.f32 %v4766
    %v5791 = vcvt.s32.f32 %v4767
    %v5792 = vcvt.s32.f32 %v4768
    %v5793 = vcvt.s32.f32 %v4769
    %v5794 = vcvt.s32.f32 %v4770
    %v5795 = vcvt.s32.f32 %v4771
    %v5796 = vcvt.s32.f32 %v4772
    %v5797 = vcvt.s32.f32 %v4773
    %v5798 = vcvt.s32.f32 %v4774
    %v5799 = vcvt.s32.f32 %v4775
    %v5800 = vcvt.s32.f32 %v4776
    %v5801 = vcvt.s32.f32 %v4777
    %v5802 = vcvt.s32.f32 %v4778
    %v5803 = vcvt.s32.f32 %v4779
    %v5804 = vcvt.s32.f32 %v4780
    %v5805 = vcvt.s32.f32 %v4781
    %v5806 = vcvt.s32.f32 %v4782
    %v5807 = vcvt.s32.f32 %v4783
    %v5808 = vcvt.s32.f32 %v4784
    %v5809 = vcvt.s32.f32 %v4785
    %v5810 = vcvt.s32.f32 %v4786
    %v5811 = vcvt.s32.f32 %v4787
    %v5812 = vcvt.s32.f32 %v4788
    %v5813 = vcvt.s32.f32 %v4789
    %v5814 = vcvt.s32.f32 %v4790
    %v5815 = vcvt.s32.f32 %v4791
    %v5816 = vcvt.s32.f32 %v4792
    %v5817 = vcvt.s32.f32 %v4793
    %v5818 = vcvt.s32.f32 %v4794
    %v5819 = vcvt.s32.f32 %v4795
    %v5820 = vcvt.s32.f32 %v4796
    %v5821 = vcvt.s32.f32 %v4797
    %v5822 = vcvt.s32.f32 %v4798
    %v5823 = vcvt.s32.f32 %v4799
    %v5824 = vcvt.s32.f32 %v4800
    %v5825 = vcvt.s32.f32 %v4801
    %v5826 = vcvt.s32.f32 %v4802
    %v5827 = vcvt.s32.f32 %v4803
    %v5828 = vcvt.s32.f32 %v4804
    %v5829 = vcvt.s32.f32 %v4805
    %v5830 = vcvt.s32.f32 %v4806
    %v5831 = vcvt.s32.f32 %v4807
    %v5832 = vcvt.s32.f32 %v4808
    %v5833 = vcvt.s32.f32 %v4809
    %v5834 = vcvt.s32.f32 %v4810
    %v5835 = vcvt.s32.f32 %v4811
    %v5836 = vcvt.s32.f32 %v4812
    %v5837 = vcvt.s32.f32 %v4813
    %v5838 = vcvt.s32.f32 %v4814
    %v5839 = vcvt.s32.f32 %v4815
    %v5840 = vcvt.s32.f32 %v4816
    %v5841 = vcvt.s32.f32 %v4817
    %v5842 = vcvt.s32.f32 %v4818
    %v5843 = vcvt.s32.f32 %v4819
    %v5844 = vcvt.s32.f32 %v4820
    %v5845 = vcvt.s32.f32 %v4821
    %v5846 = vcvt.s32.f32 %v4822
    %v5847 = vcvt.s32.f32 %v4823
    %v5848 = vcvt.s32.f32 %v4824
    %v5849 = vcvt.s32.f32 %v4825
    %v5850 = vcvt.s32.f32 %v4826
    %v5851 = vcvt.s32.f32 %v4827
    %v5852 = vcvt.s32.f32 %v4828
    %v5853 = vcvt.s32.f32 %v4829
    %v5854 = vcvt.s32.f32 %v4830
    %v5855 = vcvt.s32.f32 %v4831
    %v5856 = vcvt.s32.f32 %v4832
    %v5857 = vcvt.s32.f32 %v4833
    %v5858 = vcvt.s32.f32 %v4834
    %v5859 = vcvt.s32.f32 %v4835
    %v5860 = vcvt.s32.f32 %v4836
    %v5861 = vcvt.s32.f32 %v4837
    %v5862 = vcvt.s32.f32 %v4838
    %v5863 = vcvt.s32.f32 %v4839
    %v5864 = vcvt.s32.f32 %v4840
    %v5865 = vcvt.s32.f32 %v4841
    %v5866 = vcvt.s32.f32 %v4842
    %v5867 = vcvt.s32.f32 %v4843
    %v5868 = vcvt.s32.f32 %v4844
    %v5869 = vcvt.s32.f32 %v4845
    %v5870 = vcvt.s32.f32 %v4846
    %v5871 = vcvt.s32.f32 %v4847
    %v5872 = vcvt.s32.f32 %v4848
    %v5873 = vcvt.s32.f32 %v4849
    %v5874 = vcvt.s32.f32 %v4850
    %v5875 = vcvt.s32.f32 %v4851
    %v5876 = vcvt.s32.f32 %v4852
    %v5877 = vcvt.s32.f32 %v4853
    %v5878 = vcvt.s32.f32 %v4854
    %v5879 = vcvt.s32.f32 %v4855
    %v5880 = vcvt.s32.f32 %v4856
    %v5881 = vcvt.s32.f32 %v4857
    %v5882 = vcvt.s32.f32 %v4858
    %v5883 = vcvt.s32.f32 %v4859
    %v5884 = vcvt.s32.f32 %v4860
    %v5885 = vcvt.s32.f32 %v4861
    %v5886 = vcvt.s32.f32 %v4862
    %v5887 = vcvt.s32.f32 %v4863
    %v5888 = vcvt.s32.f32 %v4864
    %v5889 = vcvt.s32.f32 %v4865
    %v5890 = vcvt.s32.f32 %v4866
    %v5891 = vcvt.s32.f32 %v4867
    %v5892 = vcvt.s32.f32 %v4868
    %v5893 = vcvt.s32.f32 %v4869
    %v5894 = vcvt.s32.f32 %v4870
    %v5895 = vcvt.s32.f32 %v4871
    %v5896 = vcvt.s32.f32 %v4872
    %v5897 = vcvt.s32.f32 %v4873
    %v5898 = vcvt.s32.f32 %v4874
    %v5899 = vcvt.s32.f32 %v4875
    %v5900 = vcvt.s32.f32 %v4876
    %v5901 = vcvt.s32.f32 %v4877
    %v5902 = vcvt.s32.f32 %v4878
    %v5903 = vcvt.s32.f32 %v4879
    %v5904 = vcvt.s32.f32 %v4880
    %v5905 = vcvt.s32.f32 %v4881
    %v5906 = vcvt.s32.f32 %v4882
    %v5907 = vcvt.s32.f32 %v4883
    %v5908 = vcvt.s32.f32 %v4884
    %v5909 = vcvt.s32.f32 %v4885
    %v5910 = vcvt.s32.f32 %v4886
    %v5911 = vcvt.s32.f32 %v4887
    %v5912 = vcvt.s32.f32 %v4888
    %v5913 = vcvt.s32.f32 %v4889
    %v5914 = vcvt.s32.f32 %v4890
    %v5915 = vcvt.s32.f32 %v4891
    %v5916 = vcvt.s32.f32 %v4892
    %v5917 = vcvt.s32.f32 %v4893
    %v5918 = vcvt.s32.f32 %v4894
    %v5919 = vcvt.s32.f32 %v4895
    %v5920 = vcvt.s32.f32 %v4896
    %v5921 = vcvt.s32.f32 %v4897
    %v5922 = vcvt.s32.f32 %v4898
    %v5923 = vcvt.s32.f32 %v4899
    %v5924 = vcvt.s32.f32 %v4900
    %v5925 = vcvt.s32.f32 %v4901
    %v5926 = vcvt.s32.f32 %v4902
    %v5927 = vcvt.s32.f32 %v4903
    %v5928 = vcvt.s32.f32 %v4904
    %v5929 = vcvt.s32.f32 %v4905
    %v5930 = vcvt.s32.f32 %v4906
    %v5931 = vcvt.s32.f32 %v4907
    %v5932 = vcvt.s32.f32 %v4908
    %v5933 = vcvt.s32.f32 %v4909
    %v5934 = vcvt.s32.f32 %v4910
    %v5935 = vcvt.s32.f32 %v4911
    %v5936 = vcvt.s32.f32 %v4912
    %v5937 = vcvt.s32.f32 %v4913
    %v5938 = vcvt.s32.f32 %v4914
    %v5939 = vcvt.s32.f32 %v4915
    %v5940 = vcvt.s32.f32 %v4916
    %v5941 = vcvt.s32.f32 %v4917
    %v5942 = vcvt.s32.f32 %v4918
    %v5943 = vcvt.s32.f32 %v4919
    %v5944 = vcvt.s32.f32 %v4920
    %v5945 = vcvt.s32.f32 %v4921
    %v5946 = vcvt.s32.f32 %v4922
    %v5947 = vcvt.s32.f32 %v4923
    %v5948 = vcvt.s32.f32 %v4924
    %v5949 = vcvt.s32.f32 %v4925
    %v5950 = vcvt.s32.f32 %v4926
    %v5951 = vcvt.s32.f32 %v4927
    %v5952 = vcvt.s32.f32 %v4928
    %v5953 = vcvt.s32.f32 %v4929
    %v5954 = vcvt.s32.f32 %v4930
    %v5955 = vcvt.s32.f32 %v4931
    %v5956 = vcvt.s32.f32 %v4932
    %v5957 = vcvt.s32.f32 %v4933
    %v5958 = vcvt.s32.f32 %v4934
    %v5959 = vcvt.s32.f32 %v4935
    %v5960 = vcvt.s32.f32 %v4936
    %v5961 = vcvt.s32.f32 %v4937
    %v5962 = vcvt.s32.f32 %v4938
    %v5963 = vcvt.s32.f32 %v4939
    %v5964 = vcvt.s32.f32 %v4940
    %v5965 = vcvt.s32.f32 %v4941
    %v5966 = vcvt.s32.f32 %v4942
    %v5967 = vcvt.s32.f32 %v4943
    %v5968 = vcvt.s32.f32 %v4944
    %v5969 = vcvt.s32.f32 %v4945
    %v5970 = vcvt.s32.f32 %v4946
    %v5971 = vcvt.s32.f32 %v4947
    %v5972 = vcvt.s32.f32 %v4948
    %v5973 = vcvt.s32.f32 %v4949
    %v5974 = vcvt.s32.f32 %v4950
    %v5975 = vcvt.s32.f32 %v4951
    %v5976 = vcvt.s32.f32 %v4952
    %v5977 = vcvt.s32.f32 %v4953
    %v5978 = vcvt.s32.f32 %v4954
    %v5979 = vcvt.s32.f32 %v4955
    %v5980 = vcvt.s32.f32 %v4956
    %v5981 = vcvt.s32.f32 %v4957
    %v5982 = vcvt.s32.f32 %v4958
    %v5983 = vcvt.s32.f32 %v4959
    %v5984 = vcvt.s32.f32 %v4960
    %v5985 = vcvt.s32.f32 %v4961
    %v5986 = vcvt.s32.f32 %v4962
    %v5987 = vcvt.s32.f32 %v4963
    %v5988 = vcvt.s32.f32 %v4964
    %v5989 = vcvt.s32.f32 %v4965
    %v5990 = vcvt.s32.f32 %v4966
    %v5991 = vcvt.s32.f32 %v4967
    %v5992 = vcvt.s32.f32 %v4968
    %v5993 = vcvt.s32.f32 %v4969
    %v5994 = vcvt.s32.f32 %v4970
    %v5995 = vcvt.s32.f32 %v4971
    %v5996 = vcvt.s32.f32 %v4972
    %v5997 = vcvt.s32.f32 %v4973
    %v5998 = vcvt.s32.f32 %v4974
    %v5999 = vcvt.s32.f32 %v4975
    %v6000 = vcvt.s32.f32 %v4976
    %v6001 = vcvt.s32.f32 %v4977
    %v6002 = vcvt.s32.f32 %v4978
    %v6003 = vcvt.s32.f32 %v4979
    %v6004 = vcvt.s32.f32 %v4980
    %v6005 = vcvt.s32.f32 %v4981
    %v6006 = vcvt.s32.f32 %v4982
    %v6007 = vcvt.s32.f32 %v4983
    %v6008 = vcvt.s32.f32 %v4984
    %v6009 = vcvt.s32.f32 %v4985
    %v6010 = vcvt.s32.f32 %v4986
    %v6011 = vcvt.s32.f32 %v4987
    %v6012 = vcvt.s32.f32 %v4988
    %v6013 = vcvt.s32.f32 %v4989
    %v6014 = vcvt.s32.f32 %v4990
    %v6015 = vcvt.s32.f32 %v4991
    %v6016 = vcvt.s32.f32 %v4992
    %v6017 = vcvt.s32.f32 %v4993
    %v6018 = vcvt.s32.f32 %v4994
    %v6019 = vcvt.s32.f32 %v4995
    %v6020 = vcvt.s32.f32 %v4996
    %v6021 = vcvt.s32.f32 %v4997
    %v6022 = vcvt.s32.f32 %v4998
    %v6023 = vcvt.s32.f32 %v4999
    %v6024 = vcvt.s32.f32 %v5000
    %v6025 = vcvt.s32.f32 %v5001
    %v6026 = vcvt.s32.f32 %v5002
    %v6027 = vcvt.s32.f32 %v5003
    %v6028 = vcvt.s32.f32 %v5004
    %v6029 = vcvt.s32.f32 %v5005
    %v6030 = vcvt.s32.f32 %v5006
    %v6031 = vcvt.s32.f32 %v5007
    %v6032 = vcvt.s32.f32 %v5008
    %v6033 = vcvt.s32.f32 %v5009
    %v6034 = vcvt.s32.f32 %v5010
    %v6035 = vcvt.s32.f32 %v5011
    %v6036 = vcvt.s32.f32 %v5012
    %v6037 = vcvt.s32.f32 %v5013
    %v6038 = vcvt.s32.f32 %v5014
    %v6039 = vcvt.s32.f32 %v5015
    %v6040 = vcvt.s32.f32 %v5016
    %v6041 = vcvt.s32.f32 %v5017
    %v6042 = vcvt.s32.f32 %v5018
    %v6043 = vcvt.s32.f32 %v5019
    %v6044 = vcvt.s32.f32 %v5020
    %v6045 = vcvt.s32.f32 %v5021
    %v6046 = vcvt.s32.f32 %v5022
    %v6047 = vcvt.s32.f32 %v5023
    %v6048 = vcvt.s32.f32 %v5024
    %v6049 = vcvt.s32.f32 %v5025
    %v6050 = vcvt.s32.f32 %v5026
    %v6051 = vcvt.s32.f32 %v5027
    %v6052 = vcvt.s32.f32 %v5028
    %v6053 = vcvt.s32.f32 %v5029
    %v6054 = vcvt.s32.f32 %v5030
    %v6055 = vcvt.s32.f32 %v5031
    %v6056 = vcvt.s32.f32 %v5032
    %v6057 = vcvt.s32.f32 %v5033
    %v6058 = vcvt.s32.f32 %v5034
    %v6059 = vcvt.s32.f32 %v5035
    %v6060 = vcvt.s32.f32 %v5036
    %v6061 = vcvt.s32.f32 %v5037
    %v6062 = vcvt.s32.f32 %v5038
    %v6063 = vcvt.s32.f32 %v5039
    %v6064 = vcvt.s32.f32 %v5040
    %v6065 = vcvt.s32.f32 %v5041
    %v6066 = vcvt.s32.f32 %v5042
    %v6067 = vcvt.s32.f32 %v5043
    %v6068 = vcvt.s32.f32 %v5044
    %v6069 = vcvt.s32.f32 %v5045
    %v6070 = vcvt.s32.f32 %v5046
    %v6071 = vcvt.s32.f32 %v5047
    %v6072 = vcvt.s32.f32 %v5048
    %v6073 = vcvt.s32.f32 %v5049
    %v6074 = vcvt.s32.f32 %v5050
    %v6075 = vcvt.s32.f32 %v5051
    %v6076 = vcvt.s32.f32 %v5052
    %v6077 = vcvt.s32.f32 %v5053
    %v6078 = vcvt.s32.f32 %v5054
    %v6079 = vcvt.s32.f32 %v5055
    %v6080 = vcvt.s32.f32 %v5056
    %v6081 = vcvt.s32.f32 %v5057
    %v6082 = vcvt.s32.f32 %v5058
    %v6083 = vcvt.s32.f32 %v5059
    %v6084 = vcvt.s32.f32 %v5060
    %v6085 = vcvt.s32.f32 %v5061
    %v6086 = vcvt.s32.f32 %v5062
    %v6087 = vcvt.s32.f32 %v5063
    %v6088 = vcvt.s32.f32 %v5064
    %v6089 = vcvt.s32.f32 %v5065
    %v6090 = vcvt.s32.f32 %v5066
    %v6091 = vcvt.s32.f32 %v5067
    %v6092 = vcvt.s32.f32 %v5068
    %v6093 = vcvt.s32.f32 %v5069
    %v6094 = vcvt.s32.f32 %v5070
    %v6095 = vcvt.s32.f32 %v5071
    %v6096 = vcvt.s32.f32 %v5072
    %v6097 = vcvt.s32.f32 %v5073
    %v6098 = vcvt.s32.f32 %v5074
    %v6099 = vcvt.s32.f32 %v5075
    %v6100 = vcvt.s32.f32 %v5076
    %v6101 = vcvt.s32.f32 %v5077
    %v6102 = vcvt.s32.f32 %v5078
    %v6103 = vcvt.s32.f32 %v5079
    %v6104 = vcvt.s32.f32 %v5080
    %v6105 = vcvt.s32.f32 %v5081
    %v6106 = vcvt.s32.f32 %v5082
    %v6107 = vcvt.s32.f32 %v5083
    %v6108 = vcvt.s32.f32 %v5084
    %v6109 = vcvt.s32.f32 %v5085
    %v6110 = vcvt.s32.f32 %v5086
    %v6111 = vcvt.s32.f32 %v5087
    %v6112 = vcvt.s32.f32 %v5088
    %v6113 = vcvt.s32.f32 %v5089
    %v6114 = vcvt.s32.f32 %v5090
    %v6115 = vcvt.s32.f32 %v5091
    %v6116 = vcvt.s32.f32 %v5092
    %v6117 = vcvt.s32.f32 %v5093
    %v6118 = vcvt.s32.f32 %v5094
    %v6119 = vcvt.s32.f32 %v5095
    %v6120 = vcvt.s32.f32 %v5096
    %v6121 = vcvt.s32.f32 %v5097
    %v6122 = vcvt.s32.f32 %v5098
    %v6123 = vcvt.s32.f32 %v5099
    %v6124 = vcvt.s32.f32 %v5100
    %v6125 = vcvt.s32.f32 %v5101
    %v6126 = vcvt.s32.f32 %v5102
    %v6127 = vcvt.s32.f32 %v5103
    %v6128 = vcvt.s32.f32 %v5104
    %v6129 = vcvt.s32.f32 %v5105
    %v6130 = vcvt.s32.f32 %v5106
    %v6131 = vcvt.s32.f32 %v5107
    %v6132 = vcvt.s32.f32 %v5108
    %v6133 = vcvt.s32.f32 %v5109
    %v6134 = vcvt.s32.f32 %v5110
    %v6135 = vcvt.s32.f32 %v5111
    %v6136 = vcvt.s32.f32 %v5112
    %v6137 = vcvt.s32.f32 %v5113
    %v6138 = vcvt.s32.f32 %v5114
    %v6139 = vcvt.s32.f32 %v5115
    %v6140 = vcvt.s32.f32 %v5116
    %v6141 = vcvt.s32.f32 %v5117
    %v6142 = vcvt.s32.f32 %v5118
    %v6143 = vcvt.s32.f32 %v5119
    %v6144 = vcvt.s32.f32 %v5120
    %v6145 = vcvt.s32.f32 %v5121
    %v6146 = vcvt.s32.f32 %v5122
    %v6147 = vcvt.s32.f32 %v5123
    %v6148 = vcvt.s32.f32 %v5124
    %v6149 = vcvt.s32.f32 %v5125
    %v6150 = vcvt.s32.f32 %v5126
    %v6151 = vcvt.s32.f32 %v5127
    %v6152 = vcvt.s32.f32 %v5128
    %v6153 = vcvt.s32.f32 %v5129
    %v6154 = vcvt.s32.f32 %v5130
    %v6155 = vcvt.s32.f32 %v5131
    %v6156 = vcvt.s32.f32 %v5132
    %v6157 = vcvt.s32.f32 %v5133
    %v6158 = vcvt.s32.f32 %v5134
    %v6159 = vcvt.s32.f32 %v5135
    %v6160 = vcvt.s32.f32 %v5136
    %v6161 = vcvt.s32.f32 %v5137
    %v6162 = vcvt.s32.f32 %v5138
    %v6163 = vcvt.s32.f32 %v5139
    %v6164 = vcvt.s32.f32 %v5140
    %v6165 = vcvt.s32.f32 %v5141
    %v6166 = vcvt.s32.f32 %v5142
    %v6167 = vcvt.s32.f32 %v5143
    %v6168 = vcvt.s32.f32 %v5144
    %v6169 = vcvt.s32.f32 %v5145
    %v6170 = vcvt.s32.f32 %v5146
    %v6171 = vcvt.s32.f32 %v5147
    %v6172 = vcvt.s32.f32 %v5148
    %v6173 = vcvt.s32.f32 %v5149
    %v6174 = vcvt.s32.f32 %v5150
    %v6175 = vcvt.s32.f32 %v5151
    %v6176 = vcvt.s32.f32 %v5152
    %v6177 = vcvt.s32.f32 %v5153
    %v6178 = vcvt.s32.f32 %v5154
    %v6179 = vcvt.s32.f32 %v5155
    %v6180 = vcvt.s32.f32 %v5156
    %v6181 = vcvt.s32.f32 %v5157
    %v6182 = vcvt.s32.f32 %v5158
    %v6183 = vcvt.s32.f32 %v5159
    %v6184 = vcvt.s32.f32 %v5160
    %v6185 = vcvt.s32.f32 %v5161
    %v6186 = vcvt.s32.f32 %v5162
    %v6187 = vcvt.s32.f32 %v5163
    %v6188 = vcvt.s32.f32 %v5164
    %v6189 = vcvt.s32.f32 %v5165
    %v6190 = vcvt.s32.f32 %v5166
    %v6191 = vcvt.s32.f32 %v5167
    %v6192 = vcvt.s32.f32 %v5168
    %v6193 = vcvt.s32.f32 %v5169
    %v6194 = vcvt.s32.f32 %v5170
    %v6195 = vcvt.s32.f32 %v5171
    %v6196 = vcvt.s32.f32 %v5172
    %v6197 = vcvt.s32.f32 %v5173
    %v6198 = vcvt.s32.f32 %v5174
    %v6199 = vcvt.s32.f32 %v5175
    %v6200 = vcvt.s32.f32 %v5176
    %v6201 = vcvt.s32.f32 %v5177
    %v6202 = vcvt.s32.f32 %v5178
    %v6203 = vcvt.s32.f32 %v5179
    %v6204 = vcvt.s32.f32 %v5180
    %v6205 = vcvt.s32.f32 %v5181
    %v6206 = vcvt.s32.f32 %v5182
    %v6207 = vcvt.s32.f32 %v5183
    %v6208 = vcvt.s32.f32 %v5184
    %v6209 = vcvt.s32.f32 %v5185
    %v6210 = vcvt.s32.f32 %v5186
    %v6211 = vcvt.s32.f32 %v5187
    %v6212 = vcvt.s32.f32 %v5188
    %v6213 = vcvt.s32.f32 %v5189
    %v6214 = vcvt.s32.f32 %v5190
    %v6215 = vcvt.s32.f32 %v5191
    %v6216 = vcvt.s32.f32 %v5192
    %v6217 = vcvt.s32.f32 %v5193
    %v6218 = vcvt.s32.f32 %v5194
    %v6219 = vcvt.s32.f32 %v5195
    %v6220 = vcvt.s32.f32 %v5196
    %v6221 = vcvt.s32.f32 %v5197
    %v6222 = vcvt.s32.f32 %v5198
    %v6223 = vcvt.s32.f32 %v5199
    %v6224 = vcvt.s32.f32 %v5200
    %v6225 = vcvt.s32.f32 %v5201
    %v6226 = vcvt.s32.f32 %v5202
    %v6227 = vcvt.s32.f32 %v5203
    %v6228 = vcvt.s32.f32 %v5204
    %v6229 = vcvt.s32.f32 %v5205
    %v6230 = vcvt.s32.f32 %v5206
    %v6231 = vcvt.s32.f32 %v5207
    %v6232 = vcvt.s32.f32 %v5208
    %v6233 = vcvt.s32.f32 %v5209
    %v6234 = vcvt.s32.f32 %v5210
    %v6235 = vcvt.s32.f32 %v5211
    %v6236 = vcvt.s32.f32 %v5212
    %v6237 = vcvt.s32.f32 %v5213
    %v6238 = vcvt.s32.f32 %v5214
    %v6239 = vcvt.s32.f32 %v5215
    %v6240 = vcvt.s32.f32 %v5216
    %v6241 = vcvt.s32.f32 %v5217
    %v6242 = vcvt.s32.f32 %v5218
    %v6243 = vcvt.s32.f32 %v5219
    %v6244 = vcvt.s32.f32 %v5220
    %v6245 = vcvt.s32.f32 %v5221
    %v6246 = vcvt.s32.f32 %v5222
    %v6247 = vcvt.s32.f32 %v5223
    %v6248 = vcvt.s32.f32 %v5224
    %v6249 = vcvt.s32.f32 %v5225
    %v6250 = vcvt.s32.f32 %v5226
    %v6251 = vcvt.s32.f32 %v5227
    %v6252 = vcvt.s32.f32 %v5228
    %v6253 = vcvt.s32.f32 %v5229
    %v6254 = vcvt.s32.f32 %v5230
    %v6255 = vcvt.s32.f32 %v5231
    %v6256 = vcvt.s32.f32 %v5232
    %v6257 = vcvt.s32.f32 %v5233
    %v6258 = vcvt.s32.f32 %v5234
    %v6259 = vcvt.s32.f32 %v5235
    %v6260 = vcvt.s32.f32 %v5236
    %v6261 = vcvt.s32.f32 %v5237
    %v6262 = vcvt.s32.f32 %v5238
    %v6263 = vcvt.s32.f32 %v5239
    %v6264 = vcvt.s32.f32 %v5240
    %v6265 = vcvt.s32.f32 %v5241
    %v6266 = vcvt.s32.f32 %v5242
    %v6267 = vcvt.s32.f32 %v5243
    %v6268 = vcvt.s32.f32 %v5244
    %v6269 = vcvt.s32.f32 %v5245
    %v6270 = vcvt.s32.f32 %v5246
    %v6271 = vcvt.s32.f32 %v5247
    %v6272 = vcvt.s32.f32 %v5248
    %v6273 = vcvt.s32.f32 %v5249
    %v6274 = vcvt.s32.f32 %v5250
    %v6275 = vcvt.s32.f32 %v5251
    %v6276 = vcvt.s32.f32 %v5252
    %v6277 = vcvt.s32.f32 %v5253
    %v6278 = vcvt.s32.f32 %v5254
    %v6279 = vcvt.s32.f32 %v5255
    %v6280 = vcvt.s32.f32 %v5256
    %v6281 = vcvt.s32.f32 %v5257
    %v6282 = vcvt.s32.f32 %v5258
    %v6283 = vcvt.s32.f32 %v5259
    %v6284 = vcvt.s32.f32 %v5260
    %v6285 = vcvt.s32.f32 %v5261
    %v6286 = vcvt.s32.f32 %v5262
    %v6287 = vcvt.s32.f32 %v5263
    %v6288 = vcvt.s32.f32 %v5264
    %v6289 = vcvt.s32.f32 %v5265
    %v6290 = vcvt.s32.f32 %v5266
    %v6291 = vcvt.s32.f32 %v5267
    %v6292 = vcvt.s32.f32 %v5268
    %v6293 = vcvt.s32.f32 %v5269
    %v6294 = vcvt.s32.f32 %v5270
    %v6295 = vcvt.s32.f32 %v5271
    %v6296 = vcvt.s32.f32 %v5272
    %v6297 = vcvt.s32.f32 %v5273
    %v6298 = vcvt.s32.f32 %v5274
    %v6299 = vcvt.s32.f32 %v5275
    %v6300 = vcvt.s32.f32 %v5276
    %v6301 = vcvt.s32.f32 %v5277
    %v6302 = vcvt.s32.f32 %v5278
    %v6303 = vcvt.s32.f32 %v5279
    %v6304 = vcvt.s32.f32 %v5280
    %v6305 = vcvt.s32.f32 %v5281
    %v6306 = vcvt.s32.f32 %v5282
    %v6307 = vcvt.s32.f32 %v5283
    %v6308 = vcvt.s32.f32 %v5284
    %v6309 = vpack.c.bf16 %v5293, %v5285
    %v6310 = vpack.c.bf16 %v5294, %v5286
    %v6311 = vpack.c.bf16 %v5295, %v5287
    %v6312 = vpack.c.bf16 %v5296, %v5288
    %v6313 = vpack.c.bf16 %v5297, %v5289
    %v6314 = vpack.c.bf16 %v5298, %v5290
    %v6315 = vpack.c.bf16 %v5299, %v5291
    %v6316 = vpack.c.bf16 %v5300, %v5292
    %v6317 = vpack.c.bf16 %v5309, %v5301
    %v6318 = vpack.c.bf16 %v5310, %v5302
    %v6319 = vpack.c.bf16 %v5311, %v5303
    %v6320 = vpack.c.bf16 %v5312, %v5304
    %v6321 = vpack.c.bf16 %v5313, %v5305
    %v6322 = vpack.c.bf16 %v5314, %v5306
    %v6323 = vpack.c.bf16 %v5315, %v5307
    %v6324 = vpack.c.bf16 %v5316, %v5308
    %v6325 = vpack.c.bf16 %v5325, %v5317
    %v6326 = vpack.c.bf16 %v5326, %v5318
    %v6327 = vpack.c.bf16 %v5327, %v5319
    %v6328 = vpack.c.bf16 %v5328, %v5320
    %v6329 = vpack.c.bf16 %v5329, %v5321
    %v6330 = vpack.c.bf16 %v5330, %v5322
    %v6331 = vpack.c.bf16 %v5331, %v5323
    %v6332 = vpack.c.bf16 %v5332, %v5324
    %v6333 = vpack.c.bf16 %v5341, %v5333
    %v6334 = vpack.c.bf16 %v5342, %v5334
    %v6335 = vpack.c.bf16 %v5343, %v5335
    %v6336 = vpack.c.bf16 %v5344, %v5336
    %v6337 = vpack.c.bf16 %v5345, %v5337
    %v6338 = vpack.c.bf16 %v5346, %v5338
    %v6339 = vpack.c.bf16 %v5347, %v5339
    %v6340 = vpack.c.bf16 %v5348, %v5340
    %v6341 = vpack.c.bf16 %v5357, %v5349
    %v6342 = vpack.c.bf16 %v5358, %v5350
    %v6343 = vpack.c.bf16 %v5359, %v5351
    %v6344 = vpack.c.bf16 %v5360, %v5352
    %v6345 = vpack.c.bf16 %v5361, %v5353
    %v6346 = vpack.c.bf16 %v5362, %v5354
    %v6347 = vpack.c.bf16 %v5363, %v5355
    %v6348 = vpack.c.bf16 %v5364, %v5356
    %v6349 = vpack.c.bf16 %v5373, %v5365
    %v6350 = vpack.c.bf16 %v5374, %v5366
    %v6351 = vpack.c.bf16 %v5375, %v5367
    %v6352 = vpack.c.bf16 %v5376, %v5368
    %v6353 = vpack.c.bf16 %v5377, %v5369
    %v6354 = vpack.c.bf16 %v5378, %v5370
    %v6355 = vpack.c.bf16 %v5379, %v5371
    %v6356 = vpack.c.bf16 %v5380, %v5372
    %v6357 = vpack.c.bf16 %v5389, %v5381
    %v6358 = vpack.c.bf16 %v5390, %v5382
    %v6359 = vpack.c.bf16 %v5391, %v5383
    %v6360 = vpack.c.bf16 %v5392, %v5384
    %v6361 = vpack.c.bf16 %v5393, %v5385
    %v6362 = vpack.c.bf16 %v5394, %v5386
    %v6363 = vpack.c.bf16 %v5395, %v5387
    %v6364 = vpack.c.bf16 %v5396, %v5388
    %v6365 = vpack.c.bf16 %v5405, %v5397
    %v6366 = vpack.c.bf16 %v5406, %v5398
    %v6367 = vpack.c.bf16 %v5407, %v5399
    %v6368 = vpack.c.bf16 %v5408, %v5400
    %v6369 = vpack.c.bf16 %v5409, %v5401
    %v6370 = vpack.c.bf16 %v5410, %v5402
    %v6371 = vpack.c.bf16 %v5411, %v5403
    %v6372 = vpack.c.bf16 %v5412, %v5404
    %v6373 = vpack.c.bf16 %v5421, %v5413
    %v6374 = vpack.c.bf16 %v5422, %v5414
    %v6375 = vpack.c.bf16 %v5423, %v5415
    %v6376 = vpack.c.bf16 %v5424, %v5416
    %v6377 = vpack.c.bf16 %v5425, %v5417
    %v6378 = vpack.c.bf16 %v5426, %v5418
    %v6379 = vpack.c.bf16 %v5427, %v5419
    %v6380 = vpack.c.bf16 %v5428, %v5420
    %v6381 = vpack.c.bf16 %v5437, %v5429
    %v6382 = vpack.c.bf16 %v5438, %v5430
    %v6383 = vpack.c.bf16 %v5439, %v5431
    %v6384 = vpack.c.bf16 %v5440, %v5432
    %v6385 = vpack.c.bf16 %v5441, %v5433
    %v6386 = vpack.c.bf16 %v5442, %v5434
    %v6387 = vpack.c.bf16 %v5443, %v5435
    %v6388 = vpack.c.bf16 %v5444, %v5436
    %v6389 = vpack.c.bf16 %v5453, %v5445
    %v6390 = vpack.c.bf16 %v5454, %v5446
    %v6391 = vpack.c.bf16 %v5455, %v5447
    %v6392 = vpack.c.bf16 %v5456, %v5448
    %v6393 = vpack.c.bf16 %v5457, %v5449
    %v6394 = vpack.c.bf16 %v5458, %v5450
    %v6395 = vpack.c.bf16 %v5459, %v5451
    %v6396 = vpack.c.bf16 %v5460, %v5452
    %v6397 = vpack.c.bf16 %v5469, %v5461
    %v6398 = vpack.c.bf16 %v5470, %v5462
    %v6399 = vpack.c.bf16 %v5471, %v5463
    %v6400 = vpack.c.bf16 %v5472, %v5464
    %v6401 = vpack.c.bf16 %v5473, %v5465
    %v6402 = vpack.c.bf16 %v5474, %v5466
    %v6403 = vpack.c.bf16 %v5475, %v5467
    %v6404 = vpack.c.bf16 %v5476, %v5468
    %v6405 = vpack.c.bf16 %v5485, %v5477
    %v6406 = vpack.c.bf16 %v5486, %v5478
    %v6407 = vpack.c.bf16 %v5487, %v5479
    %v6408 = vpack.c.bf16 %v5488, %v5480
    %v6409 = vpack.c.bf16 %v5489, %v5481
    %v6410 = vpack.c.bf16 %v5490, %v5482
    %v6411 = vpack.c.bf16 %v5491, %v5483
    %v6412 = vpack.c.bf16 %v5492, %v5484
    %v6413 = vpack.c.bf16 %v5501, %v5493
    %v6414 = vpack.c.bf16 %v5502, %v5494
    %v6415 = vpack.c.bf16 %v5503, %v5495
    %v6416 = vpack.c.bf16 %v5504, %v5496
    %v6417 = vpack.c.bf16 %v5505, %v5497
    %v6418 = vpack.c.bf16 %v5506, %v5498
    %v6419 = vpack.c.bf16 %v5507, %v5499
    %v6420 = vpack.c.bf16 %v5508, %v5500
    %v6421 = vpack.c.bf16 %v5517, %v5509
    %v6422 = vpack.c.bf16 %v5518, %v5510
    %v6423 = vpack.c.bf16 %v5519, %v5511
    %v6424 = vpack.c.bf16 %v5520, %v5512
    %v6425 = vpack.c.bf16 %v5521, %v5513
    %v6426 = vpack.c.bf16 %v5522, %v5514
    %v6427 = vpack.c.bf16 %v5523, %v5515
    %v6428 = vpack.c.bf16 %v5524, %v5516
    %v6429 = vpack.c.bf16 %v5533, %v5525
    %v6430 = vpack.c.bf16 %v5534, %v5526
    %v6431 = vpack.c.bf16 %v5535, %v5527
    %v6432 = vpack.c.bf16 %v5536, %v5528
    %v6433 = vpack.c.bf16 %v5537, %v5529
    %v6434 = vpack.c.bf16 %v5538, %v5530
    %v6435 = vpack.c.bf16 %v5539, %v5531
    %v6436 = vpack.c.bf16 %v5540, %v5532
    %v6437 = vpack.c.bf16 %v5549, %v5541
    %v6438 = vpack.c.bf16 %v5550, %v5542
    %v6439 = vpack.c.bf16 %v5551, %v5543
    %v6440 = vpack.c.bf16 %v5552, %v5544
    %v6441 = vpack.c.bf16 %v5553, %v5545
    %v6442 = vpack.c.bf16 %v5554, %v5546
    %v6443 = vpack.c.bf16 %v5555, %v5547
    %v6444 = vpack.c.bf16 %v5556, %v5548
    %v6445 = vpack.c.bf16 %v5565, %v5557
    %v6446 = vpack.c.bf16 %v5566, %v5558
    %v6447 = vpack.c.bf16 %v5567, %v5559
    %v6448 = vpack.c.bf16 %v5568, %v5560
    %v6449 = vpack.c.bf16 %v5569, %v5561
    %v6450 = vpack.c.bf16 %v5570, %v5562
    %v6451 = vpack.c.bf16 %v5571, %v5563
    %v6452 = vpack.c.bf16 %v5572, %v5564
    %v6453 = vpack.c.bf16 %v5581, %v5573
    %v6454 = vpack.c.bf16 %v5582, %v5574
    %v6455 = vpack.c.bf16 %v5583, %v5575
    %v6456 = vpack.c.bf16 %v5584, %v5576
    %v6457 = vpack.c.bf16 %v5585, %v5577
    %v6458 = vpack.c.bf16 %v5586, %v5578
    %v6459 = vpack.c.bf16 %v5587, %v5579
    %v6460 = vpack.c.bf16 %v5588, %v5580
    %v6461 = vpack.c.bf16 %v5597, %v5589
    %v6462 = vpack.c.bf16 %v5598, %v5590
    %v6463 = vpack.c.bf16 %v5599, %v5591
    %v6464 = vpack.c.bf16 %v5600, %v5592
    %v6465 = vpack.c.bf16 %v5601, %v5593
    %v6466 = vpack.c.bf16 %v5602, %v5594
    %v6467 = vpack.c.bf16 %v5603, %v5595
    %v6468 = vpack.c.bf16 %v5604, %v5596
    %v6469 = vpack.c.bf16 %v5613, %v5605
    %v6470 = vpack.c.bf16 %v5614, %v5606
    %v6471 = vpack.c.bf16 %v5615, %v5607
    %v6472 = vpack.c.bf16 %v5616, %v5608
    %v6473 = vpack.c.bf16 %v5617, %v5609
    %v6474 = vpack.c.bf16 %v5618, %v5610
    %v6475 = vpack.c.bf16 %v5619, %v5611
    %v6476 = vpack.c.bf16 %v5620, %v5612
    %v6477 = vpack.c.bf16 %v5629, %v5621
    %v6478 = vpack.c.bf16 %v5630, %v5622
    %v6479 = vpack.c.bf16 %v5631, %v5623
    %v6480 = vpack.c.bf16 %v5632, %v5624
    %v6481 = vpack.c.bf16 %v5633, %v5625
    %v6482 = vpack.c.bf16 %v5634, %v5626
    %v6483 = vpack.c.bf16 %v5635, %v5627
    %v6484 = vpack.c.bf16 %v5636, %v5628
    %v6485 = vpack.c.bf16 %v5645, %v5637
    %v6486 = vpack.c.bf16 %v5646, %v5638
    %v6487 = vpack.c.bf16 %v5647, %v5639
    %v6488 = vpack.c.bf16 %v5648, %v5640
    %v6489 = vpack.c.bf16 %v5649, %v5641
    %v6490 = vpack.c.bf16 %v5650, %v5642
    %v6491 = vpack.c.bf16 %v5651, %v5643
    %v6492 = vpack.c.bf16 %v5652, %v5644
    %v6493 = vpack.c.bf16 %v5661, %v5653
    %v6494 = vpack.c.bf16 %v5662, %v5654
    %v6495 = vpack.c.bf16 %v5663, %v5655
    %v6496 = vpack.c.bf16 %v5664, %v5656
    %v6497 = vpack.c.bf16 %v5665, %v5657
    %v6498 = vpack.c.bf16 %v5666, %v5658
    %v6499 = vpack.c.bf16 %v5667, %v5659
    %v6500 = vpack.c.bf16 %v5668, %v5660
    %v6501 = vpack.c.bf16 %v5677, %v5669
    %v6502 = vpack.c.bf16 %v5678, %v5670
    %v6503 = vpack.c.bf16 %v5679, %v5671
    %v6504 = vpack.c.bf16 %v5680, %v5672
    %v6505 = vpack.c.bf16 %v5681, %v5673
    %v6506 = vpack.c.bf16 %v5682, %v5674
    %v6507 = vpack.c.bf16 %v5683, %v5675
    %v6508 = vpack.c.bf16 %v5684, %v5676
    %v6509 = vpack.c.bf16 %v5693, %v5685
    %v6510 = vpack.c.bf16 %v5694, %v5686
    %v6511 = vpack.c.bf16 %v5695, %v5687
    %v6512 = vpack.c.bf16 %v5696, %v5688
    %v6513 = vpack.c.bf16 %v5697, %v5689
    %v6514 = vpack.c.bf16 %v5698, %v5690
    %v6515 = vpack.c.bf16 %v5699, %v5691
    %v6516 = vpack.c.bf16 %v5700, %v5692
    %v6517 = vpack.c.bf16 %v5709, %v5701
    %v6518 = vpack.c.bf16 %v5710, %v5702
    %v6519 = vpack.c.bf16 %v5711, %v5703
    %v6520 = vpack.c.bf16 %v5712, %v5704
    %v6521 = vpack.c.bf16 %v5713, %v5705
    %v6522 = vpack.c.bf16 %v5714, %v5706
    %v6523 = vpack.c.bf16 %v5715, %v5707
    %v6524 = vpack.c.bf16 %v5716, %v5708
    %v6525 = vpack.c.bf16 %v5725, %v5717
    %v6526 = vpack.c.bf16 %v5726, %v5718
    %v6527 = vpack.c.bf16 %v5727, %v5719
    %v6528 = vpack.c.bf16 %v5728, %v5720
    %v6529 = vpack.c.bf16 %v5729, %v5721
    %v6530 = vpack.c.bf16 %v5730, %v5722
    %v6531 = vpack.c.bf16 %v5731, %v5723
    %v6532 = vpack.c.bf16 %v5732, %v5724
    %v6533 = vpack.c.bf16 %v5741, %v5733
    %v6534 = vpack.c.bf16 %v5742, %v5734
    %v6535 = vpack.c.bf16 %v5743, %v5735
    %v6536 = vpack.c.bf16 %v5744, %v5736
    %v6537 = vpack.c.bf16 %v5745, %v5737
    %v6538 = vpack.c.bf16 %v5746, %v5738
    %v6539 = vpack.c.bf16 %v5747, %v5739
    %v6540 = vpack.c.bf16 %v5748, %v5740
    %v6541 = vpack.c.bf16 %v5757, %v5749
    %v6542 = vpack.c.bf16 %v5758, %v5750
    %v6543 = vpack.c.bf16 %v5759, %v5751
    %v6544 = vpack.c.bf16 %v5760, %v5752
    %v6545 = vpack.c.bf16 %v5761, %v5753
    %v6546 = vpack.c.bf16 %v5762, %v5754
    %v6547 = vpack.c.bf16 %v5763, %v5755
    %v6548 = vpack.c.bf16 %v5764, %v5756
    %v6549 = vpack.c.bf16 %v5773, %v5765
    %v6550 = vpack.c.bf16 %v5774, %v5766
    %v6551 = vpack.c.bf16 %v5775, %v5767
    %v6552 = vpack.c.bf16 %v5776, %v5768
    %v6553 = vpack.c.bf16 %v5777, %v5769
    %v6554 = vpack.c.bf16 %v5778, %v5770
    %v6555 = vpack.c.bf16 %v5779, %v5771
    %v6556 = vpack.c.bf16 %v5780, %v5772
    %v6557 = vpack.c.bf16 %v5789, %v5781
    %v6558 = vpack.c.bf16 %v5790, %v5782
    %v6559 = vpack.c.bf16 %v5791, %v5783
    %v6560 = vpack.c.bf16 %v5792, %v5784
    %v6561 = vpack.c.bf16 %v5793, %v5785
    %v6562 = vpack.c.bf16 %v5794, %v5786
    %v6563 = vpack.c.bf16 %v5795, %v5787
    %v6564 = vpack.c.bf16 %v5796, %v5788
    %v6565 = vpack.c.bf16 %v5805, %v5797
    %v6566 = vpack.c.bf16 %v5806, %v5798
    %v6567 = vpack.c.bf16 %v5807, %v5799
    %v6568 = vpack.c.bf16 %v5808, %v5800
    %v6569 = vpack.c.bf16 %v5809, %v5801
    %v6570 = vpack.c.bf16 %v5810, %v5802
    %v6571 = vpack.c.bf16 %v5811, %v5803
    %v6572 = vpack.c.bf16 %v5812, %v5804
    %v6573 = vpack.c.bf16 %v5821, %v5813
    %v6574 = vpack.c.bf16 %v5822, %v5814
    %v6575 = vpack.c.bf16 %v5823, %v5815
    %v6576 = vpack.c.bf16 %v5824, %v5816
    %v6577 = vpack.c.bf16 %v5825, %v5817
    %v6578 = vpack.c.bf16 %v5826, %v5818
    %v6579 = vpack.c.bf16 %v5827, %v5819
    %v6580 = vpack.c.bf16 %v5828, %v5820
    %v6581 = vpack.c.bf16 %v5837, %v5829
    %v6582 = vpack.c.bf16 %v5838, %v5830
    %v6583 = vpack.c.bf16 %v5839, %v5831
    %v6584 = vpack.c.bf16 %v5840, %v5832
    %v6585 = vpack.c.bf16 %v5841, %v5833
    %v6586 = vpack.c.bf16 %v5842, %v5834
    %v6587 = vpack.c.bf16 %v5843, %v5835
    %v6588 = vpack.c.bf16 %v5844, %v5836
    %v6589 = vpack.c.bf16 %v5853, %v5845
    %v6590 = vpack.c.bf16 %v5854, %v5846
    %v6591 = vpack.c.bf16 %v5855, %v5847
    %v6592 = vpack.c.bf16 %v5856, %v5848
    %v6593 = vpack.c.bf16 %v5857, %v5849
    %v6594 = vpack.c.bf16 %v5858, %v5850
    %v6595 = vpack.c.bf16 %v5859, %v5851
    %v6596 = vpack.c.bf16 %v5860, %v5852
    %v6597 = vpack.c.bf16 %v5869, %v5861
    %v6598 = vpack.c.bf16 %v5870, %v5862
    %v6599 = vpack.c.bf16 %v5871, %v5863
    %v6600 = vpack.c.bf16 %v5872, %v5864
    %v6601 = vpack.c.bf16 %v5873, %v5865
    %v6602 = vpack.c.bf16 %v5874, %v5866
    %v6603 = vpack.c.bf16 %v5875, %v5867
    %v6604 = vpack.c.bf16 %v5876, %v5868
    %v6605 = vpack.c.bf16 %v5885, %v5877
    %v6606 = vpack.c.bf16 %v5886, %v5878
    %v6607 = vpack.c.bf16 %v5887, %v5879
    %v6608 = vpack.c.bf16 %v5888, %v5880
    %v6609 = vpack.c.bf16 %v5889, %v5881
    %v6610 = vpack.c.bf16 %v5890, %v5882
    %v6611 = vpack.c.bf16 %v5891, %v5883
    %v6612 = vpack.c.bf16 %v5892, %v5884
    %v6613 = vpack.c.bf16 %v5901, %v5893
    %v6614 = vpack.c.bf16 %v5902, %v5894
    %v6615 = vpack.c.bf16 %v5903, %v5895
    %v6616 = vpack.c.bf16 %v5904, %v5896
    %v6617 = vpack.c.bf16 %v5905, %v5897
    %v6618 = vpack.c.bf16 %v5906, %v5898
    %v6619 = vpack.c.bf16 %v5907, %v5899
    %v6620 = vpack.c.bf16 %v5908, %v5900
    %v6621 = vpack.c.bf16 %v5917, %v5909
    %v6622 = vpack.c.bf16 %v5918, %v5910
    %v6623 = vpack.c.bf16 %v5919, %v5911
    %v6624 = vpack.c.bf16 %v5920, %v5912
    %v6625 = vpack.c.bf16 %v5921, %v5913
    %v6626 = vpack.c.bf16 %v5922, %v5914
    %v6627 = vpack.c.bf16 %v5923, %v5915
    %v6628 = vpack.c.bf16 %v5924, %v5916
    %v6629 = vpack.c.bf16 %v5933, %v5925
    %v6630 = vpack.c.bf16 %v5934, %v5926
    %v6631 = vpack.c.bf16 %v5935, %v5927
    %v6632 = vpack.c.bf16 %v5936, %v5928
    %v6633 = vpack.c.bf16 %v5937, %v5929
    %v6634 = vpack.c.bf16 %v5938, %v5930
    %v6635 = vpack.c.bf16 %v5939, %v5931
    %v6636 = vpack.c.bf16 %v5940, %v5932
    %v6637 = vpack.c.bf16 %v5949, %v5941
    %v6638 = vpack.c.bf16 %v5950, %v5942
    %v6639 = vpack.c.bf16 %v5951, %v5943
    %v6640 = vpack.c.bf16 %v5952, %v5944
    %v6641 = vpack.c.bf16 %v5953, %v5945
    %v6642 = vpack.c.bf16 %v5954, %v5946
    %v6643 = vpack.c.bf16 %v5955, %v5947
    %v6644 = vpack.c.bf16 %v5956, %v5948
    %v6645 = vpack.c.bf16 %v5965, %v5957
    %v6646 = vpack.c.bf16 %v5966, %v5958
    %v6647 = vpack.c.bf16 %v5967, %v5959
    %v6648 = vpack.c.bf16 %v5968, %v5960
    %v6649 = vpack.c.bf16 %v5969, %v5961
    %v6650 = vpack.c.bf16 %v5970, %v5962
    %v6651 = vpack.c.bf16 %v5971, %v5963
    %v6652 = vpack.c.bf16 %v5972, %v5964
    %v6653 = vpack.c.bf16 %v5981, %v5973
    %v6654 = vpack.c.bf16 %v5982, %v5974
    %v6655 = vpack.c.bf16 %v5983, %v5975
    %v6656 = vpack.c.bf16 %v5984, %v5976
    %v6657 = vpack.c.bf16 %v5985, %v5977
    %v6658 = vpack.c.bf16 %v5986, %v5978
    %v6659 = vpack.c.bf16 %v5987, %v5979
    %v6660 = vpack.c.bf16 %v5988, %v5980
    %v6661 = vpack.c.bf16 %v5997, %v5989
    %v6662 = vpack.c.bf16 %v5998, %v5990
    %v6663 = vpack.c.bf16 %v5999, %v5991
    %v6664 = vpack.c.bf16 %v6000, %v5992
    %v6665 = vpack.c.bf16 %v6001, %v5993
    %v6666 = vpack.c.bf16 %v6002, %v5994
    %v6667 = vpack.c.bf16 %v6003, %v5995
    %v6668 = vpack.c.bf16 %v6004, %v5996
    %v6669 = vpack.c.bf16 %v6013, %v6005
    %v6670 = vpack.c.bf16 %v6014, %v6006
    %v6671 = vpack.c.bf16 %v6015, %v6007
    %v6672 = vpack.c.bf16 %v6016, %v6008
    %v6673 = vpack.c.bf16 %v6017, %v6009
    %v6674 = vpack.c.bf16 %v6018, %v6010
    %v6675 = vpack.c.bf16 %v6019, %v6011
    %v6676 = vpack.c.bf16 %v6020, %v6012
    %v6677 = vpack.c.bf16 %v6029, %v6021
    %v6678 = vpack.c.bf16 %v6030, %v6022
    %v6679 = vpack.c.bf16 %v6031, %v6023
    %v6680 = vpack.c.bf16 %v6032, %v6024
    %v6681 = vpack.c.bf16 %v6033, %v6025
    %v6682 = vpack.c.bf16 %v6034, %v6026
    %v6683 = vpack.c.bf16 %v6035, %v6027
    %v6684 = vpack.c.bf16 %v6036, %v6028
    %v6685 = vpack.c.bf16 %v6045, %v6037
    %v6686 = vpack.c.bf16 %v6046, %v6038
    %v6687 = vpack.c.bf16 %v6047, %v6039
    %v6688 = vpack.c.bf16 %v6048, %v6040
    %v6689 = vpack.c.bf16 %v6049, %v6041
    %v6690 = vpack.c.bf16 %v6050, %v6042
    %v6691 = vpack.c.bf16 %v6051, %v6043
    %v6692 = vpack.c.bf16 %v6052, %v6044
    %v6693 = vpack.c.bf16 %v6061, %v6053
    %v6694 = vpack.c.bf16 %v6062, %v6054
    %v6695 = vpack.c.bf16 %v6063, %v6055
    %v6696 = vpack.c.bf16 %v6064, %v6056
    %v6697 = vpack.c.bf16 %v6065, %v6057
    %v6698 = vpack.c.bf16 %v6066, %v6058
    %v6699 = vpack.c.bf16 %v6067, %v6059
    %v6700 = vpack.c.bf16 %v6068, %v6060
    %v6701 = vpack.c.bf16 %v6077, %v6069
    %v6702 = vpack.c.bf16 %v6078, %v6070
    %v6703 = vpack.c.bf16 %v6079, %v6071
    %v6704 = vpack.c.bf16 %v6080, %v6072
    %v6705 = vpack.c.bf16 %v6081, %v6073
    %v6706 = vpack.c.bf16 %v6082, %v6074
    %v6707 = vpack.c.bf16 %v6083, %v6075
    %v6708 = vpack.c.bf16 %v6084, %v6076
    %v6709 = vpack.c.bf16 %v6093, %v6085
    %v6710 = vpack.c.bf16 %v6094, %v6086
    %v6711 = vpack.c.bf16 %v6095, %v6087
    %v6712 = vpack.c.bf16 %v6096, %v6088
    %v6713 = vpack.c.bf16 %v6097, %v6089
    %v6714 = vpack.c.bf16 %v6098, %v6090
    %v6715 = vpack.c.bf16 %v6099, %v6091
    %v6716 = vpack.c.bf16 %v6100, %v6092
    %v6717 = vpack.c.bf16 %v6109, %v6101
    %v6718 = vpack.c.bf16 %v6110, %v6102
    %v6719 = vpack.c.bf16 %v6111, %v6103
    %v6720 = vpack.c.bf16 %v6112, %v6104
    %v6721 = vpack.c.bf16 %v6113, %v6105
    %v6722 = vpack.c.bf16 %v6114, %v6106
    %v6723 = vpack.c.bf16 %v6115, %v6107
    %v6724 = vpack.c.bf16 %v6116, %v6108
    %v6725 = vpack.c.bf16 %v6125, %v6117
    %v6726 = vpack.c.bf16 %v6126, %v6118
    %v6727 = vpack.c.bf16 %v6127, %v6119
    %v6728 = vpack.c.bf16 %v6128, %v6120
    %v6729 = vpack.c.bf16 %v6129, %v6121
    %v6730 = vpack.c.bf16 %v6130, %v6122
    %v6731 = vpack.c.bf16 %v6131, %v6123
    %v6732 = vpack.c.bf16 %v6132, %v6124
    %v6733 = vpack.c.bf16 %v6141, %v6133
    %v6734 = vpack.c.bf16 %v6142, %v6134
    %v6735 = vpack.c.bf16 %v6143, %v6135
    %v6736 = vpack.c.bf16 %v6144, %v6136
    %v6737 = vpack.c.bf16 %v6145, %v6137
    %v6738 = vpack.c.bf16 %v6146, %v6138
    %v6739 = vpack.c.bf16 %v6147, %v6139
    %v6740 = vpack.c.bf16 %v6148, %v6140
    %v6741 = vpack.c.bf16 %v6157, %v6149
    %v6742 = vpack.c.bf16 %v6158, %v6150
    %v6743 = vpack.c.bf16 %v6159, %v6151
    %v6744 = vpack.c.bf16 %v6160, %v6152
    %v6745 = vpack.c.bf16 %v6161, %v6153
    %v6746 = vpack.c.bf16 %v6162, %v6154
    %v6747 = vpack.c.bf16 %v6163, %v6155
    %v6748 = vpack.c.bf16 %v6164, %v6156
    %v6749 = vpack.c.bf16 %v6173, %v6165
    %v6750 = vpack.c.bf16 %v6174, %v6166
    %v6751 = vpack.c.bf16 %v6175, %v6167
    %v6752 = vpack.c.bf16 %v6176, %v6168
    %v6753 = vpack.c.bf16 %v6177, %v6169
    %v6754 = vpack.c.bf16 %v6178, %v6170
    %v6755 = vpack.c.bf16 %v6179, %v6171
    %v6756 = vpack.c.bf16 %v6180, %v6172
    %v6757 = vpack.c.bf16 %v6189, %v6181
    %v6758 = vpack.c.bf16 %v6190, %v6182
    %v6759 = vpack.c.bf16 %v6191, %v6183
    %v6760 = vpack.c.bf16 %v6192, %v6184
    %v6761 = vpack.c.bf16 %v6193, %v6185
    %v6762 = vpack.c.bf16 %v6194, %v6186
    %v6763 = vpack.c.bf16 %v6195, %v6187
    %v6764 = vpack.c.bf16 %v6196, %v6188
    %v6765 = vpack.c.bf16 %v6205, %v6197
    %v6766 = vpack.c.bf16 %v6206, %v6198
    %v6767 = vpack.c.bf16 %v6207, %v6199
    %v6768 = vpack.c.bf16 %v6208, %v6200
    %v6769 = vpack.c.bf16 %v6209, %v6201
    %v6770 = vpack.c.bf16 %v6210, %v6202
    %v6771 = vpack.c.bf16 %v6211, %v6203
    %v6772 = vpack.c.bf16 %v6212, %v6204
    %v6773 = vpack.c.bf16 %v6221, %v6213
    %v6774 = vpack.c.bf16 %v6222, %v6214
    %v6775 = vpack.c.bf16 %v6223, %v6215
    %v6776 = vpack.c.bf16 %v6224, %v6216
    %v6777 = vpack.c.bf16 %v6225, %v6217
    %v6778 = vpack.c.bf16 %v6226, %v6218
    %v6779 = vpack.c.bf16 %v6227, %v6219
    %v6780 = vpack.c.bf16 %v6228, %v6220
    %v6781 = vpack.c.bf16 %v6237, %v6229
    %v6782 = vpack.c.bf16 %v6238, %v6230
    %v6783 = vpack.c.bf16 %v6239, %v6231
    %v6784 = vpack.c.bf16 %v6240, %v6232
    %v6785 = vpack.c.bf16 %v6241, %v6233
    %v6786 = vpack.c.bf16 %v6242, %v6234
    %v6787 = vpack.c.bf16 %v6243, %v6235
    %v6788 = vpack.c.bf16 %v6244, %v6236
    %v6789 = vpack.c.bf16 %v6253, %v6245
    %v6790 = vpack.c.bf16 %v6254, %v6246
    %v6791 = vpack.c.bf16 %v6255, %v6247
    %v6792 = vpack.c.bf16 %v6256, %v6248
    %v6793 = vpack.c.bf16 %v6257, %v6249
    %v6794 = vpack.c.bf16 %v6258, %v6250
    %v6795 = vpack.c.bf16 %v6259, %v6251
    %v6796 = vpack.c.bf16 %v6260, %v6252
    %v6797 = vpack.c.bf16 %v6269, %v6261
    %v6798 = vpack.c.bf16 %v6270, %v6262
    %v6799 = vpack.c.bf16 %v6271, %v6263
    %v6800 = vpack.c.bf16 %v6272, %v6264
    %v6801 = vpack.c.bf16 %v6273, %v6265
    %v6802 = vpack.c.bf16 %v6274, %v6266
    %v6803 = vpack.c.bf16 %v6275, %v6267
    %v6804 = vpack.c.bf16 %v6276, %v6268
    %v6805 = vpack.c.bf16 %v6285, %v6277
    %v6806 = vpack.c.bf16 %v6286, %v6278
    %v6807 = vpack.c.bf16 %v6287, %v6279
    %v6808 = vpack.c.bf16 %v6288, %v6280
    %v6809 = vpack.c.bf16 %v6289, %v6281
    %v6810 = vpack.c.bf16 %v6290, %v6282
    %v6811 = vpack.c.bf16 %v6291, %v6283
    %v6812 = vpack.c.bf16 %v6292, %v6284
    %v6813 = vpack.c.bf16 %v6301, %v6293
    %v6814 = vpack.c.bf16 %v6302, %v6294
    %v6815 = vpack.c.bf16 %v6303, %v6295
    %v6816 = vpack.c.bf16 %v6304, %v6296
    %v6817 = vpack.c.bf16 %v6305, %v6297
    %v6818 = vpack.c.bf16 %v6306, %v6298
    %v6819 = vpack.c.bf16 %v6307, %v6299
    %v6820 = vpack.c.bf16 %v6308, %v6300
    %6821 = vmatpush.bf16.msra.mxu0 %v6365
    %6822 = vmatpush.bf16.msra.mxu0 %v6357
    %6823 = vmatpush.bf16.msra.mxu0 %v6349
    %6824 = vmatpush.bf16.msra.mxu0 %v6341
    %6825 = vmatpush.bf16.msra.mxu0 %v6333
    %6826 = vmatpush.bf16.msra.mxu0 %v6325
    %6827 = vmatpush.bf16.msra.mxu0 %v6317
    %6828 = vmatpush.bf16.msra.mxu0 %v6309
    %6829 = vmatmul.bf16.gmra.mxu0 %v3997
    %v6830 = vpop.f32.mrf.mxu0
    %v6831 = vadd.f32 0.0, %v6830
    %v6832 = vpop.f32.mrf.mxu0
    %6833 = vdwg.mxu0
    %6834 = vmatpush.bf16.msra.mxu0 %v6429
    %6835 = vmatpush.bf16.msra.mxu0 %v6421
    %6836 = vmatpush.bf16.msra.mxu0 %v6413
    %6837 = vmatpush.bf16.msra.mxu0 %v6405
    %6838 = vmatpush.bf16.msra.mxu0 %v6397
    %6839 = vmatpush.bf16.msra.mxu0 %v6389
    %6840 = vmatpush.bf16.msra.mxu0 %v6381
    %6841 = vmatpush.bf16.msra.mxu0 %v6373
    %6842 = vmatmul.bf16.gmra.mxu0 %v3998
    %v6843 = vpop.f32.mrf.mxu0
    %v6844 = vadd.f32 %v6831, %v6843
    %v6845 = vpop.f32.mrf.mxu0
    %6846 = vdwg.mxu0
    %6847 = vmatpush.bf16.msra.mxu0 %v6493
    %6848 = vmatpush.bf16.msra.mxu0 %v6485
    %6849 = vmatpush.bf16.msra.mxu0 %v6477
    %6850 = vmatpush.bf16.msra.mxu0 %v6469
    %6851 = vmatpush.bf16.msra.mxu0 %v6461
    %6852 = vmatpush.bf16.msra.mxu0 %v6453
    %6853 = vmatpush.bf16.msra.mxu0 %v6445
    %6854 = vmatpush.bf16.msra.mxu0 %v6437
    %6855 = vmatmul.bf16.gmra.mxu0 %v3999
    %v6856 = vpop.f32.mrf.mxu0
    %v6857 = vadd.f32 %v6844, %v6856
    %v6858 = vpop.f32.mrf.mxu0
    %6859 = vdwg.mxu0
    %6860 = vmatpush.bf16.msra.mxu0 %v6557
    %6861 = vmatpush.bf16.msra.mxu0 %v6549
    %6862 = vmatpush.bf16.msra.mxu0 %v6541
    %6863 = vmatpush.bf16.msra.mxu0 %v6533
    %6864 = vmatpush.bf16.msra.mxu0 %v6525
    %6865 = vmatpush.bf16.msra.mxu0 %v6517
    %6866 = vmatpush.bf16.msra.mxu0 %v6509
    %6867 = vmatpush.bf16.msra.mxu0 %v6501
    %6868 = vmatmul.bf16.gmra.mxu0 %v4000
    %v6869 = vpop.f32.mrf.mxu0
    %v6870 = vadd.f32 %v6857, %v6869
    %v6871 = vpop.f32.mrf.mxu0
    %6872 = vdwg.mxu0
    %6873 = vmatpush.bf16.msra.mxu0 %v6621
    %6874 = vmatpush.bf16.msra.mxu0 %v6613
    %6875 = vmatpush.bf16.msra.mxu0 %v6605
    %6876 = vmatpush.bf16.msra.mxu0 %v6597
    %6877 = vmatpush.bf16.msra.mxu0 %v6589
    %6878 = vmatpush.bf16.msra.mxu0 %v6581
    %6879 = vmatpush.bf16.msra.mxu0 %v6573
    %6880 = vmatpush.bf16.msra.mxu0 %v6565
    %6881 = vmatmul.bf16.gmra.mxu0 %v4001
    %v6882 = vpop.f32.mrf.mxu0
    %v6883 = vadd.f32 %v6870, %v6882
    %v6884 = vpop.f32.mrf.mxu0
    %6885 = vdwg.mxu0
    %6886 = vmatpush.bf16.msra.mxu0 %v6685
    %6887 = vmatpush.bf16.msra.mxu0 %v6677
    %6888 = vmatpush.bf16.msra.mxu0 %v6669
    %6889 = vmatpush.bf16.msra.mxu0 %v6661
    %6890 = vmatpush.bf16.msra.mxu0 %v6653
    %6891 = vmatpush.bf16.msra.mxu0 %v6645
    %6892 = vmatpush.bf16.msra.mxu0 %v6637
    %6893 = vmatpush.bf16.msra.mxu0 %v6629
    %6894 = vmatmul.bf16.gmra.mxu0 %v4002
    %v6895 = vpop.f32.mrf.mxu0
    %v6896 = vadd.f32 %v6883, %v6895
    %v6897 = vpop.f32.mrf.mxu0
    %6898 = vdwg.mxu0
    %6899 = vmatpush.bf16.msra.mxu0 %v6749
    %6900 = vmatpush.bf16.msra.mxu0 %v6741
    %6901 = vmatpush.bf16.msra.mxu0 %v6733
    %6902 = vmatpush.bf16.msra.mxu0 %v6725
    %6903 = vmatpush.bf16.msra.mxu0 %v6717
    %6904 = vmatpush.bf16.msra.mxu0 %v6709
    %6905 = vmatpush.bf16.msra.mxu0 %v6701
    %6906 = vmatpush.bf16.msra.mxu0 %v6693
    %6907 = vmatmul.bf16.gmra.mxu0 %v4003
    %v6908 = vpop.f32.mrf.mxu0
    %v6909 = vadd.f32 %v6896, %v6908
    %v6910 = vpop.f32.mrf.mxu0
    %6911 = vdwg.mxu0
    %6912 = vmatpush.bf16.msra.mxu0 %v6813
    %6913 = vmatpush.bf16.msra.mxu0 %v6805
    %6914 = vmatpush.bf16.msra.mxu0 %v6797
    %6915 = vmatpush.bf16.msra.mxu0 %v6789
    %6916 = vmatpush.bf16.msra.mxu0 %v6781
    %6917 = vmatpush.bf16.msra.mxu0 %v6773
    %6918 = vmatpush.bf16.msra.mxu0 %v6765
    %6919 = vmatpush.bf16.msra.mxu0 %v6757
    %6920 = vmatmul.bf16.gmra.mxu0 %v4004
    %v6921 = vpop.f32.mrf.mxu0
    %v6922 = vadd.f32 %v6909, %v6921
    %v6923 = vpop.f32.mrf.mxu0
    %6924 = vdwg.mxu0
    %6925 = vmatpush.bf16.msra.mxu0 %v6366
    %6926 = vmatpush.bf16.msra.mxu0 %v6358
    %6927 = vmatpush.bf16.msra.mxu0 %v6350
    %6928 = vmatpush.bf16.msra.mxu0 %v6342
    %6929 = vmatpush.bf16.msra.mxu0 %v6334
    %6930 = vmatpush.bf16.msra.mxu0 %v6326
    %6931 = vmatpush.bf16.msra.mxu0 %v6318
    %6932 = vmatpush.bf16.msra.mxu0 %v6310
    %6933 = vmatmul.bf16.gmra.mxu0 %v3997
    %v6934 = vpop.f32.mrf.mxu0
    %v6935 = vadd.f32 0.0, %v6934
    %v6936 = vpop.f32.mrf.mxu0
    %6937 = vdwg.mxu0
    %6938 = vmatpush.bf16.msra.mxu0 %v6430
    %6939 = vmatpush.bf16.msra.mxu0 %v6422
    %6940 = vmatpush.bf16.msra.mxu0 %v6414
    %6941 = vmatpush.bf16.msra.mxu0 %v6406
    %6942 = vmatpush.bf16.msra.mxu0 %v6398
    %6943 = vmatpush.bf16.msra.mxu0 %v6390
    %6944 = vmatpush.bf16.msra.mxu0 %v6382
    %6945 = vmatpush.bf16.msra.mxu0 %v6374
    %6946 = vmatmul.bf16.gmra.mxu0 %v3998
    %v6947 = vpop.f32.mrf.mxu0
    %v6948 = vadd.f32 %v6935, %v6947
    %v6949 = vpop.f32.mrf.mxu0
    %6950 = vdwg.mxu0
    %6951 = vmatpush.bf16.msra.mxu0 %v6494
    %6952 = vmatpush.bf16.msra.mxu0 %v6486
    %6953 = vmatpush.bf16.msra.mxu0 %v6478
    %6954 = vmatpush.bf16.msra.mxu0 %v6470
    %6955 = vmatpush.bf16.msra.mxu0 %v6462
    %6956 = vmatpush.bf16.msra.mxu0 %v6454
    %6957 = vmatpush.bf16.msra.mxu0 %v6446
    %6958 = vmatpush.bf16.msra.mxu0 %v6438
    %6959 = vmatmul.bf16.gmra.mxu0 %v3999
    %v6960 = vpop.f32.mrf.mxu0
    %v6961 = vadd.f32 %v6948, %v6960
    %v6962 = vpop.f32.mrf.mxu0
    %6963 = vdwg.mxu0
    %6964 = vmatpush.bf16.msra.mxu0 %v6558
    %6965 = vmatpush.bf16.msra.mxu0 %v6550
    %6966 = vmatpush.bf16.msra.mxu0 %v6542
    %6967 = vmatpush.bf16.msra.mxu0 %v6534
    %6968 = vmatpush.bf16.msra.mxu0 %v6526
    %6969 = vmatpush.bf16.msra.mxu0 %v6518
    %6970 = vmatpush.bf16.msra.mxu0 %v6510
    %6971 = vmatpush.bf16.msra.mxu0 %v6502
    %6972 = vmatmul.bf16.gmra.mxu0 %v4000
    %v6973 = vpop.f32.mrf.mxu0
    %v6974 = vadd.f32 %v6961, %v6973
    %v6975 = vpop.f32.mrf.mxu0
    %6976 = vdwg.mxu0
    %6977 = vmatpush.bf16.msra.mxu0 %v6622
    %6978 = vmatpush.bf16.msra.mxu0 %v6614
    %6979 = vmatpush.bf16.msra.mxu0 %v6606
    %6980 = vmatpush.bf16.msra.mxu0 %v6598
    %6981 = vmatpush.bf16.msra.mxu0 %v6590
    %6982 = vmatpush.bf16.msra.mxu0 %v6582
    %6983 = vmatpush.bf16.msra.mxu0 %v6574
    %6984 = vmatpush.bf16.msra.mxu0 %v6566
    %6985 = vmatmul.bf16.gmra.mxu0 %v4001
    %v6986 = vpop.f32.mrf.mxu0
    %v6987 = vadd.f32 %v6974, %v6986
    %v6988 = vpop.f32.mrf.mxu0
    %6989 = vdwg.mxu0
    %6990 = vmatpush.bf16.msra.mxu0 %v6686
    %6991 = vmatpush.bf16.msra.mxu0 %v6678
    %6992 = vmatpush.bf16.msra.mxu0 %v6670
    %6993 = vmatpush.bf16.msra.mxu0 %v6662
    %6994 = vmatpush.bf16.msra.mxu0 %v6654
    %6995 = vmatpush.bf16.msra.mxu0 %v6646
    %6996 = vmatpush.bf16.msra.mxu0 %v6638
    %6997 = vmatpush.bf16.msra.mxu0 %v6630
    %6998 = vmatmul.bf16.gmra.mxu0 %v4002
    %v6999 = vpop.f32.mrf.mxu0
    %v7000 = vadd.f32 %v6987, %v6999
    %v7001 = vpop.f32.mrf.mxu0
    %7002 = vdwg.mxu0
    %7003 = vmatpush.bf16.msra.mxu0 %v6750
    %7004 = vmatpush.bf16.msra.mxu0 %v6742
    %7005 = vmatpush.bf16.msra.mxu0 %v6734
    %7006 = vmatpush.bf16.msra.mxu0 %v6726
    %7007 = vmatpush.bf16.msra.mxu0 %v6718
    %7008 = vmatpush.bf16.msra.mxu0 %v6710
    %7009 = vmatpush.bf16.msra.mxu0 %v6702
    %7010 = vmatpush.bf16.msra.mxu0 %v6694
    %7011 = vmatmul.bf16.gmra.mxu0 %v4003
    %v7012 = vpop.f32.mrf.mxu0
    %v7013 = vadd.f32 %v7000, %v7012
    %v7014 = vpop.f32.mrf.mxu0
    %7015 = vdwg.mxu0
    %7016 = vmatpush.bf16.msra.mxu0 %v6814
    %7017 = vmatpush.bf16.msra.mxu0 %v6806
    %7018 = vmatpush.bf16.msra.mxu0 %v6798
    %7019 = vmatpush.bf16.msra.mxu0 %v6790
    %7020 = vmatpush.bf16.msra.mxu0 %v6782
    %7021 = vmatpush.bf16.msra.mxu0 %v6774
    %7022 = vmatpush.bf16.msra.mxu0 %v6766
    %7023 = vmatpush.bf16.msra.mxu0 %v6758
    %7024 = vmatmul.bf16.gmra.mxu0 %v4004
    %v7025 = vpop.f32.mrf.mxu0
    %v7026 = vadd.f32 %v7013, %v7025
    %v7027 = vpop.f32.mrf.mxu0
    %7028 = vdwg.mxu0
    %7029 = vmatpush.bf16.msra.mxu0 %v6367
    %7030 = vmatpush.bf16.msra.mxu0 %v6359
    %7031 = vmatpush.bf16.msra.mxu0 %v6351
    %7032 = vmatpush.bf16.msra.mxu0 %v6343
    %7033 = vmatpush.bf16.msra.mxu0 %v6335
    %7034 = vmatpush.bf16.msra.mxu0 %v6327
    %7035 = vmatpush.bf16.msra.mxu0 %v6319
    %7036 = vmatpush.bf16.msra.mxu0 %v6311
    %7037 = vmatmul.bf16.gmra.mxu0 %v3997
    %v7038 = vpop.f32.mrf.mxu0
    %v7039 = vadd.f32 0.0, %v7038
    %v7040 = vpop.f32.mrf.mxu0
    %7041 = vdwg.mxu0
    %7042 = vmatpush.bf16.msra.mxu0 %v6431
    %7043 = vmatpush.bf16.msra.mxu0 %v6423
    %7044 = vmatpush.bf16.msra.mxu0 %v6415
    %7045 = vmatpush.bf16.msra.mxu0 %v6407
    %7046 = vmatpush.bf16.msra.mxu0 %v6399
    %7047 = vmatpush.bf16.msra.mxu0 %v6391
    %7048 = vmatpush.bf16.msra.mxu0 %v6383
    %7049 = vmatpush.bf16.msra.mxu0 %v6375
    %7050 = vmatmul.bf16.gmra.mxu0 %v3998
    %v7051 = vpop.f32.mrf.mxu0
    %v7052 = vadd.f32 %v7039, %v7051
    %v7053 = vpop.f32.mrf.mxu0
    %7054 = vdwg.mxu0
    %7055 = vmatpush.bf16.msra.mxu0 %v6495
    %7056 = vmatpush.bf16.msra.mxu0 %v6487
    %7057 = vmatpush.bf16.msra.mxu0 %v6479
    %7058 = vmatpush.bf16.msra.mxu0 %v6471
    %7059 = vmatpush.bf16.msra.mxu0 %v6463
    %7060 = vmatpush.bf16.msra.mxu0 %v6455
    %7061 = vmatpush.bf16.msra.mxu0 %v6447
    %7062 = vmatpush.bf16.msra.mxu0 %v6439
    %7063 = vmatmul.bf16.gmra.mxu0 %v3999
    %v7064 = vpop.f32.mrf.mxu0
    %v7065 = vadd.f32 %v7052, %v7064
    %v7066 = vpop.f32.mrf.mxu0
    %7067 = vdwg.mxu0
    %7068 = vmatpush.bf16.msra.mxu0 %v6559
    %7069 = vmatpush.bf16.msra.mxu0 %v6551
    %7070 = vmatpush.bf16.msra.mxu0 %v6543
    %7071 = vmatpush.bf16.msra.mxu0 %v6535
    %7072 = vmatpush.bf16.msra.mxu0 %v6527
    %7073 = vmatpush.bf16.msra.mxu0 %v6519
    %7074 = vmatpush.bf16.msra.mxu0 %v6511
    %7075 = vmatpush.bf16.msra.mxu0 %v6503
    %7076 = vmatmul.bf16.gmra.mxu0 %v4000
    %v7077 = vpop.f32.mrf.mxu0
    %v7078 = vadd.f32 %v7065, %v7077
    %v7079 = vpop.f32.mrf.mxu0
    %7080 = vdwg.mxu0
    %7081 = vmatpush.bf16.msra.mxu0 %v6623
    %7082 = vmatpush.bf16.msra.mxu0 %v6615
    %7083 = vmatpush.bf16.msra.mxu0 %v6607
    %7084 = vmatpush.bf16.msra.mxu0 %v6599
    %7085 = vmatpush.bf16.msra.mxu0 %v6591
    %7086 = vmatpush.bf16.msra.mxu0 %v6583
    %7087 = vmatpush.bf16.msra.mxu0 %v6575
    %7088 = vmatpush.bf16.msra.mxu0 %v6567
    %7089 = vmatmul.bf16.gmra.mxu0 %v4001
    %v7090 = vpop.f32.mrf.mxu0
    %v7091 = vadd.f32 %v7078, %v7090
    %v7092 = vpop.f32.mrf.mxu0
    %7093 = vdwg.mxu0
    %7094 = vmatpush.bf16.msra.mxu0 %v6687
    %7095 = vmatpush.bf16.msra.mxu0 %v6679
    %7096 = vmatpush.bf16.msra.mxu0 %v6671
    %7097 = vmatpush.bf16.msra.mxu0 %v6663
    %7098 = vmatpush.bf16.msra.mxu0 %v6655
    %7099 = vmatpush.bf16.msra.mxu0 %v6647
    %7100 = vmatpush.bf16.msra.mxu0 %v6639
    %7101 = vmatpush.bf16.msra.mxu0 %v6631
    %7102 = vmatmul.bf16.gmra.mxu0 %v4002
    %v7103 = vpop.f32.mrf.mxu0
    %v7104 = vadd.f32 %v7091, %v7103
    %v7105 = vpop.f32.mrf.mxu0
    %7106 = vdwg.mxu0
    %7107 = vmatpush.bf16.msra.mxu0 %v6751
    %7108 = vmatpush.bf16.msra.mxu0 %v6743
    %7109 = vmatpush.bf16.msra.mxu0 %v6735
    %7110 = vmatpush.bf16.msra.mxu0 %v6727
    %7111 = vmatpush.bf16.msra.mxu0 %v6719
    %7112 = vmatpush.bf16.msra.mxu0 %v6711
    %7113 = vmatpush.bf16.msra.mxu0 %v6703
    %7114 = vmatpush.bf16.msra.mxu0 %v6695
    %7115 = vmatmul.bf16.gmra.mxu0 %v4003
    %v7116 = vpop.f32.mrf.mxu0
    %v7117 = vadd.f32 %v7104, %v7116
    %v7118 = vpop.f32.mrf.mxu0
    %7119 = vdwg.mxu0
    %7120 = vmatpush.bf16.msra.mxu0 %v6815
    %7121 = vmatpush.bf16.msra.mxu0 %v6807
    %7122 = vmatpush.bf16.msra.mxu0 %v6799
    %7123 = vmatpush.bf16.msra.mxu0 %v6791
    %7124 = vmatpush.bf16.msra.mxu0 %v6783
    %7125 = vmatpush.bf16.msra.mxu0 %v6775
    %7126 = vmatpush.bf16.msra.mxu0 %v6767
    %7127 = vmatpush.bf16.msra.mxu0 %v6759
    %7128 = vmatmul.bf16.gmra.mxu0 %v4004
    %v7129 = vpop.f32.mrf.mxu0
    %v7130 = vadd.f32 %v7117, %v7129
    %v7131 = vpop.f32.mrf.mxu0
    %7132 = vdwg.mxu0
    %7133 = vmatpush.bf16.msra.mxu0 %v6368
    %7134 = vmatpush.bf16.msra.mxu0 %v6360
    %7135 = vmatpush.bf16.msra.mxu0 %v6352
    %7136 = vmatpush.bf16.msra.mxu0 %v6344
    %7137 = vmatpush.bf16.msra.mxu0 %v6336
    %7138 = vmatpush.bf16.msra.mxu0 %v6328
    %7139 = vmatpush.bf16.msra.mxu0 %v6320
    %7140 = vmatpush.bf16.msra.mxu0 %v6312
    %7141 = vmatmul.bf16.gmra.mxu0 %v3997
    %v7142 = vpop.f32.mrf.mxu0
    %v7143 = vadd.f32 0.0, %v7142
    %v7144 = vpop.f32.mrf.mxu0
    %7145 = vdwg.mxu0
    %7146 = vmatpush.bf16.msra.mxu0 %v6432
    %7147 = vmatpush.bf16.msra.mxu0 %v6424
    %7148 = vmatpush.bf16.msra.mxu0 %v6416
    %7149 = vmatpush.bf16.msra.mxu0 %v6408
    %7150 = vmatpush.bf16.msra.mxu0 %v6400
    %7151 = vmatpush.bf16.msra.mxu0 %v6392
    %7152 = vmatpush.bf16.msra.mxu0 %v6384
    %7153 = vmatpush.bf16.msra.mxu0 %v6376
    %7154 = vmatmul.bf16.gmra.mxu0 %v3998
    %v7155 = vpop.f32.mrf.mxu0
    %v7156 = vadd.f32 %v7143, %v7155
    %v7157 = vpop.f32.mrf.mxu0
    %7158 = vdwg.mxu0
    %7159 = vmatpush.bf16.msra.mxu0 %v6496
    %7160 = vmatpush.bf16.msra.mxu0 %v6488
    %7161 = vmatpush.bf16.msra.mxu0 %v6480
    %7162 = vmatpush.bf16.msra.mxu0 %v6472
    %7163 = vmatpush.bf16.msra.mxu0 %v6464
    %7164 = vmatpush.bf16.msra.mxu0 %v6456
    %7165 = vmatpush.bf16.msra.mxu0 %v6448
    %7166 = vmatpush.bf16.msra.mxu0 %v6440
    %7167 = vmatmul.bf16.gmra.mxu0 %v3999
    %v7168 = vpop.f32.mrf.mxu0
    %v7169 = vadd.f32 %v7156, %v7168
    %v7170 = vpop.f32.mrf.mxu0
    %7171 = vdwg.mxu0
    %7172 = vmatpush.bf16.msra.mxu0 %v6560
    %7173 = vmatpush.bf16.msra.mxu0 %v6552
    %7174 = vmatpush.bf16.msra.mxu0 %v6544
    %7175 = vmatpush.bf16.msra.mxu0 %v6536
    %7176 = vmatpush.bf16.msra.mxu0 %v6528
    %7177 = vmatpush.bf16.msra.mxu0 %v6520
    %7178 = vmatpush.bf16.msra.mxu0 %v6512
    %7179 = vmatpush.bf16.msra.mxu0 %v6504
    %7180 = vmatmul.bf16.gmra.mxu0 %v4000
    %v7181 = vpop.f32.mrf.mxu0
    %v7182 = vadd.f32 %v7169, %v7181
    %v7183 = vpop.f32.mrf.mxu0
    %7184 = vdwg.mxu0
    %7185 = vmatpush.bf16.msra.mxu0 %v6624
    %7186 = vmatpush.bf16.msra.mxu0 %v6616
    %7187 = vmatpush.bf16.msra.mxu0 %v6608
    %7188 = vmatpush.bf16.msra.mxu0 %v6600
    %7189 = vmatpush.bf16.msra.mxu0 %v6592
    %7190 = vmatpush.bf16.msra.mxu0 %v6584
    %7191 = vmatpush.bf16.msra.mxu0 %v6576
    %7192 = vmatpush.bf16.msra.mxu0 %v6568
    %7193 = vmatmul.bf16.gmra.mxu0 %v4001
    %v7194 = vpop.f32.mrf.mxu0
    %v7195 = vadd.f32 %v7182, %v7194
    %v7196 = vpop.f32.mrf.mxu0
    %7197 = vdwg.mxu0
    %7198 = vmatpush.bf16.msra.mxu0 %v6688
    %7199 = vmatpush.bf16.msra.mxu0 %v6680
    %7200 = vmatpush.bf16.msra.mxu0 %v6672
    %7201 = vmatpush.bf16.msra.mxu0 %v6664
    %7202 = vmatpush.bf16.msra.mxu0 %v6656
    %7203 = vmatpush.bf16.msra.mxu0 %v6648
    %7204 = vmatpush.bf16.msra.mxu0 %v6640
    %7205 = vmatpush.bf16.msra.mxu0 %v6632
    %7206 = vmatmul.bf16.gmra.mxu0 %v4002
    %v7207 = vpop.f32.mrf.mxu0
    %v7208 = vadd.f32 %v7195, %v7207
    %v7209 = vpop.f32.mrf.mxu0
    %7210 = vdwg.mxu0
    %7211 = vmatpush.bf16.msra.mxu0 %v6752
    %7212 = vmatpush.bf16.msra.mxu0 %v6744
    %7213 = vmatpush.bf16.msra.mxu0 %v6736
    %7214 = vmatpush.bf16.msra.mxu0 %v6728
    %7215 = vmatpush.bf16.msra.mxu0 %v6720
    %7216 = vmatpush.bf16.msra.mxu0 %v6712
    %7217 = vmatpush.bf16.msra.mxu0 %v6704
    %7218 = vmatpush.bf16.msra.mxu0 %v6696
    %7219 = vmatmul.bf16.gmra.mxu0 %v4003
    %v7220 = vpop.f32.mrf.mxu0
    %v7221 = vadd.f32 %v7208, %v7220
    %v7222 = vpop.f32.mrf.mxu0
    %7223 = vdwg.mxu0
    %7224 = vmatpush.bf16.msra.mxu0 %v6816
    %7225 = vmatpush.bf16.msra.mxu0 %v6808
    %7226 = vmatpush.bf16.msra.mxu0 %v6800
    %7227 = vmatpush.bf16.msra.mxu0 %v6792
    %7228 = vmatpush.bf16.msra.mxu0 %v6784
    %7229 = vmatpush.bf16.msra.mxu0 %v6776
    %7230 = vmatpush.bf16.msra.mxu0 %v6768
    %7231 = vmatpush.bf16.msra.mxu0 %v6760
    %7232 = vmatmul.bf16.gmra.mxu0 %v4004
    %v7233 = vpop.f32.mrf.mxu0
    %v7234 = vadd.f32 %v7221, %v7233
    %v7235 = vpop.f32.mrf.mxu0
    %7236 = vdwg.mxu0
    %7237 = vmatpush.bf16.msra.mxu0 %v6369
    %7238 = vmatpush.bf16.msra.mxu0 %v6361
    %7239 = vmatpush.bf16.msra.mxu0 %v6353
    %7240 = vmatpush.bf16.msra.mxu0 %v6345
    %7241 = vmatpush.bf16.msra.mxu0 %v6337
    %7242 = vmatpush.bf16.msra.mxu0 %v6329
    %7243 = vmatpush.bf16.msra.mxu0 %v6321
    %7244 = vmatpush.bf16.msra.mxu0 %v6313
    %7245 = vmatmul.bf16.gmra.mxu0 %v3997
    %v7246 = vpop.f32.mrf.mxu0
    %v7247 = vadd.f32 0.0, %v7246
    %v7248 = vpop.f32.mrf.mxu0
    %7249 = vdwg.mxu0
    %7250 = vmatpush.bf16.msra.mxu0 %v6433
    %7251 = vmatpush.bf16.msra.mxu0 %v6425
    %7252 = vmatpush.bf16.msra.mxu0 %v6417
    %7253 = vmatpush.bf16.msra.mxu0 %v6409
    %7254 = vmatpush.bf16.msra.mxu0 %v6401
    %7255 = vmatpush.bf16.msra.mxu0 %v6393
    %7256 = vmatpush.bf16.msra.mxu0 %v6385
    %7257 = vmatpush.bf16.msra.mxu0 %v6377
    %7258 = vmatmul.bf16.gmra.mxu0 %v3998
    %v7259 = vpop.f32.mrf.mxu0
    %v7260 = vadd.f32 %v7247, %v7259
    %v7261 = vpop.f32.mrf.mxu0
    %7262 = vdwg.mxu0
    %7263 = vmatpush.bf16.msra.mxu0 %v6497
    %7264 = vmatpush.bf16.msra.mxu0 %v6489
    %7265 = vmatpush.bf16.msra.mxu0 %v6481
    %7266 = vmatpush.bf16.msra.mxu0 %v6473
    %7267 = vmatpush.bf16.msra.mxu0 %v6465
    %7268 = vmatpush.bf16.msra.mxu0 %v6457
    %7269 = vmatpush.bf16.msra.mxu0 %v6449
    %7270 = vmatpush.bf16.msra.mxu0 %v6441
    %7271 = vmatmul.bf16.gmra.mxu0 %v3999
    %v7272 = vpop.f32.mrf.mxu0
    %v7273 = vadd.f32 %v7260, %v7272
    %v7274 = vpop.f32.mrf.mxu0
    %7275 = vdwg.mxu0
    %7276 = vmatpush.bf16.msra.mxu0 %v6561
    %7277 = vmatpush.bf16.msra.mxu0 %v6553
    %7278 = vmatpush.bf16.msra.mxu0 %v6545
    %7279 = vmatpush.bf16.msra.mxu0 %v6537
    %7280 = vmatpush.bf16.msra.mxu0 %v6529
    %7281 = vmatpush.bf16.msra.mxu0 %v6521
    %7282 = vmatpush.bf16.msra.mxu0 %v6513
    %7283 = vmatpush.bf16.msra.mxu0 %v6505
    %7284 = vmatmul.bf16.gmra.mxu0 %v4000
    %v7285 = vpop.f32.mrf.mxu0
    %v7286 = vadd.f32 %v7273, %v7285
    %v7287 = vpop.f32.mrf.mxu0
    %7288 = vdwg.mxu0
    %7289 = vmatpush.bf16.msra.mxu0 %v6625
    %7290 = vmatpush.bf16.msra.mxu0 %v6617
    %7291 = vmatpush.bf16.msra.mxu0 %v6609
    %7292 = vmatpush.bf16.msra.mxu0 %v6601
    %7293 = vmatpush.bf16.msra.mxu0 %v6593
    %7294 = vmatpush.bf16.msra.mxu0 %v6585
    %7295 = vmatpush.bf16.msra.mxu0 %v6577
    %7296 = vmatpush.bf16.msra.mxu0 %v6569
    %7297 = vmatmul.bf16.gmra.mxu0 %v4001
    %v7298 = vpop.f32.mrf.mxu0
    %v7299 = vadd.f32 %v7286, %v7298
    %v7300 = vpop.f32.mrf.mxu0
    %7301 = vdwg.mxu0
    %7302 = vmatpush.bf16.msra.mxu0 %v6689
    %7303 = vmatpush.bf16.msra.mxu0 %v6681
    %7304 = vmatpush.bf16.msra.mxu0 %v6673
    %7305 = vmatpush.bf16.msra.mxu0 %v6665
    %7306 = vmatpush.bf16.msra.mxu0 %v6657
    %7307 = vmatpush.bf16.msra.mxu0 %v6649
    %7308 = vmatpush.bf16.msra.mxu0 %v6641
    %7309 = vmatpush.bf16.msra.mxu0 %v6633
    %7310 = vmatmul.bf16.gmra.mxu0 %v4002
    %v7311 = vpop.f32.mrf.mxu0
    %v7312 = vadd.f32 %v7299, %v7311
    %v7313 = vpop.f32.mrf.mxu0
    %7314 = vdwg.mxu0
    %7315 = vmatpush.bf16.msra.mxu0 %v6753
    %7316 = vmatpush.bf16.msra.mxu0 %v6745
    %7317 = vmatpush.bf16.msra.mxu0 %v6737
    %7318 = vmatpush.bf16.msra.mxu0 %v6729
    %7319 = vmatpush.bf16.msra.mxu0 %v6721
    %7320 = vmatpush.bf16.msra.mxu0 %v6713
    %7321 = vmatpush.bf16.msra.mxu0 %v6705
    %7322 = vmatpush.bf16.msra.mxu0 %v6697
    %7323 = vmatmul.bf16.gmra.mxu0 %v4003
    %v7324 = vpop.f32.mrf.mxu0
    %v7325 = vadd.f32 %v7312, %v7324
    %v7326 = vpop.f32.mrf.mxu0
    %7327 = vdwg.mxu0
    %7328 = vmatpush.bf16.msra.mxu0 %v6817
    %7329 = vmatpush.bf16.msra.mxu0 %v6809
    %7330 = vmatpush.bf16.msra.mxu0 %v6801
    %7331 = vmatpush.bf16.msra.mxu0 %v6793
    %7332 = vmatpush.bf16.msra.mxu0 %v6785
    %7333 = vmatpush.bf16.msra.mxu0 %v6777
    %7334 = vmatpush.bf16.msra.mxu0 %v6769
    %7335 = vmatpush.bf16.msra.mxu0 %v6761
    %7336 = vmatmul.bf16.gmra.mxu0 %v4004
    %v7337 = vpop.f32.mrf.mxu0
    %v7338 = vadd.f32 %v7325, %v7337
    %v7339 = vpop.f32.mrf.mxu0
    %7340 = vdwg.mxu0
    %7341 = vmatpush.bf16.msra.mxu0 %v6370
    %7342 = vmatpush.bf16.msra.mxu0 %v6362
    %7343 = vmatpush.bf16.msra.mxu0 %v6354
    %7344 = vmatpush.bf16.msra.mxu0 %v6346
    %7345 = vmatpush.bf16.msra.mxu0 %v6338
    %7346 = vmatpush.bf16.msra.mxu0 %v6330
    %7347 = vmatpush.bf16.msra.mxu0 %v6322
    %7348 = vmatpush.bf16.msra.mxu0 %v6314
    %7349 = vmatmul.bf16.gmra.mxu0 %v3997
    %v7350 = vpop.f32.mrf.mxu0
    %v7351 = vadd.f32 0.0, %v7350
    %v7352 = vpop.f32.mrf.mxu0
    %7353 = vdwg.mxu0
    %7354 = vmatpush.bf16.msra.mxu0 %v6434
    %7355 = vmatpush.bf16.msra.mxu0 %v6426
    %7356 = vmatpush.bf16.msra.mxu0 %v6418
    %7357 = vmatpush.bf16.msra.mxu0 %v6410
    %7358 = vmatpush.bf16.msra.mxu0 %v6402
    %7359 = vmatpush.bf16.msra.mxu0 %v6394
    %7360 = vmatpush.bf16.msra.mxu0 %v6386
    %7361 = vmatpush.bf16.msra.mxu0 %v6378
    %7362 = vmatmul.bf16.gmra.mxu0 %v3998
    %v7363 = vpop.f32.mrf.mxu0
    %v7364 = vadd.f32 %v7351, %v7363
    %v7365 = vpop.f32.mrf.mxu0
    %7366 = vdwg.mxu0
    %7367 = vmatpush.bf16.msra.mxu0 %v6498
    %7368 = vmatpush.bf16.msra.mxu0 %v6490
    %7369 = vmatpush.bf16.msra.mxu0 %v6482
    %7370 = vmatpush.bf16.msra.mxu0 %v6474
    %7371 = vmatpush.bf16.msra.mxu0 %v6466
    %7372 = vmatpush.bf16.msra.mxu0 %v6458
    %7373 = vmatpush.bf16.msra.mxu0 %v6450
    %7374 = vmatpush.bf16.msra.mxu0 %v6442
    %7375 = vmatmul.bf16.gmra.mxu0 %v3999
    %v7376 = vpop.f32.mrf.mxu0
    %v7377 = vadd.f32 %v7364, %v7376
    %v7378 = vpop.f32.mrf.mxu0
    %7379 = vdwg.mxu0
    %7380 = vmatpush.bf16.msra.mxu0 %v6562
    %7381 = vmatpush.bf16.msra.mxu0 %v6554
    %7382 = vmatpush.bf16.msra.mxu0 %v6546
    %7383 = vmatpush.bf16.msra.mxu0 %v6538
    %7384 = vmatpush.bf16.msra.mxu0 %v6530
    %7385 = vmatpush.bf16.msra.mxu0 %v6522
    %7386 = vmatpush.bf16.msra.mxu0 %v6514
    %7387 = vmatpush.bf16.msra.mxu0 %v6506
    %7388 = vmatmul.bf16.gmra.mxu0 %v4000
    %v7389 = vpop.f32.mrf.mxu0
    %v7390 = vadd.f32 %v7377, %v7389
    %v7391 = vpop.f32.mrf.mxu0
    %7392 = vdwg.mxu0
    %7393 = vmatpush.bf16.msra.mxu0 %v6626
    %7394 = vmatpush.bf16.msra.mxu0 %v6618
    %7395 = vmatpush.bf16.msra.mxu0 %v6610
    %7396 = vmatpush.bf16.msra.mxu0 %v6602
    %7397 = vmatpush.bf16.msra.mxu0 %v6594
    %7398 = vmatpush.bf16.msra.mxu0 %v6586
    %7399 = vmatpush.bf16.msra.mxu0 %v6578
    %7400 = vmatpush.bf16.msra.mxu0 %v6570
    %7401 = vmatmul.bf16.gmra.mxu0 %v4001
    %v7402 = vpop.f32.mrf.mxu0
    %v7403 = vadd.f32 %v7390, %v7402
    %v7404 = vpop.f32.mrf.mxu0
    %7405 = vdwg.mxu0
    %7406 = vmatpush.bf16.msra.mxu0 %v6690
    %7407 = vmatpush.bf16.msra.mxu0 %v6682
    %7408 = vmatpush.bf16.msra.mxu0 %v6674
    %7409 = vmatpush.bf16.msra.mxu0 %v6666
    %7410 = vmatpush.bf16.msra.mxu0 %v6658
    %7411 = vmatpush.bf16.msra.mxu0 %v6650
    %7412 = vmatpush.bf16.msra.mxu0 %v6642
    %7413 = vmatpush.bf16.msra.mxu0 %v6634
    %7414 = vmatmul.bf16.gmra.mxu0 %v4002
    %v7415 = vpop.f32.mrf.mxu0
    %v7416 = vadd.f32 %v7403, %v7415
    %v7417 = vpop.f32.mrf.mxu0
    %7418 = vdwg.mxu0
    %7419 = vmatpush.bf16.msra.mxu0 %v6754
    %7420 = vmatpush.bf16.msra.mxu0 %v6746
    %7421 = vmatpush.bf16.msra.mxu0 %v6738
    %7422 = vmatpush.bf16.msra.mxu0 %v6730
    %7423 = vmatpush.bf16.msra.mxu0 %v6722
    %7424 = vmatpush.bf16.msra.mxu0 %v6714
    %7425 = vmatpush.bf16.msra.mxu0 %v6706
    %7426 = vmatpush.bf16.msra.mxu0 %v6698
    %7427 = vmatmul.bf16.gmra.mxu0 %v4003
    %v7428 = vpop.f32.mrf.mxu0
    %v7429 = vadd.f32 %v7416, %v7428
    %v7430 = vpop.f32.mrf.mxu0
    %7431 = vdwg.mxu0
    %7432 = vmatpush.bf16.msra.mxu0 %v6818
    %7433 = vmatpush.bf16.msra.mxu0 %v6810
    %7434 = vmatpush.bf16.msra.mxu0 %v6802
    %7435 = vmatpush.bf16.msra.mxu0 %v6794
    %7436 = vmatpush.bf16.msra.mxu0 %v6786
    %7437 = vmatpush.bf16.msra.mxu0 %v6778
    %7438 = vmatpush.bf16.msra.mxu0 %v6770
    %7439 = vmatpush.bf16.msra.mxu0 %v6762
    %7440 = vmatmul.bf16.gmra.mxu0 %v4004
    %v7441 = vpop.f32.mrf.mxu0
    %v7442 = vadd.f32 %v7429, %v7441
    %v7443 = vpop.f32.mrf.mxu0
    %7444 = vdwg.mxu0
    %7445 = vmatpush.bf16.msra.mxu0 %v6371
    %7446 = vmatpush.bf16.msra.mxu0 %v6363
    %7447 = vmatpush.bf16.msra.mxu0 %v6355
    %7448 = vmatpush.bf16.msra.mxu0 %v6347
    %7449 = vmatpush.bf16.msra.mxu0 %v6339
    %7450 = vmatpush.bf16.msra.mxu0 %v6331
    %7451 = vmatpush.bf16.msra.mxu0 %v6323
    %7452 = vmatpush.bf16.msra.mxu0 %v6315
    %7453 = vmatmul.bf16.gmra.mxu0 %v3997
    %v7454 = vpop.f32.mrf.mxu0
    %v7455 = vadd.f32 0.0, %v7454
    %v7456 = vpop.f32.mrf.mxu0
    %7457 = vdwg.mxu0
    %7458 = vmatpush.bf16.msra.mxu0 %v6435
    %7459 = vmatpush.bf16.msra.mxu0 %v6427
    %7460 = vmatpush.bf16.msra.mxu0 %v6419
    %7461 = vmatpush.bf16.msra.mxu0 %v6411
    %7462 = vmatpush.bf16.msra.mxu0 %v6403
    %7463 = vmatpush.bf16.msra.mxu0 %v6395
    %7464 = vmatpush.bf16.msra.mxu0 %v6387
    %7465 = vmatpush.bf16.msra.mxu0 %v6379
    %7466 = vmatmul.bf16.gmra.mxu0 %v3998
    %v7467 = vpop.f32.mrf.mxu0
    %v7468 = vadd.f32 %v7455, %v7467
    %v7469 = vpop.f32.mrf.mxu0
    %7470 = vdwg.mxu0
    %7471 = vmatpush.bf16.msra.mxu0 %v6499
    %7472 = vmatpush.bf16.msra.mxu0 %v6491
    %7473 = vmatpush.bf16.msra.mxu0 %v6483
    %7474 = vmatpush.bf16.msra.mxu0 %v6475
    %7475 = vmatpush.bf16.msra.mxu0 %v6467
    %7476 = vmatpush.bf16.msra.mxu0 %v6459
    %7477 = vmatpush.bf16.msra.mxu0 %v6451
    %7478 = vmatpush.bf16.msra.mxu0 %v6443
    %7479 = vmatmul.bf16.gmra.mxu0 %v3999
    %v7480 = vpop.f32.mrf.mxu0
    %v7481 = vadd.f32 %v7468, %v7480
    %v7482 = vpop.f32.mrf.mxu0
    %7483 = vdwg.mxu0
    %7484 = vmatpush.bf16.msra.mxu0 %v6563
    %7485 = vmatpush.bf16.msra.mxu0 %v6555
    %7486 = vmatpush.bf16.msra.mxu0 %v6547
    %7487 = vmatpush.bf16.msra.mxu0 %v6539
    %7488 = vmatpush.bf16.msra.mxu0 %v6531
    %7489 = vmatpush.bf16.msra.mxu0 %v6523
    %7490 = vmatpush.bf16.msra.mxu0 %v6515
    %7491 = vmatpush.bf16.msra.mxu0 %v6507
    %7492 = vmatmul.bf16.gmra.mxu0 %v4000
    %v7493 = vpop.f32.mrf.mxu0
    %v7494 = vadd.f32 %v7481, %v7493
    %v7495 = vpop.f32.mrf.mxu0
    %7496 = vdwg.mxu0
    %7497 = vmatpush.bf16.msra.mxu0 %v6627
    %7498 = vmatpush.bf16.msra.mxu0 %v6619
    %7499 = vmatpush.bf16.msra.mxu0 %v6611
    %7500 = vmatpush.bf16.msra.mxu0 %v6603
    %7501 = vmatpush.bf16.msra.mxu0 %v6595
    %7502 = vmatpush.bf16.msra.mxu0 %v6587
    %7503 = vmatpush.bf16.msra.mxu0 %v6579
    %7504 = vmatpush.bf16.msra.mxu0 %v6571
    %7505 = vmatmul.bf16.gmra.mxu0 %v4001
    %v7506 = vpop.f32.mrf.mxu0
    %v7507 = vadd.f32 %v7494, %v7506
    %v7508 = vpop.f32.mrf.mxu0
    %7509 = vdwg.mxu0
    %7510 = vmatpush.bf16.msra.mxu0 %v6691
    %7511 = vmatpush.bf16.msra.mxu0 %v6683
    %7512 = vmatpush.bf16.msra.mxu0 %v6675
    %7513 = vmatpush.bf16.msra.mxu0 %v6667
    %7514 = vmatpush.bf16.msra.mxu0 %v6659
    %7515 = vmatpush.bf16.msra.mxu0 %v6651
    %7516 = vmatpush.bf16.msra.mxu0 %v6643
    %7517 = vmatpush.bf16.msra.mxu0 %v6635
    %7518 = vmatmul.bf16.gmra.mxu0 %v4002
    %v7519 = vpop.f32.mrf.mxu0
    %v7520 = vadd.f32 %v7507, %v7519
    %v7521 = vpop.f32.mrf.mxu0
    %7522 = vdwg.mxu0
    %7523 = vmatpush.bf16.msra.mxu0 %v6755
    %7524 = vmatpush.bf16.msra.mxu0 %v6747
    %7525 = vmatpush.bf16.msra.mxu0 %v6739
    %7526 = vmatpush.bf16.msra.mxu0 %v6731
    %7527 = vmatpush.bf16.msra.mxu0 %v6723
    %7528 = vmatpush.bf16.msra.mxu0 %v6715
    %7529 = vmatpush.bf16.msra.mxu0 %v6707
    %7530 = vmatpush.bf16.msra.mxu0 %v6699
    %7531 = vmatmul.bf16.gmra.mxu0 %v4003
    %v7532 = vpop.f32.mrf.mxu0
    %v7533 = vadd.f32 %v7520, %v7532
    %v7534 = vpop.f32.mrf.mxu0
    %7535 = vdwg.mxu0
    %7536 = vmatpush.bf16.msra.mxu0 %v6819
    %7537 = vmatpush.bf16.msra.mxu0 %v6811
    %7538 = vmatpush.bf16.msra.mxu0 %v6803
    %7539 = vmatpush.bf16.msra.mxu0 %v6795
    %7540 = vmatpush.bf16.msra.mxu0 %v6787
    %7541 = vmatpush.bf16.msra.mxu0 %v6779
    %7542 = vmatpush.bf16.msra.mxu0 %v6771
    %7543 = vmatpush.bf16.msra.mxu0 %v6763
    %7544 = vmatmul.bf16.gmra.mxu0 %v4004
    %v7545 = vpop.f32.mrf.mxu0
    %v7546 = vadd.f32 %v7533, %v7545
    %v7547 = vpop.f32.mrf.mxu0
    %7548 = vdwg.mxu0
    %7549 = vmatpush.bf16.msra.mxu0 %v6372
    %7550 = vmatpush.bf16.msra.mxu0 %v6364
    %7551 = vmatpush.bf16.msra.mxu0 %v6356
    %7552 = vmatpush.bf16.msra.mxu0 %v6348
    %7553 = vmatpush.bf16.msra.mxu0 %v6340
    %7554 = vmatpush.bf16.msra.mxu0 %v6332
    %7555 = vmatpush.bf16.msra.mxu0 %v6324
    %7556 = vmatpush.bf16.msra.mxu0 %v6316
    %7557 = vmatmul.bf16.gmra.mxu0 %v3997
    %v7558 = vpop.f32.mrf.mxu0
    %v7559 = vadd.f32 0.0, %v7558
    %v7560 = vpop.f32.mrf.mxu0
    %7561 = vdwg.mxu0
    %7562 = vmatpush.bf16.msra.mxu0 %v6436
    %7563 = vmatpush.bf16.msra.mxu0 %v6428
    %7564 = vmatpush.bf16.msra.mxu0 %v6420
    %7565 = vmatpush.bf16.msra.mxu0 %v6412
    %7566 = vmatpush.bf16.msra.mxu0 %v6404
    %7567 = vmatpush.bf16.msra.mxu0 %v6396
    %7568 = vmatpush.bf16.msra.mxu0 %v6388
    %7569 = vmatpush.bf16.msra.mxu0 %v6380
    %7570 = vmatmul.bf16.gmra.mxu0 %v3998
    %v7571 = vpop.f32.mrf.mxu0
    %v7572 = vadd.f32 %v7559, %v7571
    %v7573 = vpop.f32.mrf.mxu0
    %7574 = vdwg.mxu0
    %7575 = vmatpush.bf16.msra.mxu0 %v6500
    %7576 = vmatpush.bf16.msra.mxu0 %v6492
    %7577 = vmatpush.bf16.msra.mxu0 %v6484
    %7578 = vmatpush.bf16.msra.mxu0 %v6476
    %7579 = vmatpush.bf16.msra.mxu0 %v6468
    %7580 = vmatpush.bf16.msra.mxu0 %v6460
    %7581 = vmatpush.bf16.msra.mxu0 %v6452
    %7582 = vmatpush.bf16.msra.mxu0 %v6444
    %7583 = vmatmul.bf16.gmra.mxu0 %v3999
    %v7584 = vpop.f32.mrf.mxu0
    %v7585 = vadd.f32 %v7572, %v7584
    %v7586 = vpop.f32.mrf.mxu0
    %7587 = vdwg.mxu0
    %7588 = vmatpush.bf16.msra.mxu0 %v6564
    %7589 = vmatpush.bf16.msra.mxu0 %v6556
    %7590 = vmatpush.bf16.msra.mxu0 %v6548
    %7591 = vmatpush.bf16.msra.mxu0 %v6540
    %7592 = vmatpush.bf16.msra.mxu0 %v6532
    %7593 = vmatpush.bf16.msra.mxu0 %v6524
    %7594 = vmatpush.bf16.msra.mxu0 %v6516
    %7595 = vmatpush.bf16.msra.mxu0 %v6508
    %7596 = vmatmul.bf16.gmra.mxu0 %v4000
    %v7597 = vpop.f32.mrf.mxu0
    %v7598 = vadd.f32 %v7585, %v7597
    %v7599 = vpop.f32.mrf.mxu0
    %7600 = vdwg.mxu0
    %7601 = vmatpush.bf16.msra.mxu0 %v6628
    %7602 = vmatpush.bf16.msra.mxu0 %v6620
    %7603 = vmatpush.bf16.msra.mxu0 %v6612
    %7604 = vmatpush.bf16.msra.mxu0 %v6604
    %7605 = vmatpush.bf16.msra.mxu0 %v6596
    %7606 = vmatpush.bf16.msra.mxu0 %v6588
    %7607 = vmatpush.bf16.msra.mxu0 %v6580
    %7608 = vmatpush.bf16.msra.mxu0 %v6572
    %7609 = vmatmul.bf16.gmra.mxu0 %v4001
    %v7610 = vpop.f32.mrf.mxu0
    %v7611 = vadd.f32 %v7598, %v7610
    %v7612 = vpop.f32.mrf.mxu0
    %7613 = vdwg.mxu0
    %7614 = vmatpush.bf16.msra.mxu0 %v6692
    %7615 = vmatpush.bf16.msra.mxu0 %v6684
    %7616 = vmatpush.bf16.msra.mxu0 %v6676
    %7617 = vmatpush.bf16.msra.mxu0 %v6668
    %7618 = vmatpush.bf16.msra.mxu0 %v6660
    %7619 = vmatpush.bf16.msra.mxu0 %v6652
    %7620 = vmatpush.bf16.msra.mxu0 %v6644
    %7621 = vmatpush.bf16.msra.mxu0 %v6636
    %7622 = vmatmul.bf16.gmra.mxu0 %v4002
    %v7623 = vpop.f32.mrf.mxu0
    %v7624 = vadd.f32 %v7611, %v7623
    %v7625 = vpop.f32.mrf.mxu0
    %7626 = vdwg.mxu0
    %7627 = vmatpush.bf16.msra.mxu0 %v6756
    %7628 = vmatpush.bf16.msra.mxu0 %v6748
    %7629 = vmatpush.bf16.msra.mxu0 %v6740
    %7630 = vmatpush.bf16.msra.mxu0 %v6732
    %7631 = vmatpush.bf16.msra.mxu0 %v6724
    %7632 = vmatpush.bf16.msra.mxu0 %v6716
    %7633 = vmatpush.bf16.msra.mxu0 %v6708
    %7634 = vmatpush.bf16.msra.mxu0 %v6700
    %7635 = vmatmul.bf16.gmra.mxu0 %v4003
    %v7636 = vpop.f32.mrf.mxu0
    %v7637 = vadd.f32 %v7624, %v7636
    %v7638 = vpop.f32.mrf.mxu0
    %7639 = vdwg.mxu0
    %7640 = vmatpush.bf16.msra.mxu0 %v6820
    %7641 = vmatpush.bf16.msra.mxu0 %v6812
    %7642 = vmatpush.bf16.msra.mxu0 %v6804
    %7643 = vmatpush.bf16.msra.mxu0 %v6796
    %7644 = vmatpush.bf16.msra.mxu0 %v6788
    %7645 = vmatpush.bf16.msra.mxu0 %v6780
    %7646 = vmatpush.bf16.msra.mxu0 %v6772
    %7647 = vmatpush.bf16.msra.mxu0 %v6764
    %7648 = vmatmul.bf16.gmra.mxu0 %v4004
    %v7649 = vpop.f32.mrf.mxu0
    %v7650 = vadd.f32 %v7637, %v7649
    %v7651 = vpop.f32.mrf.mxu0
    %7652 = vdwg.mxu0
    %v7653 = vld [vmem:[%s14] sm:$0xff]
    %v7655 = vperm.slane %v7653, 0
    %v7656 = vperm.slane %v7653, 1
    %v7657 = vperm.slane %v7653, 2
    %v7658 = vperm.slane %v7653, 3
    %v7659 = vperm.slane %v7653, 4
    %v7660 = vperm.slane %v7653, 5
    %v7661 = vperm.slane %v7653, 6
    %v7662 = vperm.slane %v7653, 7
    %v7671 = vmul.f32 %v6922, %v7655
    %v7672 = vmul.f32 %v7026, %v7656
    %v7673 = vmul.f32 %v7130, %v7657
    %v7674 = vmul.f32 %v7234, %v7658
    %v7675 = vmul.f32 %v7338, %v7659
    %v7676 = vmul.f32 %v7442, %v7660
    %v7677 = vmul.f32 %v7546, %v7661
    %v7678 = vmul.f32 %v7650, %v7662
    %v7679 = vld [vmem:[%s15] sm:$0xff]
    %v7681 = vperm.slane %v7679, 0
    %v7682 = vperm.slane %v7679, 1
    %v7683 = vperm.slane %v7679, 2
    %v7684 = vperm.slane %v7679, 3
    %v7685 = vperm.slane %v7679, 4
    %v7686 = vperm.slane %v7679, 5
    %v7687 = vperm.slane %v7679, 6
    %v7688 = vperm.slane %v7679, 7
    %v7697 = vadd.f32 %v7671, %v7681
    %v7698 = vadd.f32 %v7672, %v7682
    %v7699 = vadd.f32 %v7673, %v7683
    %v7700 = vadd.f32 %v7674, %v7684
    %v7701 = vadd.f32 %v7675, %v7685
    %v7702 = vadd.f32 %v7676, %v7686
    %v7703 = vadd.f32 %v7677, %v7687
    %v7704 = vadd.f32 %v7678, %v7688
    %v7705 = vmax.f32 %v7697, 0.0
    %v7706 = vmax.f32 %v7698, 0.0
    %v7707 = vmax.f32 %v7699, 0.0
    %v7708 = vmax.f32 %v7700, 0.0
    %v7709 = vmax.f32 %v7701, 0.0
    %v7710 = vmax.f32 %v7702, 0.0
    %v7711 = vmax.f32 %v7703, 0.0
    %v7712 = vmax.f32 %v7704, 0.0
    %v7713 = vpack.c.bf16 %v7705, %v7705
    %v7714 = vpack.c.bf16 %v7706, %v7706
    %v7715 = vpack.c.bf16 %v7707, %v7707
    %v7716 = vpack.c.bf16 %v7708, %v7708
    %v7717 = vpack.c.bf16 %v7709, %v7709
    %v7718 = vpack.c.bf16 %v7710, %v7710
    %v7719 = vpack.c.bf16 %v7711, %v7711
    %v7720 = vpack.c.bf16 %v7712, %v7712
    %v7721 = vld [vmem:[%s16] sm:$0xf]
    %v7722 = vld [vmem:[%s16 + $0x4] sm:$0xf]
    %v7723 = vld [vmem:[%s16 + $0x8] sm:$0xf]
    %v7724 = vld [vmem:[%s16 + $0xc] sm:$0xf]
    %v7725 = vld [vmem:[%s16 + $0x10] sm:$0xf]
    %v7726 = vld [vmem:[%s16 + $0x14] sm:$0xf]
    %v7727 = vld [vmem:[%s16 + $0x18] sm:$0xf]
    %v7728 = vld [vmem:[%s16 + $0x1c] sm:$0xf]
    %v7729 = vld [vmem:[%s16 + $0x20] sm:$0xf]
    %v7730 = vld [vmem:[%s16 + $0x24] sm:$0xf]
    %v7731 = vld [vmem:[%s16 + $0x28] sm:$0xf]
    %v7732 = vld [vmem:[%s16 + $0x2c] sm:$0xf]
    %v7733 = vld [vmem:[%s16 + $0x30] sm:$0xf]
    %v7734 = vld [vmem:[%s16 + $0x34] sm:$0xf]
    %v7735 = vld [vmem:[%s16 + $0x38] sm:$0xf]
    %v7736 = vld [vmem:[%s16 + $0x3c] sm:$0xf]
    %v7737 = vld [vmem:[%s16 + $0x40] sm:$0xf]
    %v7738 = vld [vmem:[%s16 + $0x44] sm:$0xf]
    %v7739 = vld [vmem:[%s16 + $0x48] sm:$0xf]
    %v7740 = vld [vmem:[%s16 + $0x4c] sm:$0xf]
    %v7741 = vld [vmem:[%s16 + $0x50] sm:$0xf]
    %v7742 = vld [vmem:[%s16 + $0x54] sm:$0xf]
    %v7743 = vld [vmem:[%s16 + $0x58] sm:$0xf]
    %v7744 = vld [vmem:[%s16 + $0x5c] sm:$0xf]
    %v7745 = vld [vmem:[%s16 + $0x60] sm:$0xf]
    %v7746 = vld [vmem:[%s16 + $0x64] sm:$0xf]
    %v7747 = vld [vmem:[%s16 + $0x68] sm:$0xf]
    %v7748 = vld [vmem:[%s16 + $0x6c] sm:$0xf]
    %v7749 = vld [vmem:[%s16 + $0x70] sm:$0xf]
    %v7750 = vld [vmem:[%s16 + $0x74] sm:$0xf]
    %v7751 = vld [vmem:[%s16 + $0x78] sm:$0xf]
    %v7752 = vld [vmem:[%s16 + $0x7c] sm:$0xf]
    %v7753 = vld [vmem:[%s16 + $0x80] sm:$0xf]
    %v7754 = vld [vmem:[%s16 + $0x84] sm:$0xf]
    %v7755 = vld [vmem:[%s16 + $0x88] sm:$0xf]
    %v7756 = vld [vmem:[%s16 + $0x8c] sm:$0xf]
    %v7757 = vld [vmem:[%s16 + $0x90] sm:$0xf]
    %v7758 = vld [vmem:[%s16 + $0x94] sm:$0xf]
    %v7759 = vld [vmem:[%s16 + $0x98] sm:$0xf]
    %v7760 = vld [vmem:[%s16 + $0x9c] sm:$0xf]
    %v7761 = vld [vmem:[%s16 + $0xa0] sm:$0xf]
    %v7762 = vld [vmem:[%s16 + $0xa4] sm:$0xf]
    %v7763 = vld [vmem:[%s16 + $0xa8] sm:$0xf]
    %v7764 = vld [vmem:[%s16 + $0xac] sm:$0xf]
    %v7765 = vld [vmem:[%s16 + $0xb0] sm:$0xf]
    %v7766 = vld [vmem:[%s16 + $0xb4] sm:$0xf]
    %v7767 = vld [vmem:[%s16 + $0xb8] sm:$0xf]
    %v7768 = vld [vmem:[%s16 + $0xbc] sm:$0xf]
    %v7769 = vld [vmem:[%s16 + $0xc0] sm:$0xf]
    %v7770 = vld [vmem:[%s16 + $0xc4] sm:$0xf]
    %v7771 = vld [vmem:[%s16 + $0xc8] sm:$0xf]
    %v7772 = vld [vmem:[%s16 + $0xcc] sm:$0xf]
    %v7773 = vld [vmem:[%s16 + $0xd0] sm:$0xf]
    %v7774 = vld [vmem:[%s16 + $0xd4] sm:$0xf]
    %v7775 = vld [vmem:[%s16 + $0xd8] sm:$0xf]
    %v7776 = vld [vmem:[%s16 + $0xdc] sm:$0xf]
    %v7777 = vld [vmem:[%s16 + $0xe0] sm:$0xf]
    %v7778 = vld [vmem:[%s16 + $0xe4] sm:$0xf]
    %v7779 = vld [vmem:[%s16 + $0xe8] sm:$0xf]
    %v7780 = vld [vmem:[%s16 + $0xec] sm:$0xf]
    %v7781 = vld [vmem:[%s16 + $0xf0] sm:$0xf]
    %v7782 = vld [vmem:[%s16 + $0xf4] sm:$0xf]
    %v7783 = vld [vmem:[%s16 + $0xf8] sm:$0xf]
    %v7784 = vld [vmem:[%s16 + $0xfc] sm:$0xf]
    %v7785 = vld [vmem:[%s16 + $0x100] sm:$0xf]
    %v7786 = vld [vmem:[%s16 + $0x104] sm:$0xf]
    %v7787 = vld [vmem:[%s16 + $0x108] sm:$0xf]
    %v7788 = vld [vmem:[%s16 + $0x10c] sm:$0xf]
    %v7789 = vld [vmem:[%s16 + $0x110] sm:$0xf]
    %v7790 = vld [vmem:[%s16 + $0x114] sm:$0xf]
    %v7791 = vld [vmem:[%s16 + $0x118] sm:$0xf]
    %v7792 = vld [vmem:[%s16 + $0x11c] sm:$0xf]
    %v7793 = vld [vmem:[%s16 + $0x120] sm:$0xf]
    %v7794 = vld [vmem:[%s16 + $0x124] sm:$0xf]
    %v7795 = vld [vmem:[%s16 + $0x128] sm:$0xf]
    %v7796 = vld [vmem:[%s16 + $0x12c] sm:$0xf]
    %v7797 = vld [vmem:[%s16 + $0x130] sm:$0xf]
    %v7798 = vld [vmem:[%s16 + $0x134] sm:$0xf]
    %v7799 = vld [vmem:[%s16 + $0x138] sm:$0xf]
    %v7800 = vld [vmem:[%s16 + $0x13c] sm:$0xf]
    %v7801 = vld [vmem:[%s16 + $0x140] sm:$0xf]
    %v7802 = vld [vmem:[%s16 + $0x144] sm:$0xf]
    %v7803 = vld [vmem:[%s16 + $0x148] sm:$0xf]
    %v7804 = vld [vmem:[%s16 + $0x14c] sm:$0xf]
    %v7805 = vld [vmem:[%s16 + $0x150] sm:$0xf]
    %v7806 = vld [vmem:[%s16 + $0x154] sm:$0xf]
    %v7807 = vld [vmem:[%s16 + $0x158] sm:$0xf]
    %v7808 = vld [vmem:[%s16 + $0x15c] sm:$0xf]
    %v7809 = vld [vmem:[%s16 + $0x160] sm:$0xf]
    %v7810 = vld [vmem:[%s16 + $0x164] sm:$0xf]
    %v7811 = vld [vmem:[%s16 + $0x168] sm:$0xf]
    %v7812 = vld [vmem:[%s16 + $0x16c] sm:$0xf]
    %v7813 = vld [vmem:[%s16 + $0x170] sm:$0xf]
    %v7814 = vld [vmem:[%s16 + $0x174] sm:$0xf]
    %v7815 = vld [vmem:[%s16 + $0x178] sm:$0xf]
    %v7816 = vld [vmem:[%s16 + $0x17c] sm:$0xf]
    %v7817 = vld [vmem:[%s16 + $0x180] sm:$0xf]
    %v7818 = vld [vmem:[%s16 + $0x184] sm:$0xf]
    %v7819 = vld [vmem:[%s16 + $0x188] sm:$0xf]
    %v7820 = vld [vmem:[%s16 + $0x18c] sm:$0xf]
    %v7821 = vld [vmem:[%s16 + $0x190] sm:$0xf]
    %v7822 = vld [vmem:[%s16 + $0x194] sm:$0xf]
    %v7823 = vld [vmem:[%s16 + $0x198] sm:$0xf]
    %v7824 = vld [vmem:[%s16 + $0x19c] sm:$0xf]
    %v7825 = vld [vmem:[%s16 + $0x1a0] sm:$0xf]
    %v7826 = vld [vmem:[%s16 + $0x1a4] sm:$0xf]
    %v7827 = vld [vmem:[%s16 + $0x1a8] sm:$0xf]
    %v7828 = vld [vmem:[%s16 + $0x1ac] sm:$0xf]
    %v7829 = vld [vmem:[%s16 + $0x1b0] sm:$0xf]
    %v7830 = vld [vmem:[%s16 + $0x1b4] sm:$0xf]
    %v7831 = vld [vmem:[%s16 + $0x1b8] sm:$0xf]
    %v7832 = vld [vmem:[%s16 + $0x1bc] sm:$0xf]
    %v7833 = vld [vmem:[%s16 + $0x1c0] sm:$0xf]
    %v7834 = vld [vmem:[%s16 + $0x1c4] sm:$0xf]
    %v7835 = vld [vmem:[%s16 + $0x1c8] sm:$0xf]
    %v7836 = vld [vmem:[%s16 + $0x1cc] sm:$0xf]
    %v7837 = vld [vmem:[%s16 + $0x1d0] sm:$0xf]
    %v7838 = vld [vmem:[%s16 + $0x1d4] sm:$0xf]
    %v7839 = vld [vmem:[%s16 + $0x1d8] sm:$0xf]
    %v7840 = vld [vmem:[%s16 + $0x1dc] sm:$0xf]
    %v7841 = vld [vmem:[%s16 + $0x1e0] sm:$0xf]
    %v7842 = vld [vmem:[%s16 + $0x1e4] sm:$0xf]
    %v7843 = vld [vmem:[%s16 + $0x1e8] sm:$0xf]
    %v7844 = vld [vmem:[%s16 + $0x1ec] sm:$0xf]
    %v7845 = vld [vmem:[%s16 + $0x1f0] sm:$0xf]
    %v7846 = vld [vmem:[%s16 + $0x1f4] sm:$0xf]
    %v7847 = vld [vmem:[%s16 + $0x1f8] sm:$0xf]
    %v7848 = vld [vmem:[%s16 + $0x1fc] sm:$0xf]
    %v7849 = vld [vmem:[%s17] sm:$0x1]
    %v7851 = vperm.slane %v7849, 0
    %v7981 = vunpack.c.l.b16 %v7721
    %v7982 = vunpack.c.l.b16 %v7722
    %v7983 = vunpack.c.l.b16 %v7723
    %v7984 = vunpack.c.l.b16 %v7724
    %v7985 = vunpack.c.l.b16 %v7725
    %v7986 = vunpack.c.l.b16 %v7726
    %v7987 = vunpack.c.l.b16 %v7727
    %v7988 = vunpack.c.l.b16 %v7728
    %v7989 = vunpack.c.l.b16 %v7729
    %v7990 = vunpack.c.l.b16 %v7730
    %v7991 = vunpack.c.l.b16 %v7731
    %v7992 = vunpack.c.l.b16 %v7732
    %v7993 = vunpack.c.l.b16 %v7733
    %v7994 = vunpack.c.l.b16 %v7734
    %v7995 = vunpack.c.l.b16 %v7735
    %v7996 = vunpack.c.l.b16 %v7736
    %v7997 = vunpack.c.l.b16 %v7737
    %v7998 = vunpack.c.l.b16 %v7738
    %v7999 = vunpack.c.l.b16 %v7739
    %v8000 = vunpack.c.l.b16 %v7740
    %v8001 = vunpack.c.l.b16 %v7741
    %v8002 = vunpack.c.l.b16 %v7742
    %v8003 = vunpack.c.l.b16 %v7743
    %v8004 = vunpack.c.l.b16 %v7744
    %v8005 = vunpack.c.l.b16 %v7745
    %v8006 = vunpack.c.l.b16 %v7746
    %v8007 = vunpack.c.l.b16 %v7747
    %v8008 = vunpack.c.l.b16 %v7748
    %v8009 = vunpack.c.l.b16 %v7749
    %v8010 = vunpack.c.l.b16 %v7750
    %v8011 = vunpack.c.l.b16 %v7751
    %v8012 = vunpack.c.l.b16 %v7752
    %v8013 = vunpack.c.l.b16 %v7753
    %v8014 = vunpack.c.l.b16 %v7754
    %v8015 = vunpack.c.l.b16 %v7755
    %v8016 = vunpack.c.l.b16 %v7756
    %v8017 = vunpack.c.l.b16 %v7757
    %v8018 = vunpack.c.l.b16 %v7758
    %v8019 = vunpack.c.l.b16 %v7759
    %v8020 = vunpack.c.l.b16 %v7760
    %v8021 = vunpack.c.l.b16 %v7761
    %v8022 = vunpack.c.l.b16 %v7762
    %v8023 = vunpack.c.l.b16 %v7763
    %v8024 = vunpack.c.l.b16 %v7764
    %v8025 = vunpack.c.l.b16 %v7765
    %v8026 = vunpack.c.l.b16 %v7766
    %v8027 = vunpack.c.l.b16 %v7767
    %v8028 = vunpack.c.l.b16 %v7768
    %v8029 = vunpack.c.l.b16 %v7769
    %v8030 = vunpack.c.l.b16 %v7770
    %v8031 = vunpack.c.l.b16 %v7771
    %v8032 = vunpack.c.l.b16 %v7772
    %v8033 = vunpack.c.l.b16 %v7773
    %v8034 = vunpack.c.l.b16 %v7774
    %v8035 = vunpack.c.l.b16 %v7775
    %v8036 = vunpack.c.l.b16 %v7776
    %v8037 = vunpack.c.l.b16 %v7777
    %v8038 = vunpack.c.l.b16 %v7778
    %v8039 = vunpack.c.l.b16 %v7779
    %v8040 = vunpack.c.l.b16 %v7780
    %v8041 = vunpack.c.l.b16 %v7781
    %v8042 = vunpack.c.l.b16 %v7782
    %v8043 = vunpack.c.l.b16 %v7783
    %v8044 = vunpack.c.l.b16 %v7784
    %v8045 = vunpack.c.l.b16 %v7785
    %v8046 = vunpack.c.l.b16 %v7786
    %v8047 = vunpack.c.l.b16 %v7787
    %v8048 = vunpack.c.l.b16 %v7788
    %v8049 = vunpack.c.l.b16 %v7789
    %v8050 = vunpack.c.l.b16 %v7790
    %v8051 = vunpack.c.l.b16 %v7791
    %v8052 = vunpack.c.l.b16 %v7792
    %v8053 = vunpack.c.l.b16 %v7793
    %v8054 = vunpack.c.l.b16 %v7794
    %v8055 = vunpack.c.l.b16 %v7795
    %v8056 = vunpack.c.l.b16 %v7796
    %v8057 = vunpack.c.l.b16 %v7797
    %v8058 = vunpack.c.l.b16 %v7798
    %v8059 = vunpack.c.l.b16 %v7799
    %v8060 = vunpack.c.l.b16 %v7800
    %v8061 = vunpack.c.l.b16 %v7801
    %v8062 = vunpack.c.l.b16 %v7802
    %v8063 = vunpack.c.l.b16 %v7803
    %v8064 = vunpack.c.l.b16 %v7804
    %v8065 = vunpack.c.l.b16 %v7805
    %v8066 = vunpack.c.l.b16 %v7806
    %v8067 = vunpack.c.l.b16 %v7807
    %v8068 = vunpack.c.l.b16 %v7808
    %v8069 = vunpack.c.l.b16 %v7809
    %v8070 = vunpack.c.l.b16 %v7810
    %v8071 = vunpack.c.l.b16 %v7811
    %v8072 = vunpack.c.l.b16 %v7812
    %v8073 = vunpack.c.l.b16 %v7813
    %v8074 = vunpack.c.l.b16 %v7814
    %v8075 = vunpack.c.l.b16 %v7815
    %v8076 = vunpack.c.l.b16 %v7816
    %v8077 = vunpack.c.l.b16 %v7817
    %v8078 = vunpack.c.l.b16 %v7818
    %v8079 = vunpack.c.l.b16 %v7819
    %v8080 = vunpack.c.l.b16 %v7820
    %v8081 = vunpack.c.l.b16 %v7821
    %v8082 = vunpack.c.l.b16 %v7822
    %v8083 = vunpack.c.l.b16 %v7823
    %v8084 = vunpack.c.l.b16 %v7824
    %v8085 = vunpack.c.l.b16 %v7825
    %v8086 = vunpack.c.l.b16 %v7826
    %v8087 = vunpack.c.l.b16 %v7827
    %v8088 = vunpack.c.l.b16 %v7828
    %v8089 = vunpack.c.l.b16 %v7829
    %v8090 = vunpack.c.l.b16 %v7830
    %v8091 = vunpack.c.l.b16 %v7831
    %v8092 = vunpack.c.l.b16 %v7832
    %v8093 = vunpack.c.l.b16 %v7833
    %v8094 = vunpack.c.l.b16 %v7834
    %v8095 = vunpack.c.l.b16 %v7835
    %v8096 = vunpack.c.l.b16 %v7836
    %v8097 = vunpack.c.l.b16 %v7837
    %v8098 = vunpack.c.l.b16 %v7838
    %v8099 = vunpack.c.l.b16 %v7839
    %v8100 = vunpack.c.l.b16 %v7840
    %v8101 = vunpack.c.l.b16 %v7841
    %v8102 = vunpack.c.l.b16 %v7842
    %v8103 = vunpack.c.l.b16 %v7843
    %v8104 = vunpack.c.l.b16 %v7844
    %v8105 = vunpack.c.l.b16 %v7845
    %v8106 = vunpack.c.l.b16 %v7846
    %v8107 = vunpack.c.l.b16 %v7847
    %v8108 = vunpack.c.l.b16 %v7848
    %v8109 = vpack.c.b16 %v7982, %v7981
    %v8110 = vpack.c.b16 %v7984, %v7983
    %v8111 = vpack.c.b16 %v7986, %v7985
    %v8112 = vpack.c.b16 %v7988, %v7987
    %v8113 = vpack.c.b16 %v7990, %v7989
    %v8114 = vpack.c.b16 %v7992, %v7991
    %v8115 = vpack.c.b16 %v7994, %v7993
    %v8116 = vpack.c.b16 %v7996, %v7995
    %v8117 = vpack.c.b16 %v7998, %v7997
    %v8118 = vpack.c.b16 %v8000, %v7999
    %v8119 = vpack.c.b16 %v8002, %v8001
    %v8120 = vpack.c.b16 %v8004, %v8003
    %v8121 = vpack.c.b16 %v8006, %v8005
    %v8122 = vpack.c.b16 %v8008, %v8007
    %v8123 = vpack.c.b16 %v8010, %v8009
    %v8124 = vpack.c.b16 %v8012, %v8011
    %v8125 = vpack.c.b16 %v8014, %v8013
    %v8126 = vpack.c.b16 %v8016, %v8015
    %v8127 = vpack.c.b16 %v8018, %v8017
    %v8128 = vpack.c.b16 %v8020, %v8019
    %v8129 = vpack.c.b16 %v8022, %v8021
    %v8130 = vpack.c.b16 %v8024, %v8023
    %v8131 = vpack.c.b16 %v8026, %v8025
    %v8132 = vpack.c.b16 %v8028, %v8027
    %v8133 = vpack.c.b16 %v8030, %v8029
    %v8134 = vpack.c.b16 %v8032, %v8031
    %v8135 = vpack.c.b16 %v8034, %v8033
    %v8136 = vpack.c.b16 %v8036, %v8035
    %v8137 = vpack.c.b16 %v8038, %v8037
    %v8138 = vpack.c.b16 %v8040, %v8039
    %v8139 = vpack.c.b16 %v8042, %v8041
    %v8140 = vpack.c.b16 %v8044, %v8043
    %v8141 = vpack.c.b16 %v8046, %v8045
    %v8142 = vpack.c.b16 %v8048, %v8047
    %v8143 = vpack.c.b16 %v8050, %v8049
    %v8144 = vpack.c.b16 %v8052, %v8051
    %v8145 = vpack.c.b16 %v8054, %v8053
    %v8146 = vpack.c.b16 %v8056, %v8055
    %v8147 = vpack.c.b16 %v8058, %v8057
    %v8148 = vpack.c.b16 %v8060, %v8059
    %v8149 = vpack.c.b16 %v8062, %v8061
    %v8150 = vpack.c.b16 %v8064, %v8063
    %v8151 = vpack.c.b16 %v8066, %v8065
    %v8152 = vpack.c.b16 %v8068, %v8067
    %v8153 = vpack.c.b16 %v8070, %v8069
    %v8154 = vpack.c.b16 %v8072, %v8071
    %v8155 = vpack.c.b16 %v8074, %v8073
    %v8156 = vpack.c.b16 %v8076, %v8075
    %v8157 = vpack.c.b16 %v8078, %v8077
    %v8158 = vpack.c.b16 %v8080, %v8079
    %v8159 = vpack.c.b16 %v8082, %v8081
    %v8160 = vpack.c.b16 %v8084, %v8083
    %v8161 = vpack.c.b16 %v8086, %v8085
    %v8162 = vpack.c.b16 %v8088, %v8087
    %v8163 = vpack.c.b16 %v8090, %v8089
    %v8164 = vpack.c.b16 %v8092, %v8091
    %v8165 = vpack.c.b16 %v8094, %v8093
    %v8166 = vpack.c.b16 %v8096, %v8095
    %v8167 = vpack.c.b16 %v8098, %v8097
    %v8168 = vpack.c.b16 %v8100, %v8099
    %v8169 = vpack.c.b16 %v8102, %v8101
    %v8170 = vpack.c.b16 %v8104, %v8103
    %v8171 = vpack.c.b16 %v8106, %v8105
    %v8172 = vpack.c.b16 %v8108, %v8107
    %8237 = vmatpush.bf16.msra.mxu0 %v8116
    %8238 = vmatpush.bf16.msra.mxu0 %v8115
    %8239 = vmatpush.bf16.msra.mxu0 %v8114
    %8240 = vmatpush.bf16.msra.mxu0 %v8113
    %8241 = vmatpush.bf16.msra.mxu0 %v8112
    %8242 = vmatpush.bf16.msra.mxu0 %v8111
    %8243 = vmatpush.bf16.msra.mxu0 %v8110
    %8244 = vmatpush.bf16.msra.mxu0 %v8109
    %8245 = vmatmul.bf16.gmra.mxu0 %v7713
    %v8246 = vpop.f32.mrf.mxu0
    %v8247 = vadd.f32 %v7851, %v8246
    %v8248 = vpop.f32.mrf.mxu0
    %8249 = vdwg.mxu0
    %8250 = vmatpush.bf16.msra.mxu0 %v8124
    %8251 = vmatpush.bf16.msra.mxu0 %v8123
    %8252 = vmatpush.bf16.msra.mxu0 %v8122
    %8253 = vmatpush.bf16.msra.mxu0 %v8121
    %8254 = vmatpush.bf16.msra.mxu0 %v8120
    %8255 = vmatpush.bf16.msra.mxu0 %v8119
    %8256 = vmatpush.bf16.msra.mxu0 %v8118
    %8257 = vmatpush.bf16.msra.mxu0 %v8117
    %8258 = vmatmul.bf16.gmra.mxu0 %v7714
    %v8259 = vpop.f32.mrf.mxu0
    %v8260 = vadd.f32 %v8247, %v8259
    %v8261 = vpop.f32.mrf.mxu0
    %8262 = vdwg.mxu0
    %8263 = vmatpush.bf16.msra.mxu0 %v8132
    %8264 = vmatpush.bf16.msra.mxu0 %v8131
    %8265 = vmatpush.bf16.msra.mxu0 %v8130
    %8266 = vmatpush.bf16.msra.mxu0 %v8129
    %8267 = vmatpush.bf16.msra.mxu0 %v8128
    %8268 = vmatpush.bf16.msra.mxu0 %v8127
    %8269 = vmatpush.bf16.msra.mxu0 %v8126
    %8270 = vmatpush.bf16.msra.mxu0 %v8125
    %8271 = vmatmul.bf16.gmra.mxu0 %v7715
    %v8272 = vpop.f32.mrf.mxu0
    %v8273 = vadd.f32 %v8260, %v8272
    %v8274 = vpop.f32.mrf.mxu0
    %8275 = vdwg.mxu0
    %8276 = vmatpush.bf16.msra.mxu0 %v8140
    %8277 = vmatpush.bf16.msra.mxu0 %v8139
    %8278 = vmatpush.bf16.msra.mxu0 %v8138
    %8279 = vmatpush.bf16.msra.mxu0 %v8137
    %8280 = vmatpush.bf16.msra.mxu0 %v8136
    %8281 = vmatpush.bf16.msra.mxu0 %v8135
    %8282 = vmatpush.bf16.msra.mxu0 %v8134
    %8283 = vmatpush.bf16.msra.mxu0 %v8133
    %8284 = vmatmul.bf16.gmra.mxu0 %v7716
    %v8285 = vpop.f32.mrf.mxu0
    %v8286 = vadd.f32 %v8273, %v8285
    %v8287 = vpop.f32.mrf.mxu0
    %8288 = vdwg.mxu0
    %8289 = vmatpush.bf16.msra.mxu0 %v8148
    %8290 = vmatpush.bf16.msra.mxu0 %v8147
    %8291 = vmatpush.bf16.msra.mxu0 %v8146
    %8292 = vmatpush.bf16.msra.mxu0 %v8145
    %8293 = vmatpush.bf16.msra.mxu0 %v8144
    %8294 = vmatpush.bf16.msra.mxu0 %v8143
    %8295 = vmatpush.bf16.msra.mxu0 %v8142
    %8296 = vmatpush.bf16.msra.mxu0 %v8141
    %8297 = vmatmul.bf16.gmra.mxu0 %v7717
    %v8298 = vpop.f32.mrf.mxu0
    %v8299 = vadd.f32 %v8286, %v8298
    %v8300 = vpop.f32.mrf.mxu0
    %8301 = vdwg.mxu0
    %8302 = vmatpush.bf16.msra.mxu0 %v8156
    %8303 = vmatpush.bf16.msra.mxu0 %v8155
    %8304 = vmatpush.bf16.msra.mxu0 %v8154
    %8305 = vmatpush.bf16.msra.mxu0 %v8153
    %8306 = vmatpush.bf16.msra.mxu0 %v8152
    %8307 = vmatpush.bf16.msra.mxu0 %v8151
    %8308 = vmatpush.bf16.msra.mxu0 %v8150
    %8309 = vmatpush.bf16.msra.mxu0 %v8149
    %8310 = vmatmul.bf16.gmra.mxu0 %v7718
    %v8311 = vpop.f32.mrf.mxu0
    %v8312 = vadd.f32 %v8299, %v8311
    %v8313 = vpop.f32.mrf.mxu0
    %8314 = vdwg.mxu0
    %8315 = vmatpush.bf16.msra.mxu0 %v8164
    %8316 = vmatpush.bf16.msra.mxu0 %v8163
    %8317 = vmatpush.bf16.msra.mxu0 %v8162
    %8318 = vmatpush.bf16.msra.mxu0 %v8161
    %8319 = vmatpush.bf16.msra.mxu0 %v8160
    %8320 = vmatpush.bf16.msra.mxu0 %v8159
    %8321 = vmatpush.bf16.msra.mxu0 %v8158
    %8322 = vmatpush.bf16.msra.mxu0 %v8157
    %8323 = vmatmul.bf16.gmra.mxu0 %v7719
    %v8324 = vpop.f32.mrf.mxu0
    %v8325 = vadd.f32 %v8312, %v8324
    %v8326 = vpop.f32.mrf.mxu0
    %8327 = vdwg.mxu0
    %8328 = vmatpush.bf16.msra.mxu0 %v8172
    %8329 = vmatpush.bf16.msra.mxu0 %v8171
    %8330 = vmatpush.bf16.msra.mxu0 %v8170
    %8331 = vmatpush.bf16.msra.mxu0 %v8169
    %8332 = vmatpush.bf16.msra.mxu0 %v8168
    %8333 = vmatpush.bf16.msra.mxu0 %v8167
    %8334 = vmatpush.bf16.msra.mxu0 %v8166
    %8335 = vmatpush.bf16.msra.mxu0 %v8165
    %8336 = vmatmul.bf16.gmra.mxu0 %v7720
    %v8337 = vpop.f32.mrf.mxu0
    %v8338 = vadd.f32 %v8325, %v8337
    %v8339 = vpop.f32.mrf.mxu0
    %8340 = vdwg.mxu0
    %v8341 = vmax.f32 %v8338, 0.0
    %v8342 = vpack.c.bf16 %v8341, %v8341
    %v8343 = vld [vmem:[%s18] sm:$0xf]
    %v8344 = vld [vmem:[%s18 + $0x4] sm:$0xf]
    %v8345 = vld [vmem:[%s18 + $0x8] sm:$0xf]
    %v8346 = vld [vmem:[%s18 + $0xc] sm:$0xf]
    %v8347 = vld [vmem:[%s18 + $0x10] sm:$0xf]
    %v8348 = vld [vmem:[%s18 + $0x14] sm:$0xf]
    %v8349 = vld [vmem:[%s18 + $0x18] sm:$0xf]
    %v8350 = vld [vmem:[%s18 + $0x1c] sm:$0xf]
    %v8351 = vld [vmem:[%s19] sm:$0x1]
    %v8353 = vperm.slane %v8351, 0
    %v8363 = vunpack.c.l.b16 %v8343
    %v8364 = vunpack.c.l.b16 %v8344
    %v8365 = vunpack.c.l.b16 %v8345
    %v8366 = vunpack.c.l.b16 %v8346
    %v8367 = vunpack.c.l.b16 %v8347
    %v8368 = vunpack.c.l.b16 %v8348
    %v8369 = vunpack.c.l.b16 %v8349
    %v8370 = vunpack.c.l.b16 %v8350
    %v8371 = vpack.c.b16 %v8364, %v8363
    %v8372 = vpack.c.b16 %v8366, %v8365
    %v8373 = vpack.c.b16 %v8368, %v8367
    %v8374 = vpack.c.b16 %v8370, %v8369
    %vm8379 = vcmask 523264
    %v8381 = vsel %vm8379, %v8342, 0
    %8383 = vmatpush.bf16.msra.mxu0 0
    %8384 = vmatpush.bf16.msra.mxu0 0
    %8385 = vmatpush.bf16.msra.mxu0 0
    %8386 = vmatpush.bf16.msra.mxu0 0
    %8387 = vmatpush.bf16.msra.mxu0 %v8374
    %8388 = vmatpush.bf16.msra.mxu0 %v8373
    %8389 = vmatpush.bf16.msra.mxu0 %v8372
    %8390 = vmatpush.bf16.msra.mxu0 %v8371
    %8391 = vmatmul.bf16.gmra.mxu0 %v8381
    %v8392 = vpop.f32.mrf.mxu0
    %v8393 = vadd.f32 %v8353, %v8392
    %v8394 = vpop.f32.mrf.mxu0
    %8395 = vdwg.mxu0
    %vm8396 = vcmp.lt.s32.totalorder %v147, 4
    %v8397 = vsel %vm8396, %v8393, -inf
    %v8398 = vsel %vm678, %v8397, -inf
    %8399 = vmax.xlane.f32.xlu0 %v8398
    %v8400 = vpop.xlane.xlu0 %8399
    %v8401 = vsub.f32 %v8397, %v8400
    %v8402 = vmul.f32 %v8401, 1.442695
    %v8403 = vpow.pop %v8402
    %v8404 = vsel %vm678, %v8403, 0.0
    %8405 = vadd.xlane.f32.xlu0 %v8404
    %v8406 = vpop.xlane.xlu0 %8405
    %v8407 = vrcp.pop %v8406
    %v8408 = vmul.f32 %v8406, %v8407
    %v8409 = vsub.f32 1.0, %v8408
    %v8410 = vmul.f32 %v8407, %v8409
    %v8411 = vadd.f32 %v8407, %v8410
    %vm8412 = vweird.f32 %v8406
    %vm8413 = vweird.f32 %v8407
    %vm8414 = vmor %vm8412, %vm8413
    %v8415 = vsel %vm8414, %v8407, %v8411
    %v8416 = vand.u32 2147483647, %v8406
    %vm8417 = vcmp.eq.f32.partialorder %v8416, 8.507059e+37
    %v8418 = vand.u32 %v8406, 2147483648
    %v8419 = vor.u32 1.1754944e-38, %v8418
    %v8420 = vsel %vm8417, %v8419, %v8415
    %v8421 = vmul.f32 %v8403, %v8420
    %vm8422 = vcmp.eq.s32.totalorder %v147, 4
    %v8423 = vsel %vm8422, %v8393, %v8421
    %8424 = vst [vmem:[%s20] sm:$0x3] %v8423
    // Predicated region
    $region106: #{tron_net_forward.1} parent=1 // pred_check
      _
    $region107: #{tron_net_forward.1} parent=1 // pred_check_branch
      %8426 = sbr.rel (0) target = $region109
    $region108: #{tron_net_forward.1} parent=1 // pred_region
      _
    $region109: #{tron_net_forward.1} parent=1 // pred_fallthru
      _
    // Predicated region
    $region110: #{tron_net_forward.1} parent=1 // pred_check
      _
    $region111: #{tron_net_forward.1} parent=1 // pred_check_branch
      %8428 = sbr.rel (0) target = $region113
    $region112: #{tron_net_forward.1} parent=1 // pred_region
      _
    $region113: #{tron_net_forward.1} parent=1 // pred_fallthru
      _
    %8429 = vsyncpa [#allocation5], 1
    %8430 = vsyncpa [#allocation14], 1
    %8431 = vsyncpa [#allocation6], 1
    %8432 = vsyncpa [#allocation8], 1
    %8433 = vsyncpa [#allocation11], 1

</llo_original>
